<compile_context>
chip_gen: v6e
topology: v6e:2x2x1
jax: 0.10.0
libtpu: 0.0.40
codegen_flags: <defaults>
</compile_context>

<pallas_src>
import functools

import jax
import jax.numpy as jnp
from jax import lax
from jax.experimental import pallas as pl
from jax.experimental.pallas import tpu as pltpu

EPS = 1e-5


def fused_kernel(gate_ref, x_ref, w_ref, gamma_ref, beta_ref, res_ref, o_ref):
    # Block of output channels handled by this grid step.
    cb = o_ref.shape[0]
    row0 = pl.multiple_of(pl.program_id(0) * cb, 8)

    # SE gate: sigmoid + broadcast-multiply over the spatial (lane) axis.
    s = jax.nn.sigmoid(gate_ref[...])                       # (Cin, 1)  f32
    y = (x_ref[...] * s).astype(jnp.bfloat16)               # (Cin, P)  bf16

    # 1x1 conv == channel matmul; weight block is (cb, Cin) bf16, f32 accumulation.
    z = jnp.dot(w_ref[...], y, preferred_element_type=jnp.float32)   # (cb, P) f32

    # BatchNorm2d (training mode): per-output-channel batch stats over P = N*H*W,
    # one-pass biased variance (clamped against f32 cancellation), affine folded
    # into a single scale/shift.
    inv_p = 1.0 / z.shape[1]
    mean = jnp.sum(z, axis=1, keepdims=True) * inv_p                  # (cb, 1)
    var = jnp.sum(z * z, axis=1, keepdims=True) * inv_p - mean * mean
    var = jnp.maximum(var, 0.0)

    gamma = gamma_ref[pl.ds(row0, cb), :]                             # (cb, 1)
    beta = beta_ref[pl.ds(row0, cb), :]                               # (cb, 1)
    scale = lax.rsqrt(var + EPS) * gamma                              # (cb, 1)
    shift = beta - mean * scale                                       # (cb, 1)

    # Residual add + store.
    o_ref[...] = (res_ref[...] + z * scale + shift).astype(o_ref.dtype)


def _round_up(x, m):
    return (x + m - 1) // m * m


def _num_cout_blocks(device_kind=None):
    """2 balanced Cout blocks on v7x (one per TensorCore); 1 block on single-TC
    chips (v5e/v6e), where extra grid steps are pure overhead for this DMA-bound
    kernel."""
    if device_kind is None:
        device_kind = jax.devices()[0].device_kind
    kind = device_kind.lower()
    if "v7" in kind or "7x" in kind:
        return 2
    return 1


def prepare_params(conv_w, bn_gamma, bn_beta, num_cout_blocks=None):
    """One-time parameter prep (outside the hot path): keep (Cout, Cin) layout
    (no transpose), cast the weight to bf16 to halve its HBM traffic, and pad the
    Cout axis so it splits into `num_cout_blocks` equal 8-aligned blocks."""
    c_out, c_in = conv_w.shape[0], conv_w.shape[1]
    nb = num_cout_blocks if num_cout_blocks is not None else _num_cout_blocks()
    cb = _round_up(pl.cdiv(c_out, nb), 8)
    c_pad = nb * cb

    w = conv_w.reshape(c_out, c_in).astype(jnp.bfloat16)       # (Cout, Cin) bf16
    gamma = bn_gamma.reshape(c_out, 1).astype(jnp.float32)     # (Cout, 1)
    beta = bn_beta.reshape(c_out, 1).astype(jnp.float32)       # (Cout, 1)
    if c_pad != c_out:
        pad = c_pad - c_out
        w = jnp.pad(w, ((0, pad), (0, 0)))
        gamma = jnp.pad(gamma, ((0, pad), (0, 0)), constant_values=1.0)
        beta = jnp.pad(beta, ((0, pad), (0, 0)))
    return w, gamma, beta


@functools.partial(jax.jit, static_argnames=("num_cout_blocks",))
def fused_forward(x421, x417, x411, w_bf16, gamma, beta, *, num_cout_blocks=None):
    """x421: (1,C,1,1) SE gate, x417/x411: (1,C,H,W), w_bf16: (C_pad,C) bf16,
    gamma/beta: (C_pad,1) f32 (from prepare_params)."""
    n, c, h, w_sp = x417.shape
    assert n == 1, "kernel assumes N == 1 (per-sample SE gate broadcast)"
    p = h * w_sp

    nb = num_cout_blocks if num_cout_blocks is not None else _num_cout_blocks()
    cb = _round_up(pl.cdiv(c, nb), 8)
    c_pad = nb * cb
    assert w_bf16.shape == (c_pad, c), (w_bf16.shape, (c_pad, c))
    assert gamma.shape == (c_pad, 1) and beta.shape == (c_pad, 1)

    # Free views of NCHW memory (N == 1): channels-leading, spatially flat.
    x_cp = x417.reshape(c, p)
    res_cp = x411.reshape(c, p)
    gate = x421.reshape(c, 1)

    out_cp = pl.pallas_call(
        fused_kernel,
        out_shape=jax.ShapeDtypeStruct((c, p), x417.dtype),
        grid=(nb,),
        in_specs=[
            pl.BlockSpec((c, 1), lambda i: (0, 0)),        # gate  (fetched once)
            pl.BlockSpec((c, p), lambda i: (0, 0)),        # x     (fetched once)
            pl.BlockSpec((cb, c), lambda i: (i, 0)),       # weight (Cout-blocked, padded)
            pl.BlockSpec((c_pad, 1), lambda i: (0, 0)),    # gamma (full, sliced in-kernel)
            pl.BlockSpec((c_pad, 1), lambda i: (0, 0)),    # beta  (full, sliced in-kernel)
            pl.BlockSpec((cb, p), lambda i: (i, 0)),       # residual (ragged last block)
        ],
        out_specs=pl.BlockSpec((cb, p), lambda i: (i, 0)),  # ragged last block: OOB masked
        compiler_params=pltpu.CompilerParams(dimension_semantics=("parallel",)),
    )(gate, x_cp, w_bf16, gamma, beta, res_cp)

    return out_cp.reshape(n, c, h, w_sp)   # free view back to NCHW


def reference_forward(x421, x417, x411, conv_w, bn_gamma, bn_beta):
    """Exact f32 pure-JAX reference mirroring the PyTorch module (training-mode BN)."""
    c = conv_w.shape[0]
    s = jax.nn.sigmoid(x421)
    y = x417 * s
    z = jnp.einsum('nihw,oi->nohw', y, conv_w.reshape(c, c),
                   precision=lax.Precision.HIGHEST)
    mean = jnp.mean(z, axis=(0, 2, 3), keepdims=True)
    var = jnp.mean((z - mean) ** 2, axis=(0, 2, 3), keepdims=True)
    bn = (z - mean) / jnp.sqrt(var + EPS)
    bn = bn * bn_gamma.reshape(1, -1, 1, 1) + bn_beta.reshape(1, -1, 1, 1)
    return x411 + bn


def reference_forward_bf16w(x421, x417, x411, conv_w, bn_gamma, bn_beta):
    """Same math but with the kernel's bf16 quantization of weight / gated
    activations, so kernel bugs can be checked at a tight tolerance."""
    c = conv_w.shape[0]
    s = jax.nn.sigmoid(x421)
    y = (x417 * s).astype(jnp.bfloat16).astype(jnp.float32)
    w = conv_w.reshape(c, c).astype(jnp.bfloat16).astype(jnp.float32)
    z = jnp.einsum('nihw,oi->nohw', y, w, precision=lax.Precision.HIGHEST)
    mean = jnp.mean(z, axis=(0, 2, 3), keepdims=True)
    var = jnp.mean((z - mean) ** 2, axis=(0, 2, 3), keepdims=True)
    bn = (z - mean) / jnp.sqrt(var + EPS)
    bn = bn * bn_gamma.reshape(1, -1, 1, 1) + bn_beta.reshape(1, -1, 1, 1)
    return x411 + bn


if __name__ == "__main__":
    N, C, H, W = 1, 888, 7, 7
    key = jax.random.PRNGKey(0)
    k1, k2, k3, k4 = jax.random.split(key, 4)

    x421 = jax.random.normal(k1, (N, C, 1, 1), dtype=jnp.float32)
    x417 = jax.random.normal(k2, (N, C, H, W), dtype=jnp.float32)
    x411 = jax.random.normal(k3, (N, C, H, W), dtype=jnp.float32)

    # Conv2d(888, 888, 1x1, bias=False) weight; BatchNorm2d affine params
    # (PyTorch default init: weight=1, bias=0). Deterministic in-script init.
    conv_w = jax.random.normal(k4, (C, C, 1, 1), dtype=jnp.float32) * 0.02
    bn_gamma = jnp.ones((C,), dtype=jnp.float32)
    bn_beta = jnp.zeros((C,), dtype=jnp.float32)

    nb = _num_cout_blocks()
    w_bf16, gamma, beta = prepare_params(conv_w, bn_gamma, bn_beta, num_cout_blocks=nb)

    out = fused_forward(x421, x417, x411, w_bf16, gamma, beta, num_cout_blocks=nb)
    out = jax.block_until_ready(out)
    assert out.shape == (N, C, H, W)
    assert bool(jnp.all(jnp.isfinite(out)))

    # Tight check vs. a bf16-quantized reference (isolates kernel bugs from rounding).
    ref_q = jax.block_until_ready(
        reference_forward_bf16w(x421, x417, x411, conv_w, bn_gamma, bn_beta))
    assert jnp.allclose(out, ref_q, atol=5e-3, rtol=5e-3), \
        float(jnp.max(jnp.abs(out - ref_q)))

    # Looser check vs. the exact f32 module-equivalent reference: the only expected
    # difference is bf16 rounding of the weight / gated activations.
    ref = jax.block_until_ready(
        reference_forward(x421, x417, x411, conv_w, bn_gamma, bn_beta))
    assert jnp.allclose(out, ref, atol=2e-2, rtol=2e-2), \
        float(jnp.max(jnp.abs(out - ref)))

    print("KERNEL_OK")
</pallas_src>

<mosaic_0001>
module attributes {stable_mosaic.version = 11 : i64} {
  func.func @fused_kernel(%arg0: i32, %arg1: memref<888x1xf32, #tpu.memory_space<vmem>>, %arg2: memref<888x49xf32, #tpu.memory_space<vmem>>, %arg3: memref<888x888xbf16, #tpu.memory_space<vmem>>, %arg4: memref<888x1xf32, #tpu.memory_space<vmem>>, %arg5: memref<888x1xf32, #tpu.memory_space<vmem>>, %arg6: memref<888x49xf32, #tpu.memory_space<vmem>>, %arg7: memref<888x49xf32, #tpu.memory_space<vmem>>) attributes {dimension_semantics = [#tpu.dimension_semantics<parallel>], iteration_bounds = array<i64: 1>, scalar_prefetch = 0 : i64, scratch_operands = 0 : i64, tpu.core_type = #tpu.core_type<tc>, window_params = [{pipeline_mode = #tpu.pipeline_mode<synchronous>, transform_indices = @transform_0, window_bounds = array<i64: 888, 1>}, {pipeline_mode = #tpu.pipeline_mode<synchronous>, transform_indices = @transform_1, window_bounds = array<i64: 888, 49>}, {transform_indices = @transform_2, window_bounds = array<i64: 888, 888>}, {pipeline_mode = #tpu.pipeline_mode<synchronous>, transform_indices = @transform_3, window_bounds = array<i64: 888, 1>}, {pipeline_mode = #tpu.pipeline_mode<synchronous>, transform_indices = @transform_4, window_bounds = array<i64: 888, 1>}, {transform_indices = @transform_5, window_bounds = array<i64: 888, 49>}, {transform_indices = @transform_6, window_bounds = array<i64: 888, 49>}]} {
    %c888_i32 = arith.constant 888 : i32
    %0 = arith.muli %arg0, %c888_i32 : i32
    %1 = tpu.assume_multiple %0, 8 : i32
    %c0 = arith.constant 0 : index
    %c0_0 = arith.constant 0 : index
    %2 = vector.load %arg1[%c0, %c0_0] : memref<888x1xf32, #tpu.memory_space<vmem>>, vector<888x1xf32>
    %3 = arith.negf %2 : vector<888x1xf32>
    %4 = math.exp %3 : vector<888x1xf32>
    %cst = arith.constant 1.000000e+00 : f32
    %5 = vector.broadcast %cst : f32 to vector<888x1xf32>
    %6 = arith.addf %5, %4 : vector<888x1xf32>
    %7 = arith.divf %5, %6 : vector<888x1xf32>
    %c0_1 = arith.constant 0 : index
    %c0_2 = arith.constant 0 : index
    %8 = vector.load %arg2[%c0_1, %c0_2] : memref<888x49xf32, #tpu.memory_space<vmem>>, vector<888x49xf32>
    %9 = vector.broadcast %7 : vector<888x1xf32> to vector<888x49xf32>
    %10 = arith.mulf %8, %9 : vector<888x49xf32>
    %11 = arith.truncf %10 : vector<888x49xf32> to vector<888x49xbf16>
    %c0_3 = arith.constant 0 : index
    %c0_4 = arith.constant 0 : index
    %12 = vector.load %arg3[%c0_3, %c0_4] : memref<888x888xbf16, #tpu.memory_space<vmem>>, vector<888x888xbf16>
    %cst_5 = arith.constant dense<0.000000e+00> : vector<888x49xf32>
    %13 = tpu.matmul %12, %11, %cst_5 {dimension_numbers = #tpu.dot_dimension_numbers<[1], [0], [0], [1], [0, 0, 1, 1], [], []>} : vector<888x888xbf16>, vector<888x49xbf16>, vector<888x49xf32> -> vector<888x49xf32>
    %cst_6 = arith.constant dense<0.000000e+00> : vector<888xf32>
    %14 = vector.multi_reduction <add>, %13, %cst_6 [1] : vector<888x49xf32> to vector<888xf32>
    %15 = vector.shape_cast %14 : vector<888xf32> to vector<888x1xf32>
    %cst_7 = arith.constant 0.0204081628 : f32
    %16 = vector.broadcast %cst_7 : f32 to vector<888x1xf32>
    %17 = arith.mulf %15, %16 : vector<888x1xf32>
    %18 = arith.mulf %13, %13 : vector<888x49xf32>
    %cst_8 = arith.constant dense<0.000000e+00> : vector<888xf32>
    %19 = vector.multi_reduction <add>, %18, %cst_8 [1] : vector<888x49xf32> to vector<888xf32>
    %20 = vector.shape_cast %19 : vector<888xf32> to vector<888x1xf32>
    %cst_9 = arith.constant 0.0204081628 : f32
    %21 = vector.broadcast %cst_9 : f32 to vector<888x1xf32>
    %22 = arith.mulf %20, %21 : vector<888x1xf32>
    %23 = arith.mulf %17, %17 : vector<888x1xf32>
    %24 = arith.subf %22, %23 : vector<888x1xf32>
    %cst_10 = arith.constant 0.000000e+00 : f32
    %25 = vector.broadcast %cst_10 : f32 to vector<888x1xf32>
    %26 = arith.maximumf %24, %25 : vector<888x1xf32>
    %27 = arith.index_cast %1 : i32 to index
    %c0_11 = arith.constant 0 : index
    %28 = vector.load %arg4[%27, %c0_11] : memref<888x1xf32, #tpu.memory_space<vmem>>, vector<888x1xf32>
    %29 = arith.index_cast %1 : i32 to index
    %c0_12 = arith.constant 0 : index
    %30 = vector.load %arg5[%29, %c0_12] : memref<888x1xf32, #tpu.memory_space<vmem>>, vector<888x1xf32>
    %cst_13 = arith.constant 9.99999974E-6 : f32
    %31 = vector.broadcast %cst_13 : f32 to vector<888x1xf32>
    %32 = arith.addf %26, %31 : vector<888x1xf32>
    %33 = math.rsqrt %32 : vector<888x1xf32>
    %34 = arith.mulf %33, %28 : vector<888x1xf32>
    %35 = arith.mulf %17, %34 : vector<888x1xf32>
    %36 = arith.subf %30, %35 : vector<888x1xf32>
    %c0_14 = arith.constant 0 : index
    %c0_15 = arith.constant 0 : index
    %37 = vector.load %arg6[%c0_14, %c0_15] : memref<888x49xf32, #tpu.memory_space<vmem>>, vector<888x49xf32>
    %38 = vector.broadcast %34 : vector<888x1xf32> to vector<888x49xf32>
    %39 = arith.mulf %13, %38 : vector<888x49xf32>
    %40 = arith.addf %37, %39 : vector<888x49xf32>
    %41 = vector.broadcast %36 : vector<888x1xf32> to vector<888x49xf32>
    %42 = arith.addf %40, %41 : vector<888x49xf32>
    %c0_16 = arith.constant 0 : index
    %c0_17 = arith.constant 0 : index
    %43 = vector.load %arg7[%c0_16, %c0_17] : memref<888x49xf32, #tpu.memory_space<vmem>>, vector<888x49xf32>
    tpu.vector_store %arg7[%c0_16, %c0_17], %42 {strides = array<i32>} : memref<888x49xf32, #tpu.memory_space<vmem>>, vector<888x49xf32>,
    return
  }
  func.func @transform_0(%arg0: i32) -> (i32, i32) {
    %c0_i32 = arith.constant 0 : i32
    %c0_i32_0 = arith.constant 0 : i32
    %c0_i32_1 = arith.constant 0 : i32
    return %c0_i32, %c0_i32_0 : i32, i32
  }
  func.func @transform_1(%arg0: i32) -> (i32, i32) {
    %c0_i32 = arith.constant 0 : i32
    %c0_i32_0 = arith.constant 0 : i32
    %c0_i32_1 = arith.constant 0 : i32
    return %c0_i32, %c0_i32_0 : i32, i32
  }
  func.func @transform_2(%arg0: i32) -> (i32, i32) {
    %c0_i32 = arith.constant 0 : i32
    %c0_i32_0 = arith.constant 0 : i32
    return %arg0, %c0_i32 : i32, i32
  }
  func.func @transform_3(%arg0: i32) -> (i32, i32) {
    %c0_i32 = arith.constant 0 : i32
    %c0_i32_0 = arith.constant 0 : i32
    %c0_i32_1 = arith.constant 0 : i32
    return %c0_i32, %c0_i32_0 : i32, i32
  }
  func.func @transform_4(%arg0: i32) -> (i32, i32) {
    %c0_i32 = arith.constant 0 : i32
    %c0_i32_0 = arith.constant 0 : i32
    %c0_i32_1 = arith.constant 0 : i32
    return %c0_i32, %c0_i32_0 : i32, i32
  }
  func.func @transform_5(%arg0: i32) -> (i32, i32) {
    %c0_i32 = arith.constant 0 : i32
    %c0_i32_0 = arith.constant 0 : i32
    return %arg0, %c0_i32 : i32, i32
  }
  func.func @transform_6(%arg0: i32) -> (i32, i32) {
    %c0_i32 = arith.constant 0 : i32
    %c0_i32_0 = arith.constant 0 : i32
    return %arg0, %c0_i32 : i32, i32
  }
}

</mosaic_0001>

<llo_original>
// kernel: fused_forward.1
$region0: #{fused_forward.1}
  #allocation0 [shape = 'u32[]', space=smem, size = 0x4, offset = 0x4, fixed_abs, tag = 'smem constant byte address 0x4 - core index']
  #allocation1 [shape = 'u32[144,128]{1,0:T(1,128)}', space=vmem, size = 0x12000, scoped, tag = 'internal scratch']
  %s0 = inlined_call_operand.vmem [shape: f32[888,1], index: 0, kind: input, shape index: {}]
  %s1 = inlined_call_operand.vmem [shape: f32[888,49], index: 1, kind: input, shape index: {}]
  %s2 = inlined_call_operand.vmem [shape: bf16[888,888], index: 2, kind: input, shape index: {}]
  %s3 = inlined_call_operand.vmem [shape: f32[888,1], index: 3, kind: input, shape index: {}]
  %s4 = inlined_call_operand.vmem [shape: f32[888,1], index: 4, kind: input, shape index: {}]
  %s5 = inlined_call_operand.vmem [shape: f32[888,49], index: 5, kind: input, shape index: {}]
  %s6 = inlined_call_operand.vmem [shape: f32[888,49], index: 6, kind: output, shape index: {}]
  %s7 = sld [smem:[#allocation0]]
  $region34: #{fused_forward.1} parent=0
    _
  %s9 = ssub.s32 1, %s7
  %s10 = scalar_select 0, %s9, %s7
  // Predicated region
  $region2: #{fused_forward.1} parent=0 // pred_check
    _
  $region3: #{fused_forward.1} parent=0 // pred_check_branch
    %12 = sbr.rel (0) target = $region5
  $region4: #{fused_forward.1} parent=0 // pred_region
    _
  $region5: #{fused_forward.1} parent=0 // pred_fallthru
    _
  // Predicated region
  $region6: #{fused_forward.1} parent=0 // pred_check
    _
  $region7: #{fused_forward.1} parent=0 // pred_check_branch
    %14 = sbr.rel (0) target = $region9
  $region8: #{fused_forward.1} parent=0 // pred_region
    _
  $region9: #{fused_forward.1} parent=0 // pred_fallthru
    _
  // Predicated region
  $region10: #{fused_forward.1} parent=0 // pred_check
    _
  $region11: #{fused_forward.1} parent=0 // pred_check_branch
    %16 = sbr.rel (0) target = $region13
  $region12: #{fused_forward.1} parent=0 // pred_region
    _
  $region13: #{fused_forward.1} parent=0 // pred_fallthru
    _
  // Predicated region
  $region14: #{fused_forward.1} parent=0 // pred_check
    _
  $region15: #{fused_forward.1} parent=0 // pred_check_branch
    %18 = sbr.rel (0) target = $region17
  $region16: #{fused_forward.1} parent=0 // pred_region
    _
  $region17: #{fused_forward.1} parent=0 // pred_fallthru
    _
  // Predicated region
  $region18: #{fused_forward.1} parent=0 // pred_check
    _
  $region19: #{fused_forward.1} parent=0 // pred_check_branch
    %20 = sbr.rel (0) target = $region21
  $region20: #{fused_forward.1} parent=0 // pred_region
    _
  $region21: #{fused_forward.1} parent=0 // pred_fallthru
    _
  // Predicated region
  $region22: #{fused_forward.1} parent=0 // pred_check
    _
  $region23: #{fused_forward.1} parent=0 // pred_check_branch
    %22 = sbr.rel (0) target = $region25
  $region24: #{fused_forward.1} parent=0 // pred_region
    _
  $region25: #{fused_forward.1} parent=0 // pred_fallthru
    _
  %s24 = smul.u32 0, 888
  %v25 = vld [vmem:[%s0] sm:$0xff]
  %v26 = vld [vmem:[%s0 + $0x8] sm:$0xff]
  %v27 = vld [vmem:[%s0 + $0x10] sm:$0xff]
  %v28 = vld [vmem:[%s0 + $0x18] sm:$0xff]
  %v29 = vld [vmem:[%s0 + $0x20] sm:$0xff]
  %v30 = vld [vmem:[%s0 + $0x28] sm:$0xff]
  %v31 = vld [vmem:[%s0 + $0x30] sm:$0xff]
  %v32 = vld [vmem:[%s0 + $0x38] sm:$0xff]
  %v33 = vld [vmem:[%s0 + $0x40] sm:$0xff]
  %v34 = vld [vmem:[%s0 + $0x48] sm:$0xff]
  %v35 = vld [vmem:[%s0 + $0x50] sm:$0xff]
  %v36 = vld [vmem:[%s0 + $0x58] sm:$0xff]
  %v37 = vld [vmem:[%s0 + $0x60] sm:$0xff]
  %v38 = vld [vmem:[%s0 + $0x68] sm:$0xff]
  %v39 = vld [vmem:[%s0 + $0x70] sm:$0xff]
  %v40 = vld [vmem:[%s0 + $0x78] sm:$0xff]
  %v41 = vld [vmem:[%s0 + $0x80] sm:$0xff]
  %v42 = vld [vmem:[%s0 + $0x88] sm:$0xff]
  %v43 = vld [vmem:[%s0 + $0x90] sm:$0xff]
  %v44 = vld [vmem:[%s0 + $0x98] sm:$0xff]
  %v45 = vld [vmem:[%s0 + $0xa0] sm:$0xff]
  %v46 = vld [vmem:[%s0 + $0xa8] sm:$0xff]
  %v47 = vld [vmem:[%s0 + $0xb0] sm:$0xff]
  %v48 = vld [vmem:[%s0 + $0xb8] sm:$0xff]
  %v49 = vld [vmem:[%s0 + $0xc0] sm:$0xff]
  %v50 = vld [vmem:[%s0 + $0xc8] sm:$0xff]
  %v51 = vld [vmem:[%s0 + $0xd0] sm:$0xff]
  %v52 = vld [vmem:[%s0 + $0xd8] sm:$0xff]
  %v53 = vld [vmem:[%s0 + $0xe0] sm:$0xff]
  %v54 = vld [vmem:[%s0 + $0xe8] sm:$0xff]
  %v55 = vld [vmem:[%s0 + $0xf0] sm:$0xff]
  %v56 = vld [vmem:[%s0 + $0xf8] sm:$0xff]
  %v57 = vld [vmem:[%s0 + $0x100] sm:$0xff]
  %v58 = vld [vmem:[%s0 + $0x108] sm:$0xff]
  %v59 = vld [vmem:[%s0 + $0x110] sm:$0xff]
  %v60 = vld [vmem:[%s0 + $0x118] sm:$0xff]
  %v61 = vld [vmem:[%s0 + $0x120] sm:$0xff]
  %v62 = vld [vmem:[%s0 + $0x128] sm:$0xff]
  %v63 = vld [vmem:[%s0 + $0x130] sm:$0xff]
  %v64 = vld [vmem:[%s0 + $0x138] sm:$0xff]
  %v65 = vld [vmem:[%s0 + $0x140] sm:$0xff]
  %v66 = vld [vmem:[%s0 + $0x148] sm:$0xff]
  %v67 = vld [vmem:[%s0 + $0x150] sm:$0xff]
  %v68 = vld [vmem:[%s0 + $0x158] sm:$0xff]
  %v69 = vld [vmem:[%s0 + $0x160] sm:$0xff]
  %v70 = vld [vmem:[%s0 + $0x168] sm:$0xff]
  %v71 = vld [vmem:[%s0 + $0x170] sm:$0xff]
  %v72 = vld [vmem:[%s0 + $0x178] sm:$0xff]
  %v73 = vld [vmem:[%s0 + $0x180] sm:$0xff]
  %v74 = vld [vmem:[%s0 + $0x188] sm:$0xff]
  %v75 = vld [vmem:[%s0 + $0x190] sm:$0xff]
  %v76 = vld [vmem:[%s0 + $0x198] sm:$0xff]
  %v77 = vld [vmem:[%s0 + $0x1a0] sm:$0xff]
  %v78 = vld [vmem:[%s0 + $0x1a8] sm:$0xff]
  %v79 = vld [vmem:[%s0 + $0x1b0] sm:$0xff]
  %v80 = vld [vmem:[%s0 + $0x1b8] sm:$0xff]
  %v81 = vld [vmem:[%s0 + $0x1c0] sm:$0xff]
  %v82 = vld [vmem:[%s0 + $0x1c8] sm:$0xff]
  %v83 = vld [vmem:[%s0 + $0x1d0] sm:$0xff]
  %v84 = vld [vmem:[%s0 + $0x1d8] sm:$0xff]
  %v85 = vld [vmem:[%s0 + $0x1e0] sm:$0xff]
  %v86 = vld [vmem:[%s0 + $0x1e8] sm:$0xff]
  %v87 = vld [vmem:[%s0 + $0x1f0] sm:$0xff]
  %v88 = vld [vmem:[%s0 + $0x1f8] sm:$0xff]
  %v89 = vld [vmem:[%s0 + $0x200] sm:$0xff]
  %v90 = vld [vmem:[%s0 + $0x208] sm:$0xff]
  %v91 = vld [vmem:[%s0 + $0x210] sm:$0xff]
  %v92 = vld [vmem:[%s0 + $0x218] sm:$0xff]
  %v93 = vld [vmem:[%s0 + $0x220] sm:$0xff]
  %v94 = vld [vmem:[%s0 + $0x228] sm:$0xff]
  %v95 = vld [vmem:[%s0 + $0x230] sm:$0xff]
  %v96 = vld [vmem:[%s0 + $0x238] sm:$0xff]
  %v97 = vld [vmem:[%s0 + $0x240] sm:$0xff]
  %v98 = vld [vmem:[%s0 + $0x248] sm:$0xff]
  %v99 = vld [vmem:[%s0 + $0x250] sm:$0xff]
  %v100 = vld [vmem:[%s0 + $0x258] sm:$0xff]
  %v101 = vld [vmem:[%s0 + $0x260] sm:$0xff]
  %v102 = vld [vmem:[%s0 + $0x268] sm:$0xff]
  %v103 = vld [vmem:[%s0 + $0x270] sm:$0xff]
  %v104 = vld [vmem:[%s0 + $0x278] sm:$0xff]
  %v105 = vld [vmem:[%s0 + $0x280] sm:$0xff]
  %v106 = vld [vmem:[%s0 + $0x288] sm:$0xff]
  %v107 = vld [vmem:[%s0 + $0x290] sm:$0xff]
  %v108 = vld [vmem:[%s0 + $0x298] sm:$0xff]
  %v109 = vld [vmem:[%s0 + $0x2a0] sm:$0xff]
  %v110 = vld [vmem:[%s0 + $0x2a8] sm:$0xff]
  %v111 = vld [vmem:[%s0 + $0x2b0] sm:$0xff]
  %v112 = vld [vmem:[%s0 + $0x2b8] sm:$0xff]
  %v113 = vld [vmem:[%s0 + $0x2c0] sm:$0xff]
  %v114 = vld [vmem:[%s0 + $0x2c8] sm:$0xff]
  %v115 = vld [vmem:[%s0 + $0x2d0] sm:$0xff]
  %v116 = vld [vmem:[%s0 + $0x2d8] sm:$0xff]
  %v117 = vld [vmem:[%s0 + $0x2e0] sm:$0xff]
  %v118 = vld [vmem:[%s0 + $0x2e8] sm:$0xff]
  %v119 = vld [vmem:[%s0 + $0x2f0] sm:$0xff]
  %v120 = vld [vmem:[%s0 + $0x2f8] sm:$0xff]
  %v121 = vld [vmem:[%s0 + $0x300] sm:$0xff]
  %v122 = vld [vmem:[%s0 + $0x308] sm:$0xff]
  %v123 = vld [vmem:[%s0 + $0x310] sm:$0xff]
  %v124 = vld [vmem:[%s0 + $0x318] sm:$0xff]
  %v125 = vld [vmem:[%s0 + $0x320] sm:$0xff]
  %v126 = vld [vmem:[%s0 + $0x328] sm:$0xff]
  %v127 = vld [vmem:[%s0 + $0x330] sm:$0xff]
  %v128 = vld [vmem:[%s0 + $0x338] sm:$0xff]
  %v129 = vld [vmem:[%s0 + $0x340] sm:$0xff]
  %v130 = vld [vmem:[%s0 + $0x348] sm:$0xff]
  %v131 = vld [vmem:[%s0 + $0x350] sm:$0xff]
  %v132 = vld [vmem:[%s0 + $0x358] sm:$0xff]
  %v133 = vld [vmem:[%s0 + $0x360] sm:$0xff]
  %v134 = vld [vmem:[%s0 + $0x368] sm:$0xff]
  %v135 = vld [vmem:[%s0 + $0x370] sm:$0xff]
  %v136 = vxor.u32 %v25, 2147483648
  %v137 = vxor.u32 %v26, 2147483648
  %v138 = vxor.u32 %v27, 2147483648
  %v139 = vxor.u32 %v28, 2147483648
  %v140 = vxor.u32 %v29, 2147483648
  %v141 = vxor.u32 %v30, 2147483648
  %v142 = vxor.u32 %v31, 2147483648
  %v143 = vxor.u32 %v32, 2147483648
  %v144 = vxor.u32 %v33, 2147483648
  %v145 = vxor.u32 %v34, 2147483648
  %v146 = vxor.u32 %v35, 2147483648
  %v147 = vxor.u32 %v36, 2147483648
  %v148 = vxor.u32 %v37, 2147483648
  %v149 = vxor.u32 %v38, 2147483648
  %v150 = vxor.u32 %v39, 2147483648
  %v151 = vxor.u32 %v40, 2147483648
  %v152 = vxor.u32 %v41, 2147483648
  %v153 = vxor.u32 %v42, 2147483648
  %v154 = vxor.u32 %v43, 2147483648
  %v155 = vxor.u32 %v44, 2147483648
  %v156 = vxor.u32 %v45, 2147483648
  %v157 = vxor.u32 %v46, 2147483648
  %v158 = vxor.u32 %v47, 2147483648
  %v159 = vxor.u32 %v48, 2147483648
  %v160 = vxor.u32 %v49, 2147483648
  %v161 = vxor.u32 %v50, 2147483648
  %v162 = vxor.u32 %v51, 2147483648
  %v163 = vxor.u32 %v52, 2147483648
  %v164 = vxor.u32 %v53, 2147483648
  %v165 = vxor.u32 %v54, 2147483648
  %v166 = vxor.u32 %v55, 2147483648
  %v167 = vxor.u32 %v56, 2147483648
  %v168 = vxor.u32 %v57, 2147483648
  %v169 = vxor.u32 %v58, 2147483648
  %v170 = vxor.u32 %v59, 2147483648
  %v171 = vxor.u32 %v60, 2147483648
  %v172 = vxor.u32 %v61, 2147483648
  %v173 = vxor.u32 %v62, 2147483648
  %v174 = vxor.u32 %v63, 2147483648
  %v175 = vxor.u32 %v64, 2147483648
  %v176 = vxor.u32 %v65, 2147483648
  %v177 = vxor.u32 %v66, 2147483648
  %v178 = vxor.u32 %v67, 2147483648
  %v179 = vxor.u32 %v68, 2147483648
  %v180 = vxor.u32 %v69, 2147483648
  %v181 = vxor.u32 %v70, 2147483648
  %v182 = vxor.u32 %v71, 2147483648
  %v183 = vxor.u32 %v72, 2147483648
  %v184 = vxor.u32 %v73, 2147483648
  %v185 = vxor.u32 %v74, 2147483648
  %v186 = vxor.u32 %v75, 2147483648
  %v187 = vxor.u32 %v76, 2147483648
  %v188 = vxor.u32 %v77, 2147483648
  %v189 = vxor.u32 %v78, 2147483648
  %v190 = vxor.u32 %v79, 2147483648
  %v191 = vxor.u32 %v80, 2147483648
  %v192 = vxor.u32 %v81, 2147483648
  %v193 = vxor.u32 %v82, 2147483648
  %v194 = vxor.u32 %v83, 2147483648
  %v195 = vxor.u32 %v84, 2147483648
  %v196 = vxor.u32 %v85, 2147483648
  %v197 = vxor.u32 %v86, 2147483648
  %v198 = vxor.u32 %v87, 2147483648
  %v199 = vxor.u32 %v88, 2147483648
  %v200 = vxor.u32 %v89, 2147483648
  %v201 = vxor.u32 %v90, 2147483648
  %v202 = vxor.u32 %v91, 2147483648
  %v203 = vxor.u32 %v92, 2147483648
  %v204 = vxor.u32 %v93, 2147483648
  %v205 = vxor.u32 %v94, 2147483648
  %v206 = vxor.u32 %v95, 2147483648
  %v207 = vxor.u32 %v96, 2147483648
  %v208 = vxor.u32 %v97, 2147483648
  %v209 = vxor.u32 %v98, 2147483648
  %v210 = vxor.u32 %v99, 2147483648
  %v211 = vxor.u32 %v100, 2147483648
  %v212 = vxor.u32 %v101, 2147483648
  %v213 = vxor.u32 %v102, 2147483648
  %v214 = vxor.u32 %v103, 2147483648
  %v215 = vxor.u32 %v104, 2147483648
  %v216 = vxor.u32 %v105, 2147483648
  %v217 = vxor.u32 %v106, 2147483648
  %v218 = vxor.u32 %v107, 2147483648
  %v219 = vxor.u32 %v108, 2147483648
  %v220 = vxor.u32 %v109, 2147483648
  %v221 = vxor.u32 %v110, 2147483648
  %v222 = vxor.u32 %v111, 2147483648
  %v223 = vxor.u32 %v112, 2147483648
  %v224 = vxor.u32 %v113, 2147483648
  %v225 = vxor.u32 %v114, 2147483648
  %v226 = vxor.u32 %v115, 2147483648
  %v227 = vxor.u32 %v116, 2147483648
  %v228 = vxor.u32 %v117, 2147483648
  %v229 = vxor.u32 %v118, 2147483648
  %v230 = vxor.u32 %v119, 2147483648
  %v231 = vxor.u32 %v120, 2147483648
  %v232 = vxor.u32 %v121, 2147483648
  %v233 = vxor.u32 %v122, 2147483648
  %v234 = vxor.u32 %v123, 2147483648
  %v235 = vxor.u32 %v124, 2147483648
  %v236 = vxor.u32 %v125, 2147483648
  %v237 = vxor.u32 %v126, 2147483648
  %v238 = vxor.u32 %v127, 2147483648
  %v239 = vxor.u32 %v128, 2147483648
  %v240 = vxor.u32 %v129, 2147483648
  %v241 = vxor.u32 %v130, 2147483648
  %v242 = vxor.u32 %v131, 2147483648
  %v243 = vxor.u32 %v132, 2147483648
  %v244 = vxor.u32 %v133, 2147483648
  %v245 = vxor.u32 %v134, 2147483648
  %v246 = vxor.u32 %v135, 2147483648
  %v247 = vmul.f32 %v136, 1.442695
  %v248 = vpow.pop %v247
  %v249 = vmul.f32 %v137, 1.442695
  %v250 = vpow.pop %v249
  %v251 = vmul.f32 %v138, 1.442695
  %v252 = vpow.pop %v251
  %v253 = vmul.f32 %v139, 1.442695
  %v254 = vpow.pop %v253
  %v255 = vmul.f32 %v140, 1.442695
  %v256 = vpow.pop %v255
  %v257 = vmul.f32 %v141, 1.442695
  %v258 = vpow.pop %v257
  %v259 = vmul.f32 %v142, 1.442695
  %v260 = vpow.pop %v259
  %v261 = vmul.f32 %v143, 1.442695
  %v262 = vpow.pop %v261
  %v263 = vmul.f32 %v144, 1.442695
  %v264 = vpow.pop %v263
  %v265 = vmul.f32 %v145, 1.442695
  %v266 = vpow.pop %v265
  %v267 = vmul.f32 %v146, 1.442695
  %v268 = vpow.pop %v267
  %v269 = vmul.f32 %v147, 1.442695
  %v270 = vpow.pop %v269
  %v271 = vmul.f32 %v148, 1.442695
  %v272 = vpow.pop %v271
  %v273 = vmul.f32 %v149, 1.442695
  %v274 = vpow.pop %v273
  %v275 = vmul.f32 %v150, 1.442695
  %v276 = vpow.pop %v275
  %v277 = vmul.f32 %v151, 1.442695
  %v278 = vpow.pop %v277
  %v279 = vmul.f32 %v152, 1.442695
  %v280 = vpow.pop %v279
  %v281 = vmul.f32 %v153, 1.442695
  %v282 = vpow.pop %v281
  %v283 = vmul.f32 %v154, 1.442695
  %v284 = vpow.pop %v283
  %v285 = vmul.f32 %v155, 1.442695
  %v286 = vpow.pop %v285
  %v287 = vmul.f32 %v156, 1.442695
  %v288 = vpow.pop %v287
  %v289 = vmul.f32 %v157, 1.442695
  %v290 = vpow.pop %v289
  %v291 = vmul.f32 %v158, 1.442695
  %v292 = vpow.pop %v291
  %v293 = vmul.f32 %v159, 1.442695
  %v294 = vpow.pop %v293
  %v295 = vmul.f32 %v160, 1.442695
  %v296 = vpow.pop %v295
  %v297 = vmul.f32 %v161, 1.442695
  %v298 = vpow.pop %v297
  %v299 = vmul.f32 %v162, 1.442695
  %v300 = vpow.pop %v299
  %v301 = vmul.f32 %v163, 1.442695
  %v302 = vpow.pop %v301
  %v303 = vmul.f32 %v164, 1.442695
  %v304 = vpow.pop %v303
  %v305 = vmul.f32 %v165, 1.442695
  %v306 = vpow.pop %v305
  %v307 = vmul.f32 %v166, 1.442695
  %v308 = vpow.pop %v307
  %v309 = vmul.f32 %v167, 1.442695
  %v310 = vpow.pop %v309
  %v311 = vmul.f32 %v168, 1.442695
  %v312 = vpow.pop %v311
  %v313 = vmul.f32 %v169, 1.442695
  %v314 = vpow.pop %v313
  %v315 = vmul.f32 %v170, 1.442695
  %v316 = vpow.pop %v315
  %v317 = vmul.f32 %v171, 1.442695
  %v318 = vpow.pop %v317
  %v319 = vmul.f32 %v172, 1.442695
  %v320 = vpow.pop %v319
  %v321 = vmul.f32 %v173, 1.442695
  %v322 = vpow.pop %v321
  %v323 = vmul.f32 %v174, 1.442695
  %v324 = vpow.pop %v323
  %v325 = vmul.f32 %v175, 1.442695
  %v326 = vpow.pop %v325
  %v327 = vmul.f32 %v176, 1.442695
  %v328 = vpow.pop %v327
  %v329 = vmul.f32 %v177, 1.442695
  %v330 = vpow.pop %v329
  %v331 = vmul.f32 %v178, 1.442695
  %v332 = vpow.pop %v331
  %v333 = vmul.f32 %v179, 1.442695
  %v334 = vpow.pop %v333
  %v335 = vmul.f32 %v180, 1.442695
  %v336 = vpow.pop %v335
  %v337 = vmul.f32 %v181, 1.442695
  %v338 = vpow.pop %v337
  %v339 = vmul.f32 %v182, 1.442695
  %v340 = vpow.pop %v339
  %v341 = vmul.f32 %v183, 1.442695
  %v342 = vpow.pop %v341
  %v343 = vmul.f32 %v184, 1.442695
  %v344 = vpow.pop %v343
  %v345 = vmul.f32 %v185, 1.442695
  %v346 = vpow.pop %v345
  %v347 = vmul.f32 %v186, 1.442695
  %v348 = vpow.pop %v347
  %v349 = vmul.f32 %v187, 1.442695
  %v350 = vpow.pop %v349
  %v351 = vmul.f32 %v188, 1.442695
  %v352 = vpow.pop %v351
  %v353 = vmul.f32 %v189, 1.442695
  %v354 = vpow.pop %v353
  %v355 = vmul.f32 %v190, 1.442695
  %v356 = vpow.pop %v355
  %v357 = vmul.f32 %v191, 1.442695
  %v358 = vpow.pop %v357
  %v359 = vmul.f32 %v192, 1.442695
  %v360 = vpow.pop %v359
  %v361 = vmul.f32 %v193, 1.442695
  %v362 = vpow.pop %v361
  %v363 = vmul.f32 %v194, 1.442695
  %v364 = vpow.pop %v363
  %v365 = vmul.f32 %v195, 1.442695
  %v366 = vpow.pop %v365
  %v367 = vmul.f32 %v196, 1.442695
  %v368 = vpow.pop %v367
  %v369 = vmul.f32 %v197, 1.442695
  %v370 = vpow.pop %v369
  %v371 = vmul.f32 %v198, 1.442695
  %v372 = vpow.pop %v371
  %v373 = vmul.f32 %v199, 1.442695
  %v374 = vpow.pop %v373
  %v375 = vmul.f32 %v200, 1.442695
  %v376 = vpow.pop %v375
  %v377 = vmul.f32 %v201, 1.442695
  %v378 = vpow.pop %v377
  %v379 = vmul.f32 %v202, 1.442695
  %v380 = vpow.pop %v379
  %v381 = vmul.f32 %v203, 1.442695
  %v382 = vpow.pop %v381
  %v383 = vmul.f32 %v204, 1.442695
  %v384 = vpow.pop %v383
  %v385 = vmul.f32 %v205, 1.442695
  %v386 = vpow.pop %v385
  %v387 = vmul.f32 %v206, 1.442695
  %v388 = vpow.pop %v387
  %v389 = vmul.f32 %v207, 1.442695
  %v390 = vpow.pop %v389
  %v391 = vmul.f32 %v208, 1.442695
  %v392 = vpow.pop %v391
  %v393 = vmul.f32 %v209, 1.442695
  %v394 = vpow.pop %v393
  %v395 = vmul.f32 %v210, 1.442695
  %v396 = vpow.pop %v395
  %v397 = vmul.f32 %v211, 1.442695
  %v398 = vpow.pop %v397
  %v399 = vmul.f32 %v212, 1.442695
  %v400 = vpow.pop %v399
  %v401 = vmul.f32 %v213, 1.442695
  %v402 = vpow.pop %v401
  %v403 = vmul.f32 %v214, 1.442695
  %v404 = vpow.pop %v403
  %v405 = vmul.f32 %v215, 1.442695
  %v406 = vpow.pop %v405
  %v407 = vmul.f32 %v216, 1.442695
  %v408 = vpow.pop %v407
  %v409 = vmul.f32 %v217, 1.442695
  %v410 = vpow.pop %v409
  %v411 = vmul.f32 %v218, 1.442695
  %v412 = vpow.pop %v411
  %v413 = vmul.f32 %v219, 1.442695
  %v414 = vpow.pop %v413
  %v415 = vmul.f32 %v220, 1.442695
  %v416 = vpow.pop %v415
  %v417 = vmul.f32 %v221, 1.442695
  %v418 = vpow.pop %v417
  %v419 = vmul.f32 %v222, 1.442695
  %v420 = vpow.pop %v419
  %v421 = vmul.f32 %v223, 1.442695
  %v422 = vpow.pop %v421
  %v423 = vmul.f32 %v224, 1.442695
  %v424 = vpow.pop %v423
  %v425 = vmul.f32 %v225, 1.442695
  %v426 = vpow.pop %v425
  %v427 = vmul.f32 %v226, 1.442695
  %v428 = vpow.pop %v427
  %v429 = vmul.f32 %v227, 1.442695
  %v430 = vpow.pop %v429
  %v431 = vmul.f32 %v228, 1.442695
  %v432 = vpow.pop %v431
  %v433 = vmul.f32 %v229, 1.442695
  %v434 = vpow.pop %v433
  %v435 = vmul.f32 %v230, 1.442695
  %v436 = vpow.pop %v435
  %v437 = vmul.f32 %v231, 1.442695
  %v438 = vpow.pop %v437
  %v439 = vmul.f32 %v232, 1.442695
  %v440 = vpow.pop %v439
  %v441 = vmul.f32 %v233, 1.442695
  %v442 = vpow.pop %v441
  %v443 = vmul.f32 %v234, 1.442695
  %v444 = vpow.pop %v443
  %v445 = vmul.f32 %v235, 1.442695
  %v446 = vpow.pop %v445
  %v447 = vmul.f32 %v236, 1.442695
  %v448 = vpow.pop %v447
  %v449 = vmul.f32 %v237, 1.442695
  %v450 = vpow.pop %v449
  %v451 = vmul.f32 %v238, 1.442695
  %v452 = vpow.pop %v451
  %v453 = vmul.f32 %v239, 1.442695
  %v454 = vpow.pop %v453
  %v455 = vmul.f32 %v240, 1.442695
  %v456 = vpow.pop %v455
  %v457 = vmul.f32 %v241, 1.442695
  %v458 = vpow.pop %v457
  %v459 = vmul.f32 %v242, 1.442695
  %v460 = vpow.pop %v459
  %v461 = vmul.f32 %v243, 1.442695
  %v462 = vpow.pop %v461
  %v463 = vmul.f32 %v244, 1.442695
  %v464 = vpow.pop %v463
  %v465 = vmul.f32 %v245, 1.442695
  %v466 = vpow.pop %v465
  %v467 = vmul.f32 %v246, 1.442695
  %v468 = vpow.pop %v467
  %v469 = vadd.f32 %v248, 1.0
  %v470 = vadd.f32 %v250, 1.0
  %v471 = vadd.f32 %v252, 1.0
  %v472 = vadd.f32 %v254, 1.0
  %v473 = vadd.f32 %v256, 1.0
  %v474 = vadd.f32 %v258, 1.0
  %v475 = vadd.f32 %v260, 1.0
  %v476 = vadd.f32 %v262, 1.0
  %v477 = vadd.f32 %v264, 1.0
  %v478 = vadd.f32 %v266, 1.0
  %v479 = vadd.f32 %v268, 1.0
  %v480 = vadd.f32 %v270, 1.0
  %v481 = vadd.f32 %v272, 1.0
  %v482 = vadd.f32 %v274, 1.0
  %v483 = vadd.f32 %v276, 1.0
  %v484 = vadd.f32 %v278, 1.0
  %v485 = vadd.f32 %v280, 1.0
  %v486 = vadd.f32 %v282, 1.0
  %v487 = vadd.f32 %v284, 1.0
  %v488 = vadd.f32 %v286, 1.0
  %v489 = vadd.f32 %v288, 1.0
  %v490 = vadd.f32 %v290, 1.0
  %v491 = vadd.f32 %v292, 1.0
  %v492 = vadd.f32 %v294, 1.0
  %v493 = vadd.f32 %v296, 1.0
  %v494 = vadd.f32 %v298, 1.0
  %v495 = vadd.f32 %v300, 1.0
  %v496 = vadd.f32 %v302, 1.0
  %v497 = vadd.f32 %v304, 1.0
  %v498 = vadd.f32 %v306, 1.0
  %v499 = vadd.f32 %v308, 1.0
  %v500 = vadd.f32 %v310, 1.0
  %v501 = vadd.f32 %v312, 1.0
  %v502 = vadd.f32 %v314, 1.0
  %v503 = vadd.f32 %v316, 1.0
  %v504 = vadd.f32 %v318, 1.0
  %v505 = vadd.f32 %v320, 1.0
  %v506 = vadd.f32 %v322, 1.0
  %v507 = vadd.f32 %v324, 1.0
  %v508 = vadd.f32 %v326, 1.0
  %v509 = vadd.f32 %v328, 1.0
  %v510 = vadd.f32 %v330, 1.0
  %v511 = vadd.f32 %v332, 1.0
  %v512 = vadd.f32 %v334, 1.0
  %v513 = vadd.f32 %v336, 1.0
  %v514 = vadd.f32 %v338, 1.0
  %v515 = vadd.f32 %v340, 1.0
  %v516 = vadd.f32 %v342, 1.0
  %v517 = vadd.f32 %v344, 1.0
  %v518 = vadd.f32 %v346, 1.0
  %v519 = vadd.f32 %v348, 1.0
  %v520 = vadd.f32 %v350, 1.0
  %v521 = vadd.f32 %v352, 1.0
  %v522 = vadd.f32 %v354, 1.0
  %v523 = vadd.f32 %v356, 1.0
  %v524 = vadd.f32 %v358, 1.0
  %v525 = vadd.f32 %v360, 1.0
  %v526 = vadd.f32 %v362, 1.0
  %v527 = vadd.f32 %v364, 1.0
  %v528 = vadd.f32 %v366, 1.0
  %v529 = vadd.f32 %v368, 1.0
  %v530 = vadd.f32 %v370, 1.0
  %v531 = vadd.f32 %v372, 1.0
  %v532 = vadd.f32 %v374, 1.0
  %v533 = vadd.f32 %v376, 1.0
  %v534 = vadd.f32 %v378, 1.0
  %v535 = vadd.f32 %v380, 1.0
  %v536 = vadd.f32 %v382, 1.0
  %v537 = vadd.f32 %v384, 1.0
  %v538 = vadd.f32 %v386, 1.0
  %v539 = vadd.f32 %v388, 1.0
  %v540 = vadd.f32 %v390, 1.0
  %v541 = vadd.f32 %v392, 1.0
  %v542 = vadd.f32 %v394, 1.0
  %v543 = vadd.f32 %v396, 1.0
  %v544 = vadd.f32 %v398, 1.0
  %v545 = vadd.f32 %v400, 1.0
  %v546 = vadd.f32 %v402, 1.0
  %v547 = vadd.f32 %v404, 1.0
  %v548 = vadd.f32 %v406, 1.0
  %v549 = vadd.f32 %v408, 1.0
  %v550 = vadd.f32 %v410, 1.0
  %v551 = vadd.f32 %v412, 1.0
  %v552 = vadd.f32 %v414, 1.0
  %v553 = vadd.f32 %v416, 1.0
  %v554 = vadd.f32 %v418, 1.0
  %v555 = vadd.f32 %v420, 1.0
  %v556 = vadd.f32 %v422, 1.0
  %v557 = vadd.f32 %v424, 1.0
  %v558 = vadd.f32 %v426, 1.0
  %v559 = vadd.f32 %v428, 1.0
  %v560 = vadd.f32 %v430, 1.0
  %v561 = vadd.f32 %v432, 1.0
  %v562 = vadd.f32 %v434, 1.0
  %v563 = vadd.f32 %v436, 1.0
  %v564 = vadd.f32 %v438, 1.0
  %v565 = vadd.f32 %v440, 1.0
  %v566 = vadd.f32 %v442, 1.0
  %v567 = vadd.f32 %v444, 1.0
  %v568 = vadd.f32 %v446, 1.0
  %v569 = vadd.f32 %v448, 1.0
  %v570 = vadd.f32 %v450, 1.0
  %v571 = vadd.f32 %v452, 1.0
  %v572 = vadd.f32 %v454, 1.0
  %v573 = vadd.f32 %v456, 1.0
  %v574 = vadd.f32 %v458, 1.0
  %v575 = vadd.f32 %v460, 1.0
  %v576 = vadd.f32 %v462, 1.0
  %v577 = vadd.f32 %v464, 1.0
  %v578 = vadd.f32 %v466, 1.0
  %v579 = vadd.f32 %v468, 1.0
  %v580 = vrcp.pop %v469
  %v581 = vmul.f32 1.0, %v580
  %v582 = vrcp.pop %v470
  %v583 = vmul.f32 1.0, %v582
  %v584 = vrcp.pop %v471
  %v585 = vmul.f32 1.0, %v584
  %v586 = vrcp.pop %v472
  %v587 = vmul.f32 1.0, %v586
  %v588 = vrcp.pop %v473
  %v589 = vmul.f32 1.0, %v588
  %v590 = vrcp.pop %v474
  %v591 = vmul.f32 1.0, %v590
  %v592 = vrcp.pop %v475
  %v593 = vmul.f32 1.0, %v592
  %v594 = vrcp.pop %v476
  %v595 = vmul.f32 1.0, %v594
  %v596 = vrcp.pop %v477
  %v597 = vmul.f32 1.0, %v596
  %v598 = vrcp.pop %v478
  %v599 = vmul.f32 1.0, %v598
  %v600 = vrcp.pop %v479
  %v601 = vmul.f32 1.0, %v600
  %v602 = vrcp.pop %v480
  %v603 = vmul.f32 1.0, %v602
  %v604 = vrcp.pop %v481
  %v605 = vmul.f32 1.0, %v604
  %v606 = vrcp.pop %v482
  %v607 = vmul.f32 1.0, %v606
  %v608 = vrcp.pop %v483
  %v609 = vmul.f32 1.0, %v608
  %v610 = vrcp.pop %v484
  %v611 = vmul.f32 1.0, %v610
  %v612 = vrcp.pop %v485
  %v613 = vmul.f32 1.0, %v612
  %v614 = vrcp.pop %v486
  %v615 = vmul.f32 1.0, %v614
  %v616 = vrcp.pop %v487
  %v617 = vmul.f32 1.0, %v616
  %v618 = vrcp.pop %v488
  %v619 = vmul.f32 1.0, %v618
  %v620 = vrcp.pop %v489
  %v621 = vmul.f32 1.0, %v620
  %v622 = vrcp.pop %v490
  %v623 = vmul.f32 1.0, %v622
  %v624 = vrcp.pop %v491
  %v625 = vmul.f32 1.0, %v624
  %v626 = vrcp.pop %v492
  %v627 = vmul.f32 1.0, %v626
  %v628 = vrcp.pop %v493
  %v629 = vmul.f32 1.0, %v628
  %v630 = vrcp.pop %v494
  %v631 = vmul.f32 1.0, %v630
  %v632 = vrcp.pop %v495
  %v633 = vmul.f32 1.0, %v632
  %v634 = vrcp.pop %v496
  %v635 = vmul.f32 1.0, %v634
  %v636 = vrcp.pop %v497
  %v637 = vmul.f32 1.0, %v636
  %v638 = vrcp.pop %v498
  %v639 = vmul.f32 1.0, %v638
  %v640 = vrcp.pop %v499
  %v641 = vmul.f32 1.0, %v640
  %v642 = vrcp.pop %v500
  %v643 = vmul.f32 1.0, %v642
  %v644 = vrcp.pop %v501
  %v645 = vmul.f32 1.0, %v644
  %v646 = vrcp.pop %v502
  %v647 = vmul.f32 1.0, %v646
  %v648 = vrcp.pop %v503
  %v649 = vmul.f32 1.0, %v648
  %v650 = vrcp.pop %v504
  %v651 = vmul.f32 1.0, %v650
  %v652 = vrcp.pop %v505
  %v653 = vmul.f32 1.0, %v652
  %v654 = vrcp.pop %v506
  %v655 = vmul.f32 1.0, %v654
  %v656 = vrcp.pop %v507
  %v657 = vmul.f32 1.0, %v656
  %v658 = vrcp.pop %v508
  %v659 = vmul.f32 1.0, %v658
  %v660 = vrcp.pop %v509
  %v661 = vmul.f32 1.0, %v660
  %v662 = vrcp.pop %v510
  %v663 = vmul.f32 1.0, %v662
  %v664 = vrcp.pop %v511
  %v665 = vmul.f32 1.0, %v664
  %v666 = vrcp.pop %v512
  %v667 = vmul.f32 1.0, %v666
  %v668 = vrcp.pop %v513
  %v669 = vmul.f32 1.0, %v668
  %v670 = vrcp.pop %v514
  %v671 = vmul.f32 1.0, %v670
  %v672 = vrcp.pop %v515
  %v673 = vmul.f32 1.0, %v672
  %v674 = vrcp.pop %v516
  %v675 = vmul.f32 1.0, %v674
  %v676 = vrcp.pop %v517
  %v677 = vmul.f32 1.0, %v676
  %v678 = vrcp.pop %v518
  %v679 = vmul.f32 1.0, %v678
  %v680 = vrcp.pop %v519
  %v681 = vmul.f32 1.0, %v680
  %v682 = vrcp.pop %v520
  %v683 = vmul.f32 1.0, %v682
  %v684 = vrcp.pop %v521
  %v685 = vmul.f32 1.0, %v684
  %v686 = vrcp.pop %v522
  %v687 = vmul.f32 1.0, %v686
  %v688 = vrcp.pop %v523
  %v689 = vmul.f32 1.0, %v688
  %v690 = vrcp.pop %v524
  %v691 = vmul.f32 1.0, %v690
  %v692 = vrcp.pop %v525
  %v693 = vmul.f32 1.0, %v692
  %v694 = vrcp.pop %v526
  %v695 = vmul.f32 1.0, %v694
  %v696 = vrcp.pop %v527
  %v697 = vmul.f32 1.0, %v696
  %v698 = vrcp.pop %v528
  %v699 = vmul.f32 1.0, %v698
  %v700 = vrcp.pop %v529
  %v701 = vmul.f32 1.0, %v700
  %v702 = vrcp.pop %v530
  %v703 = vmul.f32 1.0, %v702
  %v704 = vrcp.pop %v531
  %v705 = vmul.f32 1.0, %v704
  %v706 = vrcp.pop %v532
  %v707 = vmul.f32 1.0, %v706
  %v708 = vrcp.pop %v533
  %v709 = vmul.f32 1.0, %v708
  %v710 = vrcp.pop %v534
  %v711 = vmul.f32 1.0, %v710
  %v712 = vrcp.pop %v535
  %v713 = vmul.f32 1.0, %v712
  %v714 = vrcp.pop %v536
  %v715 = vmul.f32 1.0, %v714
  %v716 = vrcp.pop %v537
  %v717 = vmul.f32 1.0, %v716
  %v718 = vrcp.pop %v538
  %v719 = vmul.f32 1.0, %v718
  %v720 = vrcp.pop %v539
  %v721 = vmul.f32 1.0, %v720
  %v722 = vrcp.pop %v540
  %v723 = vmul.f32 1.0, %v722
  %v724 = vrcp.pop %v541
  %v725 = vmul.f32 1.0, %v724
  %v726 = vrcp.pop %v542
  %v727 = vmul.f32 1.0, %v726
  %v728 = vrcp.pop %v543
  %v729 = vmul.f32 1.0, %v728
  %v730 = vrcp.pop %v544
  %v731 = vmul.f32 1.0, %v730
  %v732 = vrcp.pop %v545
  %v733 = vmul.f32 1.0, %v732
  %v734 = vrcp.pop %v546
  %v735 = vmul.f32 1.0, %v734
  %v736 = vrcp.pop %v547
  %v737 = vmul.f32 1.0, %v736
  %v738 = vrcp.pop %v548
  %v739 = vmul.f32 1.0, %v738
  %v740 = vrcp.pop %v549
  %v741 = vmul.f32 1.0, %v740
  %v742 = vrcp.pop %v550
  %v743 = vmul.f32 1.0, %v742
  %v744 = vrcp.pop %v551
  %v745 = vmul.f32 1.0, %v744
  %v746 = vrcp.pop %v552
  %v747 = vmul.f32 1.0, %v746
  %v748 = vrcp.pop %v553
  %v749 = vmul.f32 1.0, %v748
  %v750 = vrcp.pop %v554
  %v751 = vmul.f32 1.0, %v750
  %v752 = vrcp.pop %v555
  %v753 = vmul.f32 1.0, %v752
  %v754 = vrcp.pop %v556
  %v755 = vmul.f32 1.0, %v754
  %v756 = vrcp.pop %v557
  %v757 = vmul.f32 1.0, %v756
  %v758 = vrcp.pop %v558
  %v759 = vmul.f32 1.0, %v758
  %v760 = vrcp.pop %v559
  %v761 = vmul.f32 1.0, %v760
  %v762 = vrcp.pop %v560
  %v763 = vmul.f32 1.0, %v762
  %v764 = vrcp.pop %v561
  %v765 = vmul.f32 1.0, %v764
  %v766 = vrcp.pop %v562
  %v767 = vmul.f32 1.0, %v766
  %v768 = vrcp.pop %v563
  %v769 = vmul.f32 1.0, %v768
  %v770 = vrcp.pop %v564
  %v771 = vmul.f32 1.0, %v770
  %v772 = vrcp.pop %v565
  %v773 = vmul.f32 1.0, %v772
  %v774 = vrcp.pop %v566
  %v775 = vmul.f32 1.0, %v774
  %v776 = vrcp.pop %v567
  %v777 = vmul.f32 1.0, %v776
  %v778 = vrcp.pop %v568
  %v779 = vmul.f32 1.0, %v778
  %v780 = vrcp.pop %v569
  %v781 = vmul.f32 1.0, %v780
  %v782 = vrcp.pop %v570
  %v783 = vmul.f32 1.0, %v782
  %v784 = vrcp.pop %v571
  %v785 = vmul.f32 1.0, %v784
  %v786 = vrcp.pop %v572
  %v787 = vmul.f32 1.0, %v786
  %v788 = vrcp.pop %v573
  %v789 = vmul.f32 1.0, %v788
  %v790 = vrcp.pop %v574
  %v791 = vmul.f32 1.0, %v790
  %v792 = vrcp.pop %v575
  %v793 = vmul.f32 1.0, %v792
  %v794 = vrcp.pop %v576
  %v795 = vmul.f32 1.0, %v794
  %v796 = vrcp.pop %v577
  %v797 = vmul.f32 1.0, %v796
  %v798 = vrcp.pop %v578
  %v799 = vmul.f32 1.0, %v798
  %v800 = vrcp.pop %v579
  %v801 = vmul.f32 1.0, %v800
  %v802 = vld [vmem:[%s1] sm:$0xff]
  %v803 = vld [vmem:[%s1 + $0x8] sm:$0xff]
  %v804 = vld [vmem:[%s1 + $0x10] sm:$0xff]
  %v805 = vld [vmem:[%s1 + $0x18] sm:$0xff]
  %v806 = vld [vmem:[%s1 + $0x20] sm:$0xff]
  %v807 = vld [vmem:[%s1 + $0x28] sm:$0xff]
  %v808 = vld [vmem:[%s1 + $0x30] sm:$0xff]
  %v809 = vld [vmem:[%s1 + $0x38] sm:$0xff]
  %v810 = vld [vmem:[%s1 + $0x40] sm:$0xff]
  %v811 = vld [vmem:[%s1 + $0x48] sm:$0xff]
  %v812 = vld [vmem:[%s1 + $0x50] sm:$0xff]
  %v813 = vld [vmem:[%s1 + $0x58] sm:$0xff]
  %v814 = vld [vmem:[%s1 + $0x60] sm:$0xff]
  %v815 = vld [vmem:[%s1 + $0x68] sm:$0xff]
  %v816 = vld [vmem:[%s1 + $0x70] sm:$0xff]
  %v817 = vld [vmem:[%s1 + $0x78] sm:$0xff]
  %v818 = vld [vmem:[%s1 + $0x80] sm:$0xff]
  %v819 = vld [vmem:[%s1 + $0x88] sm:$0xff]
  %v820 = vld [vmem:[%s1 + $0x90] sm:$0xff]
  %v821 = vld [vmem:[%s1 + $0x98] sm:$0xff]
  %v822 = vld [vmem:[%s1 + $0xa0] sm:$0xff]
  %v823 = vld [vmem:[%s1 + $0xa8] sm:$0xff]
  %v824 = vld [vmem:[%s1 + $0xb0] sm:$0xff]
  %v825 = vld [vmem:[%s1 + $0xb8] sm:$0xff]
  %v826 = vld [vmem:[%s1 + $0xc0] sm:$0xff]
  %v827 = vld [vmem:[%s1 + $0xc8] sm:$0xff]
  %v828 = vld [vmem:[%s1 + $0xd0] sm:$0xff]
  %v829 = vld [vmem:[%s1 + $0xd8] sm:$0xff]
  %v830 = vld [vmem:[%s1 + $0xe0] sm:$0xff]
  %v831 = vld [vmem:[%s1 + $0xe8] sm:$0xff]
  %v832 = vld [vmem:[%s1 + $0xf0] sm:$0xff]
  %v833 = vld [vmem:[%s1 + $0xf8] sm:$0xff]
  %v834 = vld [vmem:[%s1 + $0x100] sm:$0xff]
  %v835 = vld [vmem:[%s1 + $0x108] sm:$0xff]
  %v836 = vld [vmem:[%s1 + $0x110] sm:$0xff]
  %v837 = vld [vmem:[%s1 + $0x118] sm:$0xff]
  %v838 = vld [vmem:[%s1 + $0x120] sm:$0xff]
  %v839 = vld [vmem:[%s1 + $0x128] sm:$0xff]
  %v840 = vld [vmem:[%s1 + $0x130] sm:$0xff]
  %v841 = vld [vmem:[%s1 + $0x138] sm:$0xff]
  %v842 = vld [vmem:[%s1 + $0x140] sm:$0xff]
  %v843 = vld [vmem:[%s1 + $0x148] sm:$0xff]
  %v844 = vld [vmem:[%s1 + $0x150] sm:$0xff]
  %v845 = vld [vmem:[%s1 + $0x158] sm:$0xff]
  %v846 = vld [vmem:[%s1 + $0x160] sm:$0xff]
  %v847 = vld [vmem:[%s1 + $0x168] sm:$0xff]
  %v848 = vld [vmem:[%s1 + $0x170] sm:$0xff]
  %v849 = vld [vmem:[%s1 + $0x178] sm:$0xff]
  %v850 = vld [vmem:[%s1 + $0x180] sm:$0xff]
  %v851 = vld [vmem:[%s1 + $0x188] sm:$0xff]
  %v852 = vld [vmem:[%s1 + $0x190] sm:$0xff]
  %v853 = vld [vmem:[%s1 + $0x198] sm:$0xff]
  %v854 = vld [vmem:[%s1 + $0x1a0] sm:$0xff]
  %v855 = vld [vmem:[%s1 + $0x1a8] sm:$0xff]
  %v856 = vld [vmem:[%s1 + $0x1b0] sm:$0xff]
  %v857 = vld [vmem:[%s1 + $0x1b8] sm:$0xff]
  %v858 = vld [vmem:[%s1 + $0x1c0] sm:$0xff]
  %v859 = vld [vmem:[%s1 + $0x1c8] sm:$0xff]
  %v860 = vld [vmem:[%s1 + $0x1d0] sm:$0xff]
  %v861 = vld [vmem:[%s1 + $0x1d8] sm:$0xff]
  %v862 = vld [vmem:[%s1 + $0x1e0] sm:$0xff]
  %v863 = vld [vmem:[%s1 + $0x1e8] sm:$0xff]
  %v864 = vld [vmem:[%s1 + $0x1f0] sm:$0xff]
  %v865 = vld [vmem:[%s1 + $0x1f8] sm:$0xff]
  %v866 = vld [vmem:[%s1 + $0x200] sm:$0xff]
  %v867 = vld [vmem:[%s1 + $0x208] sm:$0xff]
  %v868 = vld [vmem:[%s1 + $0x210] sm:$0xff]
  %v869 = vld [vmem:[%s1 + $0x218] sm:$0xff]
  %v870 = vld [vmem:[%s1 + $0x220] sm:$0xff]
  %v871 = vld [vmem:[%s1 + $0x228] sm:$0xff]
  %v872 = vld [vmem:[%s1 + $0x230] sm:$0xff]
  %v873 = vld [vmem:[%s1 + $0x238] sm:$0xff]
  %v874 = vld [vmem:[%s1 + $0x240] sm:$0xff]
  %v875 = vld [vmem:[%s1 + $0x248] sm:$0xff]
  %v876 = vld [vmem:[%s1 + $0x250] sm:$0xff]
  %v877 = vld [vmem:[%s1 + $0x258] sm:$0xff]
  %v878 = vld [vmem:[%s1 + $0x260] sm:$0xff]
  %v879 = vld [vmem:[%s1 + $0x268] sm:$0xff]
  %v880 = vld [vmem:[%s1 + $0x270] sm:$0xff]
  %v881 = vld [vmem:[%s1 + $0x278] sm:$0xff]
  %v882 = vld [vmem:[%s1 + $0x280] sm:$0xff]
  %v883 = vld [vmem:[%s1 + $0x288] sm:$0xff]
  %v884 = vld [vmem:[%s1 + $0x290] sm:$0xff]
  %v885 = vld [vmem:[%s1 + $0x298] sm:$0xff]
  %v886 = vld [vmem:[%s1 + $0x2a0] sm:$0xff]
  %v887 = vld [vmem:[%s1 + $0x2a8] sm:$0xff]
  %v888 = vld [vmem:[%s1 + $0x2b0] sm:$0xff]
  %v889 = vld [vmem:[%s1 + $0x2b8] sm:$0xff]
  %v890 = vld [vmem:[%s1 + $0x2c0] sm:$0xff]
  %v891 = vld [vmem:[%s1 + $0x2c8] sm:$0xff]
  %v892 = vld [vmem:[%s1 + $0x2d0] sm:$0xff]
  %v893 = vld [vmem:[%s1 + $0x2d8] sm:$0xff]
  %v894 = vld [vmem:[%s1 + $0x2e0] sm:$0xff]
  %v895 = vld [vmem:[%s1 + $0x2e8] sm:$0xff]
  %v896 = vld [vmem:[%s1 + $0x2f0] sm:$0xff]
  %v897 = vld [vmem:[%s1 + $0x2f8] sm:$0xff]
  %v898 = vld [vmem:[%s1 + $0x300] sm:$0xff]
  %v899 = vld [vmem:[%s1 + $0x308] sm:$0xff]
  %v900 = vld [vmem:[%s1 + $0x310] sm:$0xff]
  %v901 = vld [vmem:[%s1 + $0x318] sm:$0xff]
  %v902 = vld [vmem:[%s1 + $0x320] sm:$0xff]
  %v903 = vld [vmem:[%s1 + $0x328] sm:$0xff]
  %v904 = vld [vmem:[%s1 + $0x330] sm:$0xff]
  %v905 = vld [vmem:[%s1 + $0x338] sm:$0xff]
  %v906 = vld [vmem:[%s1 + $0x340] sm:$0xff]
  %v907 = vld [vmem:[%s1 + $0x348] sm:$0xff]
  %v908 = vld [vmem:[%s1 + $0x350] sm:$0xff]
  %v909 = vld [vmem:[%s1 + $0x358] sm:$0xff]
  %v910 = vld [vmem:[%s1 + $0x360] sm:$0xff]
  %v911 = vld [vmem:[%s1 + $0x368] sm:$0xff]
  %v912 = vld [vmem:[%s1 + $0x370] sm:$0xff]
  %914 = vset.pattern.permute.xlu0 0
  %915 = vperm.xlu0 %914, %v581
  %v916 = vpop.permute.xlu0 %915
  %919 = vset.pattern.permute.xlu0 0
  %920 = vperm.xlu0 %919, %v583
  %v921 = vpop.permute.xlu0 %920
  %924 = vset.pattern.permute.xlu0 0
  %925 = vperm.xlu0 %924, %v585
  %v926 = vpop.permute.xlu0 %925
  %929 = vset.pattern.permute.xlu0 0
  %930 = vperm.xlu0 %929, %v587
  %v931 = vpop.permute.xlu0 %930
  %934 = vset.pattern.permute.xlu0 0
  %935 = vperm.xlu0 %934, %v589
  %v936 = vpop.permute.xlu0 %935
  %939 = vset.pattern.permute.xlu0 0
  %940 = vperm.xlu0 %939, %v591
  %v941 = vpop.permute.xlu0 %940
  %944 = vset.pattern.permute.xlu0 0
  %945 = vperm.xlu0 %944, %v593
  %v946 = vpop.permute.xlu0 %945
  %949 = vset.pattern.permute.xlu0 0
  %950 = vperm.xlu0 %949, %v595
  %v951 = vpop.permute.xlu0 %950
  %954 = vset.pattern.permute.xlu0 0
  %955 = vperm.xlu0 %954, %v597
  %v956 = vpop.permute.xlu0 %955
  %959 = vset.pattern.permute.xlu0 0
  %960 = vperm.xlu0 %959, %v599
  %v961 = vpop.permute.xlu0 %960
  %964 = vset.pattern.permute.xlu0 0
  %965 = vperm.xlu0 %964, %v601
  %v966 = vpop.permute.xlu0 %965
  %969 = vset.pattern.permute.xlu0 0
  %970 = vperm.xlu0 %969, %v603
  %v971 = vpop.permute.xlu0 %970
  %974 = vset.pattern.permute.xlu0 0
  %975 = vperm.xlu0 %974, %v605
  %v976 = vpop.permute.xlu0 %975
  %979 = vset.pattern.permute.xlu0 0
  %980 = vperm.xlu0 %979, %v607
  %v981 = vpop.permute.xlu0 %980
  %984 = vset.pattern.permute.xlu0 0
  %985 = vperm.xlu0 %984, %v609
  %v986 = vpop.permute.xlu0 %985
  %989 = vset.pattern.permute.xlu0 0
  %990 = vperm.xlu0 %989, %v611
  %v991 = vpop.permute.xlu0 %990
  %994 = vset.pattern.permute.xlu0 0
  %995 = vperm.xlu0 %994, %v613
  %v996 = vpop.permute.xlu0 %995
  %999 = vset.pattern.permute.xlu0 0
  %1000 = vperm.xlu0 %999, %v615
  %v1001 = vpop.permute.xlu0 %1000
  %1004 = vset.pattern.permute.xlu0 0
  %1005 = vperm.xlu0 %1004, %v617
  %v1006 = vpop.permute.xlu0 %1005
  %1009 = vset.pattern.permute.xlu0 0
  %1010 = vperm.xlu0 %1009, %v619
  %v1011 = vpop.permute.xlu0 %1010
  %1014 = vset.pattern.permute.xlu0 0
  %1015 = vperm.xlu0 %1014, %v621
  %v1016 = vpop.permute.xlu0 %1015
  %1019 = vset.pattern.permute.xlu0 0
  %1020 = vperm.xlu0 %1019, %v623
  %v1021 = vpop.permute.xlu0 %1020
  %1024 = vset.pattern.permute.xlu0 0
  %1025 = vperm.xlu0 %1024, %v625
  %v1026 = vpop.permute.xlu0 %1025
  %1029 = vset.pattern.permute.xlu0 0
  %1030 = vperm.xlu0 %1029, %v627
  %v1031 = vpop.permute.xlu0 %1030
  %1034 = vset.pattern.permute.xlu0 0
  %1035 = vperm.xlu0 %1034, %v629
  %v1036 = vpop.permute.xlu0 %1035
  %1039 = vset.pattern.permute.xlu0 0
  %1040 = vperm.xlu0 %1039, %v631
  %v1041 = vpop.permute.xlu0 %1040
  %1044 = vset.pattern.permute.xlu0 0
  %1045 = vperm.xlu0 %1044, %v633
  %v1046 = vpop.permute.xlu0 %1045
  %1049 = vset.pattern.permute.xlu0 0
  %1050 = vperm.xlu0 %1049, %v635
  %v1051 = vpop.permute.xlu0 %1050
  %1054 = vset.pattern.permute.xlu0 0
  %1055 = vperm.xlu0 %1054, %v637
  %v1056 = vpop.permute.xlu0 %1055
  %1059 = vset.pattern.permute.xlu0 0
  %1060 = vperm.xlu0 %1059, %v639
  %v1061 = vpop.permute.xlu0 %1060
  %1064 = vset.pattern.permute.xlu0 0
  %1065 = vperm.xlu0 %1064, %v641
  %v1066 = vpop.permute.xlu0 %1065
  %1069 = vset.pattern.permute.xlu0 0
  %1070 = vperm.xlu0 %1069, %v643
  %v1071 = vpop.permute.xlu0 %1070
  %1074 = vset.pattern.permute.xlu0 0
  %1075 = vperm.xlu0 %1074, %v645
  %v1076 = vpop.permute.xlu0 %1075
  %1079 = vset.pattern.permute.xlu0 0
  %1080 = vperm.xlu0 %1079, %v647
  %v1081 = vpop.permute.xlu0 %1080
  %1084 = vset.pattern.permute.xlu0 0
  %1085 = vperm.xlu0 %1084, %v649
  %v1086 = vpop.permute.xlu0 %1085
  %1089 = vset.pattern.permute.xlu0 0
  %1090 = vperm.xlu0 %1089, %v651
  %v1091 = vpop.permute.xlu0 %1090
  %1094 = vset.pattern.permute.xlu0 0
  %1095 = vperm.xlu0 %1094, %v653
  %v1096 = vpop.permute.xlu0 %1095
  %1099 = vset.pattern.permute.xlu0 0
  %1100 = vperm.xlu0 %1099, %v655
  %v1101 = vpop.permute.xlu0 %1100
  %1104 = vset.pattern.permute.xlu0 0
  %1105 = vperm.xlu0 %1104, %v657
  %v1106 = vpop.permute.xlu0 %1105
  %1109 = vset.pattern.permute.xlu0 0
  %1110 = vperm.xlu0 %1109, %v659
  %v1111 = vpop.permute.xlu0 %1110
  %1114 = vset.pattern.permute.xlu0 0
  %1115 = vperm.xlu0 %1114, %v661
  %v1116 = vpop.permute.xlu0 %1115
  %1119 = vset.pattern.permute.xlu0 0
  %1120 = vperm.xlu0 %1119, %v663
  %v1121 = vpop.permute.xlu0 %1120
  %1124 = vset.pattern.permute.xlu0 0
  %1125 = vperm.xlu0 %1124, %v665
  %v1126 = vpop.permute.xlu0 %1125
  %1129 = vset.pattern.permute.xlu0 0
  %1130 = vperm.xlu0 %1129, %v667
  %v1131 = vpop.permute.xlu0 %1130
  %1134 = vset.pattern.permute.xlu0 0
  %1135 = vperm.xlu0 %1134, %v669
  %v1136 = vpop.permute.xlu0 %1135
  %1139 = vset.pattern.permute.xlu0 0
  %1140 = vperm.xlu0 %1139, %v671
  %v1141 = vpop.permute.xlu0 %1140
  %1144 = vset.pattern.permute.xlu0 0
  %1145 = vperm.xlu0 %1144, %v673
  %v1146 = vpop.permute.xlu0 %1145
  %1149 = vset.pattern.permute.xlu0 0
  %1150 = vperm.xlu0 %1149, %v675
  %v1151 = vpop.permute.xlu0 %1150
  %1154 = vset.pattern.permute.xlu0 0
  %1155 = vperm.xlu0 %1154, %v677
  %v1156 = vpop.permute.xlu0 %1155
  %1159 = vset.pattern.permute.xlu0 0
  %1160 = vperm.xlu0 %1159, %v679
  %v1161 = vpop.permute.xlu0 %1160
  %1164 = vset.pattern.permute.xlu0 0
  %1165 = vperm.xlu0 %1164, %v681
  %v1166 = vpop.permute.xlu0 %1165
  %1169 = vset.pattern.permute.xlu0 0
  %1170 = vperm.xlu0 %1169, %v683
  %v1171 = vpop.permute.xlu0 %1170
  %1174 = vset.pattern.permute.xlu0 0
  %1175 = vperm.xlu0 %1174, %v685
  %v1176 = vpop.permute.xlu0 %1175
  %1179 = vset.pattern.permute.xlu0 0
  %1180 = vperm.xlu0 %1179, %v687
  %v1181 = vpop.permute.xlu0 %1180
  %1184 = vset.pattern.permute.xlu0 0
  %1185 = vperm.xlu0 %1184, %v689
  %v1186 = vpop.permute.xlu0 %1185
  %1189 = vset.pattern.permute.xlu0 0
  %1190 = vperm.xlu0 %1189, %v691
  %v1191 = vpop.permute.xlu0 %1190
  %1194 = vset.pattern.permute.xlu0 0
  %1195 = vperm.xlu0 %1194, %v693
  %v1196 = vpop.permute.xlu0 %1195
  %1199 = vset.pattern.permute.xlu0 0
  %1200 = vperm.xlu0 %1199, %v695
  %v1201 = vpop.permute.xlu0 %1200
  %1204 = vset.pattern.permute.xlu0 0
  %1205 = vperm.xlu0 %1204, %v697
  %v1206 = vpop.permute.xlu0 %1205
  %1209 = vset.pattern.permute.xlu0 0
  %1210 = vperm.xlu0 %1209, %v699
  %v1211 = vpop.permute.xlu0 %1210
  %1214 = vset.pattern.permute.xlu0 0
  %1215 = vperm.xlu0 %1214, %v701
  %v1216 = vpop.permute.xlu0 %1215
  %1219 = vset.pattern.permute.xlu0 0
  %1220 = vperm.xlu0 %1219, %v703
  %v1221 = vpop.permute.xlu0 %1220
  %1224 = vset.pattern.permute.xlu0 0
  %1225 = vperm.xlu0 %1224, %v705
  %v1226 = vpop.permute.xlu0 %1225
  %1229 = vset.pattern.permute.xlu0 0
  %1230 = vperm.xlu0 %1229, %v707
  %v1231 = vpop.permute.xlu0 %1230
  %1234 = vset.pattern.permute.xlu0 0
  %1235 = vperm.xlu0 %1234, %v709
  %v1236 = vpop.permute.xlu0 %1235
  %1239 = vset.pattern.permute.xlu0 0
  %1240 = vperm.xlu0 %1239, %v711
  %v1241 = vpop.permute.xlu0 %1240
  %1244 = vset.pattern.permute.xlu0 0
  %1245 = vperm.xlu0 %1244, %v713
  %v1246 = vpop.permute.xlu0 %1245
  %1249 = vset.pattern.permute.xlu0 0
  %1250 = vperm.xlu0 %1249, %v715
  %v1251 = vpop.permute.xlu0 %1250
  %1254 = vset.pattern.permute.xlu0 0
  %1255 = vperm.xlu0 %1254, %v717
  %v1256 = vpop.permute.xlu0 %1255
  %1259 = vset.pattern.permute.xlu0 0
  %1260 = vperm.xlu0 %1259, %v719
  %v1261 = vpop.permute.xlu0 %1260
  %1264 = vset.pattern.permute.xlu0 0
  %1265 = vperm.xlu0 %1264, %v721
  %v1266 = vpop.permute.xlu0 %1265
  %1269 = vset.pattern.permute.xlu0 0
  %1270 = vperm.xlu0 %1269, %v723
  %v1271 = vpop.permute.xlu0 %1270
  %1274 = vset.pattern.permute.xlu0 0
  %1275 = vperm.xlu0 %1274, %v725
  %v1276 = vpop.permute.xlu0 %1275
  %1279 = vset.pattern.permute.xlu0 0
  %1280 = vperm.xlu0 %1279, %v727
  %v1281 = vpop.permute.xlu0 %1280
  %1284 = vset.pattern.permute.xlu0 0
  %1285 = vperm.xlu0 %1284, %v729
  %v1286 = vpop.permute.xlu0 %1285
  %1289 = vset.pattern.permute.xlu0 0
  %1290 = vperm.xlu0 %1289, %v731
  %v1291 = vpop.permute.xlu0 %1290
  %1294 = vset.pattern.permute.xlu0 0
  %1295 = vperm.xlu0 %1294, %v733
  %v1296 = vpop.permute.xlu0 %1295
  %1299 = vset.pattern.permute.xlu0 0
  %1300 = vperm.xlu0 %1299, %v735
  %v1301 = vpop.permute.xlu0 %1300
  %1304 = vset.pattern.permute.xlu0 0
  %1305 = vperm.xlu0 %1304, %v737
  %v1306 = vpop.permute.xlu0 %1305
  %1309 = vset.pattern.permute.xlu0 0
  %1310 = vperm.xlu0 %1309, %v739
  %v1311 = vpop.permute.xlu0 %1310
  %1314 = vset.pattern.permute.xlu0 0
  %1315 = vperm.xlu0 %1314, %v741
  %v1316 = vpop.permute.xlu0 %1315
  %1319 = vset.pattern.permute.xlu0 0
  %1320 = vperm.xlu0 %1319, %v743
  %v1321 = vpop.permute.xlu0 %1320
  %1324 = vset.pattern.permute.xlu0 0
  %1325 = vperm.xlu0 %1324, %v745
  %v1326 = vpop.permute.xlu0 %1325
  %1329 = vset.pattern.permute.xlu0 0
  %1330 = vperm.xlu0 %1329, %v747
  %v1331 = vpop.permute.xlu0 %1330
  %1334 = vset.pattern.permute.xlu0 0
  %1335 = vperm.xlu0 %1334, %v749
  %v1336 = vpop.permute.xlu0 %1335
  %1339 = vset.pattern.permute.xlu0 0
  %1340 = vperm.xlu0 %1339, %v751
  %v1341 = vpop.permute.xlu0 %1340
  %1344 = vset.pattern.permute.xlu0 0
  %1345 = vperm.xlu0 %1344, %v753
  %v1346 = vpop.permute.xlu0 %1345
  %1349 = vset.pattern.permute.xlu0 0
  %1350 = vperm.xlu0 %1349, %v755
  %v1351 = vpop.permute.xlu0 %1350
  %1354 = vset.pattern.permute.xlu0 0
  %1355 = vperm.xlu0 %1354, %v757
  %v1356 = vpop.permute.xlu0 %1355
  %1359 = vset.pattern.permute.xlu0 0
  %1360 = vperm.xlu0 %1359, %v759
  %v1361 = vpop.permute.xlu0 %1360
  %1364 = vset.pattern.permute.xlu0 0
  %1365 = vperm.xlu0 %1364, %v761
  %v1366 = vpop.permute.xlu0 %1365
  %1369 = vset.pattern.permute.xlu0 0
  %1370 = vperm.xlu0 %1369, %v763
  %v1371 = vpop.permute.xlu0 %1370
  %1374 = vset.pattern.permute.xlu0 0
  %1375 = vperm.xlu0 %1374, %v765
  %v1376 = vpop.permute.xlu0 %1375
  %1379 = vset.pattern.permute.xlu0 0
  %1380 = vperm.xlu0 %1379, %v767
  %v1381 = vpop.permute.xlu0 %1380
  %1384 = vset.pattern.permute.xlu0 0
  %1385 = vperm.xlu0 %1384, %v769
  %v1386 = vpop.permute.xlu0 %1385
  %1389 = vset.pattern.permute.xlu0 0
  %1390 = vperm.xlu0 %1389, %v771
  %v1391 = vpop.permute.xlu0 %1390
  %1394 = vset.pattern.permute.xlu0 0
  %1395 = vperm.xlu0 %1394, %v773
  %v1396 = vpop.permute.xlu0 %1395
  %1399 = vset.pattern.permute.xlu0 0
  %1400 = vperm.xlu0 %1399, %v775
  %v1401 = vpop.permute.xlu0 %1400
  %1404 = vset.pattern.permute.xlu0 0
  %1405 = vperm.xlu0 %1404, %v777
  %v1406 = vpop.permute.xlu0 %1405
  %1409 = vset.pattern.permute.xlu0 0
  %1410 = vperm.xlu0 %1409, %v779
  %v1411 = vpop.permute.xlu0 %1410
  %1414 = vset.pattern.permute.xlu0 0
  %1415 = vperm.xlu0 %1414, %v781
  %v1416 = vpop.permute.xlu0 %1415
  %1419 = vset.pattern.permute.xlu0 0
  %1420 = vperm.xlu0 %1419, %v783
  %v1421 = vpop.permute.xlu0 %1420
  %1424 = vset.pattern.permute.xlu0 0
  %1425 = vperm.xlu0 %1424, %v785
  %v1426 = vpop.permute.xlu0 %1425
  %1429 = vset.pattern.permute.xlu0 0
  %1430 = vperm.xlu0 %1429, %v787
  %v1431 = vpop.permute.xlu0 %1430
  %1434 = vset.pattern.permute.xlu0 0
  %1435 = vperm.xlu0 %1434, %v789
  %v1436 = vpop.permute.xlu0 %1435
  %1439 = vset.pattern.permute.xlu0 0
  %1440 = vperm.xlu0 %1439, %v791
  %v1441 = vpop.permute.xlu0 %1440
  %1444 = vset.pattern.permute.xlu0 0
  %1445 = vperm.xlu0 %1444, %v793
  %v1446 = vpop.permute.xlu0 %1445
  %1449 = vset.pattern.permute.xlu0 0
  %1450 = vperm.xlu0 %1449, %v795
  %v1451 = vpop.permute.xlu0 %1450
  %1454 = vset.pattern.permute.xlu0 0
  %1455 = vperm.xlu0 %1454, %v797
  %v1456 = vpop.permute.xlu0 %1455
  %1459 = vset.pattern.permute.xlu0 0
  %1460 = vperm.xlu0 %1459, %v799
  %v1461 = vpop.permute.xlu0 %1460
  %1464 = vset.pattern.permute.xlu0 0
  %1465 = vperm.xlu0 %1464, %v801
  %v1466 = vpop.permute.xlu0 %1465
  %v1468 = vmul.f32 %v802, %v916
  %v1469 = vmul.f32 %v803, %v921
  %v1470 = vmul.f32 %v804, %v926
  %v1471 = vmul.f32 %v805, %v931
  %v1472 = vmul.f32 %v806, %v936
  %v1473 = vmul.f32 %v807, %v941
  %v1474 = vmul.f32 %v808, %v946
  %v1475 = vmul.f32 %v809, %v951
  %v1476 = vmul.f32 %v810, %v956
  %v1477 = vmul.f32 %v811, %v961
  %v1478 = vmul.f32 %v812, %v966
  %v1479 = vmul.f32 %v813, %v971
  %v1480 = vmul.f32 %v814, %v976
  %v1481 = vmul.f32 %v815, %v981
  %v1482 = vmul.f32 %v816, %v986
  %v1483 = vmul.f32 %v817, %v991
  %v1484 = vmul.f32 %v818, %v996
  %v1485 = vmul.f32 %v819, %v1001
  %v1486 = vmul.f32 %v820, %v1006
  %v1487 = vmul.f32 %v821, %v1011
  %v1488 = vmul.f32 %v822, %v1016
  %v1489 = vmul.f32 %v823, %v1021
  %v1490 = vmul.f32 %v824, %v1026
  %v1491 = vmul.f32 %v825, %v1031
  %v1492 = vmul.f32 %v826, %v1036
  %v1493 = vmul.f32 %v827, %v1041
  %v1494 = vmul.f32 %v828, %v1046
  %v1495 = vmul.f32 %v829, %v1051
  %v1496 = vmul.f32 %v830, %v1056
  %v1497 = vmul.f32 %v831, %v1061
  %v1498 = vmul.f32 %v832, %v1066
  %v1499 = vmul.f32 %v833, %v1071
  %v1500 = vmul.f32 %v834, %v1076
  %v1501 = vmul.f32 %v835, %v1081
  %v1502 = vmul.f32 %v836, %v1086
  %v1503 = vmul.f32 %v837, %v1091
  %v1504 = vmul.f32 %v838, %v1096
  %v1505 = vmul.f32 %v839, %v1101
  %v1506 = vmul.f32 %v840, %v1106
  %v1507 = vmul.f32 %v841, %v1111
  %v1508 = vmul.f32 %v842, %v1116
  %v1509 = vmul.f32 %v843, %v1121
  %v1510 = vmul.f32 %v844, %v1126
  %v1511 = vmul.f32 %v845, %v1131
  %v1512 = vmul.f32 %v846, %v1136
  %v1513 = vmul.f32 %v847, %v1141
  %v1514 = vmul.f32 %v848, %v1146
  %v1515 = vmul.f32 %v849, %v1151
  %v1516 = vmul.f32 %v850, %v1156
  %v1517 = vmul.f32 %v851, %v1161
  %v1518 = vmul.f32 %v852, %v1166
  %v1519 = vmul.f32 %v853, %v1171
  %v1520 = vmul.f32 %v854, %v1176
  %v1521 = vmul.f32 %v855, %v1181
  %v1522 = vmul.f32 %v856, %v1186
  %v1523 = vmul.f32 %v857, %v1191
  %v1524 = vmul.f32 %v858, %v1196
  %v1525 = vmul.f32 %v859, %v1201
  %v1526 = vmul.f32 %v860, %v1206
  %v1527 = vmul.f32 %v861, %v1211
  %v1528 = vmul.f32 %v862, %v1216
  %v1529 = vmul.f32 %v863, %v1221
  %v1530 = vmul.f32 %v864, %v1226
  %v1531 = vmul.f32 %v865, %v1231
  %v1532 = vmul.f32 %v866, %v1236
  %v1533 = vmul.f32 %v867, %v1241
  %v1534 = vmul.f32 %v868, %v1246
  %v1535 = vmul.f32 %v869, %v1251
  %v1536 = vmul.f32 %v870, %v1256
  %v1537 = vmul.f32 %v871, %v1261
  %v1538 = vmul.f32 %v872, %v1266
  %v1539 = vmul.f32 %v873, %v1271
  %v1540 = vmul.f32 %v874, %v1276
  %v1541 = vmul.f32 %v875, %v1281
  %v1542 = vmul.f32 %v876, %v1286
  %v1543 = vmul.f32 %v877, %v1291
  %v1544 = vmul.f32 %v878, %v1296
  %v1545 = vmul.f32 %v879, %v1301
  %v1546 = vmul.f32 %v880, %v1306
  %v1547 = vmul.f32 %v881, %v1311
  %v1548 = vmul.f32 %v882, %v1316
  %v1549 = vmul.f32 %v883, %v1321
  %v1550 = vmul.f32 %v884, %v1326
  %v1551 = vmul.f32 %v885, %v1331
  %v1552 = vmul.f32 %v886, %v1336
  %v1553 = vmul.f32 %v887, %v1341
  %v1554 = vmul.f32 %v888, %v1346
  %v1555 = vmul.f32 %v889, %v1351
  %v1556 = vmul.f32 %v890, %v1356
  %v1557 = vmul.f32 %v891, %v1361
  %v1558 = vmul.f32 %v892, %v1366
  %v1559 = vmul.f32 %v893, %v1371
  %v1560 = vmul.f32 %v894, %v1376
  %v1561 = vmul.f32 %v895, %v1381
  %v1562 = vmul.f32 %v896, %v1386
  %v1563 = vmul.f32 %v897, %v1391
  %v1564 = vmul.f32 %v898, %v1396
  %v1565 = vmul.f32 %v899, %v1401
  %v1566 = vmul.f32 %v900, %v1406
  %v1567 = vmul.f32 %v901, %v1411
  %v1568 = vmul.f32 %v902, %v1416
  %v1569 = vmul.f32 %v903, %v1421
  %v1570 = vmul.f32 %v904, %v1426
  %v1571 = vmul.f32 %v905, %v1431
  %v1572 = vmul.f32 %v906, %v1436
  %v1573 = vmul.f32 %v907, %v1441
  %v1574 = vmul.f32 %v908, %v1446
  %v1575 = vmul.f32 %v909, %v1451
  %v1576 = vmul.f32 %v910, %v1456
  %v1577 = vmul.f32 %v911, %v1461
  %v1578 = vmul.f32 %v912, %v1466
  %v1579 = vpack.c.bf16 %v1469, %v1468
  %v1580 = vpack.c.bf16 %v1471, %v1470
  %v1581 = vpack.c.bf16 %v1473, %v1472
  %v1582 = vpack.c.bf16 %v1475, %v1474
  %v1583 = vpack.c.bf16 %v1477, %v1476
  %v1584 = vpack.c.bf16 %v1479, %v1478
  %v1585 = vpack.c.bf16 %v1481, %v1480
  %v1586 = vpack.c.bf16 %v1483, %v1482
  %v1587 = vpack.c.bf16 %v1485, %v1484
  %v1588 = vpack.c.bf16 %v1487, %v1486
  %v1589 = vpack.c.bf16 %v1489, %v1488
  %v1590 = vpack.c.bf16 %v1491, %v1490
  %v1591 = vpack.c.bf16 %v1493, %v1492
  %v1592 = vpack.c.bf16 %v1495, %v1494
  %v1593 = vpack.c.bf16 %v1497, %v1496
  %v1594 = vpack.c.bf16 %v1499, %v1498
  %v1595 = vpack.c.bf16 %v1501, %v1500
  %v1596 = vpack.c.bf16 %v1503, %v1502
  %v1597 = vpack.c.bf16 %v1505, %v1504
  %v1598 = vpack.c.bf16 %v1507, %v1506
  %v1599 = vpack.c.bf16 %v1509, %v1508
  %v1600 = vpack.c.bf16 %v1511, %v1510
  %v1601 = vpack.c.bf16 %v1513, %v1512
  %v1602 = vpack.c.bf16 %v1515, %v1514
  %v1603 = vpack.c.bf16 %v1517, %v1516
  %v1604 = vpack.c.bf16 %v1519, %v1518
  %v1605 = vpack.c.bf16 %v1521, %v1520
  %v1606 = vpack.c.bf16 %v1523, %v1522
  %v1607 = vpack.c.bf16 %v1525, %v1524
  %v1608 = vpack.c.bf16 %v1527, %v1526
  %v1609 = vpack.c.bf16 %v1529, %v1528
  %v1610 = vpack.c.bf16 %v1531, %v1530
  %v1611 = vpack.c.bf16 %v1533, %v1532
  %v1612 = vpack.c.bf16 %v1535, %v1534
  %v1613 = vpack.c.bf16 %v1537, %v1536
  %v1614 = vpack.c.bf16 %v1539, %v1538
  %v1615 = vpack.c.bf16 %v1541, %v1540
  %v1616 = vpack.c.bf16 %v1543, %v1542
  %v1617 = vpack.c.bf16 %v1545, %v1544
  %v1618 = vpack.c.bf16 %v1547, %v1546
  %v1619 = vpack.c.bf16 %v1549, %v1548
  %v1620 = vpack.c.bf16 %v1551, %v1550
  %v1621 = vpack.c.bf16 %v1553, %v1552
  %v1622 = vpack.c.bf16 %v1555, %v1554
  %v1623 = vpack.c.bf16 %v1557, %v1556
  %v1624 = vpack.c.bf16 %v1559, %v1558
  %v1625 = vpack.c.bf16 %v1561, %v1560
  %v1626 = vpack.c.bf16 %v1563, %v1562
  %v1627 = vpack.c.bf16 %v1565, %v1564
  %v1628 = vpack.c.bf16 %v1567, %v1566
  %v1629 = vpack.c.bf16 %v1569, %v1568
  %v1630 = vpack.c.bf16 %v1571, %v1570
  %v1631 = vpack.c.bf16 %v1573, %v1572
  %v1632 = vpack.c.bf16 %v1575, %v1574
  %v1633 = vpack.c.bf16 %v1577, %v1576
  %v1634 = vpack.c.bf16 %v1578, %v1578
  %v1635 = vld [vmem:[%s2] sm:$0xff]
  %v1636 = vld [vmem:[%s2 + $0x8] sm:$0xff]
  %v1637 = vld [vmem:[%s2 + $0x10] sm:$0xff]
  %v1638 = vld [vmem:[%s2 + $0x18] sm:$0xf]
  %v1639 = vld [vmem:[%s2 + $0x1c] sm:$0xff]
  %v1640 = vld [vmem:[%s2 + $0x24] sm:$0xff]
  %v1641 = vld [vmem:[%s2 + $0x2c] sm:$0xff]
  %v1642 = vld [vmem:[%s2 + $0x34] sm:$0xf]
  %v1643 = vld [vmem:[%s2 + $0x38] sm:$0xff]
  %v1644 = vld [vmem:[%s2 + $0x40] sm:$0xff]
  %v1645 = vld [vmem:[%s2 + $0x48] sm:$0xff]
  %v1646 = vld [vmem:[%s2 + $0x50] sm:$0xf]
  %v1647 = vld [vmem:[%s2 + $0x54] sm:$0xff]
  %v1648 = vld [vmem:[%s2 + $0x5c] sm:$0xff]
  %v1649 = vld [vmem:[%s2 + $0x64] sm:$0xff]
  %v1650 = vld [vmem:[%s2 + $0x6c] sm:$0xf]
  %v1651 = vld [vmem:[%s2 + $0x70] sm:$0xff]
  %v1652 = vld [vmem:[%s2 + $0x78] sm:$0xff]
  %v1653 = vld [vmem:[%s2 + $0x80] sm:$0xff]
  %v1654 = vld [vmem:[%s2 + $0x88] sm:$0xf]
  %v1655 = vld [vmem:[%s2 + $0x8c] sm:$0xff]
  %v1656 = vld [vmem:[%s2 + $0x94] sm:$0xff]
  %v1657 = vld [vmem:[%s2 + $0x9c] sm:$0xff]
  %v1658 = vld [vmem:[%s2 + $0xa4] sm:$0xf]
  %v1659 = vld [vmem:[%s2 + $0xa8] sm:$0xff]
  %v1660 = vld [vmem:[%s2 + $0xb0] sm:$0xff]
  %v1661 = vld [vmem:[%s2 + $0xb8] sm:$0xff]
  %v1662 = vld [vmem:[%s2 + $0xc0] sm:$0xf]
  %v1663 = vld [vmem:[%s2 + $0xc4] sm:$0xff]
  %v1664 = vld [vmem:[%s2 + $0xcc] sm:$0xff]
  %v1665 = vld [vmem:[%s2 + $0xd4] sm:$0xff]
  %v1666 = vld [vmem:[%s2 + $0xdc] sm:$0xf]
  %v1667 = vld [vmem:[%s2 + $0xe0] sm:$0xff]
  %v1668 = vld [vmem:[%s2 + $0xe8] sm:$0xff]
  %v1669 = vld [vmem:[%s2 + $0xf0] sm:$0xff]
  %v1670 = vld [vmem:[%s2 + $0xf8] sm:$0xf]
  %v1671 = vld [vmem:[%s2 + $0xfc] sm:$0xff]
  %v1672 = vld [vmem:[%s2 + $0x104] sm:$0xff]
  %v1673 = vld [vmem:[%s2 + $0x10c] sm:$0xff]
  %v1674 = vld [vmem:[%s2 + $0x114] sm:$0xf]
  %v1675 = vld [vmem:[%s2 + $0x118] sm:$0xff]
  %v1676 = vld [vmem:[%s2 + $0x120] sm:$0xff]
  %v1677 = vld [vmem:[%s2 + $0x128] sm:$0xff]
  %v1678 = vld [vmem:[%s2 + $0x130] sm:$0xf]
  %v1679 = vld [vmem:[%s2 + $0x134] sm:$0xff]
  %v1680 = vld [vmem:[%s2 + $0x13c] sm:$0xff]
  %v1681 = vld [vmem:[%s2 + $0x144] sm:$0xff]
  %v1682 = vld [vmem:[%s2 + $0x14c] sm:$0xf]
  %v1683 = vld [vmem:[%s2 + $0x150] sm:$0xff]
  %v1684 = vld [vmem:[%s2 + $0x158] sm:$0xff]
  %v1685 = vld [vmem:[%s2 + $0x160] sm:$0xff]
  %v1686 = vld [vmem:[%s2 + $0x168] sm:$0xf]
  %v1687 = vld [vmem:[%s2 + $0x16c] sm:$0xff]
  %v1688 = vld [vmem:[%s2 + $0x174] sm:$0xff]
  %v1689 = vld [vmem:[%s2 + $0x17c] sm:$0xff]
  %v1690 = vld [vmem:[%s2 + $0x184] sm:$0xf]
  %v1691 = vld [vmem:[%s2 + $0x188] sm:$0xff]
  %v1692 = vld [vmem:[%s2 + $0x190] sm:$0xff]
  %v1693 = vld [vmem:[%s2 + $0x198] sm:$0xff]
  %v1694 = vld [vmem:[%s2 + $0x1a0] sm:$0xf]
  %v1695 = vld [vmem:[%s2 + $0x1a4] sm:$0xff]
  %v1696 = vld [vmem:[%s2 + $0x1ac] sm:$0xff]
  %v1697 = vld [vmem:[%s2 + $0x1b4] sm:$0xff]
  %v1698 = vld [vmem:[%s2 + $0x1bc] sm:$0xf]
  %v1699 = vld [vmem:[%s2 + $0x1c0] sm:$0xff]
  %v1700 = vld [vmem:[%s2 + $0x1c8] sm:$0xff]
  %v1701 = vld [vmem:[%s2 + $0x1d0] sm:$0xff]
  %v1702 = vld [vmem:[%s2 + $0x1d8] sm:$0xf]
  %v1703 = vld [vmem:[%s2 + $0x1dc] sm:$0xff]
  %v1704 = vld [vmem:[%s2 + $0x1e4] sm:$0xff]
  %v1705 = vld [vmem:[%s2 + $0x1ec] sm:$0xff]
  %v1706 = vld [vmem:[%s2 + $0x1f4] sm:$0xf]
  %v1707 = vld [vmem:[%s2 + $0x1f8] sm:$0xff]
  %v1708 = vld [vmem:[%s2 + $0x200] sm:$0xff]
  %v1709 = vld [vmem:[%s2 + $0x208] sm:$0xff]
  %v1710 = vld [vmem:[%s2 + $0x210] sm:$0xf]
  %v1711 = vld [vmem:[%s2 + $0x214] sm:$0xff]
  %v1712 = vld [vmem:[%s2 + $0x21c] sm:$0xff]
  %v1713 = vld [vmem:[%s2 + $0x224] sm:$0xff]
  %v1714 = vld [vmem:[%s2 + $0x22c] sm:$0xf]
  %v1715 = vld [vmem:[%s2 + $0x230] sm:$0xff]
  %v1716 = vld [vmem:[%s2 + $0x238] sm:$0xff]
  %v1717 = vld [vmem:[%s2 + $0x240] sm:$0xff]
  %v1718 = vld [vmem:[%s2 + $0x248] sm:$0xf]
  %v1719 = vld [vmem:[%s2 + $0x24c] sm:$0xff]
  %v1720 = vld [vmem:[%s2 + $0x254] sm:$0xff]
  %v1721 = vld [vmem:[%s2 + $0x25c] sm:$0xff]
  %v1722 = vld [vmem:[%s2 + $0x264] sm:$0xf]
  %v1723 = vld [vmem:[%s2 + $0x268] sm:$0xff]
  %v1724 = vld [vmem:[%s2 + $0x270] sm:$0xff]
  %v1725 = vld [vmem:[%s2 + $0x278] sm:$0xff]
  %v1726 = vld [vmem:[%s2 + $0x280] sm:$0xf]
  %v1727 = vld [vmem:[%s2 + $0x284] sm:$0xff]
  %v1728 = vld [vmem:[%s2 + $0x28c] sm:$0xff]
  %v1729 = vld [vmem:[%s2 + $0x294] sm:$0xff]
  %v1730 = vld [vmem:[%s2 + $0x29c] sm:$0xf]
  %v1731 = vld [vmem:[%s2 + $0x2a0] sm:$0xff]
  %v1732 = vld [vmem:[%s2 + $0x2a8] sm:$0xff]
  %v1733 = vld [vmem:[%s2 + $0x2b0] sm:$0xff]
  %v1734 = vld [vmem:[%s2 + $0x2b8] sm:$0xf]
  %v1735 = vld [vmem:[%s2 + $0x2bc] sm:$0xff]
  %v1736 = vld [vmem:[%s2 + $0x2c4] sm:$0xff]
  %v1737 = vld [vmem:[%s2 + $0x2cc] sm:$0xff]
  %v1738 = vld [vmem:[%s2 + $0x2d4] sm:$0xf]
  %v1739 = vld [vmem:[%s2 + $0x2d8] sm:$0xff]
  %v1740 = vld [vmem:[%s2 + $0x2e0] sm:$0xff]
  %v1741 = vld [vmem:[%s2 + $0x2e8] sm:$0xff]
  %v1742 = vld [vmem:[%s2 + $0x2f0] sm:$0xf]
  %v1743 = vld [vmem:[%s2 + $0x2f4] sm:$0xff]
  %v1744 = vld [vmem:[%s2 + $0x2fc] sm:$0xff]
  %v1745 = vld [vmem:[%s2 + $0x304] sm:$0xff]
  %v1746 = vld [vmem:[%s2 + $0x30c] sm:$0xf]
  %v1747 = vld [vmem:[%s2 + $0x310] sm:$0xff]
  %v1748 = vld [vmem:[%s2 + $0x318] sm:$0xff]
  %v1749 = vld [vmem:[%s2 + $0x320] sm:$0xff]
  %v1750 = vld [vmem:[%s2 + $0x328] sm:$0xf]
  %v1751 = vld [vmem:[%s2 + $0x32c] sm:$0xff]
  %v1752 = vld [vmem:[%s2 + $0x334] sm:$0xff]
  %v1753 = vld [vmem:[%s2 + $0x33c] sm:$0xff]
  %v1754 = vld [vmem:[%s2 + $0x344] sm:$0xf]
  %v1755 = vld [vmem:[%s2 + $0x348] sm:$0xff]
  %v1756 = vld [vmem:[%s2 + $0x350] sm:$0xff]
  %v1757 = vld [vmem:[%s2 + $0x358] sm:$0xff]
  %v1758 = vld [vmem:[%s2 + $0x360] sm:$0xf]
  %v1759 = vld [vmem:[%s2 + $0x364] sm:$0xff]
  %v1760 = vld [vmem:[%s2 + $0x36c] sm:$0xff]
  %v1761 = vld [vmem:[%s2 + $0x374] sm:$0xff]
  %v1762 = vld [vmem:[%s2 + $0x37c] sm:$0xf]
  %v1763 = vld [vmem:[%s2 + $0x380] sm:$0xff]
  %v1764 = vld [vmem:[%s2 + $0x388] sm:$0xff]
  %v1765 = vld [vmem:[%s2 + $0x390] sm:$0xff]
  %v1766 = vld [vmem:[%s2 + $0x398] sm:$0xf]
  %v1767 = vld [vmem:[%s2 + $0x39c] sm:$0xff]
  %v1768 = vld [vmem:[%s2 + $0x3a4] sm:$0xff]
  %v1769 = vld [vmem:[%s2 + $0x3ac] sm:$0xff]
  %v1770 = vld [vmem:[%s2 + $0x3b4] sm:$0xf]
  %v1771 = vld [vmem:[%s2 + $0x3b8] sm:$0xff]
  %v1772 = vld [vmem:[%s2 + $0x3c0] sm:$0xff]
  %v1773 = vld [vmem:[%s2 + $0x3c8] sm:$0xff]
  %v1774 = vld [vmem:[%s2 + $0x3d0] sm:$0xf]
  %v1775 = vld [vmem:[%s2 + $0x3d4] sm:$0xff]
  %v1776 = vld [vmem:[%s2 + $0x3dc] sm:$0xff]
  %v1777 = vld [vmem:[%s2 + $0x3e4] sm:$0xff]
  %v1778 = vld [vmem:[%s2 + $0x3ec] sm:$0xf]
  %v1779 = vld [vmem:[%s2 + $0x3f0] sm:$0xff]
  %v1780 = vld [vmem:[%s2 + $0x3f8] sm:$0xff]
  %v1781 = vld [vmem:[%s2 + $0x400] sm:$0xff]
  %v1782 = vld [vmem:[%s2 + $0x408] sm:$0xf]
  %v1783 = vld [vmem:[%s2 + $0x40c] sm:$0xff]
  %v1784 = vld [vmem:[%s2 + $0x414] sm:$0xff]
  %v1785 = vld [vmem:[%s2 + $0x41c] sm:$0xff]
  %v1786 = vld [vmem:[%s2 + $0x424] sm:$0xf]
  %v1787 = vld [vmem:[%s2 + $0x428] sm:$0xff]
  %v1788 = vld [vmem:[%s2 + $0x430] sm:$0xff]
  %v1789 = vld [vmem:[%s2 + $0x438] sm:$0xff]
  %v1790 = vld [vmem:[%s2 + $0x440] sm:$0xf]
  %v1791 = vld [vmem:[%s2 + $0x444] sm:$0xff]
  %v1792 = vld [vmem:[%s2 + $0x44c] sm:$0xff]
  %v1793 = vld [vmem:[%s2 + $0x454] sm:$0xff]
  %v1794 = vld [vmem:[%s2 + $0x45c] sm:$0xf]
  %v1795 = vld [vmem:[%s2 + $0x460] sm:$0xff]
  %v1796 = vld [vmem:[%s2 + $0x468] sm:$0xff]
  %v1797 = vld [vmem:[%s2 + $0x470] sm:$0xff]
  %v1798 = vld [vmem:[%s2 + $0x478] sm:$0xf]
  %v1799 = vld [vmem:[%s2 + $0x47c] sm:$0xff]
  %v1800 = vld [vmem:[%s2 + $0x484] sm:$0xff]
  %v1801 = vld [vmem:[%s2 + $0x48c] sm:$0xff]
  %v1802 = vld [vmem:[%s2 + $0x494] sm:$0xf]
  %v1803 = vld [vmem:[%s2 + $0x498] sm:$0xff]
  %v1804 = vld [vmem:[%s2 + $0x4a0] sm:$0xff]
  %v1805 = vld [vmem:[%s2 + $0x4a8] sm:$0xff]
  %v1806 = vld [vmem:[%s2 + $0x4b0] sm:$0xf]
  %v1807 = vld [vmem:[%s2 + $0x4b4] sm:$0xff]
  %v1808 = vld [vmem:[%s2 + $0x4bc] sm:$0xff]
  %v1809 = vld [vmem:[%s2 + $0x4c4] sm:$0xff]
  %v1810 = vld [vmem:[%s2 + $0x4cc] sm:$0xf]
  %v1811 = vld [vmem:[%s2 + $0x4d0] sm:$0xff]
  %v1812 = vld [vmem:[%s2 + $0x4d8] sm:$0xff]
  %v1813 = vld [vmem:[%s2 + $0x4e0] sm:$0xff]
  %v1814 = vld [vmem:[%s2 + $0x4e8] sm:$0xf]
  %v1815 = vld [vmem:[%s2 + $0x4ec] sm:$0xff]
  %v1816 = vld [vmem:[%s2 + $0x4f4] sm:$0xff]
  %v1817 = vld [vmem:[%s2 + $0x4fc] sm:$0xff]
  %v1818 = vld [vmem:[%s2 + $0x504] sm:$0xf]
  %v1819 = vld [vmem:[%s2 + $0x508] sm:$0xff]
  %v1820 = vld [vmem:[%s2 + $0x510] sm:$0xff]
  %v1821 = vld [vmem:[%s2 + $0x518] sm:$0xff]
  %v1822 = vld [vmem:[%s2 + $0x520] sm:$0xf]
  %v1823 = vld [vmem:[%s2 + $0x524] sm:$0xff]
  %v1824 = vld [vmem:[%s2 + $0x52c] sm:$0xff]
  %v1825 = vld [vmem:[%s2 + $0x534] sm:$0xff]
  %v1826 = vld [vmem:[%s2 + $0x53c] sm:$0xf]
  %v1827 = vld [vmem:[%s2 + $0x540] sm:$0xff]
  %v1828 = vld [vmem:[%s2 + $0x548] sm:$0xff]
  %v1829 = vld [vmem:[%s2 + $0x550] sm:$0xff]
  %v1830 = vld [vmem:[%s2 + $0x558] sm:$0xf]
  %v1831 = vld [vmem:[%s2 + $0x55c] sm:$0xff]
  %v1832 = vld [vmem:[%s2 + $0x564] sm:$0xff]
  %v1833 = vld [vmem:[%s2 + $0x56c] sm:$0xff]
  %v1834 = vld [vmem:[%s2 + $0x574] sm:$0xf]
  %v1835 = vld [vmem:[%s2 + $0x578] sm:$0xff]
  %v1836 = vld [vmem:[%s2 + $0x580] sm:$0xff]
  %v1837 = vld [vmem:[%s2 + $0x588] sm:$0xff]
  %v1838 = vld [vmem:[%s2 + $0x590] sm:$0xf]
  %v1839 = vld [vmem:[%s2 + $0x594] sm:$0xff]
  %v1840 = vld [vmem:[%s2 + $0x59c] sm:$0xff]
  %v1841 = vld [vmem:[%s2 + $0x5a4] sm:$0xff]
  %v1842 = vld [vmem:[%s2 + $0x5ac] sm:$0xf]
  %v1843 = vld [vmem:[%s2 + $0x5b0] sm:$0xff]
  %v1844 = vld [vmem:[%s2 + $0x5b8] sm:$0xff]
  %v1845 = vld [vmem:[%s2 + $0x5c0] sm:$0xff]
  %v1846 = vld [vmem:[%s2 + $0x5c8] sm:$0xf]
  %v1847 = vld [vmem:[%s2 + $0x5cc] sm:$0xff]
  %v1848 = vld [vmem:[%s2 + $0x5d4] sm:$0xff]
  %v1849 = vld [vmem:[%s2 + $0x5dc] sm:$0xff]
  %v1850 = vld [vmem:[%s2 + $0x5e4] sm:$0xf]
  %v1851 = vld [vmem:[%s2 + $0x5e8] sm:$0xff]
  %v1852 = vld [vmem:[%s2 + $0x5f0] sm:$0xff]
  %v1853 = vld [vmem:[%s2 + $0x5f8] sm:$0xff]
  %v1854 = vld [vmem:[%s2 + $0x600] sm:$0xf]
  %v1855 = vld [vmem:[%s2 + $0x604] sm:$0xff]
  %v1856 = vld [vmem:[%s2 + $0x60c] sm:$0xff]
  %v1857 = vld [vmem:[%s2 + $0x614] sm:$0xff]
  %v1858 = vld [vmem:[%s2 + $0x61c] sm:$0xf]
  %v1859 = vld [vmem:[%s2 + $0x620] sm:$0xff]
  %v1860 = vld [vmem:[%s2 + $0x628] sm:$0xff]
  %v1861 = vld [vmem:[%s2 + $0x630] sm:$0xff]
  %v1862 = vld [vmem:[%s2 + $0x638] sm:$0xf]
  %v1863 = vld [vmem:[%s2 + $0x63c] sm:$0xff]
  %v1864 = vld [vmem:[%s2 + $0x644] sm:$0xff]
  %v1865 = vld [vmem:[%s2 + $0x64c] sm:$0xff]
  %v1866 = vld [vmem:[%s2 + $0x654] sm:$0xf]
  %v1867 = vld [vmem:[%s2 + $0x658] sm:$0xff]
  %v1868 = vld [vmem:[%s2 + $0x660] sm:$0xff]
  %v1869 = vld [vmem:[%s2 + $0x668] sm:$0xff]
  %v1870 = vld [vmem:[%s2 + $0x670] sm:$0xf]
  %v1871 = vld [vmem:[%s2 + $0x674] sm:$0xff]
  %v1872 = vld [vmem:[%s2 + $0x67c] sm:$0xff]
  %v1873 = vld [vmem:[%s2 + $0x684] sm:$0xff]
  %v1874 = vld [vmem:[%s2 + $0x68c] sm:$0xf]
  %v1875 = vld [vmem:[%s2 + $0x690] sm:$0xff]
  %v1876 = vld [vmem:[%s2 + $0x698] sm:$0xff]
  %v1877 = vld [vmem:[%s2 + $0x6a0] sm:$0xff]
  %v1878 = vld [vmem:[%s2 + $0x6a8] sm:$0xf]
  %v1879 = vld [vmem:[%s2 + $0x6ac] sm:$0xff]
  %v1880 = vld [vmem:[%s2 + $0x6b4] sm:$0xff]
  %v1881 = vld [vmem:[%s2 + $0x6bc] sm:$0xff]
  %v1882 = vld [vmem:[%s2 + $0x6c4] sm:$0xf]
  %v1883 = vld [vmem:[%s2 + $0x6c8] sm:$0xff]
  %v1884 = vld [vmem:[%s2 + $0x6d0] sm:$0xff]
  %v1885 = vld [vmem:[%s2 + $0x6d8] sm:$0xff]
  %v1886 = vld [vmem:[%s2 + $0x6e0] sm:$0xf]
  %v1887 = vld [vmem:[%s2 + $0x6e4] sm:$0xff]
  %v1888 = vld [vmem:[%s2 + $0x6ec] sm:$0xff]
  %v1889 = vld [vmem:[%s2 + $0x6f4] sm:$0xff]
  %v1890 = vld [vmem:[%s2 + $0x6fc] sm:$0xf]
  %v1891 = vld [vmem:[%s2 + $0x700] sm:$0xff]
  %v1892 = vld [vmem:[%s2 + $0x708] sm:$0xff]
  %v1893 = vld [vmem:[%s2 + $0x710] sm:$0xff]
  %v1894 = vld [vmem:[%s2 + $0x718] sm:$0xf]
  %v1895 = vld [vmem:[%s2 + $0x71c] sm:$0xff]
  %v1896 = vld [vmem:[%s2 + $0x724] sm:$0xff]
  %v1897 = vld [vmem:[%s2 + $0x72c] sm:$0xff]
  %v1898 = vld [vmem:[%s2 + $0x734] sm:$0xf]
  %v1899 = vld [vmem:[%s2 + $0x738] sm:$0xff]
  %v1900 = vld [vmem:[%s2 + $0x740] sm:$0xff]
  %v1901 = vld [vmem:[%s2 + $0x748] sm:$0xff]
  %v1902 = vld [vmem:[%s2 + $0x750] sm:$0xf]
  %v1903 = vld [vmem:[%s2 + $0x754] sm:$0xff]
  %v1904 = vld [vmem:[%s2 + $0x75c] sm:$0xff]
  %v1905 = vld [vmem:[%s2 + $0x764] sm:$0xff]
  %v1906 = vld [vmem:[%s2 + $0x76c] sm:$0xf]
  %v1907 = vld [vmem:[%s2 + $0x770] sm:$0xff]
  %v1908 = vld [vmem:[%s2 + $0x778] sm:$0xff]
  %v1909 = vld [vmem:[%s2 + $0x780] sm:$0xff]
  %v1910 = vld [vmem:[%s2 + $0x788] sm:$0xf]
  %v1911 = vld [vmem:[%s2 + $0x78c] sm:$0xff]
  %v1912 = vld [vmem:[%s2 + $0x794] sm:$0xff]
  %v1913 = vld [vmem:[%s2 + $0x79c] sm:$0xff]
  %v1914 = vld [vmem:[%s2 + $0x7a4] sm:$0xf]
  %v1915 = vld [vmem:[%s2 + $0x7a8] sm:$0xff]
  %v1916 = vld [vmem:[%s2 + $0x7b0] sm:$0xff]
  %v1917 = vld [vmem:[%s2 + $0x7b8] sm:$0xff]
  %v1918 = vld [vmem:[%s2 + $0x7c0] sm:$0xf]
  %v1919 = vld [vmem:[%s2 + $0x7c4] sm:$0xff]
  %v1920 = vld [vmem:[%s2 + $0x7cc] sm:$0xff]
  %v1921 = vld [vmem:[%s2 + $0x7d4] sm:$0xff]
  %v1922 = vld [vmem:[%s2 + $0x7dc] sm:$0xf]
  %v1923 = vld [vmem:[%s2 + $0x7e0] sm:$0xff]
  %v1924 = vld [vmem:[%s2 + $0x7e8] sm:$0xff]
  %v1925 = vld [vmem:[%s2 + $0x7f0] sm:$0xff]
  %v1926 = vld [vmem:[%s2 + $0x7f8] sm:$0xf]
  %v1927 = vld [vmem:[%s2 + $0x7fc] sm:$0xff]
  %v1928 = vld [vmem:[%s2 + $0x804] sm:$0xff]
  %v1929 = vld [vmem:[%s2 + $0x80c] sm:$0xff]
  %v1930 = vld [vmem:[%s2 + $0x814] sm:$0xf]
  %v1931 = vld [vmem:[%s2 + $0x818] sm:$0xff]
  %v1932 = vld [vmem:[%s2 + $0x820] sm:$0xff]
  %v1933 = vld [vmem:[%s2 + $0x828] sm:$0xff]
  %v1934 = vld [vmem:[%s2 + $0x830] sm:$0xf]
  %v1935 = vld [vmem:[%s2 + $0x834] sm:$0xff]
  %v1936 = vld [vmem:[%s2 + $0x83c] sm:$0xff]
  %v1937 = vld [vmem:[%s2 + $0x844] sm:$0xff]
  %v1938 = vld [vmem:[%s2 + $0x84c] sm:$0xf]
  %v1939 = vld [vmem:[%s2 + $0x850] sm:$0xff]
  %v1940 = vld [vmem:[%s2 + $0x858] sm:$0xff]
  %v1941 = vld [vmem:[%s2 + $0x860] sm:$0xff]
  %v1942 = vld [vmem:[%s2 + $0x868] sm:$0xf]
  %v1943 = vld [vmem:[%s2 + $0x86c] sm:$0xff]
  %v1944 = vld [vmem:[%s2 + $0x874] sm:$0xff]
  %v1945 = vld [vmem:[%s2 + $0x87c] sm:$0xff]
  %v1946 = vld [vmem:[%s2 + $0x884] sm:$0xf]
  %v1947 = vld [vmem:[%s2 + $0x888] sm:$0xff]
  %v1948 = vld [vmem:[%s2 + $0x890] sm:$0xff]
  %v1949 = vld [vmem:[%s2 + $0x898] sm:$0xff]
  %v1950 = vld [vmem:[%s2 + $0x8a0] sm:$0xf]
  %v1951 = vld [vmem:[%s2 + $0x8a4] sm:$0xff]
  %v1952 = vld [vmem:[%s2 + $0x8ac] sm:$0xff]
  %v1953 = vld [vmem:[%s2 + $0x8b4] sm:$0xff]
  %v1954 = vld [vmem:[%s2 + $0x8bc] sm:$0xf]
  %v1955 = vld [vmem:[%s2 + $0x8c0] sm:$0xff]
  %v1956 = vld [vmem:[%s2 + $0x8c8] sm:$0xff]
  %v1957 = vld [vmem:[%s2 + $0x8d0] sm:$0xff]
  %v1958 = vld [vmem:[%s2 + $0x8d8] sm:$0xf]
  %v1959 = vld [vmem:[%s2 + $0x8dc] sm:$0xff]
  %v1960 = vld [vmem:[%s2 + $0x8e4] sm:$0xff]
  %v1961 = vld [vmem:[%s2 + $0x8ec] sm:$0xff]
  %v1962 = vld [vmem:[%s2 + $0x8f4] sm:$0xf]
  %v1963 = vld [vmem:[%s2 + $0x8f8] sm:$0xff]
  %v1964 = vld [vmem:[%s2 + $0x900] sm:$0xff]
  %v1965 = vld [vmem:[%s2 + $0x908] sm:$0xff]
  %v1966 = vld [vmem:[%s2 + $0x910] sm:$0xf]
  %v1967 = vld [vmem:[%s2 + $0x914] sm:$0xff]
  %v1968 = vld [vmem:[%s2 + $0x91c] sm:$0xff]
  %v1969 = vld [vmem:[%s2 + $0x924] sm:$0xff]
  %v1970 = vld [vmem:[%s2 + $0x92c] sm:$0xf]
  %v1971 = vld [vmem:[%s2 + $0x930] sm:$0xff]
  %v1972 = vld [vmem:[%s2 + $0x938] sm:$0xff]
  %v1973 = vld [vmem:[%s2 + $0x940] sm:$0xff]
  %v1974 = vld [vmem:[%s2 + $0x948] sm:$0xf]
  %v1975 = vld [vmem:[%s2 + $0x94c] sm:$0xff]
  %v1976 = vld [vmem:[%s2 + $0x954] sm:$0xff]
  %v1977 = vld [vmem:[%s2 + $0x95c] sm:$0xff]
  %v1978 = vld [vmem:[%s2 + $0x964] sm:$0xf]
  %v1979 = vld [vmem:[%s2 + $0x968] sm:$0xff]
  %v1980 = vld [vmem:[%s2 + $0x970] sm:$0xff]
  %v1981 = vld [vmem:[%s2 + $0x978] sm:$0xff]
  %v1982 = vld [vmem:[%s2 + $0x980] sm:$0xf]
  %v1983 = vld [vmem:[%s2 + $0x984] sm:$0xff]
  %v1984 = vld [vmem:[%s2 + $0x98c] sm:$0xff]
  %v1985 = vld [vmem:[%s2 + $0x994] sm:$0xff]
  %v1986 = vld [vmem:[%s2 + $0x99c] sm:$0xf]
  %v1987 = vld [vmem:[%s2 + $0x9a0] sm:$0xff]
  %v1988 = vld [vmem:[%s2 + $0x9a8] sm:$0xff]
  %v1989 = vld [vmem:[%s2 + $0x9b0] sm:$0xff]
  %v1990 = vld [vmem:[%s2 + $0x9b8] sm:$0xf]
  %v1991 = vld [vmem:[%s2 + $0x9bc] sm:$0xff]
  %v1992 = vld [vmem:[%s2 + $0x9c4] sm:$0xff]
  %v1993 = vld [vmem:[%s2 + $0x9cc] sm:$0xff]
  %v1994 = vld [vmem:[%s2 + $0x9d4] sm:$0xf]
  %v1995 = vld [vmem:[%s2 + $0x9d8] sm:$0xff]
  %v1996 = vld [vmem:[%s2 + $0x9e0] sm:$0xff]
  %v1997 = vld [vmem:[%s2 + $0x9e8] sm:$0xff]
  %v1998 = vld [vmem:[%s2 + $0x9f0] sm:$0xf]
  %v1999 = vld [vmem:[%s2 + $0x9f4] sm:$0xff]
  %v2000 = vld [vmem:[%s2 + $0x9fc] sm:$0xff]
  %v2001 = vld [vmem:[%s2 + $0xa04] sm:$0xff]
  %v2002 = vld [vmem:[%s2 + $0xa0c] sm:$0xf]
  %v2003 = vld [vmem:[%s2 + $0xa10] sm:$0xff]
  %v2004 = vld [vmem:[%s2 + $0xa18] sm:$0xff]
  %v2005 = vld [vmem:[%s2 + $0xa20] sm:$0xff]
  %v2006 = vld [vmem:[%s2 + $0xa28] sm:$0xf]
  %v2007 = vld [vmem:[%s2 + $0xa2c] sm:$0xff]
  %v2008 = vld [vmem:[%s2 + $0xa34] sm:$0xff]
  %v2009 = vld [vmem:[%s2 + $0xa3c] sm:$0xff]
  %v2010 = vld [vmem:[%s2 + $0xa44] sm:$0xf]
  %v2011 = vld [vmem:[%s2 + $0xa48] sm:$0xff]
  %v2012 = vld [vmem:[%s2 + $0xa50] sm:$0xff]
  %v2013 = vld [vmem:[%s2 + $0xa58] sm:$0xff]
  %v2014 = vld [vmem:[%s2 + $0xa60] sm:$0xf]
  %v2015 = vld [vmem:[%s2 + $0xa64] sm:$0xff]
  %v2016 = vld [vmem:[%s2 + $0xa6c] sm:$0xff]
  %v2017 = vld [vmem:[%s2 + $0xa74] sm:$0xff]
  %v2018 = vld [vmem:[%s2 + $0xa7c] sm:$0xf]
  %v2019 = vld [vmem:[%s2 + $0xa80] sm:$0xff]
  %v2020 = vld [vmem:[%s2 + $0xa88] sm:$0xff]
  %v2021 = vld [vmem:[%s2 + $0xa90] sm:$0xff]
  %v2022 = vld [vmem:[%s2 + $0xa98] sm:$0xf]
  %v2023 = vld [vmem:[%s2 + $0xa9c] sm:$0xff]
  %v2024 = vld [vmem:[%s2 + $0xaa4] sm:$0xff]
  %v2025 = vld [vmem:[%s2 + $0xaac] sm:$0xff]
  %v2026 = vld [vmem:[%s2 + $0xab4] sm:$0xf]
  %v2027 = vld [vmem:[%s2 + $0xab8] sm:$0xff]
  %v2028 = vld [vmem:[%s2 + $0xac0] sm:$0xff]
  %v2029 = vld [vmem:[%s2 + $0xac8] sm:$0xff]
  %v2030 = vld [vmem:[%s2 + $0xad0] sm:$0xf]
  %v2031 = vld [vmem:[%s2 + $0xad4] sm:$0xff]
  %v2032 = vld [vmem:[%s2 + $0xadc] sm:$0xff]
  %v2033 = vld [vmem:[%s2 + $0xae4] sm:$0xff]
  %v2034 = vld [vmem:[%s2 + $0xaec] sm:$0xf]
  %v2035 = vld [vmem:[%s2 + $0xaf0] sm:$0xff]
  %v2036 = vld [vmem:[%s2 + $0xaf8] sm:$0xff]
  %v2037 = vld [vmem:[%s2 + $0xb00] sm:$0xff]
  %v2038 = vld [vmem:[%s2 + $0xb08] sm:$0xf]
  %v2039 = vld [vmem:[%s2 + $0xb0c] sm:$0xff]
  %v2040 = vld [vmem:[%s2 + $0xb14] sm:$0xff]
  %v2041 = vld [vmem:[%s2 + $0xb1c] sm:$0xff]
  %v2042 = vld [vmem:[%s2 + $0xb24] sm:$0xf]
  %v2043 = vld [vmem:[%s2 + $0xb28] sm:$0xff]
  %v2044 = vld [vmem:[%s2 + $0xb30] sm:$0xff]
  %v2045 = vld [vmem:[%s2 + $0xb38] sm:$0xff]
  %v2046 = vld [vmem:[%s2 + $0xb40] sm:$0xf]
  %v2047 = vld [vmem:[%s2 + $0xb44] sm:$0xff]
  %v2048 = vld [vmem:[%s2 + $0xb4c] sm:$0xff]
  %v2049 = vld [vmem:[%s2 + $0xb54] sm:$0xff]
  %v2050 = vld [vmem:[%s2 + $0xb5c] sm:$0xf]
  %v2051 = vld [vmem:[%s2 + $0xb60] sm:$0xff]
  %v2052 = vld [vmem:[%s2 + $0xb68] sm:$0xff]
  %v2053 = vld [vmem:[%s2 + $0xb70] sm:$0xff]
  %v2054 = vld [vmem:[%s2 + $0xb78] sm:$0xf]
  %v2055 = vld [vmem:[%s2 + $0xb7c] sm:$0xff]
  %v2056 = vld [vmem:[%s2 + $0xb84] sm:$0xff]
  %v2057 = vld [vmem:[%s2 + $0xb8c] sm:$0xff]
  %v2058 = vld [vmem:[%s2 + $0xb94] sm:$0xf]
  %v2059 = vld [vmem:[%s2 + $0xb98] sm:$0xff]
  %v2060 = vld [vmem:[%s2 + $0xba0] sm:$0xff]
  %v2061 = vld [vmem:[%s2 + $0xba8] sm:$0xff]
  %v2062 = vld [vmem:[%s2 + $0xbb0] sm:$0xf]
  %v2063 = vld [vmem:[%s2 + $0xbb4] sm:$0xff]
  %v2064 = vld [vmem:[%s2 + $0xbbc] sm:$0xff]
  %v2065 = vld [vmem:[%s2 + $0xbc4] sm:$0xff]
  %v2066 = vld [vmem:[%s2 + $0xbcc] sm:$0xf]
  %v2067 = vld [vmem:[%s2 + $0xbd0] sm:$0xff]
  %v2068 = vld [vmem:[%s2 + $0xbd8] sm:$0xff]
  %v2069 = vld [vmem:[%s2 + $0xbe0] sm:$0xff]
  %v2070 = vld [vmem:[%s2 + $0xbe8] sm:$0xf]
  %v2071 = vld [vmem:[%s2 + $0xbec] sm:$0xff]
  %v2072 = vld [vmem:[%s2 + $0xbf4] sm:$0xff]
  %v2073 = vld [vmem:[%s2 + $0xbfc] sm:$0xff]
  %v2074 = vld [vmem:[%s2 + $0xc04] sm:$0xf]
  %v2075 = vld [vmem:[%s2 + $0xc08] sm:$0xff]
  %v2076 = vld [vmem:[%s2 + $0xc10] sm:$0xff]
  %v2077 = vld [vmem:[%s2 + $0xc18] sm:$0xff]
  %v2078 = vld [vmem:[%s2 + $0xc20] sm:$0xf]
  %v2523 = vunpack.c.l.b16 %v1635
  %v2524 = vunpack.c.h.b16 %v1635
  %v2525 = vunpack.c.l.b16 %v1636
  %v2526 = vunpack.c.h.b16 %v1636
  %v2527 = vunpack.c.l.b16 %v1637
  %v2528 = vunpack.c.h.b16 %v1637
  %v2529 = vunpack.c.l.b16 %v1638
  %v2530 = vunpack.c.l.b16 %v1639
  %v2531 = vunpack.c.h.b16 %v1639
  %v2532 = vunpack.c.l.b16 %v1640
  %v2533 = vunpack.c.h.b16 %v1640
  %v2534 = vunpack.c.l.b16 %v1641
  %v2535 = vunpack.c.h.b16 %v1641
  %v2536 = vunpack.c.l.b16 %v1642
  %v2537 = vunpack.c.l.b16 %v1643
  %v2538 = vunpack.c.h.b16 %v1643
  %v2539 = vunpack.c.l.b16 %v1644
  %v2540 = vunpack.c.h.b16 %v1644
  %v2541 = vunpack.c.l.b16 %v1645
  %v2542 = vunpack.c.h.b16 %v1645
  %v2543 = vunpack.c.l.b16 %v1646
  %v2544 = vunpack.c.l.b16 %v1647
  %v2545 = vunpack.c.h.b16 %v1647
  %v2546 = vunpack.c.l.b16 %v1648
  %v2547 = vunpack.c.h.b16 %v1648
  %v2548 = vunpack.c.l.b16 %v1649
  %v2549 = vunpack.c.h.b16 %v1649
  %v2550 = vunpack.c.l.b16 %v1650
  %v2551 = vunpack.c.l.b16 %v1651
  %v2552 = vunpack.c.h.b16 %v1651
  %v2553 = vunpack.c.l.b16 %v1652
  %v2554 = vunpack.c.h.b16 %v1652
  %v2555 = vunpack.c.l.b16 %v1653
  %v2556 = vunpack.c.h.b16 %v1653
  %v2557 = vunpack.c.l.b16 %v1654
  %v2558 = vunpack.c.l.b16 %v1655
  %v2559 = vunpack.c.h.b16 %v1655
  %v2560 = vunpack.c.l.b16 %v1656
  %v2561 = vunpack.c.h.b16 %v1656
  %v2562 = vunpack.c.l.b16 %v1657
  %v2563 = vunpack.c.h.b16 %v1657
  %v2564 = vunpack.c.l.b16 %v1658
  %v2565 = vunpack.c.l.b16 %v1659
  %v2566 = vunpack.c.h.b16 %v1659
  %v2567 = vunpack.c.l.b16 %v1660
  %v2568 = vunpack.c.h.b16 %v1660
  %v2569 = vunpack.c.l.b16 %v1661
  %v2570 = vunpack.c.h.b16 %v1661
  %v2571 = vunpack.c.l.b16 %v1662
  %v2572 = vunpack.c.l.b16 %v1663
  %v2573 = vunpack.c.h.b16 %v1663
  %v2574 = vunpack.c.l.b16 %v1664
  %v2575 = vunpack.c.h.b16 %v1664
  %v2576 = vunpack.c.l.b16 %v1665
  %v2577 = vunpack.c.h.b16 %v1665
  %v2578 = vunpack.c.l.b16 %v1666
  %v2579 = vunpack.c.l.b16 %v1667
  %v2580 = vunpack.c.h.b16 %v1667
  %v2581 = vunpack.c.l.b16 %v1668
  %v2582 = vunpack.c.h.b16 %v1668
  %v2583 = vunpack.c.l.b16 %v1669
  %v2584 = vunpack.c.h.b16 %v1669
  %v2585 = vunpack.c.l.b16 %v1670
  %v2586 = vunpack.c.l.b16 %v1671
  %v2587 = vunpack.c.h.b16 %v1671
  %v2588 = vunpack.c.l.b16 %v1672
  %v2589 = vunpack.c.h.b16 %v1672
  %v2590 = vunpack.c.l.b16 %v1673
  %v2591 = vunpack.c.h.b16 %v1673
  %v2592 = vunpack.c.l.b16 %v1674
  %v2593 = vunpack.c.l.b16 %v1675
  %v2594 = vunpack.c.h.b16 %v1675
  %v2595 = vunpack.c.l.b16 %v1676
  %v2596 = vunpack.c.h.b16 %v1676
  %v2597 = vunpack.c.l.b16 %v1677
  %v2598 = vunpack.c.h.b16 %v1677
  %v2599 = vunpack.c.l.b16 %v1678
  %v2600 = vunpack.c.l.b16 %v1679
  %v2601 = vunpack.c.h.b16 %v1679
  %v2602 = vunpack.c.l.b16 %v1680
  %v2603 = vunpack.c.h.b16 %v1680
  %v2604 = vunpack.c.l.b16 %v1681
  %v2605 = vunpack.c.h.b16 %v1681
  %v2606 = vunpack.c.l.b16 %v1682
  %v2607 = vunpack.c.l.b16 %v1683
  %v2608 = vunpack.c.h.b16 %v1683
  %v2609 = vunpack.c.l.b16 %v1684
  %v2610 = vunpack.c.h.b16 %v1684
  %v2611 = vunpack.c.l.b16 %v1685
  %v2612 = vunpack.c.h.b16 %v1685
  %v2613 = vunpack.c.l.b16 %v1686
  %v2614 = vunpack.c.l.b16 %v1687
  %v2615 = vunpack.c.h.b16 %v1687
  %v2616 = vunpack.c.l.b16 %v1688
  %v2617 = vunpack.c.h.b16 %v1688
  %v2618 = vunpack.c.l.b16 %v1689
  %v2619 = vunpack.c.h.b16 %v1689
  %v2620 = vunpack.c.l.b16 %v1690
  %v2621 = vunpack.c.l.b16 %v1691
  %v2622 = vunpack.c.h.b16 %v1691
  %v2623 = vunpack.c.l.b16 %v1692
  %v2624 = vunpack.c.h.b16 %v1692
  %v2625 = vunpack.c.l.b16 %v1693
  %v2626 = vunpack.c.h.b16 %v1693
  %v2627 = vunpack.c.l.b16 %v1694
  %v2628 = vunpack.c.l.b16 %v1695
  %v2629 = vunpack.c.h.b16 %v1695
  %v2630 = vunpack.c.l.b16 %v1696
  %v2631 = vunpack.c.h.b16 %v1696
  %v2632 = vunpack.c.l.b16 %v1697
  %v2633 = vunpack.c.h.b16 %v1697
  %v2634 = vunpack.c.l.b16 %v1698
  %v2635 = vunpack.c.l.b16 %v1699
  %v2636 = vunpack.c.h.b16 %v1699
  %v2637 = vunpack.c.l.b16 %v1700
  %v2638 = vunpack.c.h.b16 %v1700
  %v2639 = vunpack.c.l.b16 %v1701
  %v2640 = vunpack.c.h.b16 %v1701
  %v2641 = vunpack.c.l.b16 %v1702
  %v2642 = vunpack.c.l.b16 %v1703
  %v2643 = vunpack.c.h.b16 %v1703
  %v2644 = vunpack.c.l.b16 %v1704
  %v2645 = vunpack.c.h.b16 %v1704
  %v2646 = vunpack.c.l.b16 %v1705
  %v2647 = vunpack.c.h.b16 %v1705
  %v2648 = vunpack.c.l.b16 %v1706
  %v2649 = vunpack.c.l.b16 %v1707
  %v2650 = vunpack.c.h.b16 %v1707
  %v2651 = vunpack.c.l.b16 %v1708
  %v2652 = vunpack.c.h.b16 %v1708
  %v2653 = vunpack.c.l.b16 %v1709
  %v2654 = vunpack.c.h.b16 %v1709
  %v2655 = vunpack.c.l.b16 %v1710
  %v2656 = vunpack.c.l.b16 %v1711
  %v2657 = vunpack.c.h.b16 %v1711
  %v2658 = vunpack.c.l.b16 %v1712
  %v2659 = vunpack.c.h.b16 %v1712
  %v2660 = vunpack.c.l.b16 %v1713
  %v2661 = vunpack.c.h.b16 %v1713
  %v2662 = vunpack.c.l.b16 %v1714
  %v2663 = vunpack.c.l.b16 %v1715
  %v2664 = vunpack.c.h.b16 %v1715
  %v2665 = vunpack.c.l.b16 %v1716
  %v2666 = vunpack.c.h.b16 %v1716
  %v2667 = vunpack.c.l.b16 %v1717
  %v2668 = vunpack.c.h.b16 %v1717
  %v2669 = vunpack.c.l.b16 %v1718
  %v2670 = vunpack.c.l.b16 %v1719
  %v2671 = vunpack.c.h.b16 %v1719
  %v2672 = vunpack.c.l.b16 %v1720
  %v2673 = vunpack.c.h.b16 %v1720
  %v2674 = vunpack.c.l.b16 %v1721
  %v2675 = vunpack.c.h.b16 %v1721
  %v2676 = vunpack.c.l.b16 %v1722
  %v2677 = vunpack.c.l.b16 %v1723
  %v2678 = vunpack.c.h.b16 %v1723
  %v2679 = vunpack.c.l.b16 %v1724
  %v2680 = vunpack.c.h.b16 %v1724
  %v2681 = vunpack.c.l.b16 %v1725
  %v2682 = vunpack.c.h.b16 %v1725
  %v2683 = vunpack.c.l.b16 %v1726
  %v2684 = vunpack.c.l.b16 %v1727
  %v2685 = vunpack.c.h.b16 %v1727
  %v2686 = vunpack.c.l.b16 %v1728
  %v2687 = vunpack.c.h.b16 %v1728
  %v2688 = vunpack.c.l.b16 %v1729
  %v2689 = vunpack.c.h.b16 %v1729
  %v2690 = vunpack.c.l.b16 %v1730
  %v2691 = vunpack.c.l.b16 %v1731
  %v2692 = vunpack.c.h.b16 %v1731
  %v2693 = vunpack.c.l.b16 %v1732
  %v2694 = vunpack.c.h.b16 %v1732
  %v2695 = vunpack.c.l.b16 %v1733
  %v2696 = vunpack.c.h.b16 %v1733
  %v2697 = vunpack.c.l.b16 %v1734
  %v2698 = vunpack.c.l.b16 %v1735
  %v2699 = vunpack.c.h.b16 %v1735
  %v2700 = vunpack.c.l.b16 %v1736
  %v2701 = vunpack.c.h.b16 %v1736
  %v2702 = vunpack.c.l.b16 %v1737
  %v2703 = vunpack.c.h.b16 %v1737
  %v2704 = vunpack.c.l.b16 %v1738
  %v2705 = vunpack.c.l.b16 %v1739
  %v2706 = vunpack.c.h.b16 %v1739
  %v2707 = vunpack.c.l.b16 %v1740
  %v2708 = vunpack.c.h.b16 %v1740
  %v2709 = vunpack.c.l.b16 %v1741
  %v2710 = vunpack.c.h.b16 %v1741
  %v2711 = vunpack.c.l.b16 %v1742
  %v2712 = vunpack.c.l.b16 %v1743
  %v2713 = vunpack.c.h.b16 %v1743
  %v2714 = vunpack.c.l.b16 %v1744
  %v2715 = vunpack.c.h.b16 %v1744
  %v2716 = vunpack.c.l.b16 %v1745
  %v2717 = vunpack.c.h.b16 %v1745
  %v2718 = vunpack.c.l.b16 %v1746
  %v2719 = vunpack.c.l.b16 %v1747
  %v2720 = vunpack.c.h.b16 %v1747
  %v2721 = vunpack.c.l.b16 %v1748
  %v2722 = vunpack.c.h.b16 %v1748
  %v2723 = vunpack.c.l.b16 %v1749
  %v2724 = vunpack.c.h.b16 %v1749
  %v2725 = vunpack.c.l.b16 %v1750
  %v2726 = vunpack.c.l.b16 %v1751
  %v2727 = vunpack.c.h.b16 %v1751
  %v2728 = vunpack.c.l.b16 %v1752
  %v2729 = vunpack.c.h.b16 %v1752
  %v2730 = vunpack.c.l.b16 %v1753
  %v2731 = vunpack.c.h.b16 %v1753
  %v2732 = vunpack.c.l.b16 %v1754
  %v2733 = vunpack.c.l.b16 %v1755
  %v2734 = vunpack.c.h.b16 %v1755
  %v2735 = vunpack.c.l.b16 %v1756
  %v2736 = vunpack.c.h.b16 %v1756
  %v2737 = vunpack.c.l.b16 %v1757
  %v2738 = vunpack.c.h.b16 %v1757
  %v2739 = vunpack.c.l.b16 %v1758
  %v2740 = vunpack.c.l.b16 %v1759
  %v2741 = vunpack.c.h.b16 %v1759
  %v2742 = vunpack.c.l.b16 %v1760
  %v2743 = vunpack.c.h.b16 %v1760
  %v2744 = vunpack.c.l.b16 %v1761
  %v2745 = vunpack.c.h.b16 %v1761
  %v2746 = vunpack.c.l.b16 %v1762
  %v2747 = vunpack.c.l.b16 %v1763
  %v2748 = vunpack.c.h.b16 %v1763
  %v2749 = vunpack.c.l.b16 %v1764
  %v2750 = vunpack.c.h.b16 %v1764
  %v2751 = vunpack.c.l.b16 %v1765
  %v2752 = vunpack.c.h.b16 %v1765
  %v2753 = vunpack.c.l.b16 %v1766
  %v2754 = vunpack.c.l.b16 %v1767
  %v2755 = vunpack.c.h.b16 %v1767
  %v2756 = vunpack.c.l.b16 %v1768
  %v2757 = vunpack.c.h.b16 %v1768
  %v2758 = vunpack.c.l.b16 %v1769
  %v2759 = vunpack.c.h.b16 %v1769
  %v2760 = vunpack.c.l.b16 %v1770
  %v2761 = vunpack.c.l.b16 %v1771
  %v2762 = vunpack.c.h.b16 %v1771
  %v2763 = vunpack.c.l.b16 %v1772
  %v2764 = vunpack.c.h.b16 %v1772
  %v2765 = vunpack.c.l.b16 %v1773
  %v2766 = vunpack.c.h.b16 %v1773
  %v2767 = vunpack.c.l.b16 %v1774
  %v2768 = vunpack.c.l.b16 %v1775
  %v2769 = vunpack.c.h.b16 %v1775
  %v2770 = vunpack.c.l.b16 %v1776
  %v2771 = vunpack.c.h.b16 %v1776
  %v2772 = vunpack.c.l.b16 %v1777
  %v2773 = vunpack.c.h.b16 %v1777
  %v2774 = vunpack.c.l.b16 %v1778
  %v2775 = vunpack.c.l.b16 %v1779
  %v2776 = vunpack.c.h.b16 %v1779
  %v2777 = vunpack.c.l.b16 %v1780
  %v2778 = vunpack.c.h.b16 %v1780
  %v2779 = vunpack.c.l.b16 %v1781
  %v2780 = vunpack.c.h.b16 %v1781
  %v2781 = vunpack.c.l.b16 %v1782
  %v2782 = vunpack.c.l.b16 %v1783
  %v2783 = vunpack.c.h.b16 %v1783
  %v2784 = vunpack.c.l.b16 %v1784
  %v2785 = vunpack.c.h.b16 %v1784
  %v2786 = vunpack.c.l.b16 %v1785
  %v2787 = vunpack.c.h.b16 %v1785
  %v2788 = vunpack.c.l.b16 %v1786
  %v2789 = vunpack.c.l.b16 %v1787
  %v2790 = vunpack.c.h.b16 %v1787
  %v2791 = vunpack.c.l.b16 %v1788
  %v2792 = vunpack.c.h.b16 %v1788
  %v2793 = vunpack.c.l.b16 %v1789
  %v2794 = vunpack.c.h.b16 %v1789
  %v2795 = vunpack.c.l.b16 %v1790
  %v2796 = vunpack.c.l.b16 %v1791
  %v2797 = vunpack.c.h.b16 %v1791
  %v2798 = vunpack.c.l.b16 %v1792
  %v2799 = vunpack.c.h.b16 %v1792
  %v2800 = vunpack.c.l.b16 %v1793
  %v2801 = vunpack.c.h.b16 %v1793
  %v2802 = vunpack.c.l.b16 %v1794
  %v2803 = vunpack.c.l.b16 %v1795
  %v2804 = vunpack.c.h.b16 %v1795
  %v2805 = vunpack.c.l.b16 %v1796
  %v2806 = vunpack.c.h.b16 %v1796
  %v2807 = vunpack.c.l.b16 %v1797
  %v2808 = vunpack.c.h.b16 %v1797
  %v2809 = vunpack.c.l.b16 %v1798
  %v2810 = vunpack.c.l.b16 %v1799
  %v2811 = vunpack.c.h.b16 %v1799
  %v2812 = vunpack.c.l.b16 %v1800
  %v2813 = vunpack.c.h.b16 %v1800
  %v2814 = vunpack.c.l.b16 %v1801
  %v2815 = vunpack.c.h.b16 %v1801
  %v2816 = vunpack.c.l.b16 %v1802
  %v2817 = vunpack.c.l.b16 %v1803
  %v2818 = vunpack.c.h.b16 %v1803
  %v2819 = vunpack.c.l.b16 %v1804
  %v2820 = vunpack.c.h.b16 %v1804
  %v2821 = vunpack.c.l.b16 %v1805
  %v2822 = vunpack.c.h.b16 %v1805
  %v2823 = vunpack.c.l.b16 %v1806
  %v2824 = vunpack.c.l.b16 %v1807
  %v2825 = vunpack.c.h.b16 %v1807
  %v2826 = vunpack.c.l.b16 %v1808
  %v2827 = vunpack.c.h.b16 %v1808
  %v2828 = vunpack.c.l.b16 %v1809
  %v2829 = vunpack.c.h.b16 %v1809
  %v2830 = vunpack.c.l.b16 %v1810
  %v2831 = vunpack.c.l.b16 %v1811
  %v2832 = vunpack.c.h.b16 %v1811
  %v2833 = vunpack.c.l.b16 %v1812
  %v2834 = vunpack.c.h.b16 %v1812
  %v2835 = vunpack.c.l.b16 %v1813
  %v2836 = vunpack.c.h.b16 %v1813
  %v2837 = vunpack.c.l.b16 %v1814
  %v2838 = vunpack.c.l.b16 %v1815
  %v2839 = vunpack.c.h.b16 %v1815
  %v2840 = vunpack.c.l.b16 %v1816
  %v2841 = vunpack.c.h.b16 %v1816
  %v2842 = vunpack.c.l.b16 %v1817
  %v2843 = vunpack.c.h.b16 %v1817
  %v2844 = vunpack.c.l.b16 %v1818
  %v2845 = vunpack.c.l.b16 %v1819
  %v2846 = vunpack.c.h.b16 %v1819
  %v2847 = vunpack.c.l.b16 %v1820
  %v2848 = vunpack.c.h.b16 %v1820
  %v2849 = vunpack.c.l.b16 %v1821
  %v2850 = vunpack.c.h.b16 %v1821
  %v2851 = vunpack.c.l.b16 %v1822
  %v2852 = vunpack.c.l.b16 %v1823
  %v2853 = vunpack.c.h.b16 %v1823
  %v2854 = vunpack.c.l.b16 %v1824
  %v2855 = vunpack.c.h.b16 %v1824
  %v2856 = vunpack.c.l.b16 %v1825
  %v2857 = vunpack.c.h.b16 %v1825
  %v2858 = vunpack.c.l.b16 %v1826
  %v2859 = vunpack.c.l.b16 %v1827
  %v2860 = vunpack.c.h.b16 %v1827
  %v2861 = vunpack.c.l.b16 %v1828
  %v2862 = vunpack.c.h.b16 %v1828
  %v2863 = vunpack.c.l.b16 %v1829
  %v2864 = vunpack.c.h.b16 %v1829
  %v2865 = vunpack.c.l.b16 %v1830
  %v2866 = vunpack.c.l.b16 %v1831
  %v2867 = vunpack.c.h.b16 %v1831
  %v2868 = vunpack.c.l.b16 %v1832
  %v2869 = vunpack.c.h.b16 %v1832
  %v2870 = vunpack.c.l.b16 %v1833
  %v2871 = vunpack.c.h.b16 %v1833
  %v2872 = vunpack.c.l.b16 %v1834
  %v2873 = vunpack.c.l.b16 %v1835
  %v2874 = vunpack.c.h.b16 %v1835
  %v2875 = vunpack.c.l.b16 %v1836
  %v2876 = vunpack.c.h.b16 %v1836
  %v2877 = vunpack.c.l.b16 %v1837
  %v2878 = vunpack.c.h.b16 %v1837
  %v2879 = vunpack.c.l.b16 %v1838
  %v2880 = vunpack.c.l.b16 %v1839
  %v2881 = vunpack.c.h.b16 %v1839
  %v2882 = vunpack.c.l.b16 %v1840
  %v2883 = vunpack.c.h.b16 %v1840
  %v2884 = vunpack.c.l.b16 %v1841
  %v2885 = vunpack.c.h.b16 %v1841
  %v2886 = vunpack.c.l.b16 %v1842
  %v2887 = vunpack.c.l.b16 %v1843
  %v2888 = vunpack.c.h.b16 %v1843
  %v2889 = vunpack.c.l.b16 %v1844
  %v2890 = vunpack.c.h.b16 %v1844
  %v2891 = vunpack.c.l.b16 %v1845
  %v2892 = vunpack.c.h.b16 %v1845
  %v2893 = vunpack.c.l.b16 %v1846
  %v2894 = vunpack.c.l.b16 %v1847
  %v2895 = vunpack.c.h.b16 %v1847
  %v2896 = vunpack.c.l.b16 %v1848
  %v2897 = vunpack.c.h.b16 %v1848
  %v2898 = vunpack.c.l.b16 %v1849
  %v2899 = vunpack.c.h.b16 %v1849
  %v2900 = vunpack.c.l.b16 %v1850
  %v2901 = vunpack.c.l.b16 %v1851
  %v2902 = vunpack.c.h.b16 %v1851
  %v2903 = vunpack.c.l.b16 %v1852
  %v2904 = vunpack.c.h.b16 %v1852
  %v2905 = vunpack.c.l.b16 %v1853
  %v2906 = vunpack.c.h.b16 %v1853
  %v2907 = vunpack.c.l.b16 %v1854
  %v2908 = vunpack.c.l.b16 %v1855
  %v2909 = vunpack.c.h.b16 %v1855
  %v2910 = vunpack.c.l.b16 %v1856
  %v2911 = vunpack.c.h.b16 %v1856
  %v2912 = vunpack.c.l.b16 %v1857
  %v2913 = vunpack.c.h.b16 %v1857
  %v2914 = vunpack.c.l.b16 %v1858
  %v2915 = vunpack.c.l.b16 %v1859
  %v2916 = vunpack.c.h.b16 %v1859
  %v2917 = vunpack.c.l.b16 %v1860
  %v2918 = vunpack.c.h.b16 %v1860
  %v2919 = vunpack.c.l.b16 %v1861
  %v2920 = vunpack.c.h.b16 %v1861
  %v2921 = vunpack.c.l.b16 %v1862
  %v2922 = vunpack.c.l.b16 %v1863
  %v2923 = vunpack.c.h.b16 %v1863
  %v2924 = vunpack.c.l.b16 %v1864
  %v2925 = vunpack.c.h.b16 %v1864
  %v2926 = vunpack.c.l.b16 %v1865
  %v2927 = vunpack.c.h.b16 %v1865
  %v2928 = vunpack.c.l.b16 %v1866
  %v2929 = vunpack.c.l.b16 %v1867
  %v2930 = vunpack.c.h.b16 %v1867
  %v2931 = vunpack.c.l.b16 %v1868
  %v2932 = vunpack.c.h.b16 %v1868
  %v2933 = vunpack.c.l.b16 %v1869
  %v2934 = vunpack.c.h.b16 %v1869
  %v2935 = vunpack.c.l.b16 %v1870
  %v2936 = vunpack.c.l.b16 %v1871
  %v2937 = vunpack.c.h.b16 %v1871
  %v2938 = vunpack.c.l.b16 %v1872
  %v2939 = vunpack.c.h.b16 %v1872
  %v2940 = vunpack.c.l.b16 %v1873
  %v2941 = vunpack.c.h.b16 %v1873
  %v2942 = vunpack.c.l.b16 %v1874
  %v2943 = vunpack.c.l.b16 %v1875
  %v2944 = vunpack.c.h.b16 %v1875
  %v2945 = vunpack.c.l.b16 %v1876
  %v2946 = vunpack.c.h.b16 %v1876
  %v2947 = vunpack.c.l.b16 %v1877
  %v2948 = vunpack.c.h.b16 %v1877
  %v2949 = vunpack.c.l.b16 %v1878
  %v2950 = vunpack.c.l.b16 %v1879
  %v2951 = vunpack.c.h.b16 %v1879
  %v2952 = vunpack.c.l.b16 %v1880
  %v2953 = vunpack.c.h.b16 %v1880
  %v2954 = vunpack.c.l.b16 %v1881
  %v2955 = vunpack.c.h.b16 %v1881
  %v2956 = vunpack.c.l.b16 %v1882
  %v2957 = vunpack.c.l.b16 %v1883
  %v2958 = vunpack.c.h.b16 %v1883
  %v2959 = vunpack.c.l.b16 %v1884
  %v2960 = vunpack.c.h.b16 %v1884
  %v2961 = vunpack.c.l.b16 %v1885
  %v2962 = vunpack.c.h.b16 %v1885
  %v2963 = vunpack.c.l.b16 %v1886
  %v2964 = vunpack.c.l.b16 %v1887
  %v2965 = vunpack.c.h.b16 %v1887
  %v2966 = vunpack.c.l.b16 %v1888
  %v2967 = vunpack.c.h.b16 %v1888
  %v2968 = vunpack.c.l.b16 %v1889
  %v2969 = vunpack.c.h.b16 %v1889
  %v2970 = vunpack.c.l.b16 %v1890
  %v2971 = vunpack.c.l.b16 %v1891
  %v2972 = vunpack.c.h.b16 %v1891
  %v2973 = vunpack.c.l.b16 %v1892
  %v2974 = vunpack.c.h.b16 %v1892
  %v2975 = vunpack.c.l.b16 %v1893
  %v2976 = vunpack.c.h.b16 %v1893
  %v2977 = vunpack.c.l.b16 %v1894
  %v2978 = vunpack.c.l.b16 %v1895
  %v2979 = vunpack.c.h.b16 %v1895
  %v2980 = vunpack.c.l.b16 %v1896
  %v2981 = vunpack.c.h.b16 %v1896
  %v2982 = vunpack.c.l.b16 %v1897
  %v2983 = vunpack.c.h.b16 %v1897
  %v2984 = vunpack.c.l.b16 %v1898
  %v2985 = vunpack.c.l.b16 %v1899
  %v2986 = vunpack.c.h.b16 %v1899
  %v2987 = vunpack.c.l.b16 %v1900
  %v2988 = vunpack.c.h.b16 %v1900
  %v2989 = vunpack.c.l.b16 %v1901
  %v2990 = vunpack.c.h.b16 %v1901
  %v2991 = vunpack.c.l.b16 %v1902
  %v2992 = vunpack.c.l.b16 %v1903
  %v2993 = vunpack.c.h.b16 %v1903
  %v2994 = vunpack.c.l.b16 %v1904
  %v2995 = vunpack.c.h.b16 %v1904
  %v2996 = vunpack.c.l.b16 %v1905
  %v2997 = vunpack.c.h.b16 %v1905
  %v2998 = vunpack.c.l.b16 %v1906
  %v2999 = vunpack.c.l.b16 %v1907
  %v3000 = vunpack.c.h.b16 %v1907
  %v3001 = vunpack.c.l.b16 %v1908
  %v3002 = vunpack.c.h.b16 %v1908
  %v3003 = vunpack.c.l.b16 %v1909
  %v3004 = vunpack.c.h.b16 %v1909
  %v3005 = vunpack.c.l.b16 %v1910
  %v3006 = vunpack.c.l.b16 %v1911
  %v3007 = vunpack.c.h.b16 %v1911
  %v3008 = vunpack.c.l.b16 %v1912
  %v3009 = vunpack.c.h.b16 %v1912
  %v3010 = vunpack.c.l.b16 %v1913
  %v3011 = vunpack.c.h.b16 %v1913
  %v3012 = vunpack.c.l.b16 %v1914
  %v3013 = vunpack.c.l.b16 %v1915
  %v3014 = vunpack.c.h.b16 %v1915
  %v3015 = vunpack.c.l.b16 %v1916
  %v3016 = vunpack.c.h.b16 %v1916
  %v3017 = vunpack.c.l.b16 %v1917
  %v3018 = vunpack.c.h.b16 %v1917
  %v3019 = vunpack.c.l.b16 %v1918
  %v3020 = vunpack.c.l.b16 %v1919
  %v3021 = vunpack.c.h.b16 %v1919
  %v3022 = vunpack.c.l.b16 %v1920
  %v3023 = vunpack.c.h.b16 %v1920
  %v3024 = vunpack.c.l.b16 %v1921
  %v3025 = vunpack.c.h.b16 %v1921
  %v3026 = vunpack.c.l.b16 %v1922
  %v3027 = vunpack.c.l.b16 %v1923
  %v3028 = vunpack.c.h.b16 %v1923
  %v3029 = vunpack.c.l.b16 %v1924
  %v3030 = vunpack.c.h.b16 %v1924
  %v3031 = vunpack.c.l.b16 %v1925
  %v3032 = vunpack.c.h.b16 %v1925
  %v3033 = vunpack.c.l.b16 %v1926
  %v3034 = vunpack.c.l.b16 %v1927
  %v3035 = vunpack.c.h.b16 %v1927
  %v3036 = vunpack.c.l.b16 %v1928
  %v3037 = vunpack.c.h.b16 %v1928
  %v3038 = vunpack.c.l.b16 %v1929
  %v3039 = vunpack.c.h.b16 %v1929
  %v3040 = vunpack.c.l.b16 %v1930
  %v3041 = vunpack.c.l.b16 %v1931
  %v3042 = vunpack.c.h.b16 %v1931
  %v3043 = vunpack.c.l.b16 %v1932
  %v3044 = vunpack.c.h.b16 %v1932
  %v3045 = vunpack.c.l.b16 %v1933
  %v3046 = vunpack.c.h.b16 %v1933
  %v3047 = vunpack.c.l.b16 %v1934
  %v3048 = vunpack.c.l.b16 %v1935
  %v3049 = vunpack.c.h.b16 %v1935
  %v3050 = vunpack.c.l.b16 %v1936
  %v3051 = vunpack.c.h.b16 %v1936
  %v3052 = vunpack.c.l.b16 %v1937
  %v3053 = vunpack.c.h.b16 %v1937
  %v3054 = vunpack.c.l.b16 %v1938
  %v3055 = vunpack.c.l.b16 %v1939
  %v3056 = vunpack.c.h.b16 %v1939
  %v3057 = vunpack.c.l.b16 %v1940
  %v3058 = vunpack.c.h.b16 %v1940
  %v3059 = vunpack.c.l.b16 %v1941
  %v3060 = vunpack.c.h.b16 %v1941
  %v3061 = vunpack.c.l.b16 %v1942
  %v3062 = vunpack.c.l.b16 %v1943
  %v3063 = vunpack.c.h.b16 %v1943
  %v3064 = vunpack.c.l.b16 %v1944
  %v3065 = vunpack.c.h.b16 %v1944
  %v3066 = vunpack.c.l.b16 %v1945
  %v3067 = vunpack.c.h.b16 %v1945
  %v3068 = vunpack.c.l.b16 %v1946
  %v3069 = vunpack.c.l.b16 %v1947
  %v3070 = vunpack.c.h.b16 %v1947
  %v3071 = vunpack.c.l.b16 %v1948
  %v3072 = vunpack.c.h.b16 %v1948
  %v3073 = vunpack.c.l.b16 %v1949
  %v3074 = vunpack.c.h.b16 %v1949
  %v3075 = vunpack.c.l.b16 %v1950
  %v3076 = vunpack.c.l.b16 %v1951
  %v3077 = vunpack.c.h.b16 %v1951
  %v3078 = vunpack.c.l.b16 %v1952
  %v3079 = vunpack.c.h.b16 %v1952
  %v3080 = vunpack.c.l.b16 %v1953
  %v3081 = vunpack.c.h.b16 %v1953
  %v3082 = vunpack.c.l.b16 %v1954
  %v3083 = vunpack.c.l.b16 %v1955
  %v3084 = vunpack.c.h.b16 %v1955
  %v3085 = vunpack.c.l.b16 %v1956
  %v3086 = vunpack.c.h.b16 %v1956
  %v3087 = vunpack.c.l.b16 %v1957
  %v3088 = vunpack.c.h.b16 %v1957
  %v3089 = vunpack.c.l.b16 %v1958
  %v3090 = vunpack.c.l.b16 %v1959
  %v3091 = vunpack.c.h.b16 %v1959
  %v3092 = vunpack.c.l.b16 %v1960
  %v3093 = vunpack.c.h.b16 %v1960
  %v3094 = vunpack.c.l.b16 %v1961
  %v3095 = vunpack.c.h.b16 %v1961
  %v3096 = vunpack.c.l.b16 %v1962
  %v3097 = vunpack.c.l.b16 %v1963
  %v3098 = vunpack.c.h.b16 %v1963
  %v3099 = vunpack.c.l.b16 %v1964
  %v3100 = vunpack.c.h.b16 %v1964
  %v3101 = vunpack.c.l.b16 %v1965
  %v3102 = vunpack.c.h.b16 %v1965
  %v3103 = vunpack.c.l.b16 %v1966
  %v3104 = vunpack.c.l.b16 %v1967
  %v3105 = vunpack.c.h.b16 %v1967
  %v3106 = vunpack.c.l.b16 %v1968
  %v3107 = vunpack.c.h.b16 %v1968
  %v3108 = vunpack.c.l.b16 %v1969
  %v3109 = vunpack.c.h.b16 %v1969
  %v3110 = vunpack.c.l.b16 %v1970
  %v3111 = vunpack.c.l.b16 %v1971
  %v3112 = vunpack.c.h.b16 %v1971
  %v3113 = vunpack.c.l.b16 %v1972
  %v3114 = vunpack.c.h.b16 %v1972
  %v3115 = vunpack.c.l.b16 %v1973
  %v3116 = vunpack.c.h.b16 %v1973
  %v3117 = vunpack.c.l.b16 %v1974
  %v3118 = vunpack.c.l.b16 %v1975
  %v3119 = vunpack.c.h.b16 %v1975
  %v3120 = vunpack.c.l.b16 %v1976
  %v3121 = vunpack.c.h.b16 %v1976
  %v3122 = vunpack.c.l.b16 %v1977
  %v3123 = vunpack.c.h.b16 %v1977
  %v3124 = vunpack.c.l.b16 %v1978
  %v3125 = vunpack.c.l.b16 %v1979
  %v3126 = vunpack.c.h.b16 %v1979
  %v3127 = vunpack.c.l.b16 %v1980
  %v3128 = vunpack.c.h.b16 %v1980
  %v3129 = vunpack.c.l.b16 %v1981
  %v3130 = vunpack.c.h.b16 %v1981
  %v3131 = vunpack.c.l.b16 %v1982
  %v3132 = vunpack.c.l.b16 %v1983
  %v3133 = vunpack.c.h.b16 %v1983
  %v3134 = vunpack.c.l.b16 %v1984
  %v3135 = vunpack.c.h.b16 %v1984
  %v3136 = vunpack.c.l.b16 %v1985
  %v3137 = vunpack.c.h.b16 %v1985
  %v3138 = vunpack.c.l.b16 %v1986
  %v3139 = vunpack.c.l.b16 %v1987
  %v3140 = vunpack.c.h.b16 %v1987
  %v3141 = vunpack.c.l.b16 %v1988
  %v3142 = vunpack.c.h.b16 %v1988
  %v3143 = vunpack.c.l.b16 %v1989
  %v3144 = vunpack.c.h.b16 %v1989
  %v3145 = vunpack.c.l.b16 %v1990
  %v3146 = vunpack.c.l.b16 %v1991
  %v3147 = vunpack.c.h.b16 %v1991
  %v3148 = vunpack.c.l.b16 %v1992
  %v3149 = vunpack.c.h.b16 %v1992
  %v3150 = vunpack.c.l.b16 %v1993
  %v3151 = vunpack.c.h.b16 %v1993
  %v3152 = vunpack.c.l.b16 %v1994
  %v3153 = vunpack.c.l.b16 %v1995
  %v3154 = vunpack.c.h.b16 %v1995
  %v3155 = vunpack.c.l.b16 %v1996
  %v3156 = vunpack.c.h.b16 %v1996
  %v3157 = vunpack.c.l.b16 %v1997
  %v3158 = vunpack.c.h.b16 %v1997
  %v3159 = vunpack.c.l.b16 %v1998
  %v3160 = vunpack.c.l.b16 %v1999
  %v3161 = vunpack.c.h.b16 %v1999
  %v3162 = vunpack.c.l.b16 %v2000
  %v3163 = vunpack.c.h.b16 %v2000
  %v3164 = vunpack.c.l.b16 %v2001
  %v3165 = vunpack.c.h.b16 %v2001
  %v3166 = vunpack.c.l.b16 %v2002
  %v3167 = vunpack.c.l.b16 %v2003
  %v3168 = vunpack.c.h.b16 %v2003
  %v3169 = vunpack.c.l.b16 %v2004
  %v3170 = vunpack.c.h.b16 %v2004
  %v3171 = vunpack.c.l.b16 %v2005
  %v3172 = vunpack.c.h.b16 %v2005
  %v3173 = vunpack.c.l.b16 %v2006
  %v3174 = vunpack.c.l.b16 %v2007
  %v3175 = vunpack.c.h.b16 %v2007
  %v3176 = vunpack.c.l.b16 %v2008
  %v3177 = vunpack.c.h.b16 %v2008
  %v3178 = vunpack.c.l.b16 %v2009
  %v3179 = vunpack.c.h.b16 %v2009
  %v3180 = vunpack.c.l.b16 %v2010
  %v3181 = vunpack.c.l.b16 %v2011
  %v3182 = vunpack.c.h.b16 %v2011
  %v3183 = vunpack.c.l.b16 %v2012
  %v3184 = vunpack.c.h.b16 %v2012
  %v3185 = vunpack.c.l.b16 %v2013
  %v3186 = vunpack.c.h.b16 %v2013
  %v3187 = vunpack.c.l.b16 %v2014
  %v3188 = vunpack.c.l.b16 %v2015
  %v3189 = vunpack.c.h.b16 %v2015
  %v3190 = vunpack.c.l.b16 %v2016
  %v3191 = vunpack.c.h.b16 %v2016
  %v3192 = vunpack.c.l.b16 %v2017
  %v3193 = vunpack.c.h.b16 %v2017
  %v3194 = vunpack.c.l.b16 %v2018
  %v3195 = vunpack.c.l.b16 %v2019
  %v3196 = vunpack.c.h.b16 %v2019
  %v3197 = vunpack.c.l.b16 %v2020
  %v3198 = vunpack.c.h.b16 %v2020
  %v3199 = vunpack.c.l.b16 %v2021
  %v3200 = vunpack.c.h.b16 %v2021
  %v3201 = vunpack.c.l.b16 %v2022
  %v3202 = vunpack.c.l.b16 %v2023
  %v3203 = vunpack.c.h.b16 %v2023
  %v3204 = vunpack.c.l.b16 %v2024
  %v3205 = vunpack.c.h.b16 %v2024
  %v3206 = vunpack.c.l.b16 %v2025
  %v3207 = vunpack.c.h.b16 %v2025
  %v3208 = vunpack.c.l.b16 %v2026
  %v3209 = vunpack.c.l.b16 %v2027
  %v3210 = vunpack.c.h.b16 %v2027
  %v3211 = vunpack.c.l.b16 %v2028
  %v3212 = vunpack.c.h.b16 %v2028
  %v3213 = vunpack.c.l.b16 %v2029
  %v3214 = vunpack.c.h.b16 %v2029
  %v3215 = vunpack.c.l.b16 %v2030
  %v3216 = vunpack.c.l.b16 %v2031
  %v3217 = vunpack.c.h.b16 %v2031
  %v3218 = vunpack.c.l.b16 %v2032
  %v3219 = vunpack.c.h.b16 %v2032
  %v3220 = vunpack.c.l.b16 %v2033
  %v3221 = vunpack.c.h.b16 %v2033
  %v3222 = vunpack.c.l.b16 %v2034
  %v3223 = vunpack.c.l.b16 %v2035
  %v3224 = vunpack.c.h.b16 %v2035
  %v3225 = vunpack.c.l.b16 %v2036
  %v3226 = vunpack.c.h.b16 %v2036
  %v3227 = vunpack.c.l.b16 %v2037
  %v3228 = vunpack.c.h.b16 %v2037
  %v3229 = vunpack.c.l.b16 %v2038
  %v3230 = vunpack.c.l.b16 %v2039
  %v3231 = vunpack.c.h.b16 %v2039
  %v3232 = vunpack.c.l.b16 %v2040
  %v3233 = vunpack.c.h.b16 %v2040
  %v3234 = vunpack.c.l.b16 %v2041
  %v3235 = vunpack.c.h.b16 %v2041
  %v3236 = vunpack.c.l.b16 %v2042
  %v3237 = vunpack.c.l.b16 %v2043
  %v3238 = vunpack.c.h.b16 %v2043
  %v3239 = vunpack.c.l.b16 %v2044
  %v3240 = vunpack.c.h.b16 %v2044
  %v3241 = vunpack.c.l.b16 %v2045
  %v3242 = vunpack.c.h.b16 %v2045
  %v3243 = vunpack.c.l.b16 %v2046
  %v3244 = vunpack.c.l.b16 %v2047
  %v3245 = vunpack.c.h.b16 %v2047
  %v3246 = vunpack.c.l.b16 %v2048
  %v3247 = vunpack.c.h.b16 %v2048
  %v3248 = vunpack.c.l.b16 %v2049
  %v3249 = vunpack.c.h.b16 %v2049
  %v3250 = vunpack.c.l.b16 %v2050
  %v3251 = vunpack.c.l.b16 %v2051
  %v3252 = vunpack.c.h.b16 %v2051
  %v3253 = vunpack.c.l.b16 %v2052
  %v3254 = vunpack.c.h.b16 %v2052
  %v3255 = vunpack.c.l.b16 %v2053
  %v3256 = vunpack.c.h.b16 %v2053
  %v3257 = vunpack.c.l.b16 %v2054
  %v3258 = vunpack.c.l.b16 %v2055
  %v3259 = vunpack.c.h.b16 %v2055
  %v3260 = vunpack.c.l.b16 %v2056
  %v3261 = vunpack.c.h.b16 %v2056
  %v3262 = vunpack.c.l.b16 %v2057
  %v3263 = vunpack.c.h.b16 %v2057
  %v3264 = vunpack.c.l.b16 %v2058
  %v3265 = vunpack.c.l.b16 %v2059
  %v3266 = vunpack.c.h.b16 %v2059
  %v3267 = vunpack.c.l.b16 %v2060
  %v3268 = vunpack.c.h.b16 %v2060
  %v3269 = vunpack.c.l.b16 %v2061
  %v3270 = vunpack.c.h.b16 %v2061
  %v3271 = vunpack.c.l.b16 %v2062
  %v3272 = vunpack.c.l.b16 %v2063
  %v3273 = vunpack.c.h.b16 %v2063
  %v3274 = vunpack.c.l.b16 %v2064
  %v3275 = vunpack.c.h.b16 %v2064
  %v3276 = vunpack.c.l.b16 %v2065
  %v3277 = vunpack.c.h.b16 %v2065
  %v3278 = vunpack.c.l.b16 %v2066
  %v3279 = vunpack.c.l.b16 %v2067
  %v3280 = vunpack.c.h.b16 %v2067
  %v3281 = vunpack.c.l.b16 %v2068
  %v3282 = vunpack.c.h.b16 %v2068
  %v3283 = vunpack.c.l.b16 %v2069
  %v3284 = vunpack.c.h.b16 %v2069
  %v3285 = vunpack.c.l.b16 %v2070
  %v3286 = vunpack.c.l.b16 %v2071
  %v3287 = vunpack.c.h.b16 %v2071
  %v3288 = vunpack.c.l.b16 %v2072
  %v3289 = vunpack.c.h.b16 %v2072
  %v3290 = vunpack.c.l.b16 %v2073
  %v3291 = vunpack.c.h.b16 %v2073
  %v3292 = vunpack.c.l.b16 %v2074
  %v3293 = vunpack.c.l.b16 %v2075
  %v3294 = vunpack.c.h.b16 %v2075
  %v3295 = vunpack.c.l.b16 %v2076
  %v3296 = vunpack.c.h.b16 %v2076
  %v3297 = vunpack.c.l.b16 %v2077
  %v3298 = vunpack.c.h.b16 %v2077
  %v3299 = vunpack.c.l.b16 %v2078
  %v3300 = vpack.c.b16 %v2530, %v2523
  %v3301 = vpack.c.b16 %v2531, %v2524
  %v3302 = vpack.c.b16 %v2532, %v2525
  %v3303 = vpack.c.b16 %v2533, %v2526
  %v3304 = vpack.c.b16 %v2534, %v2527
  %v3305 = vpack.c.b16 %v2535, %v2528
  %v3306 = vpack.c.b16 %v2536, %v2529
  %v3307 = vpack.c.b16 %v2544, %v2537
  %v3308 = vpack.c.b16 %v2545, %v2538
  %v3309 = vpack.c.b16 %v2546, %v2539
  %v3310 = vpack.c.b16 %v2547, %v2540
  %v3311 = vpack.c.b16 %v2548, %v2541
  %v3312 = vpack.c.b16 %v2549, %v2542
  %v3313 = vpack.c.b16 %v2550, %v2543
  %v3314 = vpack.c.b16 %v2558, %v2551
  %v3315 = vpack.c.b16 %v2559, %v2552
  %v3316 = vpack.c.b16 %v2560, %v2553
  %v3317 = vpack.c.b16 %v2561, %v2554
  %v3318 = vpack.c.b16 %v2562, %v2555
  %v3319 = vpack.c.b16 %v2563, %v2556
  %v3320 = vpack.c.b16 %v2564, %v2557
  %v3321 = vpack.c.b16 %v2572, %v2565
  %v3322 = vpack.c.b16 %v2573, %v2566
  %v3323 = vpack.c.b16 %v2574, %v2567
  %v3324 = vpack.c.b16 %v2575, %v2568
  %v3325 = vpack.c.b16 %v2576, %v2569
  %v3326 = vpack.c.b16 %v2577, %v2570
  %v3327 = vpack.c.b16 %v2578, %v2571
  %v3328 = vpack.c.b16 %v2586, %v2579
  %v3329 = vpack.c.b16 %v2587, %v2580
  %v3330 = vpack.c.b16 %v2588, %v2581
  %v3331 = vpack.c.b16 %v2589, %v2582
  %v3332 = vpack.c.b16 %v2590, %v2583
  %v3333 = vpack.c.b16 %v2591, %v2584
  %v3334 = vpack.c.b16 %v2592, %v2585
  %v3335 = vpack.c.b16 %v2600, %v2593
  %v3336 = vpack.c.b16 %v2601, %v2594
  %v3337 = vpack.c.b16 %v2602, %v2595
  %v3338 = vpack.c.b16 %v2603, %v2596
  %v3339 = vpack.c.b16 %v2604, %v2597
  %v3340 = vpack.c.b16 %v2605, %v2598
  %v3341 = vpack.c.b16 %v2606, %v2599
  %v3342 = vpack.c.b16 %v2614, %v2607
  %v3343 = vpack.c.b16 %v2615, %v2608
  %v3344 = vpack.c.b16 %v2616, %v2609
  %v3345 = vpack.c.b16 %v2617, %v2610
  %v3346 = vpack.c.b16 %v2618, %v2611
  %v3347 = vpack.c.b16 %v2619, %v2612
  %v3348 = vpack.c.b16 %v2620, %v2613
  %v3349 = vpack.c.b16 %v2628, %v2621
  %v3350 = vpack.c.b16 %v2629, %v2622
  %v3351 = vpack.c.b16 %v2630, %v2623
  %v3352 = vpack.c.b16 %v2631, %v2624
  %v3353 = vpack.c.b16 %v2632, %v2625
  %v3354 = vpack.c.b16 %v2633, %v2626
  %v3355 = vpack.c.b16 %v2634, %v2627
  %v3356 = vpack.c.b16 %v2642, %v2635
  %v3357 = vpack.c.b16 %v2643, %v2636
  %v3358 = vpack.c.b16 %v2644, %v2637
  %v3359 = vpack.c.b16 %v2645, %v2638
  %v3360 = vpack.c.b16 %v2646, %v2639
  %v3361 = vpack.c.b16 %v2647, %v2640
  %v3362 = vpack.c.b16 %v2648, %v2641
  %v3363 = vpack.c.b16 %v2656, %v2649
  %v3364 = vpack.c.b16 %v2657, %v2650
  %v3365 = vpack.c.b16 %v2658, %v2651
  %v3366 = vpack.c.b16 %v2659, %v2652
  %v3367 = vpack.c.b16 %v2660, %v2653
  %v3368 = vpack.c.b16 %v2661, %v2654
  %v3369 = vpack.c.b16 %v2662, %v2655
  %v3370 = vpack.c.b16 %v2670, %v2663
  %v3371 = vpack.c.b16 %v2671, %v2664
  %v3372 = vpack.c.b16 %v2672, %v2665
  %v3373 = vpack.c.b16 %v2673, %v2666
  %v3374 = vpack.c.b16 %v2674, %v2667
  %v3375 = vpack.c.b16 %v2675, %v2668
  %v3376 = vpack.c.b16 %v2676, %v2669
  %v3377 = vpack.c.b16 %v2684, %v2677
  %v3378 = vpack.c.b16 %v2685, %v2678
  %v3379 = vpack.c.b16 %v2686, %v2679
  %v3380 = vpack.c.b16 %v2687, %v2680
  %v3381 = vpack.c.b16 %v2688, %v2681
  %v3382 = vpack.c.b16 %v2689, %v2682
  %v3383 = vpack.c.b16 %v2690, %v2683
  %v3384 = vpack.c.b16 %v2698, %v2691
  %v3385 = vpack.c.b16 %v2699, %v2692
  %v3386 = vpack.c.b16 %v2700, %v2693
  %v3387 = vpack.c.b16 %v2701, %v2694
  %v3388 = vpack.c.b16 %v2702, %v2695
  %v3389 = vpack.c.b16 %v2703, %v2696
  %v3390 = vpack.c.b16 %v2704, %v2697
  %v3391 = vpack.c.b16 %v2712, %v2705
  %v3392 = vpack.c.b16 %v2713, %v2706
  %v3393 = vpack.c.b16 %v2714, %v2707
  %v3394 = vpack.c.b16 %v2715, %v2708
  %v3395 = vpack.c.b16 %v2716, %v2709
  %v3396 = vpack.c.b16 %v2717, %v2710
  %v3397 = vpack.c.b16 %v2718, %v2711
  %v3398 = vpack.c.b16 %v2726, %v2719
  %v3399 = vpack.c.b16 %v2727, %v2720
  %v3400 = vpack.c.b16 %v2728, %v2721
  %v3401 = vpack.c.b16 %v2729, %v2722
  %v3402 = vpack.c.b16 %v2730, %v2723
  %v3403 = vpack.c.b16 %v2731, %v2724
  %v3404 = vpack.c.b16 %v2732, %v2725
  %v3405 = vpack.c.b16 %v2740, %v2733
  %v3406 = vpack.c.b16 %v2741, %v2734
  %v3407 = vpack.c.b16 %v2742, %v2735
  %v3408 = vpack.c.b16 %v2743, %v2736
  %v3409 = vpack.c.b16 %v2744, %v2737
  %v3410 = vpack.c.b16 %v2745, %v2738
  %v3411 = vpack.c.b16 %v2746, %v2739
  %v3412 = vpack.c.b16 %v2754, %v2747
  %v3413 = vpack.c.b16 %v2755, %v2748
  %v3414 = vpack.c.b16 %v2756, %v2749
  %v3415 = vpack.c.b16 %v2757, %v2750
  %v3416 = vpack.c.b16 %v2758, %v2751
  %v3417 = vpack.c.b16 %v2759, %v2752
  %v3418 = vpack.c.b16 %v2760, %v2753
  %v3419 = vpack.c.b16 %v2768, %v2761
  %v3420 = vpack.c.b16 %v2769, %v2762
  %v3421 = vpack.c.b16 %v2770, %v2763
  %v3422 = vpack.c.b16 %v2771, %v2764
  %v3423 = vpack.c.b16 %v2772, %v2765
  %v3424 = vpack.c.b16 %v2773, %v2766
  %v3425 = vpack.c.b16 %v2774, %v2767
  %v3426 = vpack.c.b16 %v2782, %v2775
  %v3427 = vpack.c.b16 %v2783, %v2776
  %v3428 = vpack.c.b16 %v2784, %v2777
  %v3429 = vpack.c.b16 %v2785, %v2778
  %v3430 = vpack.c.b16 %v2786, %v2779
  %v3431 = vpack.c.b16 %v2787, %v2780
  %v3432 = vpack.c.b16 %v2788, %v2781
  %v3433 = vpack.c.b16 %v2796, %v2789
  %v3434 = vpack.c.b16 %v2797, %v2790
  %v3435 = vpack.c.b16 %v2798, %v2791
  %v3436 = vpack.c.b16 %v2799, %v2792
  %v3437 = vpack.c.b16 %v2800, %v2793
  %v3438 = vpack.c.b16 %v2801, %v2794
  %v3439 = vpack.c.b16 %v2802, %v2795
  %v3440 = vpack.c.b16 %v2810, %v2803
  %v3441 = vpack.c.b16 %v2811, %v2804
  %v3442 = vpack.c.b16 %v2812, %v2805
  %v3443 = vpack.c.b16 %v2813, %v2806
  %v3444 = vpack.c.b16 %v2814, %v2807
  %v3445 = vpack.c.b16 %v2815, %v2808
  %v3446 = vpack.c.b16 %v2816, %v2809
  %v3447 = vpack.c.b16 %v2824, %v2817
  %v3448 = vpack.c.b16 %v2825, %v2818
  %v3449 = vpack.c.b16 %v2826, %v2819
  %v3450 = vpack.c.b16 %v2827, %v2820
  %v3451 = vpack.c.b16 %v2828, %v2821
  %v3452 = vpack.c.b16 %v2829, %v2822
  %v3453 = vpack.c.b16 %v2830, %v2823
  %v3454 = vpack.c.b16 %v2838, %v2831
  %v3455 = vpack.c.b16 %v2839, %v2832
  %v3456 = vpack.c.b16 %v2840, %v2833
  %v3457 = vpack.c.b16 %v2841, %v2834
  %v3458 = vpack.c.b16 %v2842, %v2835
  %v3459 = vpack.c.b16 %v2843, %v2836
  %v3460 = vpack.c.b16 %v2844, %v2837
  %v3461 = vpack.c.b16 %v2852, %v2845
  %v3462 = vpack.c.b16 %v2853, %v2846
  %v3463 = vpack.c.b16 %v2854, %v2847
  %v3464 = vpack.c.b16 %v2855, %v2848
  %v3465 = vpack.c.b16 %v2856, %v2849
  %v3466 = vpack.c.b16 %v2857, %v2850
  %v3467 = vpack.c.b16 %v2858, %v2851
  %v3468 = vpack.c.b16 %v2866, %v2859
  %v3469 = vpack.c.b16 %v2867, %v2860
  %v3470 = vpack.c.b16 %v2868, %v2861
  %v3471 = vpack.c.b16 %v2869, %v2862
  %v3472 = vpack.c.b16 %v2870, %v2863
  %v3473 = vpack.c.b16 %v2871, %v2864
  %v3474 = vpack.c.b16 %v2872, %v2865
  %v3475 = vpack.c.b16 %v2880, %v2873
  %v3476 = vpack.c.b16 %v2881, %v2874
  %v3477 = vpack.c.b16 %v2882, %v2875
  %v3478 = vpack.c.b16 %v2883, %v2876
  %v3479 = vpack.c.b16 %v2884, %v2877
  %v3480 = vpack.c.b16 %v2885, %v2878
  %v3481 = vpack.c.b16 %v2886, %v2879
  %v3482 = vpack.c.b16 %v2894, %v2887
  %v3483 = vpack.c.b16 %v2895, %v2888
  %v3484 = vpack.c.b16 %v2896, %v2889
  %v3485 = vpack.c.b16 %v2897, %v2890
  %v3486 = vpack.c.b16 %v2898, %v2891
  %v3487 = vpack.c.b16 %v2899, %v2892
  %v3488 = vpack.c.b16 %v2900, %v2893
  %v3489 = vpack.c.b16 %v2908, %v2901
  %v3490 = vpack.c.b16 %v2909, %v2902
  %v3491 = vpack.c.b16 %v2910, %v2903
  %v3492 = vpack.c.b16 %v2911, %v2904
  %v3493 = vpack.c.b16 %v2912, %v2905
  %v3494 = vpack.c.b16 %v2913, %v2906
  %v3495 = vpack.c.b16 %v2914, %v2907
  %v3496 = vpack.c.b16 %v2922, %v2915
  %v3497 = vpack.c.b16 %v2923, %v2916
  %v3498 = vpack.c.b16 %v2924, %v2917
  %v3499 = vpack.c.b16 %v2925, %v2918
  %v3500 = vpack.c.b16 %v2926, %v2919
  %v3501 = vpack.c.b16 %v2927, %v2920
  %v3502 = vpack.c.b16 %v2928, %v2921
  %v3503 = vpack.c.b16 %v2936, %v2929
  %v3504 = vpack.c.b16 %v2937, %v2930
  %v3505 = vpack.c.b16 %v2938, %v2931
  %v3506 = vpack.c.b16 %v2939, %v2932
  %v3507 = vpack.c.b16 %v2940, %v2933
  %v3508 = vpack.c.b16 %v2941, %v2934
  %v3509 = vpack.c.b16 %v2942, %v2935
  %v3510 = vpack.c.b16 %v2950, %v2943
  %v3511 = vpack.c.b16 %v2951, %v2944
  %v3512 = vpack.c.b16 %v2952, %v2945
  %v3513 = vpack.c.b16 %v2953, %v2946
  %v3514 = vpack.c.b16 %v2954, %v2947
  %v3515 = vpack.c.b16 %v2955, %v2948
  %v3516 = vpack.c.b16 %v2956, %v2949
  %v3517 = vpack.c.b16 %v2964, %v2957
  %v3518 = vpack.c.b16 %v2965, %v2958
  %v3519 = vpack.c.b16 %v2966, %v2959
  %v3520 = vpack.c.b16 %v2967, %v2960
  %v3521 = vpack.c.b16 %v2968, %v2961
  %v3522 = vpack.c.b16 %v2969, %v2962
  %v3523 = vpack.c.b16 %v2970, %v2963
  %v3524 = vpack.c.b16 %v2978, %v2971
  %v3525 = vpack.c.b16 %v2979, %v2972
  %v3526 = vpack.c.b16 %v2980, %v2973
  %v3527 = vpack.c.b16 %v2981, %v2974
  %v3528 = vpack.c.b16 %v2982, %v2975
  %v3529 = vpack.c.b16 %v2983, %v2976
  %v3530 = vpack.c.b16 %v2984, %v2977
  %v3531 = vpack.c.b16 %v2992, %v2985
  %v3532 = vpack.c.b16 %v2993, %v2986
  %v3533 = vpack.c.b16 %v2994, %v2987
  %v3534 = vpack.c.b16 %v2995, %v2988
  %v3535 = vpack.c.b16 %v2996, %v2989
  %v3536 = vpack.c.b16 %v2997, %v2990
  %v3537 = vpack.c.b16 %v2998, %v2991
  %v3538 = vpack.c.b16 %v3006, %v2999
  %v3539 = vpack.c.b16 %v3007, %v3000
  %v3540 = vpack.c.b16 %v3008, %v3001
  %v3541 = vpack.c.b16 %v3009, %v3002
  %v3542 = vpack.c.b16 %v3010, %v3003
  %v3543 = vpack.c.b16 %v3011, %v3004
  %v3544 = vpack.c.b16 %v3012, %v3005
  %v3545 = vpack.c.b16 %v3020, %v3013
  %v3546 = vpack.c.b16 %v3021, %v3014
  %v3547 = vpack.c.b16 %v3022, %v3015
  %v3548 = vpack.c.b16 %v3023, %v3016
  %v3549 = vpack.c.b16 %v3024, %v3017
  %v3550 = vpack.c.b16 %v3025, %v3018
  %v3551 = vpack.c.b16 %v3026, %v3019
  %v3552 = vpack.c.b16 %v3034, %v3027
  %v3553 = vpack.c.b16 %v3035, %v3028
  %v3554 = vpack.c.b16 %v3036, %v3029
  %v3555 = vpack.c.b16 %v3037, %v3030
  %v3556 = vpack.c.b16 %v3038, %v3031
  %v3557 = vpack.c.b16 %v3039, %v3032
  %v3558 = vpack.c.b16 %v3040, %v3033
  %v3559 = vpack.c.b16 %v3048, %v3041
  %v3560 = vpack.c.b16 %v3049, %v3042
  %v3561 = vpack.c.b16 %v3050, %v3043
  %v3562 = vpack.c.b16 %v3051, %v3044
  %v3563 = vpack.c.b16 %v3052, %v3045
  %v3564 = vpack.c.b16 %v3053, %v3046
  %v3565 = vpack.c.b16 %v3054, %v3047
  %v3566 = vpack.c.b16 %v3062, %v3055
  %v3567 = vpack.c.b16 %v3063, %v3056
  %v3568 = vpack.c.b16 %v3064, %v3057
  %v3569 = vpack.c.b16 %v3065, %v3058
  %v3570 = vpack.c.b16 %v3066, %v3059
  %v3571 = vpack.c.b16 %v3067, %v3060
  %v3572 = vpack.c.b16 %v3068, %v3061
  %v3573 = vpack.c.b16 %v3076, %v3069
  %v3574 = vpack.c.b16 %v3077, %v3070
  %v3575 = vpack.c.b16 %v3078, %v3071
  %v3576 = vpack.c.b16 %v3079, %v3072
  %v3577 = vpack.c.b16 %v3080, %v3073
  %v3578 = vpack.c.b16 %v3081, %v3074
  %v3579 = vpack.c.b16 %v3082, %v3075
  %v3580 = vpack.c.b16 %v3090, %v3083
  %v3581 = vpack.c.b16 %v3091, %v3084
  %v3582 = vpack.c.b16 %v3092, %v3085
  %v3583 = vpack.c.b16 %v3093, %v3086
  %v3584 = vpack.c.b16 %v3094, %v3087
  %v3585 = vpack.c.b16 %v3095, %v3088
  %v3586 = vpack.c.b16 %v3096, %v3089
  %v3587 = vpack.c.b16 %v3104, %v3097
  %v3588 = vpack.c.b16 %v3105, %v3098
  %v3589 = vpack.c.b16 %v3106, %v3099
  %v3590 = vpack.c.b16 %v3107, %v3100
  %v3591 = vpack.c.b16 %v3108, %v3101
  %v3592 = vpack.c.b16 %v3109, %v3102
  %v3593 = vpack.c.b16 %v3110, %v3103
  %v3594 = vpack.c.b16 %v3118, %v3111
  %v3595 = vpack.c.b16 %v3119, %v3112
  %v3596 = vpack.c.b16 %v3120, %v3113
  %v3597 = vpack.c.b16 %v3121, %v3114
  %v3598 = vpack.c.b16 %v3122, %v3115
  %v3599 = vpack.c.b16 %v3123, %v3116
  %v3600 = vpack.c.b16 %v3124, %v3117
  %v3601 = vpack.c.b16 %v3132, %v3125
  %v3602 = vpack.c.b16 %v3133, %v3126
  %v3603 = vpack.c.b16 %v3134, %v3127
  %v3604 = vpack.c.b16 %v3135, %v3128
  %v3605 = vpack.c.b16 %v3136, %v3129
  %v3606 = vpack.c.b16 %v3137, %v3130
  %v3607 = vpack.c.b16 %v3138, %v3131
  %v3608 = vpack.c.b16 %v3146, %v3139
  %v3609 = vpack.c.b16 %v3147, %v3140
  %v3610 = vpack.c.b16 %v3148, %v3141
  %v3611 = vpack.c.b16 %v3149, %v3142
  %v3612 = vpack.c.b16 %v3150, %v3143
  %v3613 = vpack.c.b16 %v3151, %v3144
  %v3614 = vpack.c.b16 %v3152, %v3145
  %v3615 = vpack.c.b16 %v3160, %v3153
  %v3616 = vpack.c.b16 %v3161, %v3154
  %v3617 = vpack.c.b16 %v3162, %v3155
  %v3618 = vpack.c.b16 %v3163, %v3156
  %v3619 = vpack.c.b16 %v3164, %v3157
  %v3620 = vpack.c.b16 %v3165, %v3158
  %v3621 = vpack.c.b16 %v3166, %v3159
  %v3622 = vpack.c.b16 %v3174, %v3167
  %v3623 = vpack.c.b16 %v3175, %v3168
  %v3624 = vpack.c.b16 %v3176, %v3169
  %v3625 = vpack.c.b16 %v3177, %v3170
  %v3626 = vpack.c.b16 %v3178, %v3171
  %v3627 = vpack.c.b16 %v3179, %v3172
  %v3628 = vpack.c.b16 %v3180, %v3173
  %v3629 = vpack.c.b16 %v3188, %v3181
  %v3630 = vpack.c.b16 %v3189, %v3182
  %v3631 = vpack.c.b16 %v3190, %v3183
  %v3632 = vpack.c.b16 %v3191, %v3184
  %v3633 = vpack.c.b16 %v3192, %v3185
  %v3634 = vpack.c.b16 %v3193, %v3186
  %v3635 = vpack.c.b16 %v3194, %v3187
  %v3636 = vpack.c.b16 %v3202, %v3195
  %v3637 = vpack.c.b16 %v3203, %v3196
  %v3638 = vpack.c.b16 %v3204, %v3197
  %v3639 = vpack.c.b16 %v3205, %v3198
  %v3640 = vpack.c.b16 %v3206, %v3199
  %v3641 = vpack.c.b16 %v3207, %v3200
  %v3642 = vpack.c.b16 %v3208, %v3201
  %v3643 = vpack.c.b16 %v3216, %v3209
  %v3644 = vpack.c.b16 %v3217, %v3210
  %v3645 = vpack.c.b16 %v3218, %v3211
  %v3646 = vpack.c.b16 %v3219, %v3212
  %v3647 = vpack.c.b16 %v3220, %v3213
  %v3648 = vpack.c.b16 %v3221, %v3214
  %v3649 = vpack.c.b16 %v3222, %v3215
  %v3650 = vpack.c.b16 %v3230, %v3223
  %v3651 = vpack.c.b16 %v3231, %v3224
  %v3652 = vpack.c.b16 %v3232, %v3225
  %v3653 = vpack.c.b16 %v3233, %v3226
  %v3654 = vpack.c.b16 %v3234, %v3227
  %v3655 = vpack.c.b16 %v3235, %v3228
  %v3656 = vpack.c.b16 %v3236, %v3229
  %v3657 = vpack.c.b16 %v3244, %v3237
  %v3658 = vpack.c.b16 %v3245, %v3238
  %v3659 = vpack.c.b16 %v3246, %v3239
  %v3660 = vpack.c.b16 %v3247, %v3240
  %v3661 = vpack.c.b16 %v3248, %v3241
  %v3662 = vpack.c.b16 %v3249, %v3242
  %v3663 = vpack.c.b16 %v3250, %v3243
  %v3664 = vpack.c.b16 %v3258, %v3251
  %v3665 = vpack.c.b16 %v3259, %v3252
  %v3666 = vpack.c.b16 %v3260, %v3253
  %v3667 = vpack.c.b16 %v3261, %v3254
  %v3668 = vpack.c.b16 %v3262, %v3255
  %v3669 = vpack.c.b16 %v3263, %v3256
  %v3670 = vpack.c.b16 %v3264, %v3257
  %v3671 = vpack.c.b16 %v3272, %v3265
  %v3672 = vpack.c.b16 %v3273, %v3266
  %v3673 = vpack.c.b16 %v3274, %v3267
  %v3674 = vpack.c.b16 %v3275, %v3268
  %v3675 = vpack.c.b16 %v3276, %v3269
  %v3676 = vpack.c.b16 %v3277, %v3270
  %v3677 = vpack.c.b16 %v3278, %v3271
  %v3678 = vpack.c.b16 %v3286, %v3279
  %v3679 = vpack.c.b16 %v3287, %v3280
  %v3680 = vpack.c.b16 %v3288, %v3281
  %v3681 = vpack.c.b16 %v3289, %v3282
  %v3682 = vpack.c.b16 %v3290, %v3283
  %v3683 = vpack.c.b16 %v3291, %v3284
  %v3684 = vpack.c.b16 %v3292, %v3285
  %v3685 = vpack.c.b16 %v3293, %v3293
  %v3686 = vpack.c.b16 %v3294, %v3294
  %v3687 = vpack.c.b16 %v3295, %v3295
  %v3688 = vpack.c.b16 %v3296, %v3296
  %v3689 = vpack.c.b16 %v3297, %v3297
  %v3690 = vpack.c.b16 %v3298, %v3298
  %v3691 = vpack.c.b16 %v3299, %v3299
  %vm4028 = vcmask 982016
  %v4030 = vsel %vm4028, %v3306, 0
  %v4033 = vsel %vm4028, %v3313, 0
  %v4036 = vsel %vm4028, %v3320, 0
  %v4039 = vsel %vm4028, %v3327, 0
  %v4042 = vsel %vm4028, %v3334, 0
  %v4045 = vsel %vm4028, %v3341, 0
  %v4048 = vsel %vm4028, %v3348, 0
  %v4051 = vsel %vm4028, %v3355, 0
  %v4054 = vsel %vm4028, %v3362, 0
  %v4057 = vsel %vm4028, %v3369, 0
  %v4060 = vsel %vm4028, %v3376, 0
  %v4063 = vsel %vm4028, %v3383, 0
  %v4066 = vsel %vm4028, %v3390, 0
  %v4069 = vsel %vm4028, %v3397, 0
  %v4072 = vsel %vm4028, %v3404, 0
  %v4075 = vsel %vm4028, %v3411, 0
  %v4078 = vsel %vm4028, %v3418, 0
  %v4081 = vsel %vm4028, %v3425, 0
  %v4084 = vsel %vm4028, %v3432, 0
  %v4087 = vsel %vm4028, %v3439, 0
  %v4090 = vsel %vm4028, %v3446, 0
  %v4093 = vsel %vm4028, %v3453, 0
  %v4096 = vsel %vm4028, %v3460, 0
  %v4099 = vsel %vm4028, %v3467, 0
  %v4102 = vsel %vm4028, %v3474, 0
  %v4105 = vsel %vm4028, %v3481, 0
  %v4108 = vsel %vm4028, %v3488, 0
  %v4111 = vsel %vm4028, %v3495, 0
  %v4114 = vsel %vm4028, %v3502, 0
  %v4117 = vsel %vm4028, %v3509, 0
  %v4120 = vsel %vm4028, %v3516, 0
  %v4123 = vsel %vm4028, %v3523, 0
  %v4126 = vsel %vm4028, %v3530, 0
  %v4129 = vsel %vm4028, %v3537, 0
  %v4132 = vsel %vm4028, %v3544, 0
  %v4135 = vsel %vm4028, %v3551, 0
  %v4138 = vsel %vm4028, %v3558, 0
  %v4141 = vsel %vm4028, %v3565, 0
  %v4144 = vsel %vm4028, %v3572, 0
  %v4147 = vsel %vm4028, %v3579, 0
  %v4150 = vsel %vm4028, %v3586, 0
  %v4153 = vsel %vm4028, %v3593, 0
  %v4156 = vsel %vm4028, %v3600, 0
  %v4159 = vsel %vm4028, %v3607, 0
  %v4162 = vsel %vm4028, %v3614, 0
  %v4165 = vsel %vm4028, %v3621, 0
  %v4168 = vsel %vm4028, %v3628, 0
  %v4171 = vsel %vm4028, %v3635, 0
  %v4174 = vsel %vm4028, %v3642, 0
  %v4177 = vsel %vm4028, %v3649, 0
  %v4180 = vsel %vm4028, %v3656, 0
  %v4183 = vsel %vm4028, %v3663, 0
  %v4186 = vsel %vm4028, %v3670, 0
  %v4189 = vsel %vm4028, %v3677, 0
  %v4192 = vsel %vm4028, %v3684, 0
  %v4195 = vsel %vm4028, %v3691, 0
  %vm4197 = vcmask 1043456
  %v4199 = vsel %vm4197, %v1634, 0
  %4201 = vmatprep.subr.bf16.mxu0 0
  %4202 = vmatpush1.bf16.msra.mxu0 %v1586
  %4203 = vmatprep.subr.bf16.mxu0 0
  %4204 = vmatpush1.bf16.msra.mxu0 %v1585
  %4205 = vmatprep.subr.bf16.mxu0 0
  %4206 = vmatpush1.bf16.msra.mxu0 %v1584
  %4207 = vmatprep.subr.bf16.mxu0 0
  %4208 = vmatpush1.bf16.msra.mxu0 %v1583
  %4209 = vmatprep.subr.bf16.mxu0 0
  %4210 = vmatpush1.bf16.msra.mxu0 %v1582
  %4211 = vmatprep.subr.bf16.mxu0 0
  %4212 = vmatpush1.bf16.msra.mxu0 %v1581
  %4213 = vmatprep.subr.bf16.mxu0 0
  %4214 = vmatpush1.bf16.msra.mxu0 %v1580
  %4215 = vmatprep.subr.bf16.mxu0 0
  %4216 = vmatpush1.bf16.msra.mxu0 %v1579
  %4217 = vmatprep.subr.bf16.mxu0 0
  %4218 = vmatpush2.bf16.msra.mxu0 %v1594
  %4219 = vmatprep.subr.bf16.mxu0 0
  %4220 = vmatpush2.bf16.msra.mxu0 %v1593
  %4221 = vmatprep.subr.bf16.mxu0 0
  %4222 = vmatpush2.bf16.msra.mxu0 %v1592
  %4223 = vmatprep.subr.bf16.mxu0 0
  %4224 = vmatpush2.bf16.msra.mxu0 %v1591
  %4225 = vmatprep.subr.bf16.mxu0 0
  %4226 = vmatpush2.bf16.msra.mxu0 %v1590
  %4227 = vmatprep.subr.bf16.mxu0 0
  %4228 = vmatpush2.bf16.msra.mxu0 %v1589
  %4229 = vmatprep.subr.bf16.mxu0 0
  %4230 = vmatpush2.bf16.msra.mxu0 %v1588
  %4231 = vmatprep.subr.bf16.mxu0 0
  %4232 = vmatpush2.bf16.msra.mxu0 %v1587
  %4233 = vmatprep.mubr.bf16.mxu0 %v3301
  %4234 = vmatmul.mubr.bf16.gmra.mxu0 %v3300
  %v4235 = vpop.f32.mrf.mxu0
  %v4236 = vadd.f32 0.0, %v4235
  %v4237 = vpop.f32.mrf.mxu0
  %v4238 = vpop.f32.mrf.mxu0
  %v4239 = vadd.f32 0.0, %v4238
  %v4240 = vpop.f32.mrf.mxu0
  %4241 = vmatprep.mubr.bf16.mxu0 %v3308
  %4242 = vmatmul.mubr.bf16.gmra.mxu0 %v3307
  %v4243 = vpop.f32.mrf.mxu0
  %v4244 = vadd.f32 0.0, %v4243
  %v4245 = vpop.f32.mrf.mxu0
  %v4246 = vpop.f32.mrf.mxu0
  %v4247 = vadd.f32 0.0, %v4246
  %v4248 = vpop.f32.mrf.mxu0
  %4249 = vmatprep.mubr.bf16.mxu0 %v3315
  %4250 = vmatmul.mubr.bf16.gmra.mxu0 %v3314
  %v4251 = vpop.f32.mrf.mxu0
  %v4252 = vadd.f32 0.0, %v4251
  %v4253 = vpop.f32.mrf.mxu0
  %v4254 = vpop.f32.mrf.mxu0
  %v4255 = vadd.f32 0.0, %v4254
  %v4256 = vpop.f32.mrf.mxu0
  %4257 = vmatprep.mubr.bf16.mxu0 %v3322
  %4258 = vmatmul.mubr.bf16.gmra.mxu0 %v3321
  %v4259 = vpop.f32.mrf.mxu0
  %v4260 = vadd.f32 0.0, %v4259
  %v4261 = vpop.f32.mrf.mxu0
  %v4262 = vpop.f32.mrf.mxu0
  %v4263 = vadd.f32 0.0, %v4262
  %v4264 = vpop.f32.mrf.mxu0
  %4265 = vmatprep.mubr.bf16.mxu0 %v3329
  %4266 = vmatmul.mubr.bf16.gmra.mxu0 %v3328
  %v4267 = vpop.f32.mrf.mxu0
  %v4268 = vadd.f32 0.0, %v4267
  %v4269 = vpop.f32.mrf.mxu0
  %v4270 = vpop.f32.mrf.mxu0
  %v4271 = vadd.f32 0.0, %v4270
  %v4272 = vpop.f32.mrf.mxu0
  %4273 = vmatprep.mubr.bf16.mxu0 %v3336
  %4274 = vmatmul.mubr.bf16.gmra.mxu0 %v3335
  %v4275 = vpop.f32.mrf.mxu0
  %v4276 = vadd.f32 0.0, %v4275
  %v4277 = vpop.f32.mrf.mxu0
  %v4278 = vpop.f32.mrf.mxu0
  %v4279 = vadd.f32 0.0, %v4278
  %v4280 = vpop.f32.mrf.mxu0
  %4281 = vmatprep.mubr.bf16.mxu0 %v3343
  %4282 = vmatmul.mubr.bf16.gmra.mxu0 %v3342
  %v4283 = vpop.f32.mrf.mxu0
  %v4284 = vadd.f32 0.0, %v4283
  %v4285 = vpop.f32.mrf.mxu0
  %v4286 = vpop.f32.mrf.mxu0
  %v4287 = vadd.f32 0.0, %v4286
  %v4288 = vpop.f32.mrf.mxu0
  %4289 = vmatprep.mubr.bf16.mxu0 %v3350
  %4290 = vmatmul.mubr.bf16.gmra.mxu0 %v3349
  %v4291 = vpop.f32.mrf.mxu0
  %v4292 = vadd.f32 0.0, %v4291
  %v4293 = vpop.f32.mrf.mxu0
  %v4294 = vpop.f32.mrf.mxu0
  %v4295 = vadd.f32 0.0, %v4294
  %v4296 = vpop.f32.mrf.mxu0
  %4297 = vmatprep.mubr.bf16.mxu0 %v3357
  %4298 = vmatmul.mubr.bf16.gmra.mxu0 %v3356
  %v4299 = vpop.f32.mrf.mxu0
  %v4300 = vadd.f32 0.0, %v4299
  %v4301 = vpop.f32.mrf.mxu0
  %v4302 = vpop.f32.mrf.mxu0
  %v4303 = vadd.f32 0.0, %v4302
  %v4304 = vpop.f32.mrf.mxu0
  %4305 = vmatprep.mubr.bf16.mxu0 %v3364
  %4306 = vmatmul.mubr.bf16.gmra.mxu0 %v3363
  %v4307 = vpop.f32.mrf.mxu0
  %v4308 = vadd.f32 0.0, %v4307
  %v4309 = vpop.f32.mrf.mxu0
  %v4310 = vpop.f32.mrf.mxu0
  %v4311 = vadd.f32 0.0, %v4310
  %v4312 = vpop.f32.mrf.mxu0
  %4313 = vmatprep.mubr.bf16.mxu0 %v3371
  %4314 = vmatmul.mubr.bf16.gmra.mxu0 %v3370
  %v4315 = vpop.f32.mrf.mxu0
  %v4316 = vadd.f32 0.0, %v4315
  %v4317 = vpop.f32.mrf.mxu0
  %v4318 = vpop.f32.mrf.mxu0
  %v4319 = vadd.f32 0.0, %v4318
  %v4320 = vpop.f32.mrf.mxu0
  %4321 = vmatprep.mubr.bf16.mxu0 %v3378
  %4322 = vmatmul.mubr.bf16.gmra.mxu0 %v3377
  %v4323 = vpop.f32.mrf.mxu0
  %v4324 = vadd.f32 0.0, %v4323
  %v4325 = vpop.f32.mrf.mxu0
  %v4326 = vpop.f32.mrf.mxu0
  %v4327 = vadd.f32 0.0, %v4326
  %v4328 = vpop.f32.mrf.mxu0
  %4329 = vmatprep.mubr.bf16.mxu0 %v3385
  %4330 = vmatmul.mubr.bf16.gmra.mxu0 %v3384
  %v4331 = vpop.f32.mrf.mxu0
  %v4332 = vadd.f32 0.0, %v4331
  %v4333 = vpop.f32.mrf.mxu0
  %v4334 = vpop.f32.mrf.mxu0
  %v4335 = vadd.f32 0.0, %v4334
  %v4336 = vpop.f32.mrf.mxu0
  %4337 = vmatprep.mubr.bf16.mxu0 %v3392
  %4338 = vmatmul.mubr.bf16.gmra.mxu0 %v3391
  %v4339 = vpop.f32.mrf.mxu0
  %v4340 = vadd.f32 0.0, %v4339
  %v4341 = vpop.f32.mrf.mxu0
  %v4342 = vpop.f32.mrf.mxu0
  %v4343 = vadd.f32 0.0, %v4342
  %v4344 = vpop.f32.mrf.mxu0
  %4345 = vmatprep.mubr.bf16.mxu0 %v3399
  %4346 = vmatmul.mubr.bf16.gmra.mxu0 %v3398
  %v4347 = vpop.f32.mrf.mxu0
  %v4348 = vadd.f32 0.0, %v4347
  %v4349 = vpop.f32.mrf.mxu0
  %v4350 = vpop.f32.mrf.mxu0
  %v4351 = vadd.f32 0.0, %v4350
  %v4352 = vpop.f32.mrf.mxu0
  %4353 = vmatprep.mubr.bf16.mxu0 %v3406
  %4354 = vmatmul.mubr.bf16.gmra.mxu0 %v3405
  %v4355 = vpop.f32.mrf.mxu0
  %v4356 = vadd.f32 0.0, %v4355
  %v4357 = vpop.f32.mrf.mxu0
  %v4358 = vpop.f32.mrf.mxu0
  %v4359 = vadd.f32 0.0, %v4358
  %v4360 = vpop.f32.mrf.mxu0
  %4361 = vmatprep.mubr.bf16.mxu0 %v3413
  %4362 = vmatmul.mubr.bf16.gmra.mxu0 %v3412
  %v4363 = vpop.f32.mrf.mxu0
  %v4364 = vadd.f32 0.0, %v4363
  %v4365 = vpop.f32.mrf.mxu0
  %v4366 = vpop.f32.mrf.mxu0
  %v4367 = vadd.f32 0.0, %v4366
  %v4368 = vpop.f32.mrf.mxu0
  %4369 = vmatprep.mubr.bf16.mxu0 %v3420
  %4370 = vmatmul.mubr.bf16.gmra.mxu0 %v3419
  %v4371 = vpop.f32.mrf.mxu0
  %v4372 = vadd.f32 0.0, %v4371
  %v4373 = vpop.f32.mrf.mxu0
  %v4374 = vpop.f32.mrf.mxu0
  %v4375 = vadd.f32 0.0, %v4374
  %v4376 = vpop.f32.mrf.mxu0
  %4377 = vmatprep.mubr.bf16.mxu0 %v3427
  %4378 = vmatmul.mubr.bf16.gmra.mxu0 %v3426
  %v4379 = vpop.f32.mrf.mxu0
  %v4380 = vadd.f32 0.0, %v4379
  %v4381 = vpop.f32.mrf.mxu0
  %v4382 = vpop.f32.mrf.mxu0
  %v4383 = vadd.f32 0.0, %v4382
  %v4384 = vpop.f32.mrf.mxu0
  %4385 = vmatprep.mubr.bf16.mxu0 %v3434
  %4386 = vmatmul.mubr.bf16.gmra.mxu0 %v3433
  %v4387 = vpop.f32.mrf.mxu0
  %v4388 = vadd.f32 0.0, %v4387
  %v4389 = vpop.f32.mrf.mxu0
  %v4390 = vpop.f32.mrf.mxu0
  %v4391 = vadd.f32 0.0, %v4390
  %v4392 = vpop.f32.mrf.mxu0
  %4393 = vmatprep.mubr.bf16.mxu0 %v3441
  %4394 = vmatmul.mubr.bf16.gmra.mxu0 %v3440
  %v4395 = vpop.f32.mrf.mxu0
  %v4396 = vadd.f32 0.0, %v4395
  %v4397 = vpop.f32.mrf.mxu0
  %v4398 = vpop.f32.mrf.mxu0
  %v4399 = vadd.f32 0.0, %v4398
  %v4400 = vpop.f32.mrf.mxu0
  %4401 = vmatprep.mubr.bf16.mxu0 %v3448
  %4402 = vmatmul.mubr.bf16.gmra.mxu0 %v3447
  %v4403 = vpop.f32.mrf.mxu0
  %v4404 = vadd.f32 0.0, %v4403
  %v4405 = vpop.f32.mrf.mxu0
  %v4406 = vpop.f32.mrf.mxu0
  %v4407 = vadd.f32 0.0, %v4406
  %v4408 = vpop.f32.mrf.mxu0
  %4409 = vmatprep.mubr.bf16.mxu0 %v3455
  %4410 = vmatmul.mubr.bf16.gmra.mxu0 %v3454
  %v4411 = vpop.f32.mrf.mxu0
  %v4412 = vadd.f32 0.0, %v4411
  %v4413 = vpop.f32.mrf.mxu0
  %v4414 = vpop.f32.mrf.mxu0
  %v4415 = vadd.f32 0.0, %v4414
  %v4416 = vpop.f32.mrf.mxu0
  %4417 = vmatprep.mubr.bf16.mxu0 %v3462
  %4418 = vmatmul.mubr.bf16.gmra.mxu0 %v3461
  %v4419 = vpop.f32.mrf.mxu0
  %v4420 = vadd.f32 0.0, %v4419
  %v4421 = vpop.f32.mrf.mxu0
  %v4422 = vpop.f32.mrf.mxu0
  %v4423 = vadd.f32 0.0, %v4422
  %v4424 = vpop.f32.mrf.mxu0
  %4425 = vmatprep.mubr.bf16.mxu0 %v3469
  %4426 = vmatmul.mubr.bf16.gmra.mxu0 %v3468
  %v4427 = vpop.f32.mrf.mxu0
  %v4428 = vadd.f32 0.0, %v4427
  %v4429 = vpop.f32.mrf.mxu0
  %v4430 = vpop.f32.mrf.mxu0
  %v4431 = vadd.f32 0.0, %v4430
  %v4432 = vpop.f32.mrf.mxu0
  %4433 = vmatprep.mubr.bf16.mxu0 %v3476
  %4434 = vmatmul.mubr.bf16.gmra.mxu0 %v3475
  %v4435 = vpop.f32.mrf.mxu0
  %v4436 = vadd.f32 0.0, %v4435
  %v4437 = vpop.f32.mrf.mxu0
  %v4438 = vpop.f32.mrf.mxu0
  %v4439 = vadd.f32 0.0, %v4438
  %v4440 = vpop.f32.mrf.mxu0
  %4441 = vmatprep.mubr.bf16.mxu0 %v3483
  %4442 = vmatmul.mubr.bf16.gmra.mxu0 %v3482
  %v4443 = vpop.f32.mrf.mxu0
  %v4444 = vadd.f32 0.0, %v4443
  %v4445 = vpop.f32.mrf.mxu0
  %v4446 = vpop.f32.mrf.mxu0
  %v4447 = vadd.f32 0.0, %v4446
  %v4448 = vpop.f32.mrf.mxu0
  %4449 = vmatprep.mubr.bf16.mxu0 %v3490
  %4450 = vmatmul.mubr.bf16.gmra.mxu0 %v3489
  %v4451 = vpop.f32.mrf.mxu0
  %v4452 = vadd.f32 0.0, %v4451
  %v4453 = vpop.f32.mrf.mxu0
  %v4454 = vpop.f32.mrf.mxu0
  %v4455 = vadd.f32 0.0, %v4454
  %v4456 = vpop.f32.mrf.mxu0
  %4457 = vmatprep.mubr.bf16.mxu0 %v3497
  %4458 = vmatmul.mubr.bf16.gmra.mxu0 %v3496
  %v4459 = vpop.f32.mrf.mxu0
  %v4460 = vadd.f32 0.0, %v4459
  %v4461 = vpop.f32.mrf.mxu0
  %v4462 = vpop.f32.mrf.mxu0
  %v4463 = vadd.f32 0.0, %v4462
  %v4464 = vpop.f32.mrf.mxu0
  %4465 = vmatprep.mubr.bf16.mxu0 %v3504
  %4466 = vmatmul.mubr.bf16.gmra.mxu0 %v3503
  %v4467 = vpop.f32.mrf.mxu0
  %v4468 = vadd.f32 0.0, %v4467
  %v4469 = vpop.f32.mrf.mxu0
  %v4470 = vpop.f32.mrf.mxu0
  %v4471 = vadd.f32 0.0, %v4470
  %v4472 = vpop.f32.mrf.mxu0
  %4473 = vmatprep.mubr.bf16.mxu0 %v3511
  %4474 = vmatmul.mubr.bf16.gmra.mxu0 %v3510
  %v4475 = vpop.f32.mrf.mxu0
  %v4476 = vadd.f32 0.0, %v4475
  %v4477 = vpop.f32.mrf.mxu0
  %v4478 = vpop.f32.mrf.mxu0
  %v4479 = vadd.f32 0.0, %v4478
  %v4480 = vpop.f32.mrf.mxu0
  %4481 = vmatprep.mubr.bf16.mxu0 %v3518
  %4482 = vmatmul.mubr.bf16.gmra.mxu0 %v3517
  %v4483 = vpop.f32.mrf.mxu0
  %v4484 = vadd.f32 0.0, %v4483
  %v4485 = vpop.f32.mrf.mxu0
  %v4486 = vpop.f32.mrf.mxu0
  %v4487 = vadd.f32 0.0, %v4486
  %v4488 = vpop.f32.mrf.mxu0
  %4489 = vmatprep.mubr.bf16.mxu0 %v3525
  %4490 = vmatmul.mubr.bf16.gmra.mxu0 %v3524
  %v4491 = vpop.f32.mrf.mxu0
  %v4492 = vadd.f32 0.0, %v4491
  %v4493 = vpop.f32.mrf.mxu0
  %v4494 = vpop.f32.mrf.mxu0
  %v4495 = vadd.f32 0.0, %v4494
  %v4496 = vpop.f32.mrf.mxu0
  %4497 = vmatprep.mubr.bf16.mxu0 %v3532
  %4498 = vmatmul.mubr.bf16.gmra.mxu0 %v3531
  %v4499 = vpop.f32.mrf.mxu0
  %v4500 = vadd.f32 0.0, %v4499
  %v4501 = vpop.f32.mrf.mxu0
  %v4502 = vpop.f32.mrf.mxu0
  %v4503 = vadd.f32 0.0, %v4502
  %v4504 = vpop.f32.mrf.mxu0
  %4505 = vmatprep.mubr.bf16.mxu0 %v3539
  %4506 = vmatmul.mubr.bf16.gmra.mxu0 %v3538
  %v4507 = vpop.f32.mrf.mxu0
  %v4508 = vadd.f32 0.0, %v4507
  %v4509 = vpop.f32.mrf.mxu0
  %v4510 = vpop.f32.mrf.mxu0
  %v4511 = vadd.f32 0.0, %v4510
  %v4512 = vpop.f32.mrf.mxu0
  %4513 = vmatprep.mubr.bf16.mxu0 %v3546
  %4514 = vmatmul.mubr.bf16.gmra.mxu0 %v3545
  %v4515 = vpop.f32.mrf.mxu0
  %v4516 = vadd.f32 0.0, %v4515
  %v4517 = vpop.f32.mrf.mxu0
  %v4518 = vpop.f32.mrf.mxu0
  %v4519 = vadd.f32 0.0, %v4518
  %v4520 = vpop.f32.mrf.mxu0
  %4521 = vmatprep.mubr.bf16.mxu0 %v3553
  %4522 = vmatmul.mubr.bf16.gmra.mxu0 %v3552
  %v4523 = vpop.f32.mrf.mxu0
  %v4524 = vadd.f32 0.0, %v4523
  %v4525 = vpop.f32.mrf.mxu0
  %v4526 = vpop.f32.mrf.mxu0
  %v4527 = vadd.f32 0.0, %v4526
  %v4528 = vpop.f32.mrf.mxu0
  %4529 = vmatprep.mubr.bf16.mxu0 %v3560
  %4530 = vmatmul.mubr.bf16.gmra.mxu0 %v3559
  %v4531 = vpop.f32.mrf.mxu0
  %v4532 = vadd.f32 0.0, %v4531
  %v4533 = vpop.f32.mrf.mxu0
  %v4534 = vpop.f32.mrf.mxu0
  %v4535 = vadd.f32 0.0, %v4534
  %v4536 = vpop.f32.mrf.mxu0
  %4537 = vmatprep.mubr.bf16.mxu0 %v3567
  %4538 = vmatmul.mubr.bf16.gmra.mxu0 %v3566
  %v4539 = vpop.f32.mrf.mxu0
  %v4540 = vadd.f32 0.0, %v4539
  %v4541 = vpop.f32.mrf.mxu0
  %v4542 = vpop.f32.mrf.mxu0
  %v4543 = vadd.f32 0.0, %v4542
  %v4544 = vpop.f32.mrf.mxu0
  %4545 = vmatprep.mubr.bf16.mxu0 %v3574
  %4546 = vmatmul.mubr.bf16.gmra.mxu0 %v3573
  %v4547 = vpop.f32.mrf.mxu0
  %v4548 = vadd.f32 0.0, %v4547
  %v4549 = vpop.f32.mrf.mxu0
  %v4550 = vpop.f32.mrf.mxu0
  %v4551 = vadd.f32 0.0, %v4550
  %v4552 = vpop.f32.mrf.mxu0
  %4553 = vmatprep.mubr.bf16.mxu0 %v3581
  %4554 = vmatmul.mubr.bf16.gmra.mxu0 %v3580
  %v4555 = vpop.f32.mrf.mxu0
  %v4556 = vadd.f32 0.0, %v4555
  %v4557 = vpop.f32.mrf.mxu0
  %v4558 = vpop.f32.mrf.mxu0
  %v4559 = vadd.f32 0.0, %v4558
  %v4560 = vpop.f32.mrf.mxu0
  %4561 = vmatprep.mubr.bf16.mxu0 %v3588
  %4562 = vmatmul.mubr.bf16.gmra.mxu0 %v3587
  %v4563 = vpop.f32.mrf.mxu0
  %v4564 = vadd.f32 0.0, %v4563
  %v4565 = vpop.f32.mrf.mxu0
  %v4566 = vpop.f32.mrf.mxu0
  %v4567 = vadd.f32 0.0, %v4566
  %v4568 = vpop.f32.mrf.mxu0
  %4569 = vmatprep.mubr.bf16.mxu0 %v3595
  %4570 = vmatmul.mubr.bf16.gmra.mxu0 %v3594
  %v4571 = vpop.f32.mrf.mxu0
  %v4572 = vadd.f32 0.0, %v4571
  %v4573 = vpop.f32.mrf.mxu0
  %v4574 = vpop.f32.mrf.mxu0
  %v4575 = vadd.f32 0.0, %v4574
  %v4576 = vpop.f32.mrf.mxu0
  %4577 = vmatprep.mubr.bf16.mxu0 %v3602
  %4578 = vmatmul.mubr.bf16.gmra.mxu0 %v3601
  %v4579 = vpop.f32.mrf.mxu0
  %v4580 = vadd.f32 0.0, %v4579
  %v4581 = vpop.f32.mrf.mxu0
  %v4582 = vpop.f32.mrf.mxu0
  %v4583 = vadd.f32 0.0, %v4582
  %v4584 = vpop.f32.mrf.mxu0
  %4585 = vmatprep.mubr.bf16.mxu0 %v3609
  %4586 = vmatmul.mubr.bf16.gmra.mxu0 %v3608
  %v4587 = vpop.f32.mrf.mxu0
  %v4588 = vadd.f32 0.0, %v4587
  %v4589 = vpop.f32.mrf.mxu0
  %v4590 = vpop.f32.mrf.mxu0
  %v4591 = vadd.f32 0.0, %v4590
  %v4592 = vpop.f32.mrf.mxu0
  %4593 = vmatprep.mubr.bf16.mxu0 %v3616
  %4594 = vmatmul.mubr.bf16.gmra.mxu0 %v3615
  %v4595 = vpop.f32.mrf.mxu0
  %v4596 = vadd.f32 0.0, %v4595
  %v4597 = vpop.f32.mrf.mxu0
  %v4598 = vpop.f32.mrf.mxu0
  %v4599 = vadd.f32 0.0, %v4598
  %v4600 = vpop.f32.mrf.mxu0
  %4601 = vmatprep.mubr.bf16.mxu0 %v3623
  %4602 = vmatmul.mubr.bf16.gmra.mxu0 %v3622
  %v4603 = vpop.f32.mrf.mxu0
  %v4604 = vadd.f32 0.0, %v4603
  %v4605 = vpop.f32.mrf.mxu0
  %v4606 = vpop.f32.mrf.mxu0
  %v4607 = vadd.f32 0.0, %v4606
  %v4608 = vpop.f32.mrf.mxu0
  %4609 = vmatprep.mubr.bf16.mxu0 %v3630
  %4610 = vmatmul.mubr.bf16.gmra.mxu0 %v3629
  %v4611 = vpop.f32.mrf.mxu0
  %v4612 = vadd.f32 0.0, %v4611
  %v4613 = vpop.f32.mrf.mxu0
  %v4614 = vpop.f32.mrf.mxu0
  %v4615 = vadd.f32 0.0, %v4614
  %v4616 = vpop.f32.mrf.mxu0
  %4617 = vmatprep.mubr.bf16.mxu0 %v3637
  %4618 = vmatmul.mubr.bf16.gmra.mxu0 %v3636
  %v4619 = vpop.f32.mrf.mxu0
  %v4620 = vadd.f32 0.0, %v4619
  %v4621 = vpop.f32.mrf.mxu0
  %v4622 = vpop.f32.mrf.mxu0
  %v4623 = vadd.f32 0.0, %v4622
  %v4624 = vpop.f32.mrf.mxu0
  %4625 = vmatprep.mubr.bf16.mxu0 %v3644
  %4626 = vmatmul.mubr.bf16.gmra.mxu0 %v3643
  %v4627 = vpop.f32.mrf.mxu0
  %v4628 = vadd.f32 0.0, %v4627
  %v4629 = vpop.f32.mrf.mxu0
  %v4630 = vpop.f32.mrf.mxu0
  %v4631 = vadd.f32 0.0, %v4630
  %v4632 = vpop.f32.mrf.mxu0
  %4633 = vmatprep.mubr.bf16.mxu0 %v3651
  %4634 = vmatmul.mubr.bf16.gmra.mxu0 %v3650
  %v4635 = vpop.f32.mrf.mxu0
  %v4636 = vadd.f32 0.0, %v4635
  %v4637 = vpop.f32.mrf.mxu0
  %v4638 = vpop.f32.mrf.mxu0
  %v4639 = vadd.f32 0.0, %v4638
  %v4640 = vpop.f32.mrf.mxu0
  %4641 = vmatprep.mubr.bf16.mxu0 %v3658
  %4642 = vmatmul.mubr.bf16.gmra.mxu0 %v3657
  %v4643 = vpop.f32.mrf.mxu0
  %v4644 = vadd.f32 0.0, %v4643
  %v4645 = vpop.f32.mrf.mxu0
  %v4646 = vpop.f32.mrf.mxu0
  %v4647 = vadd.f32 0.0, %v4646
  %v4648 = vpop.f32.mrf.mxu0
  %4649 = vmatprep.mubr.bf16.mxu0 %v3665
  %4650 = vmatmul.mubr.bf16.gmra.mxu0 %v3664
  %v4651 = vpop.f32.mrf.mxu0
  %v4652 = vadd.f32 0.0, %v4651
  %v4653 = vpop.f32.mrf.mxu0
  %v4654 = vpop.f32.mrf.mxu0
  %v4655 = vadd.f32 0.0, %v4654
  %v4656 = vpop.f32.mrf.mxu0
  %4657 = vmatprep.mubr.bf16.mxu0 %v3672
  %4658 = vmatmul.mubr.bf16.gmra.mxu0 %v3671
  %v4659 = vpop.f32.mrf.mxu0
  %v4660 = vadd.f32 0.0, %v4659
  %v4661 = vpop.f32.mrf.mxu0
  %v4662 = vpop.f32.mrf.mxu0
  %v4663 = vadd.f32 0.0, %v4662
  %v4664 = vpop.f32.mrf.mxu0
  %4665 = vmatprep.mubr.bf16.mxu0 %v3679
  %4666 = vmatmul.mubr.bf16.gmra.mxu0 %v3678
  %v4667 = vpop.f32.mrf.mxu0
  %v4668 = vadd.f32 0.0, %v4667
  %v4669 = vpop.f32.mrf.mxu0
  %v4670 = vpop.f32.mrf.mxu0
  %v4671 = vadd.f32 0.0, %v4670
  %v4672 = vpop.f32.mrf.mxu0
  %4673 = vmatprep.mubr.bf16.mxu0 %v3686
  %4674 = vmatmul.mubr.bf16.gmra.mxu0 %v3685
  %v4675 = vpop.f32.mrf.mxu0
  %v4676 = vadd.f32 0.0, %v4675
  %v4677 = vpop.f32.mrf.mxu0
  %v4678 = vpop.f32.mrf.mxu0
  %v4679 = vpop.f32.mrf.mxu0
  %4680 = vdwg.mxu0
  %4681 = vmatprep.subr.bf16.mxu0 0
  %4682 = vmatpush1.bf16.msra.mxu0 %v1602
  %4683 = vmatprep.subr.bf16.mxu0 0
  %4684 = vmatpush1.bf16.msra.mxu0 %v1601
  %4685 = vmatprep.subr.bf16.mxu0 0
  %4686 = vmatpush1.bf16.msra.mxu0 %v1600
  %4687 = vmatprep.subr.bf16.mxu0 0
  %4688 = vmatpush1.bf16.msra.mxu0 %v1599
  %4689 = vmatprep.subr.bf16.mxu0 0
  %4690 = vmatpush1.bf16.msra.mxu0 %v1598
  %4691 = vmatprep.subr.bf16.mxu0 0
  %4692 = vmatpush1.bf16.msra.mxu0 %v1597
  %4693 = vmatprep.subr.bf16.mxu0 0
  %4694 = vmatpush1.bf16.msra.mxu0 %v1596
  %4695 = vmatprep.subr.bf16.mxu0 0
  %4696 = vmatpush1.bf16.msra.mxu0 %v1595
  %4697 = vmatprep.subr.bf16.mxu0 0
  %4698 = vmatpush2.bf16.msra.mxu0 %v1610
  %4699 = vmatprep.subr.bf16.mxu0 0
  %4700 = vmatpush2.bf16.msra.mxu0 %v1609
  %4701 = vmatprep.subr.bf16.mxu0 0
  %4702 = vmatpush2.bf16.msra.mxu0 %v1608
  %4703 = vmatprep.subr.bf16.mxu0 0
  %4704 = vmatpush2.bf16.msra.mxu0 %v1607
  %4705 = vmatprep.subr.bf16.mxu0 0
  %4706 = vmatpush2.bf16.msra.mxu0 %v1606
  %4707 = vmatprep.subr.bf16.mxu0 0
  %4708 = vmatpush2.bf16.msra.mxu0 %v1605
  %4709 = vmatprep.subr.bf16.mxu0 0
  %4710 = vmatpush2.bf16.msra.mxu0 %v1604
  %4711 = vmatprep.subr.bf16.mxu0 0
  %4712 = vmatpush2.bf16.msra.mxu0 %v1603
  %4713 = vmatprep.mubr.bf16.mxu0 %v3303
  %4714 = vmatmul.mubr.bf16.gmra.mxu0 %v3302
  %v4715 = vpop.f32.mrf.mxu0
  %v4716 = vadd.f32 %v4236, %v4715
  %v4717 = vpop.f32.mrf.mxu0
  %v4718 = vpop.f32.mrf.mxu0
  %v4719 = vadd.f32 %v4239, %v4718
  %v4720 = vpop.f32.mrf.mxu0
  %4721 = vmatprep.mubr.bf16.mxu0 %v3310
  %4722 = vmatmul.mubr.bf16.gmra.mxu0 %v3309
  %v4723 = vpop.f32.mrf.mxu0
  %v4724 = vadd.f32 %v4244, %v4723
  %v4725 = vpop.f32.mrf.mxu0
  %v4726 = vpop.f32.mrf.mxu0
  %v4727 = vadd.f32 %v4247, %v4726
  %v4728 = vpop.f32.mrf.mxu0
  %4729 = vmatprep.mubr.bf16.mxu0 %v3317
  %4730 = vmatmul.mubr.bf16.gmra.mxu0 %v3316
  %v4731 = vpop.f32.mrf.mxu0
  %v4732 = vadd.f32 %v4252, %v4731
  %v4733 = vpop.f32.mrf.mxu0
  %v4734 = vpop.f32.mrf.mxu0
  %v4735 = vadd.f32 %v4255, %v4734
  %v4736 = vpop.f32.mrf.mxu0
  %4737 = vmatprep.mubr.bf16.mxu0 %v3324
  %4738 = vmatmul.mubr.bf16.gmra.mxu0 %v3323
  %v4739 = vpop.f32.mrf.mxu0
  %v4740 = vadd.f32 %v4260, %v4739
  %v4741 = vpop.f32.mrf.mxu0
  %v4742 = vpop.f32.mrf.mxu0
  %v4743 = vadd.f32 %v4263, %v4742
  %v4744 = vpop.f32.mrf.mxu0
  %4745 = vmatprep.mubr.bf16.mxu0 %v3331
  %4746 = vmatmul.mubr.bf16.gmra.mxu0 %v3330
  %v4747 = vpop.f32.mrf.mxu0
  %v4748 = vadd.f32 %v4268, %v4747
  %v4749 = vpop.f32.mrf.mxu0
  %v4750 = vpop.f32.mrf.mxu0
  %v4751 = vadd.f32 %v4271, %v4750
  %v4752 = vpop.f32.mrf.mxu0
  %4753 = vmatprep.mubr.bf16.mxu0 %v3338
  %4754 = vmatmul.mubr.bf16.gmra.mxu0 %v3337
  %v4755 = vpop.f32.mrf.mxu0
  %v4756 = vadd.f32 %v4276, %v4755
  %v4757 = vpop.f32.mrf.mxu0
  %v4758 = vpop.f32.mrf.mxu0
  %v4759 = vadd.f32 %v4279, %v4758
  %v4760 = vpop.f32.mrf.mxu0
  %4761 = vmatprep.mubr.bf16.mxu0 %v3345
  %4762 = vmatmul.mubr.bf16.gmra.mxu0 %v3344
  %v4763 = vpop.f32.mrf.mxu0
  %v4764 = vadd.f32 %v4284, %v4763
  %v4765 = vpop.f32.mrf.mxu0
  %v4766 = vpop.f32.mrf.mxu0
  %v4767 = vadd.f32 %v4287, %v4766
  %v4768 = vpop.f32.mrf.mxu0
  %4769 = vmatprep.mubr.bf16.mxu0 %v3352
  %4770 = vmatmul.mubr.bf16.gmra.mxu0 %v3351
  %v4771 = vpop.f32.mrf.mxu0
  %v4772 = vadd.f32 %v4292, %v4771
  %v4773 = vpop.f32.mrf.mxu0
  %v4774 = vpop.f32.mrf.mxu0
  %v4775 = vadd.f32 %v4295, %v4774
  %v4776 = vpop.f32.mrf.mxu0
  %4777 = vmatprep.mubr.bf16.mxu0 %v3359
  %4778 = vmatmul.mubr.bf16.gmra.mxu0 %v3358
  %v4779 = vpop.f32.mrf.mxu0
  %v4780 = vadd.f32 %v4300, %v4779
  %v4781 = vpop.f32.mrf.mxu0
  %v4782 = vpop.f32.mrf.mxu0
  %v4783 = vadd.f32 %v4303, %v4782
  %v4784 = vpop.f32.mrf.mxu0
  %4785 = vmatprep.mubr.bf16.mxu0 %v3366
  %4786 = vmatmul.mubr.bf16.gmra.mxu0 %v3365
  %v4787 = vpop.f32.mrf.mxu0
  %v4788 = vadd.f32 %v4308, %v4787
  %v4789 = vpop.f32.mrf.mxu0
  %v4790 = vpop.f32.mrf.mxu0
  %v4791 = vadd.f32 %v4311, %v4790
  %v4792 = vpop.f32.mrf.mxu0
  %4793 = vmatprep.mubr.bf16.mxu0 %v3373
  %4794 = vmatmul.mubr.bf16.gmra.mxu0 %v3372
  %v4795 = vpop.f32.mrf.mxu0
  %v4796 = vadd.f32 %v4316, %v4795
  %v4797 = vpop.f32.mrf.mxu0
  %v4798 = vpop.f32.mrf.mxu0
  %v4799 = vadd.f32 %v4319, %v4798
  %v4800 = vpop.f32.mrf.mxu0
  %4801 = vmatprep.mubr.bf16.mxu0 %v3380
  %4802 = vmatmul.mubr.bf16.gmra.mxu0 %v3379
  %v4803 = vpop.f32.mrf.mxu0
  %v4804 = vadd.f32 %v4324, %v4803
  %v4805 = vpop.f32.mrf.mxu0
  %v4806 = vpop.f32.mrf.mxu0
  %v4807 = vadd.f32 %v4327, %v4806
  %v4808 = vpop.f32.mrf.mxu0
  %4809 = vmatprep.mubr.bf16.mxu0 %v3387
  %4810 = vmatmul.mubr.bf16.gmra.mxu0 %v3386
  %v4811 = vpop.f32.mrf.mxu0
  %v4812 = vadd.f32 %v4332, %v4811
  %v4813 = vpop.f32.mrf.mxu0
  %v4814 = vpop.f32.mrf.mxu0
  %v4815 = vadd.f32 %v4335, %v4814
  %v4816 = vpop.f32.mrf.mxu0
  %4817 = vmatprep.mubr.bf16.mxu0 %v3394
  %4818 = vmatmul.mubr.bf16.gmra.mxu0 %v3393
  %v4819 = vpop.f32.mrf.mxu0
  %v4820 = vadd.f32 %v4340, %v4819
  %v4821 = vpop.f32.mrf.mxu0
  %v4822 = vpop.f32.mrf.mxu0
  %v4823 = vadd.f32 %v4343, %v4822
  %v4824 = vpop.f32.mrf.mxu0
  %4825 = vmatprep.mubr.bf16.mxu0 %v3401
  %4826 = vmatmul.mubr.bf16.gmra.mxu0 %v3400
  %v4827 = vpop.f32.mrf.mxu0
  %v4828 = vadd.f32 %v4348, %v4827
  %v4829 = vpop.f32.mrf.mxu0
  %v4830 = vpop.f32.mrf.mxu0
  %v4831 = vadd.f32 %v4351, %v4830
  %v4832 = vpop.f32.mrf.mxu0
  %4833 = vmatprep.mubr.bf16.mxu0 %v3408
  %4834 = vmatmul.mubr.bf16.gmra.mxu0 %v3407
  %v4835 = vpop.f32.mrf.mxu0
  %v4836 = vadd.f32 %v4356, %v4835
  %v4837 = vpop.f32.mrf.mxu0
  %v4838 = vpop.f32.mrf.mxu0
  %v4839 = vadd.f32 %v4359, %v4838
  %v4840 = vpop.f32.mrf.mxu0
  %4841 = vmatprep.mubr.bf16.mxu0 %v3415
  %4842 = vmatmul.mubr.bf16.gmra.mxu0 %v3414
  %v4843 = vpop.f32.mrf.mxu0
  %v4844 = vadd.f32 %v4364, %v4843
  %v4845 = vpop.f32.mrf.mxu0
  %v4846 = vpop.f32.mrf.mxu0
  %v4847 = vadd.f32 %v4367, %v4846
  %v4848 = vpop.f32.mrf.mxu0
  %4849 = vmatprep.mubr.bf16.mxu0 %v3422
  %4850 = vmatmul.mubr.bf16.gmra.mxu0 %v3421
  %v4851 = vpop.f32.mrf.mxu0
  %v4852 = vadd.f32 %v4372, %v4851
  %v4853 = vpop.f32.mrf.mxu0
  %v4854 = vpop.f32.mrf.mxu0
  %v4855 = vadd.f32 %v4375, %v4854
  %v4856 = vpop.f32.mrf.mxu0
  %4857 = vmatprep.mubr.bf16.mxu0 %v3429
  %4858 = vmatmul.mubr.bf16.gmra.mxu0 %v3428
  %v4859 = vpop.f32.mrf.mxu0
  %v4860 = vadd.f32 %v4380, %v4859
  %v4861 = vpop.f32.mrf.mxu0
  %v4862 = vpop.f32.mrf.mxu0
  %v4863 = vadd.f32 %v4383, %v4862
  %v4864 = vpop.f32.mrf.mxu0
  %4865 = vmatprep.mubr.bf16.mxu0 %v3436
  %4866 = vmatmul.mubr.bf16.gmra.mxu0 %v3435
  %v4867 = vpop.f32.mrf.mxu0
  %v4868 = vadd.f32 %v4388, %v4867
  %v4869 = vpop.f32.mrf.mxu0
  %v4870 = vpop.f32.mrf.mxu0
  %v4871 = vadd.f32 %v4391, %v4870
  %v4872 = vpop.f32.mrf.mxu0
  %4873 = vmatprep.mubr.bf16.mxu0 %v3443
  %4874 = vmatmul.mubr.bf16.gmra.mxu0 %v3442
  %v4875 = vpop.f32.mrf.mxu0
  %v4876 = vadd.f32 %v4396, %v4875
  %v4877 = vpop.f32.mrf.mxu0
  %v4878 = vpop.f32.mrf.mxu0
  %v4879 = vadd.f32 %v4399, %v4878
  %v4880 = vpop.f32.mrf.mxu0
  %4881 = vmatprep.mubr.bf16.mxu0 %v3450
  %4882 = vmatmul.mubr.bf16.gmra.mxu0 %v3449
  %v4883 = vpop.f32.mrf.mxu0
  %v4884 = vadd.f32 %v4404, %v4883
  %v4885 = vpop.f32.mrf.mxu0
  %v4886 = vpop.f32.mrf.mxu0
  %v4887 = vadd.f32 %v4407, %v4886
  %v4888 = vpop.f32.mrf.mxu0
  %4889 = vmatprep.mubr.bf16.mxu0 %v3457
  %4890 = vmatmul.mubr.bf16.gmra.mxu0 %v3456
  %v4891 = vpop.f32.mrf.mxu0
  %v4892 = vadd.f32 %v4412, %v4891
  %v4893 = vpop.f32.mrf.mxu0
  %v4894 = vpop.f32.mrf.mxu0
  %v4895 = vadd.f32 %v4415, %v4894
  %v4896 = vpop.f32.mrf.mxu0
  %4897 = vmatprep.mubr.bf16.mxu0 %v3464
  %4898 = vmatmul.mubr.bf16.gmra.mxu0 %v3463
  %v4899 = vpop.f32.mrf.mxu0
  %v4900 = vadd.f32 %v4420, %v4899
  %v4901 = vpop.f32.mrf.mxu0
  %v4902 = vpop.f32.mrf.mxu0
  %v4903 = vadd.f32 %v4423, %v4902
  %v4904 = vpop.f32.mrf.mxu0
  %4905 = vmatprep.mubr.bf16.mxu0 %v3471
  %4906 = vmatmul.mubr.bf16.gmra.mxu0 %v3470
  %v4907 = vpop.f32.mrf.mxu0
  %v4908 = vadd.f32 %v4428, %v4907
  %v4909 = vpop.f32.mrf.mxu0
  %v4910 = vpop.f32.mrf.mxu0
  %v4911 = vadd.f32 %v4431, %v4910
  %v4912 = vpop.f32.mrf.mxu0
  %4913 = vmatprep.mubr.bf16.mxu0 %v3478
  %4914 = vmatmul.mubr.bf16.gmra.mxu0 %v3477
  %v4915 = vpop.f32.mrf.mxu0
  %v4916 = vadd.f32 %v4436, %v4915
  %v4917 = vpop.f32.mrf.mxu0
  %v4918 = vpop.f32.mrf.mxu0
  %v4919 = vadd.f32 %v4439, %v4918
  %v4920 = vpop.f32.mrf.mxu0
  %4921 = vmatprep.mubr.bf16.mxu0 %v3485
  %4922 = vmatmul.mubr.bf16.gmra.mxu0 %v3484
  %v4923 = vpop.f32.mrf.mxu0
  %v4924 = vadd.f32 %v4444, %v4923
  %v4925 = vpop.f32.mrf.mxu0
  %v4926 = vpop.f32.mrf.mxu0
  %v4927 = vadd.f32 %v4447, %v4926
  %v4928 = vpop.f32.mrf.mxu0
  %4929 = vmatprep.mubr.bf16.mxu0 %v3492
  %4930 = vmatmul.mubr.bf16.gmra.mxu0 %v3491
  %v4931 = vpop.f32.mrf.mxu0
  %v4932 = vadd.f32 %v4452, %v4931
  %v4933 = vpop.f32.mrf.mxu0
  %v4934 = vpop.f32.mrf.mxu0
  %v4935 = vadd.f32 %v4455, %v4934
  %v4936 = vpop.f32.mrf.mxu0
  %4937 = vmatprep.mubr.bf16.mxu0 %v3499
  %4938 = vmatmul.mubr.bf16.gmra.mxu0 %v3498
  %v4939 = vpop.f32.mrf.mxu0
  %v4940 = vadd.f32 %v4460, %v4939
  %v4941 = vpop.f32.mrf.mxu0
  %v4942 = vpop.f32.mrf.mxu0
  %v4943 = vadd.f32 %v4463, %v4942
  %v4944 = vpop.f32.mrf.mxu0
  %4945 = vmatprep.mubr.bf16.mxu0 %v3506
  %4946 = vmatmul.mubr.bf16.gmra.mxu0 %v3505
  %v4947 = vpop.f32.mrf.mxu0
  %v4948 = vadd.f32 %v4468, %v4947
  %v4949 = vpop.f32.mrf.mxu0
  %v4950 = vpop.f32.mrf.mxu0
  %v4951 = vadd.f32 %v4471, %v4950
  %v4952 = vpop.f32.mrf.mxu0
  %4953 = vmatprep.mubr.bf16.mxu0 %v3513
  %4954 = vmatmul.mubr.bf16.gmra.mxu0 %v3512
  %v4955 = vpop.f32.mrf.mxu0
  %v4956 = vadd.f32 %v4476, %v4955
  %v4957 = vpop.f32.mrf.mxu0
  %v4958 = vpop.f32.mrf.mxu0
  %v4959 = vadd.f32 %v4479, %v4958
  %v4960 = vpop.f32.mrf.mxu0
  %4961 = vmatprep.mubr.bf16.mxu0 %v3520
  %4962 = vmatmul.mubr.bf16.gmra.mxu0 %v3519
  %v4963 = vpop.f32.mrf.mxu0
  %v4964 = vadd.f32 %v4484, %v4963
  %v4965 = vpop.f32.mrf.mxu0
  %v4966 = vpop.f32.mrf.mxu0
  %v4967 = vadd.f32 %v4487, %v4966
  %v4968 = vpop.f32.mrf.mxu0
  %4969 = vmatprep.mubr.bf16.mxu0 %v3527
  %4970 = vmatmul.mubr.bf16.gmra.mxu0 %v3526
  %v4971 = vpop.f32.mrf.mxu0
  %v4972 = vadd.f32 %v4492, %v4971
  %v4973 = vpop.f32.mrf.mxu0
  %v4974 = vpop.f32.mrf.mxu0
  %v4975 = vadd.f32 %v4495, %v4974
  %v4976 = vpop.f32.mrf.mxu0
  %4977 = vmatprep.mubr.bf16.mxu0 %v3534
  %4978 = vmatmul.mubr.bf16.gmra.mxu0 %v3533
  %v4979 = vpop.f32.mrf.mxu0
  %v4980 = vadd.f32 %v4500, %v4979
  %v4981 = vpop.f32.mrf.mxu0
  %v4982 = vpop.f32.mrf.mxu0
  %v4983 = vadd.f32 %v4503, %v4982
  %v4984 = vpop.f32.mrf.mxu0
  %4985 = vmatprep.mubr.bf16.mxu0 %v3541
  %4986 = vmatmul.mubr.bf16.gmra.mxu0 %v3540
  %v4987 = vpop.f32.mrf.mxu0
  %v4988 = vadd.f32 %v4508, %v4987
  %v4989 = vpop.f32.mrf.mxu0
  %v4990 = vpop.f32.mrf.mxu0
  %v4991 = vadd.f32 %v4511, %v4990
  %v4992 = vpop.f32.mrf.mxu0
  %4993 = vmatprep.mubr.bf16.mxu0 %v3548
  %4994 = vmatmul.mubr.bf16.gmra.mxu0 %v3547
  %v4995 = vpop.f32.mrf.mxu0
  %v4996 = vadd.f32 %v4516, %v4995
  %v4997 = vpop.f32.mrf.mxu0
  %v4998 = vpop.f32.mrf.mxu0
  %v4999 = vadd.f32 %v4519, %v4998
  %v5000 = vpop.f32.mrf.mxu0
  %5001 = vmatprep.mubr.bf16.mxu0 %v3555
  %5002 = vmatmul.mubr.bf16.gmra.mxu0 %v3554
  %v5003 = vpop.f32.mrf.mxu0
  %v5004 = vadd.f32 %v4524, %v5003
  %v5005 = vpop.f32.mrf.mxu0
  %v5006 = vpop.f32.mrf.mxu0
  %v5007 = vadd.f32 %v4527, %v5006
  %v5008 = vpop.f32.mrf.mxu0
  %5009 = vmatprep.mubr.bf16.mxu0 %v3562
  %5010 = vmatmul.mubr.bf16.gmra.mxu0 %v3561
  %v5011 = vpop.f32.mrf.mxu0
  %v5012 = vadd.f32 %v4532, %v5011
  %v5013 = vpop.f32.mrf.mxu0
  %v5014 = vpop.f32.mrf.mxu0
  %v5015 = vadd.f32 %v4535, %v5014
  %v5016 = vpop.f32.mrf.mxu0
  %5017 = vmatprep.mubr.bf16.mxu0 %v3569
  %5018 = vmatmul.mubr.bf16.gmra.mxu0 %v3568
  %v5019 = vpop.f32.mrf.mxu0
  %v5020 = vadd.f32 %v4540, %v5019
  %v5021 = vpop.f32.mrf.mxu0
  %v5022 = vpop.f32.mrf.mxu0
  %v5023 = vadd.f32 %v4543, %v5022
  %v5024 = vpop.f32.mrf.mxu0
  %5025 = vmatprep.mubr.bf16.mxu0 %v3576
  %5026 = vmatmul.mubr.bf16.gmra.mxu0 %v3575
  %v5027 = vpop.f32.mrf.mxu0
  %v5028 = vadd.f32 %v4548, %v5027
  %v5029 = vpop.f32.mrf.mxu0
  %v5030 = vpop.f32.mrf.mxu0
  %v5031 = vadd.f32 %v4551, %v5030
  %v5032 = vpop.f32.mrf.mxu0
  %5033 = vmatprep.mubr.bf16.mxu0 %v3583
  %5034 = vmatmul.mubr.bf16.gmra.mxu0 %v3582
  %v5035 = vpop.f32.mrf.mxu0
  %v5036 = vadd.f32 %v4556, %v5035
  %v5037 = vpop.f32.mrf.mxu0
  %v5038 = vpop.f32.mrf.mxu0
  %v5039 = vadd.f32 %v4559, %v5038
  %v5040 = vpop.f32.mrf.mxu0
  %5041 = vmatprep.mubr.bf16.mxu0 %v3590
  %5042 = vmatmul.mubr.bf16.gmra.mxu0 %v3589
  %v5043 = vpop.f32.mrf.mxu0
  %v5044 = vadd.f32 %v4564, %v5043
  %v5045 = vpop.f32.mrf.mxu0
  %v5046 = vpop.f32.mrf.mxu0
  %v5047 = vadd.f32 %v4567, %v5046
  %v5048 = vpop.f32.mrf.mxu0
  %5049 = vmatprep.mubr.bf16.mxu0 %v3597
  %5050 = vmatmul.mubr.bf16.gmra.mxu0 %v3596
  %v5051 = vpop.f32.mrf.mxu0
  %v5052 = vadd.f32 %v4572, %v5051
  %v5053 = vpop.f32.mrf.mxu0
  %v5054 = vpop.f32.mrf.mxu0
  %v5055 = vadd.f32 %v4575, %v5054
  %v5056 = vpop.f32.mrf.mxu0
  %5057 = vmatprep.mubr.bf16.mxu0 %v3604
  %5058 = vmatmul.mubr.bf16.gmra.mxu0 %v3603
  %v5059 = vpop.f32.mrf.mxu0
  %v5060 = vadd.f32 %v4580, %v5059
  %v5061 = vpop.f32.mrf.mxu0
  %v5062 = vpop.f32.mrf.mxu0
  %v5063 = vadd.f32 %v4583, %v5062
  %v5064 = vpop.f32.mrf.mxu0
  %5065 = vmatprep.mubr.bf16.mxu0 %v3611
  %5066 = vmatmul.mubr.bf16.gmra.mxu0 %v3610
  %v5067 = vpop.f32.mrf.mxu0
  %v5068 = vadd.f32 %v4588, %v5067
  %v5069 = vpop.f32.mrf.mxu0
  %v5070 = vpop.f32.mrf.mxu0
  %v5071 = vadd.f32 %v4591, %v5070
  %v5072 = vpop.f32.mrf.mxu0
  %5073 = vmatprep.mubr.bf16.mxu0 %v3618
  %5074 = vmatmul.mubr.bf16.gmra.mxu0 %v3617
  %v5075 = vpop.f32.mrf.mxu0
  %v5076 = vadd.f32 %v4596, %v5075
  %v5077 = vpop.f32.mrf.mxu0
  %v5078 = vpop.f32.mrf.mxu0
  %v5079 = vadd.f32 %v4599, %v5078
  %v5080 = vpop.f32.mrf.mxu0
  %5081 = vmatprep.mubr.bf16.mxu0 %v3625
  %5082 = vmatmul.mubr.bf16.gmra.mxu0 %v3624
  %v5083 = vpop.f32.mrf.mxu0
  %v5084 = vadd.f32 %v4604, %v5083
  %v5085 = vpop.f32.mrf.mxu0
  %v5086 = vpop.f32.mrf.mxu0
  %v5087 = vadd.f32 %v4607, %v5086
  %v5088 = vpop.f32.mrf.mxu0
  %5089 = vmatprep.mubr.bf16.mxu0 %v3632
  %5090 = vmatmul.mubr.bf16.gmra.mxu0 %v3631
  %v5091 = vpop.f32.mrf.mxu0
  %v5092 = vadd.f32 %v4612, %v5091
  %v5093 = vpop.f32.mrf.mxu0
  %v5094 = vpop.f32.mrf.mxu0
  %v5095 = vadd.f32 %v4615, %v5094
  %v5096 = vpop.f32.mrf.mxu0
  %5097 = vmatprep.mubr.bf16.mxu0 %v3639
  %5098 = vmatmul.mubr.bf16.gmra.mxu0 %v3638
  %v5099 = vpop.f32.mrf.mxu0
  %v5100 = vadd.f32 %v4620, %v5099
  %v5101 = vpop.f32.mrf.mxu0
  %v5102 = vpop.f32.mrf.mxu0
  %v5103 = vadd.f32 %v4623, %v5102
  %v5104 = vpop.f32.mrf.mxu0
  %5105 = vmatprep.mubr.bf16.mxu0 %v3646
  %5106 = vmatmul.mubr.bf16.gmra.mxu0 %v3645
  %v5107 = vpop.f32.mrf.mxu0
  %v5108 = vadd.f32 %v4628, %v5107
  %v5109 = vpop.f32.mrf.mxu0
  %v5110 = vpop.f32.mrf.mxu0
  %v5111 = vadd.f32 %v4631, %v5110
  %v5112 = vpop.f32.mrf.mxu0
  %5113 = vmatprep.mubr.bf16.mxu0 %v3653
  %5114 = vmatmul.mubr.bf16.gmra.mxu0 %v3652
  %v5115 = vpop.f32.mrf.mxu0
  %v5116 = vadd.f32 %v4636, %v5115
  %v5117 = vpop.f32.mrf.mxu0
  %v5118 = vpop.f32.mrf.mxu0
  %v5119 = vadd.f32 %v4639, %v5118
  %v5120 = vpop.f32.mrf.mxu0
  %5121 = vmatprep.mubr.bf16.mxu0 %v3660
  %5122 = vmatmul.mubr.bf16.gmra.mxu0 %v3659
  %v5123 = vpop.f32.mrf.mxu0
  %v5124 = vadd.f32 %v4644, %v5123
  %v5125 = vpop.f32.mrf.mxu0
  %v5126 = vpop.f32.mrf.mxu0
  %v5127 = vadd.f32 %v4647, %v5126
  %v5128 = vpop.f32.mrf.mxu0
  %5129 = vmatprep.mubr.bf16.mxu0 %v3667
  %5130 = vmatmul.mubr.bf16.gmra.mxu0 %v3666
  %v5131 = vpop.f32.mrf.mxu0
  %v5132 = vadd.f32 %v4652, %v5131
  %v5133 = vpop.f32.mrf.mxu0
  %v5134 = vpop.f32.mrf.mxu0
  %v5135 = vadd.f32 %v4655, %v5134
  %v5136 = vpop.f32.mrf.mxu0
  %5137 = vmatprep.mubr.bf16.mxu0 %v3674
  %5138 = vmatmul.mubr.bf16.gmra.mxu0 %v3673
  %v5139 = vpop.f32.mrf.mxu0
  %v5140 = vadd.f32 %v4660, %v5139
  %v5141 = vpop.f32.mrf.mxu0
  %v5142 = vpop.f32.mrf.mxu0
  %v5143 = vadd.f32 %v4663, %v5142
  %v5144 = vpop.f32.mrf.mxu0
  %5145 = vmatprep.mubr.bf16.mxu0 %v3681
  %5146 = vmatmul.mubr.bf16.gmra.mxu0 %v3680
  %v5147 = vpop.f32.mrf.mxu0
  %v5148 = vadd.f32 %v4668, %v5147
  %v5149 = vpop.f32.mrf.mxu0
  %v5150 = vpop.f32.mrf.mxu0
  %v5151 = vadd.f32 %v4671, %v5150
  %v5152 = vpop.f32.mrf.mxu0
  %5153 = vmatprep.mubr.bf16.mxu0 %v3688
  %5154 = vmatmul.mubr.bf16.gmra.mxu0 %v3687
  %v5155 = vpop.f32.mrf.mxu0
  %v5156 = vadd.f32 %v4676, %v5155
  %v5157 = vpop.f32.mrf.mxu0
  %v5158 = vpop.f32.mrf.mxu0
  %v5159 = vpop.f32.mrf.mxu0
  %5160 = vdwg.mxu0
  %5161 = vmatprep.subr.bf16.mxu0 0
  %5162 = vmatpush1.bf16.msra.mxu0 %v1618
  %5163 = vmatprep.subr.bf16.mxu0 0
  %5164 = vmatpush1.bf16.msra.mxu0 %v1617
  %5165 = vmatprep.subr.bf16.mxu0 0
  %5166 = vmatpush1.bf16.msra.mxu0 %v1616
  %5167 = vmatprep.subr.bf16.mxu0 0
  %5168 = vmatpush1.bf16.msra.mxu0 %v1615
  %5169 = vmatprep.subr.bf16.mxu0 0
  %5170 = vmatpush1.bf16.msra.mxu0 %v1614
  %5171 = vmatprep.subr.bf16.mxu0 0
  %5172 = vmatpush1.bf16.msra.mxu0 %v1613
  %5173 = vmatprep.subr.bf16.mxu0 0
  %5174 = vmatpush1.bf16.msra.mxu0 %v1612
  %5175 = vmatprep.subr.bf16.mxu0 0
  %5176 = vmatpush1.bf16.msra.mxu0 %v1611
  %5177 = vmatprep.subr.bf16.mxu0 0
  %5178 = vmatpush2.bf16.msra.mxu0 %v1626
  %5179 = vmatprep.subr.bf16.mxu0 0
  %5180 = vmatpush2.bf16.msra.mxu0 %v1625
  %5181 = vmatprep.subr.bf16.mxu0 0
  %5182 = vmatpush2.bf16.msra.mxu0 %v1624
  %5183 = vmatprep.subr.bf16.mxu0 0
  %5184 = vmatpush2.bf16.msra.mxu0 %v1623
  %5185 = vmatprep.subr.bf16.mxu0 0
  %5186 = vmatpush2.bf16.msra.mxu0 %v1622
  %5187 = vmatprep.subr.bf16.mxu0 0
  %5188 = vmatpush2.bf16.msra.mxu0 %v1621
  %5189 = vmatprep.subr.bf16.mxu0 0
  %5190 = vmatpush2.bf16.msra.mxu0 %v1620
  %5191 = vmatprep.subr.bf16.mxu0 0
  %5192 = vmatpush2.bf16.msra.mxu0 %v1619
  %5193 = vmatprep.mubr.bf16.mxu0 %v3305
  %5194 = vmatmul.mubr.bf16.gmra.mxu0 %v3304
  %v5195 = vpop.f32.mrf.mxu0
  %v5196 = vadd.f32 %v4716, %v5195
  %v5197 = vpop.f32.mrf.mxu0
  %v5198 = vpop.f32.mrf.mxu0
  %v5199 = vadd.f32 %v4719, %v5198
  %v5200 = vpop.f32.mrf.mxu0
  %5201 = vmatprep.mubr.bf16.mxu0 %v3312
  %5202 = vmatmul.mubr.bf16.gmra.mxu0 %v3311
  %v5203 = vpop.f32.mrf.mxu0
  %v5204 = vadd.f32 %v4724, %v5203
  %v5205 = vpop.f32.mrf.mxu0
  %v5206 = vpop.f32.mrf.mxu0
  %v5207 = vadd.f32 %v4727, %v5206
  %v5208 = vpop.f32.mrf.mxu0
  %5209 = vmatprep.mubr.bf16.mxu0 %v3319
  %5210 = vmatmul.mubr.bf16.gmra.mxu0 %v3318
  %v5211 = vpop.f32.mrf.mxu0
  %v5212 = vadd.f32 %v4732, %v5211
  %v5213 = vpop.f32.mrf.mxu0
  %v5214 = vpop.f32.mrf.mxu0
  %v5215 = vadd.f32 %v4735, %v5214
  %v5216 = vpop.f32.mrf.mxu0
  %5217 = vmatprep.mubr.bf16.mxu0 %v3326
  %5218 = vmatmul.mubr.bf16.gmra.mxu0 %v3325
  %v5219 = vpop.f32.mrf.mxu0
  %v5220 = vadd.f32 %v4740, %v5219
  %v5221 = vpop.f32.mrf.mxu0
  %v5222 = vpop.f32.mrf.mxu0
  %v5223 = vadd.f32 %v4743, %v5222
  %v5224 = vpop.f32.mrf.mxu0
  %5225 = vmatprep.mubr.bf16.mxu0 %v3333
  %5226 = vmatmul.mubr.bf16.gmra.mxu0 %v3332
  %v5227 = vpop.f32.mrf.mxu0
  %v5228 = vadd.f32 %v4748, %v5227
  %v5229 = vpop.f32.mrf.mxu0
  %v5230 = vpop.f32.mrf.mxu0
  %v5231 = vadd.f32 %v4751, %v5230
  %v5232 = vpop.f32.mrf.mxu0
  %5233 = vmatprep.mubr.bf16.mxu0 %v3340
  %5234 = vmatmul.mubr.bf16.gmra.mxu0 %v3339
  %v5235 = vpop.f32.mrf.mxu0
  %v5236 = vadd.f32 %v4756, %v5235
  %v5237 = vpop.f32.mrf.mxu0
  %v5238 = vpop.f32.mrf.mxu0
  %v5239 = vadd.f32 %v4759, %v5238
  %v5240 = vpop.f32.mrf.mxu0
  %5241 = vmatprep.mubr.bf16.mxu0 %v3347
  %5242 = vmatmul.mubr.bf16.gmra.mxu0 %v3346
  %v5243 = vpop.f32.mrf.mxu0
  %v5244 = vadd.f32 %v4764, %v5243
  %v5245 = vpop.f32.mrf.mxu0
  %v5246 = vpop.f32.mrf.mxu0
  %v5247 = vadd.f32 %v4767, %v5246
  %v5248 = vpop.f32.mrf.mxu0
  %5249 = vmatprep.mubr.bf16.mxu0 %v3354
  %5250 = vmatmul.mubr.bf16.gmra.mxu0 %v3353
  %v5251 = vpop.f32.mrf.mxu0
  %v5252 = vadd.f32 %v4772, %v5251
  %v5253 = vpop.f32.mrf.mxu0
  %v5254 = vpop.f32.mrf.mxu0
  %v5255 = vadd.f32 %v4775, %v5254
  %v5256 = vpop.f32.mrf.mxu0
  %5257 = vmatprep.mubr.bf16.mxu0 %v3361
  %5258 = vmatmul.mubr.bf16.gmra.mxu0 %v3360
  %v5259 = vpop.f32.mrf.mxu0
  %v5260 = vadd.f32 %v4780, %v5259
  %v5261 = vpop.f32.mrf.mxu0
  %v5262 = vpop.f32.mrf.mxu0
  %v5263 = vadd.f32 %v4783, %v5262
  %v5264 = vpop.f32.mrf.mxu0
  %5265 = vmatprep.mubr.bf16.mxu0 %v3368
  %5266 = vmatmul.mubr.bf16.gmra.mxu0 %v3367
  %v5267 = vpop.f32.mrf.mxu0
  %v5268 = vadd.f32 %v4788, %v5267
  %v5269 = vpop.f32.mrf.mxu0
  %v5270 = vpop.f32.mrf.mxu0
  %v5271 = vadd.f32 %v4791, %v5270
  %v5272 = vpop.f32.mrf.mxu0
  %5273 = vmatprep.mubr.bf16.mxu0 %v3375
  %5274 = vmatmul.mubr.bf16.gmra.mxu0 %v3374
  %v5275 = vpop.f32.mrf.mxu0
  %v5276 = vadd.f32 %v4796, %v5275
  %v5277 = vpop.f32.mrf.mxu0
  %v5278 = vpop.f32.mrf.mxu0
  %v5279 = vadd.f32 %v4799, %v5278
  %v5280 = vpop.f32.mrf.mxu0
  %5281 = vmatprep.mubr.bf16.mxu0 %v3382
  %5282 = vmatmul.mubr.bf16.gmra.mxu0 %v3381
  %v5283 = vpop.f32.mrf.mxu0
  %v5284 = vadd.f32 %v4804, %v5283
  %v5285 = vpop.f32.mrf.mxu0
  %v5286 = vpop.f32.mrf.mxu0
  %v5287 = vadd.f32 %v4807, %v5286
  %v5288 = vpop.f32.mrf.mxu0
  %5289 = vmatprep.mubr.bf16.mxu0 %v3389
  %5290 = vmatmul.mubr.bf16.gmra.mxu0 %v3388
  %v5291 = vpop.f32.mrf.mxu0
  %v5292 = vadd.f32 %v4812, %v5291
  %v5293 = vpop.f32.mrf.mxu0
  %v5294 = vpop.f32.mrf.mxu0
  %v5295 = vadd.f32 %v4815, %v5294
  %v5296 = vpop.f32.mrf.mxu0
  %5297 = vmatprep.mubr.bf16.mxu0 %v3396
  %5298 = vmatmul.mubr.bf16.gmra.mxu0 %v3395
  %v5299 = vpop.f32.mrf.mxu0
  %v5300 = vadd.f32 %v4820, %v5299
  %v5301 = vpop.f32.mrf.mxu0
  %v5302 = vpop.f32.mrf.mxu0
  %v5303 = vadd.f32 %v4823, %v5302
  %v5304 = vpop.f32.mrf.mxu0
  %5305 = vmatprep.mubr.bf16.mxu0 %v3403
  %5306 = vmatmul.mubr.bf16.gmra.mxu0 %v3402
  %v5307 = vpop.f32.mrf.mxu0
  %v5308 = vadd.f32 %v4828, %v5307
  %v5309 = vpop.f32.mrf.mxu0
  %v5310 = vpop.f32.mrf.mxu0
  %v5311 = vadd.f32 %v4831, %v5310
  %v5312 = vpop.f32.mrf.mxu0
  %5313 = vmatprep.mubr.bf16.mxu0 %v3410
  %5314 = vmatmul.mubr.bf16.gmra.mxu0 %v3409
  %v5315 = vpop.f32.mrf.mxu0
  %v5316 = vadd.f32 %v4836, %v5315
  %v5317 = vpop.f32.mrf.mxu0
  %v5318 = vpop.f32.mrf.mxu0
  %v5319 = vadd.f32 %v4839, %v5318
  %v5320 = vpop.f32.mrf.mxu0
  %5321 = vmatprep.mubr.bf16.mxu0 %v3417
  %5322 = vmatmul.mubr.bf16.gmra.mxu0 %v3416
  %v5323 = vpop.f32.mrf.mxu0
  %v5324 = vadd.f32 %v4844, %v5323
  %v5325 = vpop.f32.mrf.mxu0
  %v5326 = vpop.f32.mrf.mxu0
  %v5327 = vadd.f32 %v4847, %v5326
  %v5328 = vpop.f32.mrf.mxu0
  %5329 = vmatprep.mubr.bf16.mxu0 %v3424
  %5330 = vmatmul.mubr.bf16.gmra.mxu0 %v3423
  %v5331 = vpop.f32.mrf.mxu0
  %v5332 = vadd.f32 %v4852, %v5331
  %v5333 = vpop.f32.mrf.mxu0
  %v5334 = vpop.f32.mrf.mxu0
  %v5335 = vadd.f32 %v4855, %v5334
  %v5336 = vpop.f32.mrf.mxu0
  %5337 = vmatprep.mubr.bf16.mxu0 %v3431
  %5338 = vmatmul.mubr.bf16.gmra.mxu0 %v3430
  %v5339 = vpop.f32.mrf.mxu0
  %v5340 = vadd.f32 %v4860, %v5339
  %v5341 = vpop.f32.mrf.mxu0
  %v5342 = vpop.f32.mrf.mxu0
  %v5343 = vadd.f32 %v4863, %v5342
  %v5344 = vpop.f32.mrf.mxu0
  %5345 = vmatprep.mubr.bf16.mxu0 %v3438
  %5346 = vmatmul.mubr.bf16.gmra.mxu0 %v3437
  %v5347 = vpop.f32.mrf.mxu0
  %v5348 = vadd.f32 %v4868, %v5347
  %v5349 = vpop.f32.mrf.mxu0
  %v5350 = vpop.f32.mrf.mxu0
  %v5351 = vadd.f32 %v4871, %v5350
  %v5352 = vpop.f32.mrf.mxu0
  %5353 = vmatprep.mubr.bf16.mxu0 %v3445
  %5354 = vmatmul.mubr.bf16.gmra.mxu0 %v3444
  %v5355 = vpop.f32.mrf.mxu0
  %v5356 = vadd.f32 %v4876, %v5355
  %v5357 = vpop.f32.mrf.mxu0
  %v5358 = vpop.f32.mrf.mxu0
  %v5359 = vadd.f32 %v4879, %v5358
  %v5360 = vpop.f32.mrf.mxu0
  %5361 = vmatprep.mubr.bf16.mxu0 %v3452
  %5362 = vmatmul.mubr.bf16.gmra.mxu0 %v3451
  %v5363 = vpop.f32.mrf.mxu0
  %v5364 = vadd.f32 %v4884, %v5363
  %v5365 = vpop.f32.mrf.mxu0
  %v5366 = vpop.f32.mrf.mxu0
  %v5367 = vadd.f32 %v4887, %v5366
  %v5368 = vpop.f32.mrf.mxu0
  %5369 = vmatprep.mubr.bf16.mxu0 %v3459
  %5370 = vmatmul.mubr.bf16.gmra.mxu0 %v3458
  %v5371 = vpop.f32.mrf.mxu0
  %v5372 = vadd.f32 %v4892, %v5371
  %v5373 = vpop.f32.mrf.mxu0
  %v5374 = vpop.f32.mrf.mxu0
  %v5375 = vadd.f32 %v4895, %v5374
  %v5376 = vpop.f32.mrf.mxu0
  %5377 = vmatprep.mubr.bf16.mxu0 %v3466
  %5378 = vmatmul.mubr.bf16.gmra.mxu0 %v3465
  %v5379 = vpop.f32.mrf.mxu0
  %v5380 = vadd.f32 %v4900, %v5379
  %v5381 = vpop.f32.mrf.mxu0
  %v5382 = vpop.f32.mrf.mxu0
  %v5383 = vadd.f32 %v4903, %v5382
  %v5384 = vpop.f32.mrf.mxu0
  %5385 = vmatprep.mubr.bf16.mxu0 %v3473
  %5386 = vmatmul.mubr.bf16.gmra.mxu0 %v3472
  %v5387 = vpop.f32.mrf.mxu0
  %v5388 = vadd.f32 %v4908, %v5387
  %v5389 = vpop.f32.mrf.mxu0
  %v5390 = vpop.f32.mrf.mxu0
  %v5391 = vadd.f32 %v4911, %v5390
  %v5392 = vpop.f32.mrf.mxu0
  %5393 = vmatprep.mubr.bf16.mxu0 %v3480
  %5394 = vmatmul.mubr.bf16.gmra.mxu0 %v3479
  %v5395 = vpop.f32.mrf.mxu0
  %v5396 = vadd.f32 %v4916, %v5395
  %v5397 = vpop.f32.mrf.mxu0
  %v5398 = vpop.f32.mrf.mxu0
  %v5399 = vadd.f32 %v4919, %v5398
  %v5400 = vpop.f32.mrf.mxu0
  %5401 = vmatprep.mubr.bf16.mxu0 %v3487
  %5402 = vmatmul.mubr.bf16.gmra.mxu0 %v3486
  %v5403 = vpop.f32.mrf.mxu0
  %v5404 = vadd.f32 %v4924, %v5403
  %v5405 = vpop.f32.mrf.mxu0
  %v5406 = vpop.f32.mrf.mxu0
  %v5407 = vadd.f32 %v4927, %v5406
  %v5408 = vpop.f32.mrf.mxu0
  %5409 = vmatprep.mubr.bf16.mxu0 %v3494
  %5410 = vmatmul.mubr.bf16.gmra.mxu0 %v3493
  %v5411 = vpop.f32.mrf.mxu0
  %v5412 = vadd.f32 %v4932, %v5411
  %v5413 = vpop.f32.mrf.mxu0
  %v5414 = vpop.f32.mrf.mxu0
  %v5415 = vadd.f32 %v4935, %v5414
  %v5416 = vpop.f32.mrf.mxu0
  %5417 = vmatprep.mubr.bf16.mxu0 %v3501
  %5418 = vmatmul.mubr.bf16.gmra.mxu0 %v3500
  %v5419 = vpop.f32.mrf.mxu0
  %v5420 = vadd.f32 %v4940, %v5419
  %v5421 = vpop.f32.mrf.mxu0
  %v5422 = vpop.f32.mrf.mxu0
  %v5423 = vadd.f32 %v4943, %v5422
  %v5424 = vpop.f32.mrf.mxu0
  %5425 = vmatprep.mubr.bf16.mxu0 %v3508
  %5426 = vmatmul.mubr.bf16.gmra.mxu0 %v3507
  %v5427 = vpop.f32.mrf.mxu0
  %v5428 = vadd.f32 %v4948, %v5427
  %v5429 = vpop.f32.mrf.mxu0
  %v5430 = vpop.f32.mrf.mxu0
  %v5431 = vadd.f32 %v4951, %v5430
  %v5432 = vpop.f32.mrf.mxu0
  %5433 = vmatprep.mubr.bf16.mxu0 %v3515
  %5434 = vmatmul.mubr.bf16.gmra.mxu0 %v3514
  %v5435 = vpop.f32.mrf.mxu0
  %v5436 = vadd.f32 %v4956, %v5435
  %v5437 = vpop.f32.mrf.mxu0
  %v5438 = vpop.f32.mrf.mxu0
  %v5439 = vadd.f32 %v4959, %v5438
  %v5440 = vpop.f32.mrf.mxu0
  %5441 = vmatprep.mubr.bf16.mxu0 %v3522
  %5442 = vmatmul.mubr.bf16.gmra.mxu0 %v3521
  %v5443 = vpop.f32.mrf.mxu0
  %v5444 = vadd.f32 %v4964, %v5443
  %v5445 = vpop.f32.mrf.mxu0
  %v5446 = vpop.f32.mrf.mxu0
  %v5447 = vadd.f32 %v4967, %v5446
  %v5448 = vpop.f32.mrf.mxu0
  %5449 = vmatprep.mubr.bf16.mxu0 %v3529
  %5450 = vmatmul.mubr.bf16.gmra.mxu0 %v3528
  %v5451 = vpop.f32.mrf.mxu0
  %v5452 = vadd.f32 %v4972, %v5451
  %v5453 = vpop.f32.mrf.mxu0
  %v5454 = vpop.f32.mrf.mxu0
  %v5455 = vadd.f32 %v4975, %v5454
  %v5456 = vpop.f32.mrf.mxu0
  %5457 = vmatprep.mubr.bf16.mxu0 %v3536
  %5458 = vmatmul.mubr.bf16.gmra.mxu0 %v3535
  %v5459 = vpop.f32.mrf.mxu0
  %v5460 = vadd.f32 %v4980, %v5459
  %v5461 = vpop.f32.mrf.mxu0
  %v5462 = vpop.f32.mrf.mxu0
  %v5463 = vadd.f32 %v4983, %v5462
  %v5464 = vpop.f32.mrf.mxu0
  %5465 = vmatprep.mubr.bf16.mxu0 %v3543
  %5466 = vmatmul.mubr.bf16.gmra.mxu0 %v3542
  %v5467 = vpop.f32.mrf.mxu0
  %v5468 = vadd.f32 %v4988, %v5467
  %v5469 = vpop.f32.mrf.mxu0
  %v5470 = vpop.f32.mrf.mxu0
  %v5471 = vadd.f32 %v4991, %v5470
  %v5472 = vpop.f32.mrf.mxu0
  %5473 = vmatprep.mubr.bf16.mxu0 %v3550
  %5474 = vmatmul.mubr.bf16.gmra.mxu0 %v3549
  %v5475 = vpop.f32.mrf.mxu0
  %v5476 = vadd.f32 %v4996, %v5475
  %v5477 = vpop.f32.mrf.mxu0
  %v5478 = vpop.f32.mrf.mxu0
  %v5479 = vadd.f32 %v4999, %v5478
  %v5480 = vpop.f32.mrf.mxu0
  %5481 = vmatprep.mubr.bf16.mxu0 %v3557
  %5482 = vmatmul.mubr.bf16.gmra.mxu0 %v3556
  %v5483 = vpop.f32.mrf.mxu0
  %v5484 = vadd.f32 %v5004, %v5483
  %v5485 = vpop.f32.mrf.mxu0
  %v5486 = vpop.f32.mrf.mxu0
  %v5487 = vadd.f32 %v5007, %v5486
  %v5488 = vpop.f32.mrf.mxu0
  %5489 = vmatprep.mubr.bf16.mxu0 %v3564
  %5490 = vmatmul.mubr.bf16.gmra.mxu0 %v3563
  %v5491 = vpop.f32.mrf.mxu0
  %v5492 = vadd.f32 %v5012, %v5491
  %v5493 = vpop.f32.mrf.mxu0
  %v5494 = vpop.f32.mrf.mxu0
  %v5495 = vadd.f32 %v5015, %v5494
  %v5496 = vpop.f32.mrf.mxu0
  %5497 = vmatprep.mubr.bf16.mxu0 %v3571
  %5498 = vmatmul.mubr.bf16.gmra.mxu0 %v3570
  %v5499 = vpop.f32.mrf.mxu0
  %v5500 = vadd.f32 %v5020, %v5499
  %v5501 = vpop.f32.mrf.mxu0
  %v5502 = vpop.f32.mrf.mxu0
  %v5503 = vadd.f32 %v5023, %v5502
  %v5504 = vpop.f32.mrf.mxu0
  %5505 = vmatprep.mubr.bf16.mxu0 %v3578
  %5506 = vmatmul.mubr.bf16.gmra.mxu0 %v3577
  %v5507 = vpop.f32.mrf.mxu0
  %v5508 = vadd.f32 %v5028, %v5507
  %v5509 = vpop.f32.mrf.mxu0
  %v5510 = vpop.f32.mrf.mxu0
  %v5511 = vadd.f32 %v5031, %v5510
  %v5512 = vpop.f32.mrf.mxu0
  %5513 = vmatprep.mubr.bf16.mxu0 %v3585
  %5514 = vmatmul.mubr.bf16.gmra.mxu0 %v3584
  %v5515 = vpop.f32.mrf.mxu0
  %v5516 = vadd.f32 %v5036, %v5515
  %v5517 = vpop.f32.mrf.mxu0
  %v5518 = vpop.f32.mrf.mxu0
  %v5519 = vadd.f32 %v5039, %v5518
  %v5520 = vpop.f32.mrf.mxu0
  %5521 = vmatprep.mubr.bf16.mxu0 %v3592
  %5522 = vmatmul.mubr.bf16.gmra.mxu0 %v3591
  %v5523 = vpop.f32.mrf.mxu0
  %v5524 = vadd.f32 %v5044, %v5523
  %v5525 = vpop.f32.mrf.mxu0
  %v5526 = vpop.f32.mrf.mxu0
  %v5527 = vadd.f32 %v5047, %v5526
  %v5528 = vpop.f32.mrf.mxu0
  %5529 = vmatprep.mubr.bf16.mxu0 %v3599
  %5530 = vmatmul.mubr.bf16.gmra.mxu0 %v3598
  %v5531 = vpop.f32.mrf.mxu0
  %v5532 = vadd.f32 %v5052, %v5531
  %v5533 = vpop.f32.mrf.mxu0
  %v5534 = vpop.f32.mrf.mxu0
  %v5535 = vadd.f32 %v5055, %v5534
  %v5536 = vpop.f32.mrf.mxu0
  %5537 = vmatprep.mubr.bf16.mxu0 %v3606
  %5538 = vmatmul.mubr.bf16.gmra.mxu0 %v3605
  %v5539 = vpop.f32.mrf.mxu0
  %v5540 = vadd.f32 %v5060, %v5539
  %v5541 = vpop.f32.mrf.mxu0
  %v5542 = vpop.f32.mrf.mxu0
  %v5543 = vadd.f32 %v5063, %v5542
  %v5544 = vpop.f32.mrf.mxu0
  %5545 = vmatprep.mubr.bf16.mxu0 %v3613
  %5546 = vmatmul.mubr.bf16.gmra.mxu0 %v3612
  %v5547 = vpop.f32.mrf.mxu0
  %v5548 = vadd.f32 %v5068, %v5547
  %v5549 = vpop.f32.mrf.mxu0
  %v5550 = vpop.f32.mrf.mxu0
  %v5551 = vadd.f32 %v5071, %v5550
  %v5552 = vpop.f32.mrf.mxu0
  %5553 = vmatprep.mubr.bf16.mxu0 %v3620
  %5554 = vmatmul.mubr.bf16.gmra.mxu0 %v3619
  %v5555 = vpop.f32.mrf.mxu0
  %v5556 = vadd.f32 %v5076, %v5555
  %v5557 = vpop.f32.mrf.mxu0
  %v5558 = vpop.f32.mrf.mxu0
  %v5559 = vadd.f32 %v5079, %v5558
  %v5560 = vpop.f32.mrf.mxu0
  %5561 = vmatprep.mubr.bf16.mxu0 %v3627
  %5562 = vmatmul.mubr.bf16.gmra.mxu0 %v3626
  %v5563 = vpop.f32.mrf.mxu0
  %v5564 = vadd.f32 %v5084, %v5563
  %v5565 = vpop.f32.mrf.mxu0
  %v5566 = vpop.f32.mrf.mxu0
  %v5567 = vadd.f32 %v5087, %v5566
  %v5568 = vpop.f32.mrf.mxu0
  %5569 = vmatprep.mubr.bf16.mxu0 %v3634
  %5570 = vmatmul.mubr.bf16.gmra.mxu0 %v3633
  %v5571 = vpop.f32.mrf.mxu0
  %v5572 = vadd.f32 %v5092, %v5571
  %v5573 = vpop.f32.mrf.mxu0
  %v5574 = vpop.f32.mrf.mxu0
  %v5575 = vadd.f32 %v5095, %v5574
  %v5576 = vpop.f32.mrf.mxu0
  %5577 = vmatprep.mubr.bf16.mxu0 %v3641
  %5578 = vmatmul.mubr.bf16.gmra.mxu0 %v3640
  %v5579 = vpop.f32.mrf.mxu0
  %v5580 = vadd.f32 %v5100, %v5579
  %v5581 = vpop.f32.mrf.mxu0
  %v5582 = vpop.f32.mrf.mxu0
  %v5583 = vadd.f32 %v5103, %v5582
  %v5584 = vpop.f32.mrf.mxu0
  %5585 = vmatprep.mubr.bf16.mxu0 %v3648
  %5586 = vmatmul.mubr.bf16.gmra.mxu0 %v3647
  %v5587 = vpop.f32.mrf.mxu0
  %v5588 = vadd.f32 %v5108, %v5587
  %v5589 = vpop.f32.mrf.mxu0
  %v5590 = vpop.f32.mrf.mxu0
  %v5591 = vadd.f32 %v5111, %v5590
  %v5592 = vpop.f32.mrf.mxu0
  %5593 = vmatprep.mubr.bf16.mxu0 %v3655
  %5594 = vmatmul.mubr.bf16.gmra.mxu0 %v3654
  %v5595 = vpop.f32.mrf.mxu0
  %v5596 = vadd.f32 %v5116, %v5595
  %v5597 = vpop.f32.mrf.mxu0
  %v5598 = vpop.f32.mrf.mxu0
  %v5599 = vadd.f32 %v5119, %v5598
  %v5600 = vpop.f32.mrf.mxu0
  %5601 = vmatprep.mubr.bf16.mxu0 %v3662
  %5602 = vmatmul.mubr.bf16.gmra.mxu0 %v3661
  %v5603 = vpop.f32.mrf.mxu0
  %v5604 = vadd.f32 %v5124, %v5603
  %v5605 = vpop.f32.mrf.mxu0
  %v5606 = vpop.f32.mrf.mxu0
  %v5607 = vadd.f32 %v5127, %v5606
  %v5608 = vpop.f32.mrf.mxu0
  %5609 = vmatprep.mubr.bf16.mxu0 %v3669
  %5610 = vmatmul.mubr.bf16.gmra.mxu0 %v3668
  %v5611 = vpop.f32.mrf.mxu0
  %v5612 = vadd.f32 %v5132, %v5611
  %v5613 = vpop.f32.mrf.mxu0
  %v5614 = vpop.f32.mrf.mxu0
  %v5615 = vadd.f32 %v5135, %v5614
  %v5616 = vpop.f32.mrf.mxu0
  %5617 = vmatprep.mubr.bf16.mxu0 %v3676
  %5618 = vmatmul.mubr.bf16.gmra.mxu0 %v3675
  %v5619 = vpop.f32.mrf.mxu0
  %v5620 = vadd.f32 %v5140, %v5619
  %v5621 = vpop.f32.mrf.mxu0
  %v5622 = vpop.f32.mrf.mxu0
  %v5623 = vadd.f32 %v5143, %v5622
  %v5624 = vpop.f32.mrf.mxu0
  %5625 = vmatprep.mubr.bf16.mxu0 %v3683
  %5626 = vmatmul.mubr.bf16.gmra.mxu0 %v3682
  %v5627 = vpop.f32.mrf.mxu0
  %v5628 = vadd.f32 %v5148, %v5627
  %v5629 = vpop.f32.mrf.mxu0
  %v5630 = vpop.f32.mrf.mxu0
  %v5631 = vadd.f32 %v5151, %v5630
  %v5632 = vpop.f32.mrf.mxu0
  %5633 = vmatprep.mubr.bf16.mxu0 %v3690
  %5634 = vmatmul.mubr.bf16.gmra.mxu0 %v3689
  %v5635 = vpop.f32.mrf.mxu0
  %v5636 = vadd.f32 %v5156, %v5635
  %v5637 = vpop.f32.mrf.mxu0
  %v5638 = vpop.f32.mrf.mxu0
  %v5639 = vpop.f32.mrf.mxu0
  %5640 = vdwg.mxu0
  %5641 = vmatprep.subr.bf16.mxu0 0
  %5642 = vmatpush1.bf16.msra.mxu0 %v4199
  %5643 = vmatprep.subr.bf16.mxu0 0
  %5644 = vmatpush1.bf16.msra.mxu0 %v1633
  %5645 = vmatprep.subr.bf16.mxu0 0
  %5646 = vmatpush1.bf16.msra.mxu0 %v1632
  %5647 = vmatprep.subr.bf16.mxu0 0
  %5648 = vmatpush1.bf16.msra.mxu0 %v1631
  %5649 = vmatprep.subr.bf16.mxu0 0
  %5650 = vmatpush1.bf16.msra.mxu0 %v1630
  %5651 = vmatprep.subr.bf16.mxu0 0
  %5652 = vmatpush1.bf16.msra.mxu0 %v1629
  %5653 = vmatprep.subr.bf16.mxu0 0
  %5654 = vmatpush1.bf16.msra.mxu0 %v1628
  %5655 = vmatprep.subr.bf16.mxu0 0
  %5656 = vmatpush1.bf16.msra.mxu0 %v1627
  %5657 = vmatprep.subr.bf16.mxu0 0
  %5658 = vmatpush2.bf16.msra.mxu0 0
  %5659 = vmatprep.subr.bf16.mxu0 0
  %5660 = vmatpush2.bf16.msra.mxu0 0
  %5661 = vmatprep.subr.bf16.mxu0 0
  %5662 = vmatpush2.bf16.msra.mxu0 0
  %5663 = vmatprep.subr.bf16.mxu0 0
  %5664 = vmatpush2.bf16.msra.mxu0 0
  %5665 = vmatprep.subr.bf16.mxu0 0
  %5666 = vmatpush2.bf16.msra.mxu0 0
  %5667 = vmatprep.subr.bf16.mxu0 0
  %5668 = vmatpush2.bf16.msra.mxu0 0
  %5669 = vmatprep.subr.bf16.mxu0 0
  %5670 = vmatpush2.bf16.msra.mxu0 0
  %5671 = vmatprep.subr.bf16.mxu0 0
  %5672 = vmatpush2.bf16.msra.mxu0 0
  %5673 = vmatprep.mubr.bf16.mxu0 0
  %5674 = vmatmul.mubr.bf16.gmra.mxu0 %v4030
  %v5675 = vpop.f32.mrf.mxu0
  %v5676 = vadd.f32 %v5196, %v5675
  %v5677 = vpop.f32.mrf.mxu0
  %v5678 = vpop.f32.mrf.mxu0
  %v5679 = vadd.f32 %v5199, %v5678
  %v5680 = vpop.f32.mrf.mxu0
  %5681 = vmatprep.mubr.bf16.mxu0 0
  %5682 = vmatmul.mubr.bf16.gmra.mxu0 %v4033
  %v5683 = vpop.f32.mrf.mxu0
  %v5684 = vadd.f32 %v5204, %v5683
  %v5685 = vpop.f32.mrf.mxu0
  %v5686 = vpop.f32.mrf.mxu0
  %v5687 = vadd.f32 %v5207, %v5686
  %v5688 = vpop.f32.mrf.mxu0
  %5689 = vmatprep.mubr.bf16.mxu0 0
  %5690 = vmatmul.mubr.bf16.gmra.mxu0 %v4036
  %v5691 = vpop.f32.mrf.mxu0
  %v5692 = vadd.f32 %v5212, %v5691
  %v5693 = vpop.f32.mrf.mxu0
  %v5694 = vpop.f32.mrf.mxu0
  %v5695 = vadd.f32 %v5215, %v5694
  %v5696 = vpop.f32.mrf.mxu0
  %5697 = vmatprep.mubr.bf16.mxu0 0
  %5698 = vmatmul.mubr.bf16.gmra.mxu0 %v4039
  %v5699 = vpop.f32.mrf.mxu0
  %v5700 = vadd.f32 %v5220, %v5699
  %v5701 = vpop.f32.mrf.mxu0
  %v5702 = vpop.f32.mrf.mxu0
  %v5703 = vadd.f32 %v5223, %v5702
  %v5704 = vpop.f32.mrf.mxu0
  %5705 = vmatprep.mubr.bf16.mxu0 0
  %5706 = vmatmul.mubr.bf16.gmra.mxu0 %v4042
  %v5707 = vpop.f32.mrf.mxu0
  %v5708 = vadd.f32 %v5228, %v5707
  %v5709 = vpop.f32.mrf.mxu0
  %v5710 = vpop.f32.mrf.mxu0
  %v5711 = vadd.f32 %v5231, %v5710
  %v5712 = vpop.f32.mrf.mxu0
  %5713 = vmatprep.mubr.bf16.mxu0 0
  %5714 = vmatmul.mubr.bf16.gmra.mxu0 %v4045
  %v5715 = vpop.f32.mrf.mxu0
  %v5716 = vadd.f32 %v5236, %v5715
  %v5717 = vpop.f32.mrf.mxu0
  %v5718 = vpop.f32.mrf.mxu0
  %v5719 = vadd.f32 %v5239, %v5718
  %v5720 = vpop.f32.mrf.mxu0
  %5721 = vmatprep.mubr.bf16.mxu0 0
  %5722 = vmatmul.mubr.bf16.gmra.mxu0 %v4048
  %v5723 = vpop.f32.mrf.mxu0
  %v5724 = vadd.f32 %v5244, %v5723
  %v5725 = vpop.f32.mrf.mxu0
  %v5726 = vpop.f32.mrf.mxu0
  %v5727 = vadd.f32 %v5247, %v5726
  %v5728 = vpop.f32.mrf.mxu0
  %5729 = vmatprep.mubr.bf16.mxu0 0
  %5730 = vmatmul.mubr.bf16.gmra.mxu0 %v4051
  %v5731 = vpop.f32.mrf.mxu0
  %v5732 = vadd.f32 %v5252, %v5731
  %v5733 = vpop.f32.mrf.mxu0
  %v5734 = vpop.f32.mrf.mxu0
  %v5735 = vadd.f32 %v5255, %v5734
  %v5736 = vpop.f32.mrf.mxu0
  %5737 = vmatprep.mubr.bf16.mxu0 0
  %5738 = vmatmul.mubr.bf16.gmra.mxu0 %v4054
  %v5739 = vpop.f32.mrf.mxu0
  %v5740 = vadd.f32 %v5260, %v5739
  %v5741 = vpop.f32.mrf.mxu0
  %v5742 = vpop.f32.mrf.mxu0
  %v5743 = vadd.f32 %v5263, %v5742
  %v5744 = vpop.f32.mrf.mxu0
  %5745 = vmatprep.mubr.bf16.mxu0 0
  %5746 = vmatmul.mubr.bf16.gmra.mxu0 %v4057
  %v5747 = vpop.f32.mrf.mxu0
  %v5748 = vadd.f32 %v5268, %v5747
  %v5749 = vpop.f32.mrf.mxu0
  %v5750 = vpop.f32.mrf.mxu0
  %v5751 = vadd.f32 %v5271, %v5750
  %v5752 = vpop.f32.mrf.mxu0
  %5753 = vmatprep.mubr.bf16.mxu0 0
  %5754 = vmatmul.mubr.bf16.gmra.mxu0 %v4060
  %v5755 = vpop.f32.mrf.mxu0
  %v5756 = vadd.f32 %v5276, %v5755
  %v5757 = vpop.f32.mrf.mxu0
  %v5758 = vpop.f32.mrf.mxu0
  %v5759 = vadd.f32 %v5279, %v5758
  %v5760 = vpop.f32.mrf.mxu0
  %5761 = vmatprep.mubr.bf16.mxu0 0
  %5762 = vmatmul.mubr.bf16.gmra.mxu0 %v4063
  %v5763 = vpop.f32.mrf.mxu0
  %v5764 = vadd.f32 %v5284, %v5763
  %v5765 = vpop.f32.mrf.mxu0
  %v5766 = vpop.f32.mrf.mxu0
  %v5767 = vadd.f32 %v5287, %v5766
  %v5768 = vpop.f32.mrf.mxu0
  %5769 = vmatprep.mubr.bf16.mxu0 0
  %5770 = vmatmul.mubr.bf16.gmra.mxu0 %v4066
  %v5771 = vpop.f32.mrf.mxu0
  %v5772 = vadd.f32 %v5292, %v5771
  %v5773 = vpop.f32.mrf.mxu0
  %v5774 = vpop.f32.mrf.mxu0
  %v5775 = vadd.f32 %v5295, %v5774
  %v5776 = vpop.f32.mrf.mxu0
  %5777 = vmatprep.mubr.bf16.mxu0 0
  %5778 = vmatmul.mubr.bf16.gmra.mxu0 %v4069
  %v5779 = vpop.f32.mrf.mxu0
  %v5780 = vadd.f32 %v5300, %v5779
  %v5781 = vpop.f32.mrf.mxu0
  %v5782 = vpop.f32.mrf.mxu0
  %v5783 = vadd.f32 %v5303, %v5782
  %v5784 = vpop.f32.mrf.mxu0
  %5785 = vmatprep.mubr.bf16.mxu0 0
  %5786 = vmatmul.mubr.bf16.gmra.mxu0 %v4072
  %v5787 = vpop.f32.mrf.mxu0
  %v5788 = vadd.f32 %v5308, %v5787
  %v5789 = vpop.f32.mrf.mxu0
  %v5790 = vpop.f32.mrf.mxu0
  %v5791 = vadd.f32 %v5311, %v5790
  %v5792 = vpop.f32.mrf.mxu0
  %5793 = vmatprep.mubr.bf16.mxu0 0
  %5794 = vmatmul.mubr.bf16.gmra.mxu0 %v4075
  %v5795 = vpop.f32.mrf.mxu0
  %v5796 = vadd.f32 %v5316, %v5795
  %v5797 = vpop.f32.mrf.mxu0
  %v5798 = vpop.f32.mrf.mxu0
  %v5799 = vadd.f32 %v5319, %v5798
  %v5800 = vpop.f32.mrf.mxu0
  %5801 = vmatprep.mubr.bf16.mxu0 0
  %5802 = vmatmul.mubr.bf16.gmra.mxu0 %v4078
  %v5803 = vpop.f32.mrf.mxu0
  %v5804 = vadd.f32 %v5324, %v5803
  %v5805 = vpop.f32.mrf.mxu0
  %v5806 = vpop.f32.mrf.mxu0
  %v5807 = vadd.f32 %v5327, %v5806
  %v5808 = vpop.f32.mrf.mxu0
  %5809 = vmatprep.mubr.bf16.mxu0 0
  %5810 = vmatmul.mubr.bf16.gmra.mxu0 %v4081
  %v5811 = vpop.f32.mrf.mxu0
  %v5812 = vadd.f32 %v5332, %v5811
  %v5813 = vpop.f32.mrf.mxu0
  %v5814 = vpop.f32.mrf.mxu0
  %v5815 = vadd.f32 %v5335, %v5814
  %v5816 = vpop.f32.mrf.mxu0
  %5817 = vmatprep.mubr.bf16.mxu0 0
  %5818 = vmatmul.mubr.bf16.gmra.mxu0 %v4084
  %v5819 = vpop.f32.mrf.mxu0
  %v5820 = vadd.f32 %v5340, %v5819
  %v5821 = vpop.f32.mrf.mxu0
  %v5822 = vpop.f32.mrf.mxu0
  %v5823 = vadd.f32 %v5343, %v5822
  %v5824 = vpop.f32.mrf.mxu0
  %5825 = vmatprep.mubr.bf16.mxu0 0
  %5826 = vmatmul.mubr.bf16.gmra.mxu0 %v4087
  %v5827 = vpop.f32.mrf.mxu0
  %v5828 = vadd.f32 %v5348, %v5827
  %v5829 = vpop.f32.mrf.mxu0
  %v5830 = vpop.f32.mrf.mxu0
  %v5831 = vadd.f32 %v5351, %v5830
  %v5832 = vpop.f32.mrf.mxu0
  %5833 = vmatprep.mubr.bf16.mxu0 0
  %5834 = vmatmul.mubr.bf16.gmra.mxu0 %v4090
  %v5835 = vpop.f32.mrf.mxu0
  %v5836 = vadd.f32 %v5356, %v5835
  %v5837 = vpop.f32.mrf.mxu0
  %v5838 = vpop.f32.mrf.mxu0
  %v5839 = vadd.f32 %v5359, %v5838
  %v5840 = vpop.f32.mrf.mxu0
  %5841 = vmatprep.mubr.bf16.mxu0 0
  %5842 = vmatmul.mubr.bf16.gmra.mxu0 %v4093
  %v5843 = vpop.f32.mrf.mxu0
  %v5844 = vadd.f32 %v5364, %v5843
  %v5845 = vpop.f32.mrf.mxu0
  %v5846 = vpop.f32.mrf.mxu0
  %v5847 = vadd.f32 %v5367, %v5846
  %v5848 = vpop.f32.mrf.mxu0
  %5849 = vmatprep.mubr.bf16.mxu0 0
  %5850 = vmatmul.mubr.bf16.gmra.mxu0 %v4096
  %v5851 = vpop.f32.mrf.mxu0
  %v5852 = vadd.f32 %v5372, %v5851
  %v5853 = vpop.f32.mrf.mxu0
  %v5854 = vpop.f32.mrf.mxu0
  %v5855 = vadd.f32 %v5375, %v5854
  %v5856 = vpop.f32.mrf.mxu0
  %5857 = vmatprep.mubr.bf16.mxu0 0
  %5858 = vmatmul.mubr.bf16.gmra.mxu0 %v4099
  %v5859 = vpop.f32.mrf.mxu0
  %v5860 = vadd.f32 %v5380, %v5859
  %v5861 = vpop.f32.mrf.mxu0
  %v5862 = vpop.f32.mrf.mxu0
  %v5863 = vadd.f32 %v5383, %v5862
  %v5864 = vpop.f32.mrf.mxu0
  %5865 = vmatprep.mubr.bf16.mxu0 0
  %5866 = vmatmul.mubr.bf16.gmra.mxu0 %v4102
  %v5867 = vpop.f32.mrf.mxu0
  %v5868 = vadd.f32 %v5388, %v5867
  %v5869 = vpop.f32.mrf.mxu0
  %v5870 = vpop.f32.mrf.mxu0
  %v5871 = vadd.f32 %v5391, %v5870
  %v5872 = vpop.f32.mrf.mxu0
  %5873 = vmatprep.mubr.bf16.mxu0 0
  %5874 = vmatmul.mubr.bf16.gmra.mxu0 %v4105
  %v5875 = vpop.f32.mrf.mxu0
  %v5876 = vadd.f32 %v5396, %v5875
  %v5877 = vpop.f32.mrf.mxu0
  %v5878 = vpop.f32.mrf.mxu0
  %v5879 = vadd.f32 %v5399, %v5878
  %v5880 = vpop.f32.mrf.mxu0
  %5881 = vmatprep.mubr.bf16.mxu0 0
  %5882 = vmatmul.mubr.bf16.gmra.mxu0 %v4108
  %v5883 = vpop.f32.mrf.mxu0
  %v5884 = vadd.f32 %v5404, %v5883
  %v5885 = vpop.f32.mrf.mxu0
  %v5886 = vpop.f32.mrf.mxu0
  %v5887 = vadd.f32 %v5407, %v5886
  %v5888 = vpop.f32.mrf.mxu0
  %5889 = vmatprep.mubr.bf16.mxu0 0
  %5890 = vmatmul.mubr.bf16.gmra.mxu0 %v4111
  %v5891 = vpop.f32.mrf.mxu0
  %v5892 = vadd.f32 %v5412, %v5891
  %v5893 = vpop.f32.mrf.mxu0
  %v5894 = vpop.f32.mrf.mxu0
  %v5895 = vadd.f32 %v5415, %v5894
  %v5896 = vpop.f32.mrf.mxu0
  %5897 = vmatprep.mubr.bf16.mxu0 0
  %5898 = vmatmul.mubr.bf16.gmra.mxu0 %v4114
  %v5899 = vpop.f32.mrf.mxu0
  %v5900 = vadd.f32 %v5420, %v5899
  %v5901 = vpop.f32.mrf.mxu0
  %v5902 = vpop.f32.mrf.mxu0
  %v5903 = vadd.f32 %v5423, %v5902
  %v5904 = vpop.f32.mrf.mxu0
  %5905 = vmatprep.mubr.bf16.mxu0 0
  %5906 = vmatmul.mubr.bf16.gmra.mxu0 %v4117
  %v5907 = vpop.f32.mrf.mxu0
  %v5908 = vadd.f32 %v5428, %v5907
  %v5909 = vpop.f32.mrf.mxu0
  %v5910 = vpop.f32.mrf.mxu0
  %v5911 = vadd.f32 %v5431, %v5910
  %v5912 = vpop.f32.mrf.mxu0
  %5913 = vmatprep.mubr.bf16.mxu0 0
  %5914 = vmatmul.mubr.bf16.gmra.mxu0 %v4120
  %v5915 = vpop.f32.mrf.mxu0
  %v5916 = vadd.f32 %v5436, %v5915
  %v5917 = vpop.f32.mrf.mxu0
  %v5918 = vpop.f32.mrf.mxu0
  %v5919 = vadd.f32 %v5439, %v5918
  %v5920 = vpop.f32.mrf.mxu0
  %5921 = vmatprep.mubr.bf16.mxu0 0
  %5922 = vmatmul.mubr.bf16.gmra.mxu0 %v4123
  %v5923 = vpop.f32.mrf.mxu0
  %v5924 = vadd.f32 %v5444, %v5923
  %v5925 = vpop.f32.mrf.mxu0
  %v5926 = vpop.f32.mrf.mxu0
  %v5927 = vadd.f32 %v5447, %v5926
  %v5928 = vpop.f32.mrf.mxu0
  %5929 = vmatprep.mubr.bf16.mxu0 0
  %5930 = vmatmul.mubr.bf16.gmra.mxu0 %v4126
  %v5931 = vpop.f32.mrf.mxu0
  %v5932 = vadd.f32 %v5452, %v5931
  %v5933 = vpop.f32.mrf.mxu0
  %v5934 = vpop.f32.mrf.mxu0
  %v5935 = vadd.f32 %v5455, %v5934
  %v5936 = vpop.f32.mrf.mxu0
  %5937 = vmatprep.mubr.bf16.mxu0 0
  %5938 = vmatmul.mubr.bf16.gmra.mxu0 %v4129
  %v5939 = vpop.f32.mrf.mxu0
  %v5940 = vadd.f32 %v5460, %v5939
  %v5941 = vpop.f32.mrf.mxu0
  %v5942 = vpop.f32.mrf.mxu0
  %v5943 = vadd.f32 %v5463, %v5942
  %v5944 = vpop.f32.mrf.mxu0
  %5945 = vmatprep.mubr.bf16.mxu0 0
  %5946 = vmatmul.mubr.bf16.gmra.mxu0 %v4132
  %v5947 = vpop.f32.mrf.mxu0
  %v5948 = vadd.f32 %v5468, %v5947
  %v5949 = vpop.f32.mrf.mxu0
  %v5950 = vpop.f32.mrf.mxu0
  %v5951 = vadd.f32 %v5471, %v5950
  %v5952 = vpop.f32.mrf.mxu0
  %5953 = vmatprep.mubr.bf16.mxu0 0
  %5954 = vmatmul.mubr.bf16.gmra.mxu0 %v4135
  %v5955 = vpop.f32.mrf.mxu0
  %v5956 = vadd.f32 %v5476, %v5955
  %v5957 = vpop.f32.mrf.mxu0
  %v5958 = vpop.f32.mrf.mxu0
  %v5959 = vadd.f32 %v5479, %v5958
  %v5960 = vpop.f32.mrf.mxu0
  %5961 = vmatprep.mubr.bf16.mxu0 0
  %5962 = vmatmul.mubr.bf16.gmra.mxu0 %v4138
  %v5963 = vpop.f32.mrf.mxu0
  %v5964 = vadd.f32 %v5484, %v5963
  %v5965 = vpop.f32.mrf.mxu0
  %v5966 = vpop.f32.mrf.mxu0
  %v5967 = vadd.f32 %v5487, %v5966
  %v5968 = vpop.f32.mrf.mxu0
  %5969 = vmatprep.mubr.bf16.mxu0 0
  %5970 = vmatmul.mubr.bf16.gmra.mxu0 %v4141
  %v5971 = vpop.f32.mrf.mxu0
  %v5972 = vadd.f32 %v5492, %v5971
  %v5973 = vpop.f32.mrf.mxu0
  %v5974 = vpop.f32.mrf.mxu0
  %v5975 = vadd.f32 %v5495, %v5974
  %v5976 = vpop.f32.mrf.mxu0
  %5977 = vmatprep.mubr.bf16.mxu0 0
  %5978 = vmatmul.mubr.bf16.gmra.mxu0 %v4144
  %v5979 = vpop.f32.mrf.mxu0
  %v5980 = vadd.f32 %v5500, %v5979
  %v5981 = vpop.f32.mrf.mxu0
  %v5982 = vpop.f32.mrf.mxu0
  %v5983 = vadd.f32 %v5503, %v5982
  %v5984 = vpop.f32.mrf.mxu0
  %5985 = vmatprep.mubr.bf16.mxu0 0
  %5986 = vmatmul.mubr.bf16.gmra.mxu0 %v4147
  %v5987 = vpop.f32.mrf.mxu0
  %v5988 = vadd.f32 %v5508, %v5987
  %v5989 = vpop.f32.mrf.mxu0
  %v5990 = vpop.f32.mrf.mxu0
  %v5991 = vadd.f32 %v5511, %v5990
  %v5992 = vpop.f32.mrf.mxu0
  %5993 = vmatprep.mubr.bf16.mxu0 0
  %5994 = vmatmul.mubr.bf16.gmra.mxu0 %v4150
  %v5995 = vpop.f32.mrf.mxu0
  %v5996 = vadd.f32 %v5516, %v5995
  %v5997 = vpop.f32.mrf.mxu0
  %v5998 = vpop.f32.mrf.mxu0
  %v5999 = vadd.f32 %v5519, %v5998
  %v6000 = vpop.f32.mrf.mxu0
  %6001 = vmatprep.mubr.bf16.mxu0 0
  %6002 = vmatmul.mubr.bf16.gmra.mxu0 %v4153
  %v6003 = vpop.f32.mrf.mxu0
  %v6004 = vadd.f32 %v5524, %v6003
  %v6005 = vpop.f32.mrf.mxu0
  %v6006 = vpop.f32.mrf.mxu0
  %v6007 = vadd.f32 %v5527, %v6006
  %v6008 = vpop.f32.mrf.mxu0
  %6009 = vmatprep.mubr.bf16.mxu0 0
  %6010 = vmatmul.mubr.bf16.gmra.mxu0 %v4156
  %v6011 = vpop.f32.mrf.mxu0
  %v6012 = vadd.f32 %v5532, %v6011
  %v6013 = vpop.f32.mrf.mxu0
  %v6014 = vpop.f32.mrf.mxu0
  %v6015 = vadd.f32 %v5535, %v6014
  %v6016 = vpop.f32.mrf.mxu0
  %6017 = vmatprep.mubr.bf16.mxu0 0
  %6018 = vmatmul.mubr.bf16.gmra.mxu0 %v4159
  %v6019 = vpop.f32.mrf.mxu0
  %v6020 = vadd.f32 %v5540, %v6019
  %v6021 = vpop.f32.mrf.mxu0
  %v6022 = vpop.f32.mrf.mxu0
  %v6023 = vadd.f32 %v5543, %v6022
  %v6024 = vpop.f32.mrf.mxu0
  %6025 = vmatprep.mubr.bf16.mxu0 0
  %6026 = vmatmul.mubr.bf16.gmra.mxu0 %v4162
  %v6027 = vpop.f32.mrf.mxu0
  %v6028 = vadd.f32 %v5548, %v6027
  %v6029 = vpop.f32.mrf.mxu0
  %v6030 = vpop.f32.mrf.mxu0
  %v6031 = vadd.f32 %v5551, %v6030
  %v6032 = vpop.f32.mrf.mxu0
  %6033 = vmatprep.mubr.bf16.mxu0 0
  %6034 = vmatmul.mubr.bf16.gmra.mxu0 %v4165
  %v6035 = vpop.f32.mrf.mxu0
  %v6036 = vadd.f32 %v5556, %v6035
  %v6037 = vpop.f32.mrf.mxu0
  %v6038 = vpop.f32.mrf.mxu0
  %v6039 = vadd.f32 %v5559, %v6038
  %v6040 = vpop.f32.mrf.mxu0
  %6041 = vmatprep.mubr.bf16.mxu0 0
  %6042 = vmatmul.mubr.bf16.gmra.mxu0 %v4168
  %v6043 = vpop.f32.mrf.mxu0
  %v6044 = vadd.f32 %v5564, %v6043
  %v6045 = vpop.f32.mrf.mxu0
  %v6046 = vpop.f32.mrf.mxu0
  %v6047 = vadd.f32 %v5567, %v6046
  %v6048 = vpop.f32.mrf.mxu0
  %6049 = vmatprep.mubr.bf16.mxu0 0
  %6050 = vmatmul.mubr.bf16.gmra.mxu0 %v4171
  %v6051 = vpop.f32.mrf.mxu0
  %v6052 = vadd.f32 %v5572, %v6051
  %v6053 = vpop.f32.mrf.mxu0
  %v6054 = vpop.f32.mrf.mxu0
  %v6055 = vadd.f32 %v5575, %v6054
  %v6056 = vpop.f32.mrf.mxu0
  %6057 = vmatprep.mubr.bf16.mxu0 0
  %6058 = vmatmul.mubr.bf16.gmra.mxu0 %v4174
  %v6059 = vpop.f32.mrf.mxu0
  %v6060 = vadd.f32 %v5580, %v6059
  %v6061 = vpop.f32.mrf.mxu0
  %v6062 = vpop.f32.mrf.mxu0
  %v6063 = vadd.f32 %v5583, %v6062
  %v6064 = vpop.f32.mrf.mxu0
  %6065 = vmatprep.mubr.bf16.mxu0 0
  %6066 = vmatmul.mubr.bf16.gmra.mxu0 %v4177
  %v6067 = vpop.f32.mrf.mxu0
  %v6068 = vadd.f32 %v5588, %v6067
  %v6069 = vpop.f32.mrf.mxu0
  %v6070 = vpop.f32.mrf.mxu0
  %v6071 = vadd.f32 %v5591, %v6070
  %v6072 = vpop.f32.mrf.mxu0
  %6073 = vmatprep.mubr.bf16.mxu0 0
  %6074 = vmatmul.mubr.bf16.gmra.mxu0 %v4180
  %v6075 = vpop.f32.mrf.mxu0
  %v6076 = vadd.f32 %v5596, %v6075
  %v6077 = vpop.f32.mrf.mxu0
  %v6078 = vpop.f32.mrf.mxu0
  %v6079 = vadd.f32 %v5599, %v6078
  %v6080 = vpop.f32.mrf.mxu0
  %6081 = vmatprep.mubr.bf16.mxu0 0
  %6082 = vmatmul.mubr.bf16.gmra.mxu0 %v4183
  %v6083 = vpop.f32.mrf.mxu0
  %v6084 = vadd.f32 %v5604, %v6083
  %v6085 = vpop.f32.mrf.mxu0
  %v6086 = vpop.f32.mrf.mxu0
  %v6087 = vadd.f32 %v5607, %v6086
  %v6088 = vpop.f32.mrf.mxu0
  %6089 = vmatprep.mubr.bf16.mxu0 0
  %6090 = vmatmul.mubr.bf16.gmra.mxu0 %v4186
  %v6091 = vpop.f32.mrf.mxu0
  %v6092 = vadd.f32 %v5612, %v6091
  %v6093 = vpop.f32.mrf.mxu0
  %v6094 = vpop.f32.mrf.mxu0
  %v6095 = vadd.f32 %v5615, %v6094
  %v6096 = vpop.f32.mrf.mxu0
  %6097 = vmatprep.mubr.bf16.mxu0 0
  %6098 = vmatmul.mubr.bf16.gmra.mxu0 %v4189
  %v6099 = vpop.f32.mrf.mxu0
  %v6100 = vadd.f32 %v5620, %v6099
  %v6101 = vpop.f32.mrf.mxu0
  %v6102 = vpop.f32.mrf.mxu0
  %v6103 = vadd.f32 %v5623, %v6102
  %v6104 = vpop.f32.mrf.mxu0
  %6105 = vmatprep.mubr.bf16.mxu0 0
  %6106 = vmatmul.mubr.bf16.gmra.mxu0 %v4192
  %v6107 = vpop.f32.mrf.mxu0
  %v6108 = vadd.f32 %v5628, %v6107
  %v6109 = vpop.f32.mrf.mxu0
  %v6110 = vpop.f32.mrf.mxu0
  %v6111 = vadd.f32 %v5631, %v6110
  %v6112 = vpop.f32.mrf.mxu0
  %6113 = vmatprep.mubr.bf16.mxu0 0
  %6114 = vmatmul.mubr.bf16.gmra.mxu0 %v4195
  %v6115 = vpop.f32.mrf.mxu0
  %v6116 = vadd.f32 %v5636, %v6115
  %v6117 = vpop.f32.mrf.mxu0
  %v6118 = vpop.f32.mrf.mxu0
  %v6119 = vpop.f32.mrf.mxu0
  %6120 = vdwg.mxu0
  %vm6121 = vcmask 400384
  %v6122 = vsel %vm6121, %v5676, 0.0
  %6123 = vadd.xlane.f32.xlu0 %v6122
  %v6124 = vpop.xlane.xlu0 %6123
  %v6125 = vsel %vm6121, %v5679, 0.0
  %6126 = vadd.xlane.f32.xlu0 %v6125
  %v6127 = vpop.xlane.xlu0 %6126
  %v6128 = vsel %vm6121, %v5684, 0.0
  %6129 = vadd.xlane.f32.xlu0 %v6128
  %v6130 = vpop.xlane.xlu0 %6129
  %v6131 = vsel %vm6121, %v5687, 0.0
  %6132 = vadd.xlane.f32.xlu0 %v6131
  %v6133 = vpop.xlane.xlu0 %6132
  %v6134 = vsel %vm6121, %v5692, 0.0
  %6135 = vadd.xlane.f32.xlu0 %v6134
  %v6136 = vpop.xlane.xlu0 %6135
  %v6137 = vsel %vm6121, %v5695, 0.0
  %6138 = vadd.xlane.f32.xlu0 %v6137
  %v6139 = vpop.xlane.xlu0 %6138
  %v6140 = vsel %vm6121, %v5700, 0.0
  %6141 = vadd.xlane.f32.xlu0 %v6140
  %v6142 = vpop.xlane.xlu0 %6141
  %v6143 = vsel %vm6121, %v5703, 0.0
  %6144 = vadd.xlane.f32.xlu0 %v6143
  %v6145 = vpop.xlane.xlu0 %6144
  %v6146 = vsel %vm6121, %v5708, 0.0
  %6147 = vadd.xlane.f32.xlu0 %v6146
  %v6148 = vpop.xlane.xlu0 %6147
  %v6149 = vsel %vm6121, %v5711, 0.0
  %6150 = vadd.xlane.f32.xlu0 %v6149
  %v6151 = vpop.xlane.xlu0 %6150
  %v6152 = vsel %vm6121, %v5716, 0.0
  %6153 = vadd.xlane.f32.xlu0 %v6152
  %v6154 = vpop.xlane.xlu0 %6153
  %v6155 = vsel %vm6121, %v5719, 0.0
  %6156 = vadd.xlane.f32.xlu0 %v6155
  %v6157 = vpop.xlane.xlu0 %6156
  %v6158 = vsel %vm6121, %v5724, 0.0
  %6159 = vadd.xlane.f32.xlu0 %v6158
  %v6160 = vpop.xlane.xlu0 %6159
  %v6161 = vsel %vm6121, %v5727, 0.0
  %6162 = vadd.xlane.f32.xlu0 %v6161
  %v6163 = vpop.xlane.xlu0 %6162
  %v6164 = vsel %vm6121, %v5732, 0.0
  %6165 = vadd.xlane.f32.xlu0 %v6164
  %v6166 = vpop.xlane.xlu0 %6165
  %v6167 = vsel %vm6121, %v5735, 0.0
  %6168 = vadd.xlane.f32.xlu0 %v6167
  %v6169 = vpop.xlane.xlu0 %6168
  %v6170 = vsel %vm6121, %v5740, 0.0
  %6171 = vadd.xlane.f32.xlu0 %v6170
  %v6172 = vpop.xlane.xlu0 %6171
  %v6173 = vsel %vm6121, %v5743, 0.0
  %6174 = vadd.xlane.f32.xlu0 %v6173
  %v6175 = vpop.xlane.xlu0 %6174
  %v6176 = vsel %vm6121, %v5748, 0.0
  %6177 = vadd.xlane.f32.xlu0 %v6176
  %v6178 = vpop.xlane.xlu0 %6177
  %v6179 = vsel %vm6121, %v5751, 0.0
  %6180 = vadd.xlane.f32.xlu0 %v6179
  %v6181 = vpop.xlane.xlu0 %6180
  %v6182 = vsel %vm6121, %v5756, 0.0
  %6183 = vadd.xlane.f32.xlu0 %v6182
  %v6184 = vpop.xlane.xlu0 %6183
  %v6185 = vsel %vm6121, %v5759, 0.0
  %6186 = vadd.xlane.f32.xlu0 %v6185
  %v6187 = vpop.xlane.xlu0 %6186
  %v6188 = vsel %vm6121, %v5764, 0.0
  %6189 = vadd.xlane.f32.xlu0 %v6188
  %v6190 = vpop.xlane.xlu0 %6189
  %v6191 = vsel %vm6121, %v5767, 0.0
  %6192 = vadd.xlane.f32.xlu0 %v6191
  %v6193 = vpop.xlane.xlu0 %6192
  %v6194 = vsel %vm6121, %v5772, 0.0
  %6195 = vadd.xlane.f32.xlu0 %v6194
  %v6196 = vpop.xlane.xlu0 %6195
  %v6197 = vsel %vm6121, %v5775, 0.0
  %6198 = vadd.xlane.f32.xlu0 %v6197
  %v6199 = vpop.xlane.xlu0 %6198
  %v6200 = vsel %vm6121, %v5780, 0.0
  %6201 = vadd.xlane.f32.xlu0 %v6200
  %v6202 = vpop.xlane.xlu0 %6201
  %v6203 = vsel %vm6121, %v5783, 0.0
  %6204 = vadd.xlane.f32.xlu0 %v6203
  %v6205 = vpop.xlane.xlu0 %6204
  %v6206 = vsel %vm6121, %v5788, 0.0
  %6207 = vadd.xlane.f32.xlu0 %v6206
  %v6208 = vpop.xlane.xlu0 %6207
  %v6209 = vsel %vm6121, %v5791, 0.0
  %6210 = vadd.xlane.f32.xlu0 %v6209
  %v6211 = vpop.xlane.xlu0 %6210
  %v6212 = vsel %vm6121, %v5796, 0.0
  %6213 = vadd.xlane.f32.xlu0 %v6212
  %v6214 = vpop.xlane.xlu0 %6213
  %v6215 = vsel %vm6121, %v5799, 0.0
  %6216 = vadd.xlane.f32.xlu0 %v6215
  %v6217 = vpop.xlane.xlu0 %6216
  %v6218 = vsel %vm6121, %v5804, 0.0
  %6219 = vadd.xlane.f32.xlu0 %v6218
  %v6220 = vpop.xlane.xlu0 %6219
  %v6221 = vsel %vm6121, %v5807, 0.0
  %6222 = vadd.xlane.f32.xlu0 %v6221
  %v6223 = vpop.xlane.xlu0 %6222
  %v6224 = vsel %vm6121, %v5812, 0.0
  %6225 = vadd.xlane.f32.xlu0 %v6224
  %v6226 = vpop.xlane.xlu0 %6225
  %v6227 = vsel %vm6121, %v5815, 0.0
  %6228 = vadd.xlane.f32.xlu0 %v6227
  %v6229 = vpop.xlane.xlu0 %6228
  %v6230 = vsel %vm6121, %v5820, 0.0
  %6231 = vadd.xlane.f32.xlu0 %v6230
  %v6232 = vpop.xlane.xlu0 %6231
  %v6233 = vsel %vm6121, %v5823, 0.0
  %6234 = vadd.xlane.f32.xlu0 %v6233
  %v6235 = vpop.xlane.xlu0 %6234
  %v6236 = vsel %vm6121, %v5828, 0.0
  %6237 = vadd.xlane.f32.xlu0 %v6236
  %v6238 = vpop.xlane.xlu0 %6237
  %v6239 = vsel %vm6121, %v5831, 0.0
  %6240 = vadd.xlane.f32.xlu0 %v6239
  %v6241 = vpop.xlane.xlu0 %6240
  %v6242 = vsel %vm6121, %v5836, 0.0
  %6243 = vadd.xlane.f32.xlu0 %v6242
  %v6244 = vpop.xlane.xlu0 %6243
  %v6245 = vsel %vm6121, %v5839, 0.0
  %6246 = vadd.xlane.f32.xlu0 %v6245
  %v6247 = vpop.xlane.xlu0 %6246
  %v6248 = vsel %vm6121, %v5844, 0.0
  %6249 = vadd.xlane.f32.xlu0 %v6248
  %v6250 = vpop.xlane.xlu0 %6249
  %v6251 = vsel %vm6121, %v5847, 0.0
  %6252 = vadd.xlane.f32.xlu0 %v6251
  %v6253 = vpop.xlane.xlu0 %6252
  %v6254 = vsel %vm6121, %v5852, 0.0
  %6255 = vadd.xlane.f32.xlu0 %v6254
  %v6256 = vpop.xlane.xlu0 %6255
  %v6257 = vsel %vm6121, %v5855, 0.0
  %6258 = vadd.xlane.f32.xlu0 %v6257
  %v6259 = vpop.xlane.xlu0 %6258
  %v6260 = vsel %vm6121, %v5860, 0.0
  %6261 = vadd.xlane.f32.xlu0 %v6260
  %v6262 = vpop.xlane.xlu0 %6261
  %v6263 = vsel %vm6121, %v5863, 0.0
  %6264 = vadd.xlane.f32.xlu0 %v6263
  %v6265 = vpop.xlane.xlu0 %6264
  %v6266 = vsel %vm6121, %v5868, 0.0
  %6267 = vadd.xlane.f32.xlu0 %v6266
  %v6268 = vpop.xlane.xlu0 %6267
  %v6269 = vsel %vm6121, %v5871, 0.0
  %6270 = vadd.xlane.f32.xlu0 %v6269
  %v6271 = vpop.xlane.xlu0 %6270
  %v6272 = vsel %vm6121, %v5876, 0.0
  %6273 = vadd.xlane.f32.xlu0 %v6272
  %v6274 = vpop.xlane.xlu0 %6273
  %v6275 = vsel %vm6121, %v5879, 0.0
  %6276 = vadd.xlane.f32.xlu0 %v6275
  %v6277 = vpop.xlane.xlu0 %6276
  %v6278 = vsel %vm6121, %v5884, 0.0
  %6279 = vadd.xlane.f32.xlu0 %v6278
  %v6280 = vpop.xlane.xlu0 %6279
  %v6281 = vsel %vm6121, %v5887, 0.0
  %6282 = vadd.xlane.f32.xlu0 %v6281
  %v6283 = vpop.xlane.xlu0 %6282
  %v6284 = vsel %vm6121, %v5892, 0.0
  %6285 = vadd.xlane.f32.xlu0 %v6284
  %v6286 = vpop.xlane.xlu0 %6285
  %v6287 = vsel %vm6121, %v5895, 0.0
  %6288 = vadd.xlane.f32.xlu0 %v6287
  %v6289 = vpop.xlane.xlu0 %6288
  %v6290 = vsel %vm6121, %v5900, 0.0
  %6291 = vadd.xlane.f32.xlu0 %v6290
  %v6292 = vpop.xlane.xlu0 %6291
  %v6293 = vsel %vm6121, %v5903, 0.0
  %6294 = vadd.xlane.f32.xlu0 %v6293
  %v6295 = vpop.xlane.xlu0 %6294
  %v6296 = vsel %vm6121, %v5908, 0.0
  %6297 = vadd.xlane.f32.xlu0 %v6296
  %v6298 = vpop.xlane.xlu0 %6297
  %v6299 = vsel %vm6121, %v5911, 0.0
  %6300 = vadd.xlane.f32.xlu0 %v6299
  %v6301 = vpop.xlane.xlu0 %6300
  %v6302 = vsel %vm6121, %v5916, 0.0
  %6303 = vadd.xlane.f32.xlu0 %v6302
  %v6304 = vpop.xlane.xlu0 %6303
  %v6305 = vsel %vm6121, %v5919, 0.0
  %6306 = vadd.xlane.f32.xlu0 %v6305
  %v6307 = vpop.xlane.xlu0 %6306
  %v6308 = vsel %vm6121, %v5924, 0.0
  %6309 = vadd.xlane.f32.xlu0 %v6308
  %v6310 = vpop.xlane.xlu0 %6309
  %v6311 = vsel %vm6121, %v5927, 0.0
  %6312 = vadd.xlane.f32.xlu0 %v6311
  %v6313 = vpop.xlane.xlu0 %6312
  %v6314 = vsel %vm6121, %v5932, 0.0
  %6315 = vadd.xlane.f32.xlu0 %v6314
  %v6316 = vpop.xlane.xlu0 %6315
  %v6317 = vsel %vm6121, %v5935, 0.0
  %6318 = vadd.xlane.f32.xlu0 %v6317
  %v6319 = vpop.xlane.xlu0 %6318
  %v6320 = vsel %vm6121, %v5940, 0.0
  %6321 = vadd.xlane.f32.xlu0 %v6320
  %v6322 = vpop.xlane.xlu0 %6321
  %v6323 = vsel %vm6121, %v5943, 0.0
  %6324 = vadd.xlane.f32.xlu0 %v6323
  %v6325 = vpop.xlane.xlu0 %6324
  %v6326 = vsel %vm6121, %v5948, 0.0
  %6327 = vadd.xlane.f32.xlu0 %v6326
  %v6328 = vpop.xlane.xlu0 %6327
  %v6329 = vsel %vm6121, %v5951, 0.0
  %6330 = vadd.xlane.f32.xlu0 %v6329
  %v6331 = vpop.xlane.xlu0 %6330
  %v6332 = vsel %vm6121, %v5956, 0.0
  %6333 = vadd.xlane.f32.xlu0 %v6332
  %v6334 = vpop.xlane.xlu0 %6333
  %v6335 = vsel %vm6121, %v5959, 0.0
  %6336 = vadd.xlane.f32.xlu0 %v6335
  %v6337 = vpop.xlane.xlu0 %6336
  %v6338 = vsel %vm6121, %v5964, 0.0
  %6339 = vadd.xlane.f32.xlu0 %v6338
  %v6340 = vpop.xlane.xlu0 %6339
  %v6341 = vsel %vm6121, %v5967, 0.0
  %6342 = vadd.xlane.f32.xlu0 %v6341
  %v6343 = vpop.xlane.xlu0 %6342
  %v6344 = vsel %vm6121, %v5972, 0.0
  %6345 = vadd.xlane.f32.xlu0 %v6344
  %v6346 = vpop.xlane.xlu0 %6345
  %v6347 = vsel %vm6121, %v5975, 0.0
  %6348 = vadd.xlane.f32.xlu0 %v6347
  %v6349 = vpop.xlane.xlu0 %6348
  %v6350 = vsel %vm6121, %v5980, 0.0
  %6351 = vadd.xlane.f32.xlu0 %v6350
  %v6352 = vpop.xlane.xlu0 %6351
  %v6353 = vsel %vm6121, %v5983, 0.0
  %6354 = vadd.xlane.f32.xlu0 %v6353
  %v6355 = vpop.xlane.xlu0 %6354
  %v6356 = vsel %vm6121, %v5988, 0.0
  %6357 = vadd.xlane.f32.xlu0 %v6356
  %v6358 = vpop.xlane.xlu0 %6357
  %v6359 = vsel %vm6121, %v5991, 0.0
  %6360 = vadd.xlane.f32.xlu0 %v6359
  %v6361 = vpop.xlane.xlu0 %6360
  %v6362 = vsel %vm6121, %v5996, 0.0
  %6363 = vadd.xlane.f32.xlu0 %v6362
  %v6364 = vpop.xlane.xlu0 %6363
  %v6365 = vsel %vm6121, %v5999, 0.0
  %6366 = vadd.xlane.f32.xlu0 %v6365
  %v6367 = vpop.xlane.xlu0 %6366
  %v6368 = vsel %vm6121, %v6004, 0.0
  %6369 = vadd.xlane.f32.xlu0 %v6368
  %v6370 = vpop.xlane.xlu0 %6369
  %v6371 = vsel %vm6121, %v6007, 0.0
  %6372 = vadd.xlane.f32.xlu0 %v6371
  %v6373 = vpop.xlane.xlu0 %6372
  %v6374 = vsel %vm6121, %v6012, 0.0
  %6375 = vadd.xlane.f32.xlu0 %v6374
  %v6376 = vpop.xlane.xlu0 %6375
  %v6377 = vsel %vm6121, %v6015, 0.0
  %6378 = vadd.xlane.f32.xlu0 %v6377
  %v6379 = vpop.xlane.xlu0 %6378
  %v6380 = vsel %vm6121, %v6020, 0.0
  %6381 = vadd.xlane.f32.xlu0 %v6380
  %v6382 = vpop.xlane.xlu0 %6381
  %v6383 = vsel %vm6121, %v6023, 0.0
  %6384 = vadd.xlane.f32.xlu0 %v6383
  %v6385 = vpop.xlane.xlu0 %6384
  %v6386 = vsel %vm6121, %v6028, 0.0
  %6387 = vadd.xlane.f32.xlu0 %v6386
  %v6388 = vpop.xlane.xlu0 %6387
  %v6389 = vsel %vm6121, %v6031, 0.0
  %6390 = vadd.xlane.f32.xlu0 %v6389
  %v6391 = vpop.xlane.xlu0 %6390
  %v6392 = vsel %vm6121, %v6036, 0.0
  %6393 = vadd.xlane.f32.xlu0 %v6392
  %v6394 = vpop.xlane.xlu0 %6393
  %v6395 = vsel %vm6121, %v6039, 0.0
  %6396 = vadd.xlane.f32.xlu0 %v6395
  %v6397 = vpop.xlane.xlu0 %6396
  %v6398 = vsel %vm6121, %v6044, 0.0
  %6399 = vadd.xlane.f32.xlu0 %v6398
  %v6400 = vpop.xlane.xlu0 %6399
  %v6401 = vsel %vm6121, %v6047, 0.0
  %6402 = vadd.xlane.f32.xlu0 %v6401
  %v6403 = vpop.xlane.xlu0 %6402
  %v6404 = vsel %vm6121, %v6052, 0.0
  %6405 = vadd.xlane.f32.xlu0 %v6404
  %v6406 = vpop.xlane.xlu0 %6405
  %v6407 = vsel %vm6121, %v6055, 0.0
  %6408 = vadd.xlane.f32.xlu0 %v6407
  %v6409 = vpop.xlane.xlu0 %6408
  %v6410 = vsel %vm6121, %v6060, 0.0
  %6411 = vadd.xlane.f32.xlu0 %v6410
  %v6412 = vpop.xlane.xlu0 %6411
  %v6413 = vsel %vm6121, %v6063, 0.0
  %6414 = vadd.xlane.f32.xlu0 %v6413
  %v6415 = vpop.xlane.xlu0 %6414
  %v6416 = vsel %vm6121, %v6068, 0.0
  %6417 = vadd.xlane.f32.xlu0 %v6416
  %v6418 = vpop.xlane.xlu0 %6417
  %v6419 = vsel %vm6121, %v6071, 0.0
  %6420 = vadd.xlane.f32.xlu0 %v6419
  %v6421 = vpop.xlane.xlu0 %6420
  %v6422 = vsel %vm6121, %v6076, 0.0
  %6423 = vadd.xlane.f32.xlu0 %v6422
  %v6424 = vpop.xlane.xlu0 %6423
  %v6425 = vsel %vm6121, %v6079, 0.0
  %6426 = vadd.xlane.f32.xlu0 %v6425
  %v6427 = vpop.xlane.xlu0 %6426
  %v6428 = vsel %vm6121, %v6084, 0.0
  %6429 = vadd.xlane.f32.xlu0 %v6428
  %v6430 = vpop.xlane.xlu0 %6429
  %v6431 = vsel %vm6121, %v6087, 0.0
  %6432 = vadd.xlane.f32.xlu0 %v6431
  %v6433 = vpop.xlane.xlu0 %6432
  %v6434 = vsel %vm6121, %v6092, 0.0
  %6435 = vadd.xlane.f32.xlu0 %v6434
  %v6436 = vpop.xlane.xlu0 %6435
  %v6437 = vsel %vm6121, %v6095, 0.0
  %6438 = vadd.xlane.f32.xlu0 %v6437
  %v6439 = vpop.xlane.xlu0 %6438
  %v6440 = vsel %vm6121, %v6100, 0.0
  %6441 = vadd.xlane.f32.xlu0 %v6440
  %v6442 = vpop.xlane.xlu0 %6441
  %v6443 = vsel %vm6121, %v6103, 0.0
  %6444 = vadd.xlane.f32.xlu0 %v6443
  %v6445 = vpop.xlane.xlu0 %6444
  %v6446 = vsel %vm6121, %v6108, 0.0
  %6447 = vadd.xlane.f32.xlu0 %v6446
  %v6448 = vpop.xlane.xlu0 %6447
  %v6449 = vsel %vm6121, %v6111, 0.0
  %6450 = vadd.xlane.f32.xlu0 %v6449
  %v6451 = vpop.xlane.xlu0 %6450
  %v6452 = vsel %vm6121, %v6116, 0.0
  %6453 = vadd.xlane.f32.xlu0 %v6452
  %v6454 = vpop.xlane.xlu0 %6453
  %v6455 = vmul.f32 %v6124, 0.020408163
  %v6456 = vmul.f32 %v6127, 0.020408163
  %v6457 = vmul.f32 %v6130, 0.020408163
  %v6458 = vmul.f32 %v6133, 0.020408163
  %v6459 = vmul.f32 %v6136, 0.020408163
  %v6460 = vmul.f32 %v6139, 0.020408163
  %v6461 = vmul.f32 %v6142, 0.020408163
  %v6462 = vmul.f32 %v6145, 0.020408163
  %v6463 = vmul.f32 %v6148, 0.020408163
  %v6464 = vmul.f32 %v6151, 0.020408163
  %v6465 = vmul.f32 %v6154, 0.020408163
  %v6466 = vmul.f32 %v6157, 0.020408163
  %v6467 = vmul.f32 %v6160, 0.020408163
  %v6468 = vmul.f32 %v6163, 0.020408163
  %v6469 = vmul.f32 %v6166, 0.020408163
  %v6470 = vmul.f32 %v6169, 0.020408163
  %v6471 = vmul.f32 %v6172, 0.020408163
  %v6472 = vmul.f32 %v6175, 0.020408163
  %v6473 = vmul.f32 %v6178, 0.020408163
  %v6474 = vmul.f32 %v6181, 0.020408163
  %v6475 = vmul.f32 %v6184, 0.020408163
  %v6476 = vmul.f32 %v6187, 0.020408163
  %v6477 = vmul.f32 %v6190, 0.020408163
  %v6478 = vmul.f32 %v6193, 0.020408163
  %v6479 = vmul.f32 %v6196, 0.020408163
  %v6480 = vmul.f32 %v6199, 0.020408163
  %v6481 = vmul.f32 %v6202, 0.020408163
  %v6482 = vmul.f32 %v6205, 0.020408163
  %v6483 = vmul.f32 %v6208, 0.020408163
  %v6484 = vmul.f32 %v6211, 0.020408163
  %v6485 = vmul.f32 %v6214, 0.020408163
  %v6486 = vmul.f32 %v6217, 0.020408163
  %v6487 = vmul.f32 %v6220, 0.020408163
  %v6488 = vmul.f32 %v6223, 0.020408163
  %v6489 = vmul.f32 %v6226, 0.020408163
  %v6490 = vmul.f32 %v6229, 0.020408163
  %v6491 = vmul.f32 %v6232, 0.020408163
  %v6492 = vmul.f32 %v6235, 0.020408163
  %v6493 = vmul.f32 %v6238, 0.020408163
  %v6494 = vmul.f32 %v6241, 0.020408163
  %v6495 = vmul.f32 %v6244, 0.020408163
  %v6496 = vmul.f32 %v6247, 0.020408163
  %v6497 = vmul.f32 %v6250, 0.020408163
  %v6498 = vmul.f32 %v6253, 0.020408163
  %v6499 = vmul.f32 %v6256, 0.020408163
  %v6500 = vmul.f32 %v6259, 0.020408163
  %v6501 = vmul.f32 %v6262, 0.020408163
  %v6502 = vmul.f32 %v6265, 0.020408163
  %v6503 = vmul.f32 %v6268, 0.020408163
  %v6504 = vmul.f32 %v6271, 0.020408163
  %v6505 = vmul.f32 %v6274, 0.020408163
  %v6506 = vmul.f32 %v6277, 0.020408163
  %v6507 = vmul.f32 %v6280, 0.020408163
  %v6508 = vmul.f32 %v6283, 0.020408163
  %v6509 = vmul.f32 %v6286, 0.020408163
  %v6510 = vmul.f32 %v6289, 0.020408163
  %v6511 = vmul.f32 %v6292, 0.020408163
  %v6512 = vmul.f32 %v6295, 0.020408163
  %v6513 = vmul.f32 %v6298, 0.020408163
  %v6514 = vmul.f32 %v6301, 0.020408163
  %v6515 = vmul.f32 %v6304, 0.020408163
  %v6516 = vmul.f32 %v6307, 0.020408163
  %v6517 = vmul.f32 %v6310, 0.020408163
  %v6518 = vmul.f32 %v6313, 0.020408163
  %v6519 = vmul.f32 %v6316, 0.020408163
  %v6520 = vmul.f32 %v6319, 0.020408163
  %v6521 = vmul.f32 %v6322, 0.020408163
  %v6522 = vmul.f32 %v6325, 0.020408163
  %v6523 = vmul.f32 %v6328, 0.020408163
  %v6524 = vmul.f32 %v6331, 0.020408163
  %v6525 = vmul.f32 %v6334, 0.020408163
  %v6526 = vmul.f32 %v6337, 0.020408163
  %v6527 = vmul.f32 %v6340, 0.020408163
  %v6528 = vmul.f32 %v6343, 0.020408163
  %v6529 = vmul.f32 %v6346, 0.020408163
  %v6530 = vmul.f32 %v6349, 0.020408163
  %v6531 = vmul.f32 %v6352, 0.020408163
  %v6532 = vmul.f32 %v6355, 0.020408163
  %v6533 = vmul.f32 %v6358, 0.020408163
  %v6534 = vmul.f32 %v6361, 0.020408163
  %v6535 = vmul.f32 %v6364, 0.020408163
  %v6536 = vmul.f32 %v6367, 0.020408163
  %v6537 = vmul.f32 %v6370, 0.020408163
  %v6538 = vmul.f32 %v6373, 0.020408163
  %v6539 = vmul.f32 %v6376, 0.020408163
  %v6540 = vmul.f32 %v6379, 0.020408163
  %v6541 = vmul.f32 %v6382, 0.020408163
  %v6542 = vmul.f32 %v6385, 0.020408163
  %v6543 = vmul.f32 %v6388, 0.020408163
  %v6544 = vmul.f32 %v6391, 0.020408163
  %v6545 = vmul.f32 %v6394, 0.020408163
  %v6546 = vmul.f32 %v6397, 0.020408163
  %v6547 = vmul.f32 %v6400, 0.020408163
  %v6548 = vmul.f32 %v6403, 0.020408163
  %v6549 = vmul.f32 %v6406, 0.020408163
  %v6550 = vmul.f32 %v6409, 0.020408163
  %v6551 = vmul.f32 %v6412, 0.020408163
  %v6552 = vmul.f32 %v6415, 0.020408163
  %v6553 = vmul.f32 %v6418, 0.020408163
  %v6554 = vmul.f32 %v6421, 0.020408163
  %v6555 = vmul.f32 %v6424, 0.020408163
  %v6556 = vmul.f32 %v6427, 0.020408163
  %v6557 = vmul.f32 %v6430, 0.020408163
  %v6558 = vmul.f32 %v6433, 0.020408163
  %v6559 = vmul.f32 %v6436, 0.020408163
  %v6560 = vmul.f32 %v6439, 0.020408163
  %v6561 = vmul.f32 %v6442, 0.020408163
  %v6562 = vmul.f32 %v6445, 0.020408163
  %v6563 = vmul.f32 %v6448, 0.020408163
  %v6564 = vmul.f32 %v6451, 0.020408163
  %v6565 = vmul.f32 %v6454, 0.020408163
  %v6566 = vmul.f32 %v5676, %v5676
  %v6567 = vmul.f32 %v5679, %v5679
  %v6568 = vmul.f32 %v5684, %v5684
  %v6569 = vmul.f32 %v5687, %v5687
  %v6570 = vmul.f32 %v5692, %v5692
  %v6571 = vmul.f32 %v5695, %v5695
  %v6572 = vmul.f32 %v5700, %v5700
  %v6573 = vmul.f32 %v5703, %v5703
  %v6574 = vmul.f32 %v5708, %v5708
  %v6575 = vmul.f32 %v5711, %v5711
  %v6576 = vmul.f32 %v5716, %v5716
  %v6577 = vmul.f32 %v5719, %v5719
  %v6578 = vmul.f32 %v5724, %v5724
  %v6579 = vmul.f32 %v5727, %v5727
  %v6580 = vmul.f32 %v5732, %v5732
  %v6581 = vmul.f32 %v5735, %v5735
  %v6582 = vmul.f32 %v5740, %v5740
  %v6583 = vmul.f32 %v5743, %v5743
  %v6584 = vmul.f32 %v5748, %v5748
  %v6585 = vmul.f32 %v5751, %v5751
  %v6586 = vmul.f32 %v5756, %v5756
  %v6587 = vmul.f32 %v5759, %v5759
  %v6588 = vmul.f32 %v5764, %v5764
  %v6589 = vmul.f32 %v5767, %v5767
  %v6590 = vmul.f32 %v5772, %v5772
  %v6591 = vmul.f32 %v5775, %v5775
  %v6592 = vmul.f32 %v5780, %v5780
  %v6593 = vmul.f32 %v5783, %v5783
  %v6594 = vmul.f32 %v5788, %v5788
  %v6595 = vmul.f32 %v5791, %v5791
  %v6596 = vmul.f32 %v5796, %v5796
  %v6597 = vmul.f32 %v5799, %v5799
  %v6598 = vmul.f32 %v5804, %v5804
  %v6599 = vmul.f32 %v5807, %v5807
  %v6600 = vmul.f32 %v5812, %v5812
  %v6601 = vmul.f32 %v5815, %v5815
  %v6602 = vmul.f32 %v5820, %v5820
  %v6603 = vmul.f32 %v5823, %v5823
  %v6604 = vmul.f32 %v5828, %v5828
  %v6605 = vmul.f32 %v5831, %v5831
  %v6606 = vmul.f32 %v5836, %v5836
  %v6607 = vmul.f32 %v5839, %v5839
  %v6608 = vmul.f32 %v5844, %v5844
  %v6609 = vmul.f32 %v5847, %v5847
  %v6610 = vmul.f32 %v5852, %v5852
  %v6611 = vmul.f32 %v5855, %v5855
  %v6612 = vmul.f32 %v5860, %v5860
  %v6613 = vmul.f32 %v5863, %v5863
  %v6614 = vmul.f32 %v5868, %v5868
  %v6615 = vmul.f32 %v5871, %v5871
  %v6616 = vmul.f32 %v5876, %v5876
  %v6617 = vmul.f32 %v5879, %v5879
  %v6618 = vmul.f32 %v5884, %v5884
  %v6619 = vmul.f32 %v5887, %v5887
  %v6620 = vmul.f32 %v5892, %v5892
  %v6621 = vmul.f32 %v5895, %v5895
  %v6622 = vmul.f32 %v5900, %v5900
  %v6623 = vmul.f32 %v5903, %v5903
  %v6624 = vmul.f32 %v5908, %v5908
  %v6625 = vmul.f32 %v5911, %v5911
  %v6626 = vmul.f32 %v5916, %v5916
  %v6627 = vmul.f32 %v5919, %v5919
  %v6628 = vmul.f32 %v5924, %v5924
  %v6629 = vmul.f32 %v5927, %v5927
  %v6630 = vmul.f32 %v5932, %v5932
  %v6631 = vmul.f32 %v5935, %v5935
  %v6632 = vmul.f32 %v5940, %v5940
  %v6633 = vmul.f32 %v5943, %v5943
  %v6634 = vmul.f32 %v5948, %v5948
  %v6635 = vmul.f32 %v5951, %v5951
  %v6636 = vmul.f32 %v5956, %v5956
  %v6637 = vmul.f32 %v5959, %v5959
  %v6638 = vmul.f32 %v5964, %v5964
  %v6639 = vmul.f32 %v5967, %v5967
  %v6640 = vmul.f32 %v5972, %v5972
  %v6641 = vmul.f32 %v5975, %v5975
  %v6642 = vmul.f32 %v5980, %v5980
  %v6643 = vmul.f32 %v5983, %v5983
  %v6644 = vmul.f32 %v5988, %v5988
  %v6645 = vmul.f32 %v5991, %v5991
  %v6646 = vmul.f32 %v5996, %v5996
  %v6647 = vmul.f32 %v5999, %v5999
  %v6648 = vmul.f32 %v6004, %v6004
  %v6649 = vmul.f32 %v6007, %v6007
  %v6650 = vmul.f32 %v6012, %v6012
  %v6651 = vmul.f32 %v6015, %v6015
  %v6652 = vmul.f32 %v6020, %v6020
  %v6653 = vmul.f32 %v6023, %v6023
  %v6654 = vmul.f32 %v6028, %v6028
  %v6655 = vmul.f32 %v6031, %v6031
  %v6656 = vmul.f32 %v6036, %v6036
  %v6657 = vmul.f32 %v6039, %v6039
  %v6658 = vmul.f32 %v6044, %v6044
  %v6659 = vmul.f32 %v6047, %v6047
  %v6660 = vmul.f32 %v6052, %v6052
  %v6661 = vmul.f32 %v6055, %v6055
  %v6662 = vmul.f32 %v6060, %v6060
  %v6663 = vmul.f32 %v6063, %v6063
  %v6664 = vmul.f32 %v6068, %v6068
  %v6665 = vmul.f32 %v6071, %v6071
  %v6666 = vmul.f32 %v6076, %v6076
  %v6667 = vmul.f32 %v6079, %v6079
  %v6668 = vmul.f32 %v6084, %v6084
  %v6669 = vmul.f32 %v6087, %v6087
  %v6670 = vmul.f32 %v6092, %v6092
  %v6671 = vmul.f32 %v6095, %v6095
  %v6672 = vmul.f32 %v6100, %v6100
  %v6673 = vmul.f32 %v6103, %v6103
  %v6674 = vmul.f32 %v6108, %v6108
  %v6675 = vmul.f32 %v6111, %v6111
  %v6676 = vmul.f32 %v6116, %v6116
  %v6677 = vsel %vm6121, %v6566, 0.0
  %6678 = vadd.xlane.f32.xlu0 %v6677
  %v6679 = vpop.xlane.xlu0 %6678
  %v6680 = vsel %vm6121, %v6567, 0.0
  %6681 = vadd.xlane.f32.xlu0 %v6680
  %v6682 = vpop.xlane.xlu0 %6681
  %v6683 = vsel %vm6121, %v6568, 0.0
  %6684 = vadd.xlane.f32.xlu0 %v6683
  %v6685 = vpop.xlane.xlu0 %6684
  %v6686 = vsel %vm6121, %v6569, 0.0
  %6687 = vadd.xlane.f32.xlu0 %v6686
  %v6688 = vpop.xlane.xlu0 %6687
  %v6689 = vsel %vm6121, %v6570, 0.0
  %6690 = vadd.xlane.f32.xlu0 %v6689
  %v6691 = vpop.xlane.xlu0 %6690
  %v6692 = vsel %vm6121, %v6571, 0.0
  %6693 = vadd.xlane.f32.xlu0 %v6692
  %v6694 = vpop.xlane.xlu0 %6693
  %v6695 = vsel %vm6121, %v6572, 0.0
  %6696 = vadd.xlane.f32.xlu0 %v6695
  %v6697 = vpop.xlane.xlu0 %6696
  %v6698 = vsel %vm6121, %v6573, 0.0
  %6699 = vadd.xlane.f32.xlu0 %v6698
  %v6700 = vpop.xlane.xlu0 %6699
  %v6701 = vsel %vm6121, %v6574, 0.0
  %6702 = vadd.xlane.f32.xlu0 %v6701
  %v6703 = vpop.xlane.xlu0 %6702
  %v6704 = vsel %vm6121, %v6575, 0.0
  %6705 = vadd.xlane.f32.xlu0 %v6704
  %v6706 = vpop.xlane.xlu0 %6705
  %v6707 = vsel %vm6121, %v6576, 0.0
  %6708 = vadd.xlane.f32.xlu0 %v6707
  %v6709 = vpop.xlane.xlu0 %6708
  %v6710 = vsel %vm6121, %v6577, 0.0
  %6711 = vadd.xlane.f32.xlu0 %v6710
  %v6712 = vpop.xlane.xlu0 %6711
  %v6713 = vsel %vm6121, %v6578, 0.0
  %6714 = vadd.xlane.f32.xlu0 %v6713
  %v6715 = vpop.xlane.xlu0 %6714
  %v6716 = vsel %vm6121, %v6579, 0.0
  %6717 = vadd.xlane.f32.xlu0 %v6716
  %v6718 = vpop.xlane.xlu0 %6717
  %v6719 = vsel %vm6121, %v6580, 0.0
  %6720 = vadd.xlane.f32.xlu0 %v6719
  %v6721 = vpop.xlane.xlu0 %6720
  %v6722 = vsel %vm6121, %v6581, 0.0
  %6723 = vadd.xlane.f32.xlu0 %v6722
  %v6724 = vpop.xlane.xlu0 %6723
  %v6725 = vsel %vm6121, %v6582, 0.0
  %6726 = vadd.xlane.f32.xlu0 %v6725
  %v6727 = vpop.xlane.xlu0 %6726
  %v6728 = vsel %vm6121, %v6583, 0.0
  %6729 = vadd.xlane.f32.xlu0 %v6728
  %v6730 = vpop.xlane.xlu0 %6729
  %v6731 = vsel %vm6121, %v6584, 0.0
  %6732 = vadd.xlane.f32.xlu0 %v6731
  %v6733 = vpop.xlane.xlu0 %6732
  %v6734 = vsel %vm6121, %v6585, 0.0
  %6735 = vadd.xlane.f32.xlu0 %v6734
  %v6736 = vpop.xlane.xlu0 %6735
  %v6737 = vsel %vm6121, %v6586, 0.0
  %6738 = vadd.xlane.f32.xlu0 %v6737
  %v6739 = vpop.xlane.xlu0 %6738
  %v6740 = vsel %vm6121, %v6587, 0.0
  %6741 = vadd.xlane.f32.xlu0 %v6740
  %v6742 = vpop.xlane.xlu0 %6741
  %v6743 = vsel %vm6121, %v6588, 0.0
  %6744 = vadd.xlane.f32.xlu0 %v6743
  %v6745 = vpop.xlane.xlu0 %6744
  %v6746 = vsel %vm6121, %v6589, 0.0
  %6747 = vadd.xlane.f32.xlu0 %v6746
  %v6748 = vpop.xlane.xlu0 %6747
  %v6749 = vsel %vm6121, %v6590, 0.0
  %6750 = vadd.xlane.f32.xlu0 %v6749
  %v6751 = vpop.xlane.xlu0 %6750
  %v6752 = vsel %vm6121, %v6591, 0.0
  %6753 = vadd.xlane.f32.xlu0 %v6752
  %v6754 = vpop.xlane.xlu0 %6753
  %v6755 = vsel %vm6121, %v6592, 0.0
  %6756 = vadd.xlane.f32.xlu0 %v6755
  %v6757 = vpop.xlane.xlu0 %6756
  %v6758 = vsel %vm6121, %v6593, 0.0
  %6759 = vadd.xlane.f32.xlu0 %v6758
  %v6760 = vpop.xlane.xlu0 %6759
  %v6761 = vsel %vm6121, %v6594, 0.0
  %6762 = vadd.xlane.f32.xlu0 %v6761
  %v6763 = vpop.xlane.xlu0 %6762
  %v6764 = vsel %vm6121, %v6595, 0.0
  %6765 = vadd.xlane.f32.xlu0 %v6764
  %v6766 = vpop.xlane.xlu0 %6765
  %v6767 = vsel %vm6121, %v6596, 0.0
  %6768 = vadd.xlane.f32.xlu0 %v6767
  %v6769 = vpop.xlane.xlu0 %6768
  %v6770 = vsel %vm6121, %v6597, 0.0
  %6771 = vadd.xlane.f32.xlu0 %v6770
  %v6772 = vpop.xlane.xlu0 %6771
  %v6773 = vsel %vm6121, %v6598, 0.0
  %6774 = vadd.xlane.f32.xlu0 %v6773
  %v6775 = vpop.xlane.xlu0 %6774
  %v6776 = vsel %vm6121, %v6599, 0.0
  %6777 = vadd.xlane.f32.xlu0 %v6776
  %v6778 = vpop.xlane.xlu0 %6777
  %v6779 = vsel %vm6121, %v6600, 0.0
  %6780 = vadd.xlane.f32.xlu0 %v6779
  %v6781 = vpop.xlane.xlu0 %6780
  %v6782 = vsel %vm6121, %v6601, 0.0
  %6783 = vadd.xlane.f32.xlu0 %v6782
  %v6784 = vpop.xlane.xlu0 %6783
  %v6785 = vsel %vm6121, %v6602, 0.0
  %6786 = vadd.xlane.f32.xlu0 %v6785
  %v6787 = vpop.xlane.xlu0 %6786
  %v6788 = vsel %vm6121, %v6603, 0.0
  %6789 = vadd.xlane.f32.xlu0 %v6788
  %v6790 = vpop.xlane.xlu0 %6789
  %v6791 = vsel %vm6121, %v6604, 0.0
  %6792 = vadd.xlane.f32.xlu0 %v6791
  %v6793 = vpop.xlane.xlu0 %6792
  %v6794 = vsel %vm6121, %v6605, 0.0
  %6795 = vadd.xlane.f32.xlu0 %v6794
  %v6796 = vpop.xlane.xlu0 %6795
  %v6797 = vsel %vm6121, %v6606, 0.0
  %6798 = vadd.xlane.f32.xlu0 %v6797
  %v6799 = vpop.xlane.xlu0 %6798
  %v6800 = vsel %vm6121, %v6607, 0.0
  %6801 = vadd.xlane.f32.xlu0 %v6800
  %v6802 = vpop.xlane.xlu0 %6801
  %v6803 = vsel %vm6121, %v6608, 0.0
  %6804 = vadd.xlane.f32.xlu0 %v6803
  %v6805 = vpop.xlane.xlu0 %6804
  %v6806 = vsel %vm6121, %v6609, 0.0
  %6807 = vadd.xlane.f32.xlu0 %v6806
  %v6808 = vpop.xlane.xlu0 %6807
  %v6809 = vsel %vm6121, %v6610, 0.0
  %6810 = vadd.xlane.f32.xlu0 %v6809
  %v6811 = vpop.xlane.xlu0 %6810
  %v6812 = vsel %vm6121, %v6611, 0.0
  %6813 = vadd.xlane.f32.xlu0 %v6812
  %v6814 = vpop.xlane.xlu0 %6813
  %v6815 = vsel %vm6121, %v6612, 0.0
  %6816 = vadd.xlane.f32.xlu0 %v6815
  %v6817 = vpop.xlane.xlu0 %6816
  %v6818 = vsel %vm6121, %v6613, 0.0
  %6819 = vadd.xlane.f32.xlu0 %v6818
  %v6820 = vpop.xlane.xlu0 %6819
  %v6821 = vsel %vm6121, %v6614, 0.0
  %6822 = vadd.xlane.f32.xlu0 %v6821
  %v6823 = vpop.xlane.xlu0 %6822
  %v6824 = vsel %vm6121, %v6615, 0.0
  %6825 = vadd.xlane.f32.xlu0 %v6824
  %v6826 = vpop.xlane.xlu0 %6825
  %v6827 = vsel %vm6121, %v6616, 0.0
  %6828 = vadd.xlane.f32.xlu0 %v6827
  %v6829 = vpop.xlane.xlu0 %6828
  %v6830 = vsel %vm6121, %v6617, 0.0
  %6831 = vadd.xlane.f32.xlu0 %v6830
  %v6832 = vpop.xlane.xlu0 %6831
  %v6833 = vsel %vm6121, %v6618, 0.0
  %6834 = vadd.xlane.f32.xlu0 %v6833
  %v6835 = vpop.xlane.xlu0 %6834
  %v6836 = vsel %vm6121, %v6619, 0.0
  %6837 = vadd.xlane.f32.xlu0 %v6836
  %v6838 = vpop.xlane.xlu0 %6837
  %v6839 = vsel %vm6121, %v6620, 0.0
  %6840 = vadd.xlane.f32.xlu0 %v6839
  %v6841 = vpop.xlane.xlu0 %6840
  %v6842 = vsel %vm6121, %v6621, 0.0
  %6843 = vadd.xlane.f32.xlu0 %v6842
  %v6844 = vpop.xlane.xlu0 %6843
  %v6845 = vsel %vm6121, %v6622, 0.0
  %6846 = vadd.xlane.f32.xlu0 %v6845
  %v6847 = vpop.xlane.xlu0 %6846
  %v6848 = vsel %vm6121, %v6623, 0.0
  %6849 = vadd.xlane.f32.xlu0 %v6848
  %v6850 = vpop.xlane.xlu0 %6849
  %v6851 = vsel %vm6121, %v6624, 0.0
  %6852 = vadd.xlane.f32.xlu0 %v6851
  %v6853 = vpop.xlane.xlu0 %6852
  %v6854 = vsel %vm6121, %v6625, 0.0
  %6855 = vadd.xlane.f32.xlu0 %v6854
  %v6856 = vpop.xlane.xlu0 %6855
  %v6857 = vsel %vm6121, %v6626, 0.0
  %6858 = vadd.xlane.f32.xlu0 %v6857
  %v6859 = vpop.xlane.xlu0 %6858
  %v6860 = vsel %vm6121, %v6627, 0.0
  %6861 = vadd.xlane.f32.xlu0 %v6860
  %v6862 = vpop.xlane.xlu0 %6861
  %v6863 = vsel %vm6121, %v6628, 0.0
  %6864 = vadd.xlane.f32.xlu0 %v6863
  %v6865 = vpop.xlane.xlu0 %6864
  %v6866 = vsel %vm6121, %v6629, 0.0
  %6867 = vadd.xlane.f32.xlu0 %v6866
  %v6868 = vpop.xlane.xlu0 %6867
  %v6869 = vsel %vm6121, %v6630, 0.0
  %6870 = vadd.xlane.f32.xlu0 %v6869
  %v6871 = vpop.xlane.xlu0 %6870
  %v6872 = vsel %vm6121, %v6631, 0.0
  %6873 = vadd.xlane.f32.xlu0 %v6872
  %v6874 = vpop.xlane.xlu0 %6873
  %v6875 = vsel %vm6121, %v6632, 0.0
  %6876 = vadd.xlane.f32.xlu0 %v6875
  %v6877 = vpop.xlane.xlu0 %6876
  %v6878 = vsel %vm6121, %v6633, 0.0
  %6879 = vadd.xlane.f32.xlu0 %v6878
  %v6880 = vpop.xlane.xlu0 %6879
  %v6881 = vsel %vm6121, %v6634, 0.0
  %6882 = vadd.xlane.f32.xlu0 %v6881
  %v6883 = vpop.xlane.xlu0 %6882
  %v6884 = vsel %vm6121, %v6635, 0.0
  %6885 = vadd.xlane.f32.xlu0 %v6884
  %v6886 = vpop.xlane.xlu0 %6885
  %v6887 = vsel %vm6121, %v6636, 0.0
  %6888 = vadd.xlane.f32.xlu0 %v6887
  %v6889 = vpop.xlane.xlu0 %6888
  %v6890 = vsel %vm6121, %v6637, 0.0
  %6891 = vadd.xlane.f32.xlu0 %v6890
  %v6892 = vpop.xlane.xlu0 %6891
  %v6893 = vsel %vm6121, %v6638, 0.0
  %6894 = vadd.xlane.f32.xlu0 %v6893
  %v6895 = vpop.xlane.xlu0 %6894
  %v6896 = vsel %vm6121, %v6639, 0.0
  %6897 = vadd.xlane.f32.xlu0 %v6896
  %v6898 = vpop.xlane.xlu0 %6897
  %v6899 = vsel %vm6121, %v6640, 0.0
  %6900 = vadd.xlane.f32.xlu0 %v6899
  %v6901 = vpop.xlane.xlu0 %6900
  %v6902 = vsel %vm6121, %v6641, 0.0
  %6903 = vadd.xlane.f32.xlu0 %v6902
  %v6904 = vpop.xlane.xlu0 %6903
  %v6905 = vsel %vm6121, %v6642, 0.0
  %6906 = vadd.xlane.f32.xlu0 %v6905
  %v6907 = vpop.xlane.xlu0 %6906
  %v6908 = vsel %vm6121, %v6643, 0.0
  %6909 = vadd.xlane.f32.xlu0 %v6908
  %v6910 = vpop.xlane.xlu0 %6909
  %v6911 = vsel %vm6121, %v6644, 0.0
  %6912 = vadd.xlane.f32.xlu0 %v6911
  %v6913 = vpop.xlane.xlu0 %6912
  %v6914 = vsel %vm6121, %v6645, 0.0
  %6915 = vadd.xlane.f32.xlu0 %v6914
  %v6916 = vpop.xlane.xlu0 %6915
  %v6917 = vsel %vm6121, %v6646, 0.0
  %6918 = vadd.xlane.f32.xlu0 %v6917
  %v6919 = vpop.xlane.xlu0 %6918
  %v6920 = vsel %vm6121, %v6647, 0.0
  %6921 = vadd.xlane.f32.xlu0 %v6920
  %v6922 = vpop.xlane.xlu0 %6921
  %v6923 = vsel %vm6121, %v6648, 0.0
  %6924 = vadd.xlane.f32.xlu0 %v6923
  %v6925 = vpop.xlane.xlu0 %6924
  %v6926 = vsel %vm6121, %v6649, 0.0
  %6927 = vadd.xlane.f32.xlu0 %v6926
  %v6928 = vpop.xlane.xlu0 %6927
  %v6929 = vsel %vm6121, %v6650, 0.0
  %6930 = vadd.xlane.f32.xlu0 %v6929
  %v6931 = vpop.xlane.xlu0 %6930
  %v6932 = vsel %vm6121, %v6651, 0.0
  %6933 = vadd.xlane.f32.xlu0 %v6932
  %v6934 = vpop.xlane.xlu0 %6933
  %v6935 = vsel %vm6121, %v6652, 0.0
  %6936 = vadd.xlane.f32.xlu0 %v6935
  %v6937 = vpop.xlane.xlu0 %6936
  %v6938 = vsel %vm6121, %v6653, 0.0
  %6939 = vadd.xlane.f32.xlu0 %v6938
  %v6940 = vpop.xlane.xlu0 %6939
  %v6941 = vsel %vm6121, %v6654, 0.0
  %6942 = vadd.xlane.f32.xlu0 %v6941
  %v6943 = vpop.xlane.xlu0 %6942
  %v6944 = vsel %vm6121, %v6655, 0.0
  %6945 = vadd.xlane.f32.xlu0 %v6944
  %v6946 = vpop.xlane.xlu0 %6945
  %v6947 = vsel %vm6121, %v6656, 0.0
  %6948 = vadd.xlane.f32.xlu0 %v6947
  %v6949 = vpop.xlane.xlu0 %6948
  %v6950 = vsel %vm6121, %v6657, 0.0
  %6951 = vadd.xlane.f32.xlu0 %v6950
  %v6952 = vpop.xlane.xlu0 %6951
  %v6953 = vsel %vm6121, %v6658, 0.0
  %6954 = vadd.xlane.f32.xlu0 %v6953
  %v6955 = vpop.xlane.xlu0 %6954
  %v6956 = vsel %vm6121, %v6659, 0.0
  %6957 = vadd.xlane.f32.xlu0 %v6956
  %v6958 = vpop.xlane.xlu0 %6957
  %v6959 = vsel %vm6121, %v6660, 0.0
  %6960 = vadd.xlane.f32.xlu0 %v6959
  %v6961 = vpop.xlane.xlu0 %6960
  %v6962 = vsel %vm6121, %v6661, 0.0
  %6963 = vadd.xlane.f32.xlu0 %v6962
  %v6964 = vpop.xlane.xlu0 %6963
  %v6965 = vsel %vm6121, %v6662, 0.0
  %6966 = vadd.xlane.f32.xlu0 %v6965
  %v6967 = vpop.xlane.xlu0 %6966
  %v6968 = vsel %vm6121, %v6663, 0.0
  %6969 = vadd.xlane.f32.xlu0 %v6968
  %v6970 = vpop.xlane.xlu0 %6969
  %v6971 = vsel %vm6121, %v6664, 0.0
  %6972 = vadd.xlane.f32.xlu0 %v6971
  %v6973 = vpop.xlane.xlu0 %6972
  %v6974 = vsel %vm6121, %v6665, 0.0
  %6975 = vadd.xlane.f32.xlu0 %v6974
  %v6976 = vpop.xlane.xlu0 %6975
  %v6977 = vsel %vm6121, %v6666, 0.0
  %6978 = vadd.xlane.f32.xlu0 %v6977
  %v6979 = vpop.xlane.xlu0 %6978
  %v6980 = vsel %vm6121, %v6667, 0.0
  %6981 = vadd.xlane.f32.xlu0 %v6980
  %v6982 = vpop.xlane.xlu0 %6981
  %v6983 = vsel %vm6121, %v6668, 0.0
  %6984 = vadd.xlane.f32.xlu0 %v6983
  %v6985 = vpop.xlane.xlu0 %6984
  %v6986 = vsel %vm6121, %v6669, 0.0
  %6987 = vadd.xlane.f32.xlu0 %v6986
  %v6988 = vpop.xlane.xlu0 %6987
  %v6989 = vsel %vm6121, %v6670, 0.0
  %6990 = vadd.xlane.f32.xlu0 %v6989
  %v6991 = vpop.xlane.xlu0 %6990
  %v6992 = vsel %vm6121, %v6671, 0.0
  %6993 = vadd.xlane.f32.xlu0 %v6992
  %v6994 = vpop.xlane.xlu0 %6993
  %v6995 = vsel %vm6121, %v6672, 0.0
  %6996 = vadd.xlane.f32.xlu0 %v6995
  %v6997 = vpop.xlane.xlu0 %6996
  %v6998 = vsel %vm6121, %v6673, 0.0
  %6999 = vadd.xlane.f32.xlu0 %v6998
  %v7000 = vpop.xlane.xlu0 %6999
  %v7001 = vsel %vm6121, %v6674, 0.0
  %7002 = vadd.xlane.f32.xlu0 %v7001
  %v7003 = vpop.xlane.xlu0 %7002
  %v7004 = vsel %vm6121, %v6675, 0.0
  %7005 = vadd.xlane.f32.xlu0 %v7004
  %v7006 = vpop.xlane.xlu0 %7005
  %v7007 = vsel %vm6121, %v6676, 0.0
  %7008 = vadd.xlane.f32.xlu0 %v7007
  %v7009 = vpop.xlane.xlu0 %7008
  %v7010 = vmul.f32 %v6679, 0.020408163
  %v7011 = vmul.f32 %v6682, 0.020408163
  %v7012 = vmul.f32 %v6685, 0.020408163
  %v7013 = vmul.f32 %v6688, 0.020408163
  %v7014 = vmul.f32 %v6691, 0.020408163
  %v7015 = vmul.f32 %v6694, 0.020408163
  %v7016 = vmul.f32 %v6697, 0.020408163
  %v7017 = vmul.f32 %v6700, 0.020408163
  %v7018 = vmul.f32 %v6703, 0.020408163
  %v7019 = vmul.f32 %v6706, 0.020408163
  %v7020 = vmul.f32 %v6709, 0.020408163
  %v7021 = vmul.f32 %v6712, 0.020408163
  %v7022 = vmul.f32 %v6715, 0.020408163
  %v7023 = vmul.f32 %v6718, 0.020408163
  %v7024 = vmul.f32 %v6721, 0.020408163
  %v7025 = vmul.f32 %v6724, 0.020408163
  %v7026 = vmul.f32 %v6727, 0.020408163
  %v7027 = vmul.f32 %v6730, 0.020408163
  %v7028 = vmul.f32 %v6733, 0.020408163
  %v7029 = vmul.f32 %v6736, 0.020408163
  %v7030 = vmul.f32 %v6739, 0.020408163
  %v7031 = vmul.f32 %v6742, 0.020408163
  %v7032 = vmul.f32 %v6745, 0.020408163
  %v7033 = vmul.f32 %v6748, 0.020408163
  %v7034 = vmul.f32 %v6751, 0.020408163
  %v7035 = vmul.f32 %v6754, 0.020408163
  %v7036 = vmul.f32 %v6757, 0.020408163
  %v7037 = vmul.f32 %v6760, 0.020408163
  %v7038 = vmul.f32 %v6763, 0.020408163
  %v7039 = vmul.f32 %v6766, 0.020408163
  %v7040 = vmul.f32 %v6769, 0.020408163
  %v7041 = vmul.f32 %v6772, 0.020408163
  %v7042 = vmul.f32 %v6775, 0.020408163
  %v7043 = vmul.f32 %v6778, 0.020408163
  %v7044 = vmul.f32 %v6781, 0.020408163
  %v7045 = vmul.f32 %v6784, 0.020408163
  %v7046 = vmul.f32 %v6787, 0.020408163
  %v7047 = vmul.f32 %v6790, 0.020408163
  %v7048 = vmul.f32 %v6793, 0.020408163
  %v7049 = vmul.f32 %v6796, 0.020408163
  %v7050 = vmul.f32 %v6799, 0.020408163
  %v7051 = vmul.f32 %v6802, 0.020408163
  %v7052 = vmul.f32 %v6805, 0.020408163
  %v7053 = vmul.f32 %v6808, 0.020408163
  %v7054 = vmul.f32 %v6811, 0.020408163
  %v7055 = vmul.f32 %v6814, 0.020408163
  %v7056 = vmul.f32 %v6817, 0.020408163
  %v7057 = vmul.f32 %v6820, 0.020408163
  %v7058 = vmul.f32 %v6823, 0.020408163
  %v7059 = vmul.f32 %v6826, 0.020408163
  %v7060 = vmul.f32 %v6829, 0.020408163
  %v7061 = vmul.f32 %v6832, 0.020408163
  %v7062 = vmul.f32 %v6835, 0.020408163
  %v7063 = vmul.f32 %v6838, 0.020408163
  %v7064 = vmul.f32 %v6841, 0.020408163
  %v7065 = vmul.f32 %v6844, 0.020408163
  %v7066 = vmul.f32 %v6847, 0.020408163
  %v7067 = vmul.f32 %v6850, 0.020408163
  %v7068 = vmul.f32 %v6853, 0.020408163
  %v7069 = vmul.f32 %v6856, 0.020408163
  %v7070 = vmul.f32 %v6859, 0.020408163
  %v7071 = vmul.f32 %v6862, 0.020408163
  %v7072 = vmul.f32 %v6865, 0.020408163
  %v7073 = vmul.f32 %v6868, 0.020408163
  %v7074 = vmul.f32 %v6871, 0.020408163
  %v7075 = vmul.f32 %v6874, 0.020408163
  %v7076 = vmul.f32 %v6877, 0.020408163
  %v7077 = vmul.f32 %v6880, 0.020408163
  %v7078 = vmul.f32 %v6883, 0.020408163
  %v7079 = vmul.f32 %v6886, 0.020408163
  %v7080 = vmul.f32 %v6889, 0.020408163
  %v7081 = vmul.f32 %v6892, 0.020408163
  %v7082 = vmul.f32 %v6895, 0.020408163
  %v7083 = vmul.f32 %v6898, 0.020408163
  %v7084 = vmul.f32 %v6901, 0.020408163
  %v7085 = vmul.f32 %v6904, 0.020408163
  %v7086 = vmul.f32 %v6907, 0.020408163
  %v7087 = vmul.f32 %v6910, 0.020408163
  %v7088 = vmul.f32 %v6913, 0.020408163
  %v7089 = vmul.f32 %v6916, 0.020408163
  %v7090 = vmul.f32 %v6919, 0.020408163
  %v7091 = vmul.f32 %v6922, 0.020408163
  %v7092 = vmul.f32 %v6925, 0.020408163
  %v7093 = vmul.f32 %v6928, 0.020408163
  %v7094 = vmul.f32 %v6931, 0.020408163
  %v7095 = vmul.f32 %v6934, 0.020408163
  %v7096 = vmul.f32 %v6937, 0.020408163
  %v7097 = vmul.f32 %v6940, 0.020408163
  %v7098 = vmul.f32 %v6943, 0.020408163
  %v7099 = vmul.f32 %v6946, 0.020408163
  %v7100 = vmul.f32 %v6949, 0.020408163
  %v7101 = vmul.f32 %v6952, 0.020408163
  %v7102 = vmul.f32 %v6955, 0.020408163
  %v7103 = vmul.f32 %v6958, 0.020408163
  %v7104 = vmul.f32 %v6961, 0.020408163
  %v7105 = vmul.f32 %v6964, 0.020408163
  %v7106 = vmul.f32 %v6967, 0.020408163
  %v7107 = vmul.f32 %v6970, 0.020408163
  %v7108 = vmul.f32 %v6973, 0.020408163
  %v7109 = vmul.f32 %v6976, 0.020408163
  %v7110 = vmul.f32 %v6979, 0.020408163
  %v7111 = vmul.f32 %v6982, 0.020408163
  %v7112 = vmul.f32 %v6985, 0.020408163
  %v7113 = vmul.f32 %v6988, 0.020408163
  %v7114 = vmul.f32 %v6991, 0.020408163
  %v7115 = vmul.f32 %v6994, 0.020408163
  %v7116 = vmul.f32 %v6997, 0.020408163
  %v7117 = vmul.f32 %v7000, 0.020408163
  %v7118 = vmul.f32 %v7003, 0.020408163
  %v7119 = vmul.f32 %v7006, 0.020408163
  %v7120 = vmul.f32 %v7009, 0.020408163
  %v7121 = vmul.f32 %v6455, %v6455
  %v7122 = vmul.f32 %v6456, %v6456
  %v7123 = vmul.f32 %v6457, %v6457
  %v7124 = vmul.f32 %v6458, %v6458
  %v7125 = vmul.f32 %v6459, %v6459
  %v7126 = vmul.f32 %v6460, %v6460
  %v7127 = vmul.f32 %v6461, %v6461
  %v7128 = vmul.f32 %v6462, %v6462
  %v7129 = vmul.f32 %v6463, %v6463
  %v7130 = vmul.f32 %v6464, %v6464
  %v7131 = vmul.f32 %v6465, %v6465
  %v7132 = vmul.f32 %v6466, %v6466
  %v7133 = vmul.f32 %v6467, %v6467
  %v7134 = vmul.f32 %v6468, %v6468
  %v7135 = vmul.f32 %v6469, %v6469
  %v7136 = vmul.f32 %v6470, %v6470
  %v7137 = vmul.f32 %v6471, %v6471
  %v7138 = vmul.f32 %v6472, %v6472
  %v7139 = vmul.f32 %v6473, %v6473
  %v7140 = vmul.f32 %v6474, %v6474
  %v7141 = vmul.f32 %v6475, %v6475
  %v7142 = vmul.f32 %v6476, %v6476
  %v7143 = vmul.f32 %v6477, %v6477
  %v7144 = vmul.f32 %v6478, %v6478
  %v7145 = vmul.f32 %v6479, %v6479
  %v7146 = vmul.f32 %v6480, %v6480
  %v7147 = vmul.f32 %v6481, %v6481
  %v7148 = vmul.f32 %v6482, %v6482
  %v7149 = vmul.f32 %v6483, %v6483
  %v7150 = vmul.f32 %v6484, %v6484
  %v7151 = vmul.f32 %v6485, %v6485
  %v7152 = vmul.f32 %v6486, %v6486
  %v7153 = vmul.f32 %v6487, %v6487
  %v7154 = vmul.f32 %v6488, %v6488
  %v7155 = vmul.f32 %v6489, %v6489
  %v7156 = vmul.f32 %v6490, %v6490
  %v7157 = vmul.f32 %v6491, %v6491
  %v7158 = vmul.f32 %v6492, %v6492
  %v7159 = vmul.f32 %v6493, %v6493
  %v7160 = vmul.f32 %v6494, %v6494
  %v7161 = vmul.f32 %v6495, %v6495
  %v7162 = vmul.f32 %v6496, %v6496
  %v7163 = vmul.f32 %v6497, %v6497
  %v7164 = vmul.f32 %v6498, %v6498
  %v7165 = vmul.f32 %v6499, %v6499
  %v7166 = vmul.f32 %v6500, %v6500
  %v7167 = vmul.f32 %v6501, %v6501
  %v7168 = vmul.f32 %v6502, %v6502
  %v7169 = vmul.f32 %v6503, %v6503
  %v7170 = vmul.f32 %v6504, %v6504
  %v7171 = vmul.f32 %v6505, %v6505
  %v7172 = vmul.f32 %v6506, %v6506
  %v7173 = vmul.f32 %v6507, %v6507
  %v7174 = vmul.f32 %v6508, %v6508
  %v7175 = vmul.f32 %v6509, %v6509
  %v7176 = vmul.f32 %v6510, %v6510
  %v7177 = vmul.f32 %v6511, %v6511
  %v7178 = vmul.f32 %v6512, %v6512
  %v7179 = vmul.f32 %v6513, %v6513
  %v7180 = vmul.f32 %v6514, %v6514
  %v7181 = vmul.f32 %v6515, %v6515
  %v7182 = vmul.f32 %v6516, %v6516
  %v7183 = vmul.f32 %v6517, %v6517
  %v7184 = vmul.f32 %v6518, %v6518
  %v7185 = vmul.f32 %v6519, %v6519
  %v7186 = vmul.f32 %v6520, %v6520
  %v7187 = vmul.f32 %v6521, %v6521
  %v7188 = vmul.f32 %v6522, %v6522
  %v7189 = vmul.f32 %v6523, %v6523
  %v7190 = vmul.f32 %v6524, %v6524
  %v7191 = vmul.f32 %v6525, %v6525
  %v7192 = vmul.f32 %v6526, %v6526
  %v7193 = vmul.f32 %v6527, %v6527
  %v7194 = vmul.f32 %v6528, %v6528
  %v7195 = vmul.f32 %v6529, %v6529
  %v7196 = vmul.f32 %v6530, %v6530
  %v7197 = vmul.f32 %v6531, %v6531
  %v7198 = vmul.f32 %v6532, %v6532
  %v7199 = vmul.f32 %v6533, %v6533
  %v7200 = vmul.f32 %v6534, %v6534
  %v7201 = vmul.f32 %v6535, %v6535
  %v7202 = vmul.f32 %v6536, %v6536
  %v7203 = vmul.f32 %v6537, %v6537
  %v7204 = vmul.f32 %v6538, %v6538
  %v7205 = vmul.f32 %v6539, %v6539
  %v7206 = vmul.f32 %v6540, %v6540
  %v7207 = vmul.f32 %v6541, %v6541
  %v7208 = vmul.f32 %v6542, %v6542
  %v7209 = vmul.f32 %v6543, %v6543
  %v7210 = vmul.f32 %v6544, %v6544
  %v7211 = vmul.f32 %v6545, %v6545
  %v7212 = vmul.f32 %v6546, %v6546
  %v7213 = vmul.f32 %v6547, %v6547
  %v7214 = vmul.f32 %v6548, %v6548
  %v7215 = vmul.f32 %v6549, %v6549
  %v7216 = vmul.f32 %v6550, %v6550
  %v7217 = vmul.f32 %v6551, %v6551
  %v7218 = vmul.f32 %v6552, %v6552
  %v7219 = vmul.f32 %v6553, %v6553
  %v7220 = vmul.f32 %v6554, %v6554
  %v7221 = vmul.f32 %v6555, %v6555
  %v7222 = vmul.f32 %v6556, %v6556
  %v7223 = vmul.f32 %v6557, %v6557
  %v7224 = vmul.f32 %v6558, %v6558
  %v7225 = vmul.f32 %v6559, %v6559
  %v7226 = vmul.f32 %v6560, %v6560
  %v7227 = vmul.f32 %v6561, %v6561
  %v7228 = vmul.f32 %v6562, %v6562
  %v7229 = vmul.f32 %v6563, %v6563
  %v7230 = vmul.f32 %v6564, %v6564
  %v7231 = vmul.f32 %v6565, %v6565
  %v7232 = vsub.f32 %v7010, %v7121
  %v7233 = vsub.f32 %v7011, %v7122
  %v7234 = vsub.f32 %v7012, %v7123
  %v7235 = vsub.f32 %v7013, %v7124
  %v7236 = vsub.f32 %v7014, %v7125
  %v7237 = vsub.f32 %v7015, %v7126
  %v7238 = vsub.f32 %v7016, %v7127
  %v7239 = vsub.f32 %v7017, %v7128
  %v7240 = vsub.f32 %v7018, %v7129
  %v7241 = vsub.f32 %v7019, %v7130
  %v7242 = vsub.f32 %v7020, %v7131
  %v7243 = vsub.f32 %v7021, %v7132
  %v7244 = vsub.f32 %v7022, %v7133
  %v7245 = vsub.f32 %v7023, %v7134
  %v7246 = vsub.f32 %v7024, %v7135
  %v7247 = vsub.f32 %v7025, %v7136
  %v7248 = vsub.f32 %v7026, %v7137
  %v7249 = vsub.f32 %v7027, %v7138
  %v7250 = vsub.f32 %v7028, %v7139
  %v7251 = vsub.f32 %v7029, %v7140
  %v7252 = vsub.f32 %v7030, %v7141
  %v7253 = vsub.f32 %v7031, %v7142
  %v7254 = vsub.f32 %v7032, %v7143
  %v7255 = vsub.f32 %v7033, %v7144
  %v7256 = vsub.f32 %v7034, %v7145
  %v7257 = vsub.f32 %v7035, %v7146
  %v7258 = vsub.f32 %v7036, %v7147
  %v7259 = vsub.f32 %v7037, %v7148
  %v7260 = vsub.f32 %v7038, %v7149
  %v7261 = vsub.f32 %v7039, %v7150
  %v7262 = vsub.f32 %v7040, %v7151
  %v7263 = vsub.f32 %v7041, %v7152
  %v7264 = vsub.f32 %v7042, %v7153
  %v7265 = vsub.f32 %v7043, %v7154
  %v7266 = vsub.f32 %v7044, %v7155
  %v7267 = vsub.f32 %v7045, %v7156
  %v7268 = vsub.f32 %v7046, %v7157
  %v7269 = vsub.f32 %v7047, %v7158
  %v7270 = vsub.f32 %v7048, %v7159
  %v7271 = vsub.f32 %v7049, %v7160
  %v7272 = vsub.f32 %v7050, %v7161
  %v7273 = vsub.f32 %v7051, %v7162
  %v7274 = vsub.f32 %v7052, %v7163
  %v7275 = vsub.f32 %v7053, %v7164
  %v7276 = vsub.f32 %v7054, %v7165
  %v7277 = vsub.f32 %v7055, %v7166
  %v7278 = vsub.f32 %v7056, %v7167
  %v7279 = vsub.f32 %v7057, %v7168
  %v7280 = vsub.f32 %v7058, %v7169
  %v7281 = vsub.f32 %v7059, %v7170
  %v7282 = vsub.f32 %v7060, %v7171
  %v7283 = vsub.f32 %v7061, %v7172
  %v7284 = vsub.f32 %v7062, %v7173
  %v7285 = vsub.f32 %v7063, %v7174
  %v7286 = vsub.f32 %v7064, %v7175
  %v7287 = vsub.f32 %v7065, %v7176
  %v7288 = vsub.f32 %v7066, %v7177
  %v7289 = vsub.f32 %v7067, %v7178
  %v7290 = vsub.f32 %v7068, %v7179
  %v7291 = vsub.f32 %v7069, %v7180
  %v7292 = vsub.f32 %v7070, %v7181
  %v7293 = vsub.f32 %v7071, %v7182
  %v7294 = vsub.f32 %v7072, %v7183
  %v7295 = vsub.f32 %v7073, %v7184
  %v7296 = vsub.f32 %v7074, %v7185
  %v7297 = vsub.f32 %v7075, %v7186
  %v7298 = vsub.f32 %v7076, %v7187
  %v7299 = vsub.f32 %v7077, %v7188
  %v7300 = vsub.f32 %v7078, %v7189
  %v7301 = vsub.f32 %v7079, %v7190
  %v7302 = vsub.f32 %v7080, %v7191
  %v7303 = vsub.f32 %v7081, %v7192
  %v7304 = vsub.f32 %v7082, %v7193
  %v7305 = vsub.f32 %v7083, %v7194
  %v7306 = vsub.f32 %v7084, %v7195
  %v7307 = vsub.f32 %v7085, %v7196
  %v7308 = vsub.f32 %v7086, %v7197
  %v7309 = vsub.f32 %v7087, %v7198
  %v7310 = vsub.f32 %v7088, %v7199
  %v7311 = vsub.f32 %v7089, %v7200
  %v7312 = vsub.f32 %v7090, %v7201
  %v7313 = vsub.f32 %v7091, %v7202
  %v7314 = vsub.f32 %v7092, %v7203
  %v7315 = vsub.f32 %v7093, %v7204
  %v7316 = vsub.f32 %v7094, %v7205
  %v7317 = vsub.f32 %v7095, %v7206
  %v7318 = vsub.f32 %v7096, %v7207
  %v7319 = vsub.f32 %v7097, %v7208
  %v7320 = vsub.f32 %v7098, %v7209
  %v7321 = vsub.f32 %v7099, %v7210
  %v7322 = vsub.f32 %v7100, %v7211
  %v7323 = vsub.f32 %v7101, %v7212
  %v7324 = vsub.f32 %v7102, %v7213
  %v7325 = vsub.f32 %v7103, %v7214
  %v7326 = vsub.f32 %v7104, %v7215
  %v7327 = vsub.f32 %v7105, %v7216
  %v7328 = vsub.f32 %v7106, %v7217
  %v7329 = vsub.f32 %v7107, %v7218
  %v7330 = vsub.f32 %v7108, %v7219
  %v7331 = vsub.f32 %v7109, %v7220
  %v7332 = vsub.f32 %v7110, %v7221
  %v7333 = vsub.f32 %v7111, %v7222
  %v7334 = vsub.f32 %v7112, %v7223
  %v7335 = vsub.f32 %v7113, %v7224
  %v7336 = vsub.f32 %v7114, %v7225
  %v7337 = vsub.f32 %v7115, %v7226
  %v7338 = vsub.f32 %v7116, %v7227
  %v7339 = vsub.f32 %v7117, %v7228
  %v7340 = vsub.f32 %v7118, %v7229
  %v7341 = vsub.f32 %v7119, %v7230
  %v7342 = vsub.f32 %v7120, %v7231
  %v7343 = vmax.f32 %v7232, 0.0
  %v7344 = vmax.f32 %v7233, 0.0
  %v7345 = vmax.f32 %v7234, 0.0
  %v7346 = vmax.f32 %v7235, 0.0
  %v7347 = vmax.f32 %v7236, 0.0
  %v7348 = vmax.f32 %v7237, 0.0
  %v7349 = vmax.f32 %v7238, 0.0
  %v7350 = vmax.f32 %v7239, 0.0
  %v7351 = vmax.f32 %v7240, 0.0
  %v7352 = vmax.f32 %v7241, 0.0
  %v7353 = vmax.f32 %v7242, 0.0
  %v7354 = vmax.f32 %v7243, 0.0
  %v7355 = vmax.f32 %v7244, 0.0
  %v7356 = vmax.f32 %v7245, 0.0
  %v7357 = vmax.f32 %v7246, 0.0
  %v7358 = vmax.f32 %v7247, 0.0
  %v7359 = vmax.f32 %v7248, 0.0
  %v7360 = vmax.f32 %v7249, 0.0
  %v7361 = vmax.f32 %v7250, 0.0
  %v7362 = vmax.f32 %v7251, 0.0
  %v7363 = vmax.f32 %v7252, 0.0
  %v7364 = vmax.f32 %v7253, 0.0
  %v7365 = vmax.f32 %v7254, 0.0
  %v7366 = vmax.f32 %v7255, 0.0
  %v7367 = vmax.f32 %v7256, 0.0
  %v7368 = vmax.f32 %v7257, 0.0
  %v7369 = vmax.f32 %v7258, 0.0
  %v7370 = vmax.f32 %v7259, 0.0
  %v7371 = vmax.f32 %v7260, 0.0
  %v7372 = vmax.f32 %v7261, 0.0
  %v7373 = vmax.f32 %v7262, 0.0
  %v7374 = vmax.f32 %v7263, 0.0
  %v7375 = vmax.f32 %v7264, 0.0
  %v7376 = vmax.f32 %v7265, 0.0
  %v7377 = vmax.f32 %v7266, 0.0
  %v7378 = vmax.f32 %v7267, 0.0
  %v7379 = vmax.f32 %v7268, 0.0
  %v7380 = vmax.f32 %v7269, 0.0
  %v7381 = vmax.f32 %v7270, 0.0
  %v7382 = vmax.f32 %v7271, 0.0
  %v7383 = vmax.f32 %v7272, 0.0
  %v7384 = vmax.f32 %v7273, 0.0
  %v7385 = vmax.f32 %v7274, 0.0
  %v7386 = vmax.f32 %v7275, 0.0
  %v7387 = vmax.f32 %v7276, 0.0
  %v7388 = vmax.f32 %v7277, 0.0
  %v7389 = vmax.f32 %v7278, 0.0
  %v7390 = vmax.f32 %v7279, 0.0
  %v7391 = vmax.f32 %v7280, 0.0
  %v7392 = vmax.f32 %v7281, 0.0
  %v7393 = vmax.f32 %v7282, 0.0
  %v7394 = vmax.f32 %v7283, 0.0
  %v7395 = vmax.f32 %v7284, 0.0
  %v7396 = vmax.f32 %v7285, 0.0
  %v7397 = vmax.f32 %v7286, 0.0
  %v7398 = vmax.f32 %v7287, 0.0
  %v7399 = vmax.f32 %v7288, 0.0
  %v7400 = vmax.f32 %v7289, 0.0
  %v7401 = vmax.f32 %v7290, 0.0
  %v7402 = vmax.f32 %v7291, 0.0
  %v7403 = vmax.f32 %v7292, 0.0
  %v7404 = vmax.f32 %v7293, 0.0
  %v7405 = vmax.f32 %v7294, 0.0
  %v7406 = vmax.f32 %v7295, 0.0
  %v7407 = vmax.f32 %v7296, 0.0
  %v7408 = vmax.f32 %v7297, 0.0
  %v7409 = vmax.f32 %v7298, 0.0
  %v7410 = vmax.f32 %v7299, 0.0
  %v7411 = vmax.f32 %v7300, 0.0
  %v7412 = vmax.f32 %v7301, 0.0
  %v7413 = vmax.f32 %v7302, 0.0
  %v7414 = vmax.f32 %v7303, 0.0
  %v7415 = vmax.f32 %v7304, 0.0
  %v7416 = vmax.f32 %v7305, 0.0
  %v7417 = vmax.f32 %v7306, 0.0
  %v7418 = vmax.f32 %v7307, 0.0
  %v7419 = vmax.f32 %v7308, 0.0
  %v7420 = vmax.f32 %v7309, 0.0
  %v7421 = vmax.f32 %v7310, 0.0
  %v7422 = vmax.f32 %v7311, 0.0
  %v7423 = vmax.f32 %v7312, 0.0
  %v7424 = vmax.f32 %v7313, 0.0
  %v7425 = vmax.f32 %v7314, 0.0
  %v7426 = vmax.f32 %v7315, 0.0
  %v7427 = vmax.f32 %v7316, 0.0
  %v7428 = vmax.f32 %v7317, 0.0
  %v7429 = vmax.f32 %v7318, 0.0
  %v7430 = vmax.f32 %v7319, 0.0
  %v7431 = vmax.f32 %v7320, 0.0
  %v7432 = vmax.f32 %v7321, 0.0
  %v7433 = vmax.f32 %v7322, 0.0
  %v7434 = vmax.f32 %v7323, 0.0
  %v7435 = vmax.f32 %v7324, 0.0
  %v7436 = vmax.f32 %v7325, 0.0
  %v7437 = vmax.f32 %v7326, 0.0
  %v7438 = vmax.f32 %v7327, 0.0
  %v7439 = vmax.f32 %v7328, 0.0
  %v7440 = vmax.f32 %v7329, 0.0
  %v7441 = vmax.f32 %v7330, 0.0
  %v7442 = vmax.f32 %v7331, 0.0
  %v7443 = vmax.f32 %v7332, 0.0
  %v7444 = vmax.f32 %v7333, 0.0
  %v7445 = vmax.f32 %v7334, 0.0
  %v7446 = vmax.f32 %v7335, 0.0
  %v7447 = vmax.f32 %v7336, 0.0
  %v7448 = vmax.f32 %v7337, 0.0
  %v7449 = vmax.f32 %v7338, 0.0
  %v7450 = vmax.f32 %v7339, 0.0
  %v7451 = vmax.f32 %v7340, 0.0
  %v7452 = vmax.f32 %v7341, 0.0
  %v7453 = vmax.f32 %v7342, 0.0
  %s7454 = scalar_lea.vmem %s3, %s24
  %v7455 = vld [vmem:[%s7454] sm:$0xff]
  %v7456 = vld [vmem:[%s7454 + $0x8] sm:$0xff]
  %v7457 = vld [vmem:[%s7454 + $0x10] sm:$0xff]
  %v7458 = vld [vmem:[%s7454 + $0x18] sm:$0xff]
  %v7459 = vld [vmem:[%s7454 + $0x20] sm:$0xff]
  %v7460 = vld [vmem:[%s7454 + $0x28] sm:$0xff]
  %v7461 = vld [vmem:[%s7454 + $0x30] sm:$0xff]
  %v7462 = vld [vmem:[%s7454 + $0x38] sm:$0xff]
  %v7463 = vld [vmem:[%s7454 + $0x40] sm:$0xff]
  %v7464 = vld [vmem:[%s7454 + $0x48] sm:$0xff]
  %v7465 = vld [vmem:[%s7454 + $0x50] sm:$0xff]
  %v7466 = vld [vmem:[%s7454 + $0x58] sm:$0xff]
  %v7467 = vld [vmem:[%s7454 + $0x60] sm:$0xff]
  %v7468 = vld [vmem:[%s7454 + $0x68] sm:$0xff]
  %v7469 = vld [vmem:[%s7454 + $0x70] sm:$0xff]
  %v7470 = vld [vmem:[%s7454 + $0x78] sm:$0xff]
  %v7471 = vld [vmem:[%s7454 + $0x80] sm:$0xff]
  %v7472 = vld [vmem:[%s7454 + $0x88] sm:$0xff]
  %v7473 = vld [vmem:[%s7454 + $0x90] sm:$0xff]
  %v7474 = vld [vmem:[%s7454 + $0x98] sm:$0xff]
  %v7475 = vld [vmem:[%s7454 + $0xa0] sm:$0xff]
  %v7476 = vld [vmem:[%s7454 + $0xa8] sm:$0xff]
  %v7477 = vld [vmem:[%s7454 + $0xb0] sm:$0xff]
  %v7478 = vld [vmem:[%s7454 + $0xb8] sm:$0xff]
  %v7479 = vld [vmem:[%s7454 + $0xc0] sm:$0xff]
  %v7480 = vld [vmem:[%s7454 + $0xc8] sm:$0xff]
  %v7481 = vld [vmem:[%s7454 + $0xd0] sm:$0xff]
  %v7482 = vld [vmem:[%s7454 + $0xd8] sm:$0xff]
  %v7483 = vld [vmem:[%s7454 + $0xe0] sm:$0xff]
  %v7484 = vld [vmem:[%s7454 + $0xe8] sm:$0xff]
  %v7485 = vld [vmem:[%s7454 + $0xf0] sm:$0xff]
  %v7486 = vld [vmem:[%s7454 + $0xf8] sm:$0xff]
  %v7487 = vld [vmem:[%s7454 + $0x100] sm:$0xff]
  %v7488 = vld [vmem:[%s7454 + $0x108] sm:$0xff]
  %v7489 = vld [vmem:[%s7454 + $0x110] sm:$0xff]
  %v7490 = vld [vmem:[%s7454 + $0x118] sm:$0xff]
  %v7491 = vld [vmem:[%s7454 + $0x120] sm:$0xff]
  %v7492 = vld [vmem:[%s7454 + $0x128] sm:$0xff]
  %v7493 = vld [vmem:[%s7454 + $0x130] sm:$0xff]
  %v7494 = vld [vmem:[%s7454 + $0x138] sm:$0xff]
  %v7495 = vld [vmem:[%s7454 + $0x140] sm:$0xff]
  %v7496 = vld [vmem:[%s7454 + $0x148] sm:$0xff]
  %v7497 = vld [vmem:[%s7454 + $0x150] sm:$0xff]
  %v7498 = vld [vmem:[%s7454 + $0x158] sm:$0xff]
  %v7499 = vld [vmem:[%s7454 + $0x160] sm:$0xff]
  %v7500 = vld [vmem:[%s7454 + $0x168] sm:$0xff]
  %v7501 = vld [vmem:[%s7454 + $0x170] sm:$0xff]
  %v7502 = vld [vmem:[%s7454 + $0x178] sm:$0xff]
  %v7503 = vld [vmem:[%s7454 + $0x180] sm:$0xff]
  %v7504 = vld [vmem:[%s7454 + $0x188] sm:$0xff]
  %v7505 = vld [vmem:[%s7454 + $0x190] sm:$0xff]
  %v7506 = vld [vmem:[%s7454 + $0x198] sm:$0xff]
  %v7507 = vld [vmem:[%s7454 + $0x1a0] sm:$0xff]
  %v7508 = vld [vmem:[%s7454 + $0x1a8] sm:$0xff]
  %v7509 = vld [vmem:[%s7454 + $0x1b0] sm:$0xff]
  %v7510 = vld [vmem:[%s7454 + $0x1b8] sm:$0xff]
  %v7511 = vld [vmem:[%s7454 + $0x1c0] sm:$0xff]
  %v7512 = vld [vmem:[%s7454 + $0x1c8] sm:$0xff]
  %v7513 = vld [vmem:[%s7454 + $0x1d0] sm:$0xff]
  %v7514 = vld [vmem:[%s7454 + $0x1d8] sm:$0xff]
  %v7515 = vld [vmem:[%s7454 + $0x1e0] sm:$0xff]
  %v7516 = vld [vmem:[%s7454 + $0x1e8] sm:$0xff]
  %v7517 = vld [vmem:[%s7454 + $0x1f0] sm:$0xff]
  %v7518 = vld [vmem:[%s7454 + $0x1f8] sm:$0xff]
  %v7519 = vld [vmem:[%s7454 + $0x200] sm:$0xff]
  %v7520 = vld [vmem:[%s7454 + $0x208] sm:$0xff]
  %v7521 = vld [vmem:[%s7454 + $0x210] sm:$0xff]
  %v7522 = vld [vmem:[%s7454 + $0x218] sm:$0xff]
  %v7523 = vld [vmem:[%s7454 + $0x220] sm:$0xff]
  %v7524 = vld [vmem:[%s7454 + $0x228] sm:$0xff]
  %v7525 = vld [vmem:[%s7454 + $0x230] sm:$0xff]
  %v7526 = vld [vmem:[%s7454 + $0x238] sm:$0xff]
  %v7527 = vld [vmem:[%s7454 + $0x240] sm:$0xff]
  %v7528 = vld [vmem:[%s7454 + $0x248] sm:$0xff]
  %v7529 = vld [vmem:[%s7454 + $0x250] sm:$0xff]
  %v7530 = vld [vmem:[%s7454 + $0x258] sm:$0xff]
  %v7531 = vld [vmem:[%s7454 + $0x260] sm:$0xff]
  %v7532 = vld [vmem:[%s7454 + $0x268] sm:$0xff]
  %v7533 = vld [vmem:[%s7454 + $0x270] sm:$0xff]
  %v7534 = vld [vmem:[%s7454 + $0x278] sm:$0xff]
  %v7535 = vld [vmem:[%s7454 + $0x280] sm:$0xff]
  %v7536 = vld [vmem:[%s7454 + $0x288] sm:$0xff]
  %v7537 = vld [vmem:[%s7454 + $0x290] sm:$0xff]
  %v7538 = vld [vmem:[%s7454 + $0x298] sm:$0xff]
  %v7539 = vld [vmem:[%s7454 + $0x2a0] sm:$0xff]
  %v7540 = vld [vmem:[%s7454 + $0x2a8] sm:$0xff]
  %v7541 = vld [vmem:[%s7454 + $0x2b0] sm:$0xff]
  %v7542 = vld [vmem:[%s7454 + $0x2b8] sm:$0xff]
  %v7543 = vld [vmem:[%s7454 + $0x2c0] sm:$0xff]
  %v7544 = vld [vmem:[%s7454 + $0x2c8] sm:$0xff]
  %v7545 = vld [vmem:[%s7454 + $0x2d0] sm:$0xff]
  %v7546 = vld [vmem:[%s7454 + $0x2d8] sm:$0xff]
  %v7547 = vld [vmem:[%s7454 + $0x2e0] sm:$0xff]
  %v7548 = vld [vmem:[%s7454 + $0x2e8] sm:$0xff]
  %v7549 = vld [vmem:[%s7454 + $0x2f0] sm:$0xff]
  %v7550 = vld [vmem:[%s7454 + $0x2f8] sm:$0xff]
  %v7551 = vld [vmem:[%s7454 + $0x300] sm:$0xff]
  %v7552 = vld [vmem:[%s7454 + $0x308] sm:$0xff]
  %v7553 = vld [vmem:[%s7454 + $0x310] sm:$0xff]
  %v7554 = vld [vmem:[%s7454 + $0x318] sm:$0xff]
  %v7555 = vld [vmem:[%s7454 + $0x320] sm:$0xff]
  %v7556 = vld [vmem:[%s7454 + $0x328] sm:$0xff]
  %v7557 = vld [vmem:[%s7454 + $0x330] sm:$0xff]
  %v7558 = vld [vmem:[%s7454 + $0x338] sm:$0xff]
  %v7559 = vld [vmem:[%s7454 + $0x340] sm:$0xff]
  %v7560 = vld [vmem:[%s7454 + $0x348] sm:$0xff]
  %v7561 = vld [vmem:[%s7454 + $0x350] sm:$0xff]
  %v7562 = vld [vmem:[%s7454 + $0x358] sm:$0xff]
  %v7563 = vld [vmem:[%s7454 + $0x360] sm:$0xff]
  %v7564 = vld [vmem:[%s7454 + $0x368] sm:$0xff]
  %v7565 = vld [vmem:[%s7454 + $0x370] sm:$0xff]
  %s7566 = scalar_lea.vmem %s4, %s24
  %v7567 = vld [vmem:[%s7566] sm:$0xff]
  %v7568 = vld [vmem:[%s7566 + $0x8] sm:$0xff]
  %v7569 = vld [vmem:[%s7566 + $0x10] sm:$0xff]
  %v7570 = vld [vmem:[%s7566 + $0x18] sm:$0xff]
  %v7571 = vld [vmem:[%s7566 + $0x20] sm:$0xff]
  %v7572 = vld [vmem:[%s7566 + $0x28] sm:$0xff]
  %v7573 = vld [vmem:[%s7566 + $0x30] sm:$0xff]
  %v7574 = vld [vmem:[%s7566 + $0x38] sm:$0xff]
  %v7575 = vld [vmem:[%s7566 + $0x40] sm:$0xff]
  %v7576 = vld [vmem:[%s7566 + $0x48] sm:$0xff]
  %v7577 = vld [vmem:[%s7566 + $0x50] sm:$0xff]
  %v7578 = vld [vmem:[%s7566 + $0x58] sm:$0xff]
  %v7579 = vld [vmem:[%s7566 + $0x60] sm:$0xff]
  %v7580 = vld [vmem:[%s7566 + $0x68] sm:$0xff]
  %v7581 = vld [vmem:[%s7566 + $0x70] sm:$0xff]
  %v7582 = vld [vmem:[%s7566 + $0x78] sm:$0xff]
  %v7583 = vld [vmem:[%s7566 + $0x80] sm:$0xff]
  %v7584 = vld [vmem:[%s7566 + $0x88] sm:$0xff]
  %v7585 = vld [vmem:[%s7566 + $0x90] sm:$0xff]
  %v7586 = vld [vmem:[%s7566 + $0x98] sm:$0xff]
  %v7587 = vld [vmem:[%s7566 + $0xa0] sm:$0xff]
  %v7588 = vld [vmem:[%s7566 + $0xa8] sm:$0xff]
  %v7589 = vld [vmem:[%s7566 + $0xb0] sm:$0xff]
  %v7590 = vld [vmem:[%s7566 + $0xb8] sm:$0xff]
  %v7591 = vld [vmem:[%s7566 + $0xc0] sm:$0xff]
  %v7592 = vld [vmem:[%s7566 + $0xc8] sm:$0xff]
  %v7593 = vld [vmem:[%s7566 + $0xd0] sm:$0xff]
  %v7594 = vld [vmem:[%s7566 + $0xd8] sm:$0xff]
  %v7595 = vld [vmem:[%s7566 + $0xe0] sm:$0xff]
  %v7596 = vld [vmem:[%s7566 + $0xe8] sm:$0xff]
  %v7597 = vld [vmem:[%s7566 + $0xf0] sm:$0xff]
  %v7598 = vld [vmem:[%s7566 + $0xf8] sm:$0xff]
  %v7599 = vld [vmem:[%s7566 + $0x100] sm:$0xff]
  %v7600 = vld [vmem:[%s7566 + $0x108] sm:$0xff]
  %v7601 = vld [vmem:[%s7566 + $0x110] sm:$0xff]
  %v7602 = vld [vmem:[%s7566 + $0x118] sm:$0xff]
  %v7603 = vld [vmem:[%s7566 + $0x120] sm:$0xff]
  %v7604 = vld [vmem:[%s7566 + $0x128] sm:$0xff]
  %v7605 = vld [vmem:[%s7566 + $0x130] sm:$0xff]
  %v7606 = vld [vmem:[%s7566 + $0x138] sm:$0xff]
  %v7607 = vld [vmem:[%s7566 + $0x140] sm:$0xff]
  %v7608 = vld [vmem:[%s7566 + $0x148] sm:$0xff]
  %v7609 = vld [vmem:[%s7566 + $0x150] sm:$0xff]
  %v7610 = vld [vmem:[%s7566 + $0x158] sm:$0xff]
  %v7611 = vld [vmem:[%s7566 + $0x160] sm:$0xff]
  %v7612 = vld [vmem:[%s7566 + $0x168] sm:$0xff]
  %v7613 = vld [vmem:[%s7566 + $0x170] sm:$0xff]
  %v7614 = vld [vmem:[%s7566 + $0x178] sm:$0xff]
  %v7615 = vld [vmem:[%s7566 + $0x180] sm:$0xff]
  %v7616 = vld [vmem:[%s7566 + $0x188] sm:$0xff]
  %v7617 = vld [vmem:[%s7566 + $0x190] sm:$0xff]
  %v7618 = vld [vmem:[%s7566 + $0x198] sm:$0xff]
  %v7619 = vld [vmem:[%s7566 + $0x1a0] sm:$0xff]
  %v7620 = vld [vmem:[%s7566 + $0x1a8] sm:$0xff]
  %v7621 = vld [vmem:[%s7566 + $0x1b0] sm:$0xff]
  %v7622 = vld [vmem:[%s7566 + $0x1b8] sm:$0xff]
  %v7623 = vld [vmem:[%s7566 + $0x1c0] sm:$0xff]
  %v7624 = vld [vmem:[%s7566 + $0x1c8] sm:$0xff]
  %v7625 = vld [vmem:[%s7566 + $0x1d0] sm:$0xff]
  %v7626 = vld [vmem:[%s7566 + $0x1d8] sm:$0xff]
  %v7627 = vld [vmem:[%s7566 + $0x1e0] sm:$0xff]
  %v7628 = vld [vmem:[%s7566 + $0x1e8] sm:$0xff]
  %v7629 = vld [vmem:[%s7566 + $0x1f0] sm:$0xff]
  %v7630 = vld [vmem:[%s7566 + $0x1f8] sm:$0xff]
  %v7631 = vld [vmem:[%s7566 + $0x200] sm:$0xff]
  %v7632 = vld [vmem:[%s7566 + $0x208] sm:$0xff]
  %v7633 = vld [vmem:[%s7566 + $0x210] sm:$0xff]
  %v7634 = vld [vmem:[%s7566 + $0x218] sm:$0xff]
  %v7635 = vld [vmem:[%s7566 + $0x220] sm:$0xff]
  %v7636 = vld [vmem:[%s7566 + $0x228] sm:$0xff]
  %v7637 = vld [vmem:[%s7566 + $0x230] sm:$0xff]
  %v7638 = vld [vmem:[%s7566 + $0x238] sm:$0xff]
  %v7639 = vld [vmem:[%s7566 + $0x240] sm:$0xff]
  %v7640 = vld [vmem:[%s7566 + $0x248] sm:$0xff]
  %v7641 = vld [vmem:[%s7566 + $0x250] sm:$0xff]
  %v7642 = vld [vmem:[%s7566 + $0x258] sm:$0xff]
  %v7643 = vld [vmem:[%s7566 + $0x260] sm:$0xff]
  %v7644 = vld [vmem:[%s7566 + $0x268] sm:$0xff]
  %v7645 = vld [vmem:[%s7566 + $0x270] sm:$0xff]
  %v7646 = vld [vmem:[%s7566 + $0x278] sm:$0xff]
  %v7647 = vld [vmem:[%s7566 + $0x280] sm:$0xff]
  %v7648 = vld [vmem:[%s7566 + $0x288] sm:$0xff]
  %v7649 = vld [vmem:[%s7566 + $0x290] sm:$0xff]
  %v7650 = vld [vmem:[%s7566 + $0x298] sm:$0xff]
  %v7651 = vld [vmem:[%s7566 + $0x2a0] sm:$0xff]
  %v7652 = vld [vmem:[%s7566 + $0x2a8] sm:$0xff]
  %v7653 = vld [vmem:[%s7566 + $0x2b0] sm:$0xff]
  %v7654 = vld [vmem:[%s7566 + $0x2b8] sm:$0xff]
  %v7655 = vld [vmem:[%s7566 + $0x2c0] sm:$0xff]
  %v7656 = vld [vmem:[%s7566 + $0x2c8] sm:$0xff]
  %v7657 = vld [vmem:[%s7566 + $0x2d0] sm:$0xff]
  %v7658 = vld [vmem:[%s7566 + $0x2d8] sm:$0xff]
  %v7659 = vld [vmem:[%s7566 + $0x2e0] sm:$0xff]
  %v7660 = vld [vmem:[%s7566 + $0x2e8] sm:$0xff]
  %v7661 = vld [vmem:[%s7566 + $0x2f0] sm:$0xff]
  %v7662 = vld [vmem:[%s7566 + $0x2f8] sm:$0xff]
  %v7663 = vld [vmem:[%s7566 + $0x300] sm:$0xff]
  %v7664 = vld [vmem:[%s7566 + $0x308] sm:$0xff]
  %v7665 = vld [vmem:[%s7566 + $0x310] sm:$0xff]
  %v7666 = vld [vmem:[%s7566 + $0x318] sm:$0xff]
  %v7667 = vld [vmem:[%s7566 + $0x320] sm:$0xff]
  %v7668 = vld [vmem:[%s7566 + $0x328] sm:$0xff]
  %v7669 = vld [vmem:[%s7566 + $0x330] sm:$0xff]
  %v7670 = vld [vmem:[%s7566 + $0x338] sm:$0xff]
  %v7671 = vld [vmem:[%s7566 + $0x340] sm:$0xff]
  %v7672 = vld [vmem:[%s7566 + $0x348] sm:$0xff]
  %v7673 = vld [vmem:[%s7566 + $0x350] sm:$0xff]
  %v7674 = vld [vmem:[%s7566 + $0x358] sm:$0xff]
  %v7675 = vld [vmem:[%s7566 + $0x360] sm:$0xff]
  %v7676 = vld [vmem:[%s7566 + $0x368] sm:$0xff]
  %v7677 = vld [vmem:[%s7566 + $0x370] sm:$0xff]
  %v7678 = vadd.f32 %v7343, 1e-05
  %v7679 = vadd.f32 %v7344, 1e-05
  %v7680 = vadd.f32 %v7345, 1e-05
  %v7681 = vadd.f32 %v7346, 1e-05
  %v7682 = vadd.f32 %v7347, 1e-05
  %v7683 = vadd.f32 %v7348, 1e-05
  %v7684 = vadd.f32 %v7349, 1e-05
  %v7685 = vadd.f32 %v7350, 1e-05
  %v7686 = vadd.f32 %v7351, 1e-05
  %v7687 = vadd.f32 %v7352, 1e-05
  %v7688 = vadd.f32 %v7353, 1e-05
  %v7689 = vadd.f32 %v7354, 1e-05
  %v7690 = vadd.f32 %v7355, 1e-05
  %v7691 = vadd.f32 %v7356, 1e-05
  %v7692 = vadd.f32 %v7357, 1e-05
  %v7693 = vadd.f32 %v7358, 1e-05
  %v7694 = vadd.f32 %v7359, 1e-05
  %v7695 = vadd.f32 %v7360, 1e-05
  %v7696 = vadd.f32 %v7361, 1e-05
  %v7697 = vadd.f32 %v7362, 1e-05
  %v7698 = vadd.f32 %v7363, 1e-05
  %v7699 = vadd.f32 %v7364, 1e-05
  %v7700 = vadd.f32 %v7365, 1e-05
  %v7701 = vadd.f32 %v7366, 1e-05
  %v7702 = vadd.f32 %v7367, 1e-05
  %v7703 = vadd.f32 %v7368, 1e-05
  %v7704 = vadd.f32 %v7369, 1e-05
  %v7705 = vadd.f32 %v7370, 1e-05
  %v7706 = vadd.f32 %v7371, 1e-05
  %v7707 = vadd.f32 %v7372, 1e-05
  %v7708 = vadd.f32 %v7373, 1e-05
  %v7709 = vadd.f32 %v7374, 1e-05
  %v7710 = vadd.f32 %v7375, 1e-05
  %v7711 = vadd.f32 %v7376, 1e-05
  %v7712 = vadd.f32 %v7377, 1e-05
  %v7713 = vadd.f32 %v7378, 1e-05
  %v7714 = vadd.f32 %v7379, 1e-05
  %v7715 = vadd.f32 %v7380, 1e-05
  %v7716 = vadd.f32 %v7381, 1e-05
  %v7717 = vadd.f32 %v7382, 1e-05
  %v7718 = vadd.f32 %v7383, 1e-05
  %v7719 = vadd.f32 %v7384, 1e-05
  %v7720 = vadd.f32 %v7385, 1e-05
  %v7721 = vadd.f32 %v7386, 1e-05
  %v7722 = vadd.f32 %v7387, 1e-05
  %v7723 = vadd.f32 %v7388, 1e-05
  %v7724 = vadd.f32 %v7389, 1e-05
  %v7725 = vadd.f32 %v7390, 1e-05
  %v7726 = vadd.f32 %v7391, 1e-05
  %v7727 = vadd.f32 %v7392, 1e-05
  %v7728 = vadd.f32 %v7393, 1e-05
  %v7729 = vadd.f32 %v7394, 1e-05
  %v7730 = vadd.f32 %v7395, 1e-05
  %v7731 = vadd.f32 %v7396, 1e-05
  %v7732 = vadd.f32 %v7397, 1e-05
  %v7733 = vadd.f32 %v7398, 1e-05
  %v7734 = vadd.f32 %v7399, 1e-05
  %v7735 = vadd.f32 %v7400, 1e-05
  %v7736 = vadd.f32 %v7401, 1e-05
  %v7737 = vadd.f32 %v7402, 1e-05
  %v7738 = vadd.f32 %v7403, 1e-05
  %v7739 = vadd.f32 %v7404, 1e-05
  %v7740 = vadd.f32 %v7405, 1e-05
  %v7741 = vadd.f32 %v7406, 1e-05
  %v7742 = vadd.f32 %v7407, 1e-05
  %v7743 = vadd.f32 %v7408, 1e-05
  %v7744 = vadd.f32 %v7409, 1e-05
  %v7745 = vadd.f32 %v7410, 1e-05
  %v7746 = vadd.f32 %v7411, 1e-05
  %v7747 = vadd.f32 %v7412, 1e-05
  %v7748 = vadd.f32 %v7413, 1e-05
  %v7749 = vadd.f32 %v7414, 1e-05
  %v7750 = vadd.f32 %v7415, 1e-05
  %v7751 = vadd.f32 %v7416, 1e-05
  %v7752 = vadd.f32 %v7417, 1e-05
  %v7753 = vadd.f32 %v7418, 1e-05
  %v7754 = vadd.f32 %v7419, 1e-05
  %v7755 = vadd.f32 %v7420, 1e-05
  %v7756 = vadd.f32 %v7421, 1e-05
  %v7757 = vadd.f32 %v7422, 1e-05
  %v7758 = vadd.f32 %v7423, 1e-05
  %v7759 = vadd.f32 %v7424, 1e-05
  %v7760 = vadd.f32 %v7425, 1e-05
  %v7761 = vadd.f32 %v7426, 1e-05
  %v7762 = vadd.f32 %v7427, 1e-05
  %v7763 = vadd.f32 %v7428, 1e-05
  %v7764 = vadd.f32 %v7429, 1e-05
  %v7765 = vadd.f32 %v7430, 1e-05
  %v7766 = vadd.f32 %v7431, 1e-05
  %v7767 = vadd.f32 %v7432, 1e-05
  %v7768 = vadd.f32 %v7433, 1e-05
  %v7769 = vadd.f32 %v7434, 1e-05
  %v7770 = vadd.f32 %v7435, 1e-05
  %v7771 = vadd.f32 %v7436, 1e-05
  %v7772 = vadd.f32 %v7437, 1e-05
  %v7773 = vadd.f32 %v7438, 1e-05
  %v7774 = vadd.f32 %v7439, 1e-05
  %v7775 = vadd.f32 %v7440, 1e-05
  %v7776 = vadd.f32 %v7441, 1e-05
  %v7777 = vadd.f32 %v7442, 1e-05
  %v7778 = vadd.f32 %v7443, 1e-05
  %v7779 = vadd.f32 %v7444, 1e-05
  %v7780 = vadd.f32 %v7445, 1e-05
  %v7781 = vadd.f32 %v7446, 1e-05
  %v7782 = vadd.f32 %v7447, 1e-05
  %v7783 = vadd.f32 %v7448, 1e-05
  %v7784 = vadd.f32 %v7449, 1e-05
  %v7785 = vadd.f32 %v7450, 1e-05
  %v7786 = vadd.f32 %v7451, 1e-05
  %v7787 = vadd.f32 %v7452, 1e-05
  %v7788 = vadd.f32 %v7453, 1e-05
  %v7789 = vrsqrt.pop %v7678
  %v7790 = vrsqrt.pop %v7679
  %v7791 = vrsqrt.pop %v7680
  %v7792 = vrsqrt.pop %v7681
  %v7793 = vrsqrt.pop %v7682
  %v7794 = vrsqrt.pop %v7683
  %v7795 = vrsqrt.pop %v7684
  %v7796 = vrsqrt.pop %v7685
  %v7797 = vrsqrt.pop %v7686
  %v7798 = vrsqrt.pop %v7687
  %v7799 = vrsqrt.pop %v7688
  %v7800 = vrsqrt.pop %v7689
  %v7801 = vrsqrt.pop %v7690
  %v7802 = vrsqrt.pop %v7691
  %v7803 = vrsqrt.pop %v7692
  %v7804 = vrsqrt.pop %v7693
  %v7805 = vrsqrt.pop %v7694
  %v7806 = vrsqrt.pop %v7695
  %v7807 = vrsqrt.pop %v7696
  %v7808 = vrsqrt.pop %v7697
  %v7809 = vrsqrt.pop %v7698
  %v7810 = vrsqrt.pop %v7699
  %v7811 = vrsqrt.pop %v7700
  %v7812 = vrsqrt.pop %v7701
  %v7813 = vrsqrt.pop %v7702
  %v7814 = vrsqrt.pop %v7703
  %v7815 = vrsqrt.pop %v7704
  %v7816 = vrsqrt.pop %v7705
  %v7817 = vrsqrt.pop %v7706
  %v7818 = vrsqrt.pop %v7707
  %v7819 = vrsqrt.pop %v7708
  %v7820 = vrsqrt.pop %v7709
  %v7821 = vrsqrt.pop %v7710
  %v7822 = vrsqrt.pop %v7711
  %v7823 = vrsqrt.pop %v7712
  %v7824 = vrsqrt.pop %v7713
  %v7825 = vrsqrt.pop %v7714
  %v7826 = vrsqrt.pop %v7715
  %v7827 = vrsqrt.pop %v7716
  %v7828 = vrsqrt.pop %v7717
  %v7829 = vrsqrt.pop %v7718
  %v7830 = vrsqrt.pop %v7719
  %v7831 = vrsqrt.pop %v7720
  %v7832 = vrsqrt.pop %v7721
  %v7833 = vrsqrt.pop %v7722
  %v7834 = vrsqrt.pop %v7723
  %v7835 = vrsqrt.pop %v7724
  %v7836 = vrsqrt.pop %v7725
  %v7837 = vrsqrt.pop %v7726
  %v7838 = vrsqrt.pop %v7727
  %v7839 = vrsqrt.pop %v7728
  %v7840 = vrsqrt.pop %v7729
  %v7841 = vrsqrt.pop %v7730
  %v7842 = vrsqrt.pop %v7731
  %v7843 = vrsqrt.pop %v7732
  %v7844 = vrsqrt.pop %v7733
  %v7845 = vrsqrt.pop %v7734
  %v7846 = vrsqrt.pop %v7735
  %v7847 = vrsqrt.pop %v7736
  %v7848 = vrsqrt.pop %v7737
  %v7849 = vrsqrt.pop %v7738
  %v7850 = vrsqrt.pop %v7739
  %v7851 = vrsqrt.pop %v7740
  %v7852 = vrsqrt.pop %v7741
  %v7853 = vrsqrt.pop %v7742
  %v7854 = vrsqrt.pop %v7743
  %v7855 = vrsqrt.pop %v7744
  %v7856 = vrsqrt.pop %v7745
  %v7857 = vrsqrt.pop %v7746
  %v7858 = vrsqrt.pop %v7747
  %v7859 = vrsqrt.pop %v7748
  %v7860 = vrsqrt.pop %v7749
  %v7861 = vrsqrt.pop %v7750
  %v7862 = vrsqrt.pop %v7751
  %v7863 = vrsqrt.pop %v7752
  %v7864 = vrsqrt.pop %v7753
  %v7865 = vrsqrt.pop %v7754
  %v7866 = vrsqrt.pop %v7755
  %v7867 = vrsqrt.pop %v7756
  %v7868 = vrsqrt.pop %v7757
  %v7869 = vrsqrt.pop %v7758
  %v7870 = vrsqrt.pop %v7759
  %v7871 = vrsqrt.pop %v7760
  %v7872 = vrsqrt.pop %v7761
  %v7873 = vrsqrt.pop %v7762
  %v7874 = vrsqrt.pop %v7763
  %v7875 = vrsqrt.pop %v7764
  %v7876 = vrsqrt.pop %v7765
  %v7877 = vrsqrt.pop %v7766
  %v7878 = vrsqrt.pop %v7767
  %v7879 = vrsqrt.pop %v7768
  %v7880 = vrsqrt.pop %v7769
  %v7881 = vrsqrt.pop %v7770
  %v7882 = vrsqrt.pop %v7771
  %v7883 = vrsqrt.pop %v7772
  %v7884 = vrsqrt.pop %v7773
  %v7885 = vrsqrt.pop %v7774
  %v7886 = vrsqrt.pop %v7775
  %v7887 = vrsqrt.pop %v7776
  %v7888 = vrsqrt.pop %v7777
  %v7889 = vrsqrt.pop %v7778
  %v7890 = vrsqrt.pop %v7779
  %v7891 = vrsqrt.pop %v7780
  %v7892 = vrsqrt.pop %v7781
  %v7893 = vrsqrt.pop %v7782
  %v7894 = vrsqrt.pop %v7783
  %v7895 = vrsqrt.pop %v7784
  %v7896 = vrsqrt.pop %v7785
  %v7897 = vrsqrt.pop %v7786
  %v7898 = vrsqrt.pop %v7787
  %v7899 = vrsqrt.pop %v7788
  %v7900 = vmul.f32 %v7789, %v7455
  %v7901 = vmul.f32 %v7790, %v7456
  %v7902 = vmul.f32 %v7791, %v7457
  %v7903 = vmul.f32 %v7792, %v7458
  %v7904 = vmul.f32 %v7793, %v7459
  %v7905 = vmul.f32 %v7794, %v7460
  %v7906 = vmul.f32 %v7795, %v7461
  %v7907 = vmul.f32 %v7796, %v7462
  %v7908 = vmul.f32 %v7797, %v7463
  %v7909 = vmul.f32 %v7798, %v7464
  %v7910 = vmul.f32 %v7799, %v7465
  %v7911 = vmul.f32 %v7800, %v7466
  %v7912 = vmul.f32 %v7801, %v7467
  %v7913 = vmul.f32 %v7802, %v7468
  %v7914 = vmul.f32 %v7803, %v7469
  %v7915 = vmul.f32 %v7804, %v7470
  %v7916 = vmul.f32 %v7805, %v7471
  %v7917 = vmul.f32 %v7806, %v7472
  %v7918 = vmul.f32 %v7807, %v7473
  %v7919 = vmul.f32 %v7808, %v7474
  %v7920 = vmul.f32 %v7809, %v7475
  %v7921 = vmul.f32 %v7810, %v7476
  %v7922 = vmul.f32 %v7811, %v7477
  %v7923 = vmul.f32 %v7812, %v7478
  %v7924 = vmul.f32 %v7813, %v7479
  %v7925 = vmul.f32 %v7814, %v7480
  %v7926 = vmul.f32 %v7815, %v7481
  %v7927 = vmul.f32 %v7816, %v7482
  %v7928 = vmul.f32 %v7817, %v7483
  %v7929 = vmul.f32 %v7818, %v7484
  %v7930 = vmul.f32 %v7819, %v7485
  %v7931 = vmul.f32 %v7820, %v7486
  %v7932 = vmul.f32 %v7821, %v7487
  %v7933 = vmul.f32 %v7822, %v7488
  %v7934 = vmul.f32 %v7823, %v7489
  %v7935 = vmul.f32 %v7824, %v7490
  %v7936 = vmul.f32 %v7825, %v7491
  %v7937 = vmul.f32 %v7826, %v7492
  %v7938 = vmul.f32 %v7827, %v7493
  %v7939 = vmul.f32 %v7828, %v7494
  %v7940 = vmul.f32 %v7829, %v7495
  %v7941 = vmul.f32 %v7830, %v7496
  %v7942 = vmul.f32 %v7831, %v7497
  %v7943 = vmul.f32 %v7832, %v7498
  %v7944 = vmul.f32 %v7833, %v7499
  %v7945 = vmul.f32 %v7834, %v7500
  %v7946 = vmul.f32 %v7835, %v7501
  %v7947 = vmul.f32 %v7836, %v7502
  %v7948 = vmul.f32 %v7837, %v7503
  %v7949 = vmul.f32 %v7838, %v7504
  %v7950 = vmul.f32 %v7839, %v7505
  %v7951 = vmul.f32 %v7840, %v7506
  %v7952 = vmul.f32 %v7841, %v7507
  %v7953 = vmul.f32 %v7842, %v7508
  %v7954 = vmul.f32 %v7843, %v7509
  %v7955 = vmul.f32 %v7844, %v7510
  %v7956 = vmul.f32 %v7845, %v7511
  %v7957 = vmul.f32 %v7846, %v7512
  %v7958 = vmul.f32 %v7847, %v7513
  %v7959 = vmul.f32 %v7848, %v7514
  %v7960 = vmul.f32 %v7849, %v7515
  %v7961 = vmul.f32 %v7850, %v7516
  %v7962 = vmul.f32 %v7851, %v7517
  %v7963 = vmul.f32 %v7852, %v7518
  %v7964 = vmul.f32 %v7853, %v7519
  %v7965 = vmul.f32 %v7854, %v7520
  %v7966 = vmul.f32 %v7855, %v7521
  %v7967 = vmul.f32 %v7856, %v7522
  %v7968 = vmul.f32 %v7857, %v7523
  %v7969 = vmul.f32 %v7858, %v7524
  %v7970 = vmul.f32 %v7859, %v7525
  %v7971 = vmul.f32 %v7860, %v7526
  %v7972 = vmul.f32 %v7861, %v7527
  %v7973 = vmul.f32 %v7862, %v7528
  %v7974 = vmul.f32 %v7863, %v7529
  %v7975 = vmul.f32 %v7864, %v7530
  %v7976 = vmul.f32 %v7865, %v7531
  %v7977 = vmul.f32 %v7866, %v7532
  %v7978 = vmul.f32 %v7867, %v7533
  %v7979 = vmul.f32 %v7868, %v7534
  %v7980 = vmul.f32 %v7869, %v7535
  %v7981 = vmul.f32 %v7870, %v7536
  %v7982 = vmul.f32 %v7871, %v7537
  %v7983 = vmul.f32 %v7872, %v7538
  %v7984 = vmul.f32 %v7873, %v7539
  %v7985 = vmul.f32 %v7874, %v7540
  %v7986 = vmul.f32 %v7875, %v7541
  %v7987 = vmul.f32 %v7876, %v7542
  %v7988 = vmul.f32 %v7877, %v7543
  %v7989 = vmul.f32 %v7878, %v7544
  %v7990 = vmul.f32 %v7879, %v7545
  %v7991 = vmul.f32 %v7880, %v7546
  %v7992 = vmul.f32 %v7881, %v7547
  %v7993 = vmul.f32 %v7882, %v7548
  %v7994 = vmul.f32 %v7883, %v7549
  %v7995 = vmul.f32 %v7884, %v7550
  %v7996 = vmul.f32 %v7885, %v7551
  %v7997 = vmul.f32 %v7886, %v7552
  %v7998 = vmul.f32 %v7887, %v7553
  %v7999 = vmul.f32 %v7888, %v7554
  %v8000 = vmul.f32 %v7889, %v7555
  %v8001 = vmul.f32 %v7890, %v7556
  %v8002 = vmul.f32 %v7891, %v7557
  %v8003 = vmul.f32 %v7892, %v7558
  %v8004 = vmul.f32 %v7893, %v7559
  %v8005 = vmul.f32 %v7894, %v7560
  %v8006 = vmul.f32 %v7895, %v7561
  %v8007 = vmul.f32 %v7896, %v7562
  %v8008 = vmul.f32 %v7897, %v7563
  %v8009 = vmul.f32 %v7898, %v7564
  %v8010 = vmul.f32 %v7899, %v7565
  %v8011 = vmul.f32 %v6455, %v7900
  %v8012 = vmul.f32 %v6456, %v7901
  %v8013 = vmul.f32 %v6457, %v7902
  %v8014 = vmul.f32 %v6458, %v7903
  %v8015 = vmul.f32 %v6459, %v7904
  %v8016 = vmul.f32 %v6460, %v7905
  %v8017 = vmul.f32 %v6461, %v7906
  %v8018 = vmul.f32 %v6462, %v7907
  %v8019 = vmul.f32 %v6463, %v7908
  %v8020 = vmul.f32 %v6464, %v7909
  %v8021 = vmul.f32 %v6465, %v7910
  %v8022 = vmul.f32 %v6466, %v7911
  %v8023 = vmul.f32 %v6467, %v7912
  %v8024 = vmul.f32 %v6468, %v7913
  %v8025 = vmul.f32 %v6469, %v7914
  %v8026 = vmul.f32 %v6470, %v7915
  %v8027 = vmul.f32 %v6471, %v7916
  %v8028 = vmul.f32 %v6472, %v7917
  %v8029 = vmul.f32 %v6473, %v7918
  %v8030 = vmul.f32 %v6474, %v7919
  %v8031 = vmul.f32 %v6475, %v7920
  %v8032 = vmul.f32 %v6476, %v7921
  %v8033 = vmul.f32 %v6477, %v7922
  %v8034 = vmul.f32 %v6478, %v7923
  %v8035 = vmul.f32 %v6479, %v7924
  %v8036 = vmul.f32 %v6480, %v7925
  %v8037 = vmul.f32 %v6481, %v7926
  %v8038 = vmul.f32 %v6482, %v7927
  %v8039 = vmul.f32 %v6483, %v7928
  %v8040 = vmul.f32 %v6484, %v7929
  %v8041 = vmul.f32 %v6485, %v7930
  %v8042 = vmul.f32 %v6486, %v7931
  %v8043 = vmul.f32 %v6487, %v7932
  %v8044 = vmul.f32 %v6488, %v7933
  %v8045 = vmul.f32 %v6489, %v7934
  %v8046 = vmul.f32 %v6490, %v7935
  %v8047 = vmul.f32 %v6491, %v7936
  %v8048 = vmul.f32 %v6492, %v7937
  %v8049 = vmul.f32 %v6493, %v7938
  %v8050 = vmul.f32 %v6494, %v7939
  %v8051 = vmul.f32 %v6495, %v7940
  %v8052 = vmul.f32 %v6496, %v7941
  %v8053 = vmul.f32 %v6497, %v7942
  %v8054 = vmul.f32 %v6498, %v7943
  %v8055 = vmul.f32 %v6499, %v7944
  %v8056 = vmul.f32 %v6500, %v7945
  %v8057 = vmul.f32 %v6501, %v7946
  %v8058 = vmul.f32 %v6502, %v7947
  %v8059 = vmul.f32 %v6503, %v7948
  %v8060 = vmul.f32 %v6504, %v7949
  %v8061 = vmul.f32 %v6505, %v7950
  %v8062 = vmul.f32 %v6506, %v7951
  %v8063 = vmul.f32 %v6507, %v7952
  %v8064 = vmul.f32 %v6508, %v7953
  %v8065 = vmul.f32 %v6509, %v7954
  %v8066 = vmul.f32 %v6510, %v7955
  %v8067 = vmul.f32 %v6511, %v7956
  %v8068 = vmul.f32 %v6512, %v7957
  %v8069 = vmul.f32 %v6513, %v7958
  %v8070 = vmul.f32 %v6514, %v7959
  %v8071 = vmul.f32 %v6515, %v7960
  %v8072 = vmul.f32 %v6516, %v7961
  %v8073 = vmul.f32 %v6517, %v7962
  %v8074 = vmul.f32 %v6518, %v7963
  %v8075 = vmul.f32 %v6519, %v7964
  %v8076 = vmul.f32 %v6520, %v7965
  %v8077 = vmul.f32 %v6521, %v7966
  %v8078 = vmul.f32 %v6522, %v7967
  %v8079 = vmul.f32 %v6523, %v7968
  %v8080 = vmul.f32 %v6524, %v7969
  %v8081 = vmul.f32 %v6525, %v7970
  %v8082 = vmul.f32 %v6526, %v7971
  %v8083 = vmul.f32 %v6527, %v7972
  %v8084 = vmul.f32 %v6528, %v7973
  %v8085 = vmul.f32 %v6529, %v7974
  %v8086 = vmul.f32 %v6530, %v7975
  %v8087 = vmul.f32 %v6531, %v7976
  %v8088 = vmul.f32 %v6532, %v7977
  %v8089 = vmul.f32 %v6533, %v7978
  %v8090 = vmul.f32 %v6534, %v7979
  %v8091 = vmul.f32 %v6535, %v7980
  %v8092 = vmul.f32 %v6536, %v7981
  %v8093 = vmul.f32 %v6537, %v7982
  %v8094 = vmul.f32 %v6538, %v7983
  %v8095 = vmul.f32 %v6539, %v7984
  %v8096 = vmul.f32 %v6540, %v7985
  %v8097 = vmul.f32 %v6541, %v7986
  %v8098 = vmul.f32 %v6542, %v7987
  %v8099 = vmul.f32 %v6543, %v7988
  %v8100 = vmul.f32 %v6544, %v7989
  %v8101 = vmul.f32 %v6545, %v7990
  %v8102 = vmul.f32 %v6546, %v7991
  %v8103 = vmul.f32 %v6547, %v7992
  %v8104 = vmul.f32 %v6548, %v7993
  %v8105 = vmul.f32 %v6549, %v7994
  %v8106 = vmul.f32 %v6550, %v7995
  %v8107 = vmul.f32 %v6551, %v7996
  %v8108 = vmul.f32 %v6552, %v7997
  %v8109 = vmul.f32 %v6553, %v7998
  %v8110 = vmul.f32 %v6554, %v7999
  %v8111 = vmul.f32 %v6555, %v8000
  %v8112 = vmul.f32 %v6556, %v8001
  %v8113 = vmul.f32 %v6557, %v8002
  %v8114 = vmul.f32 %v6558, %v8003
  %v8115 = vmul.f32 %v6559, %v8004
  %v8116 = vmul.f32 %v6560, %v8005
  %v8117 = vmul.f32 %v6561, %v8006
  %v8118 = vmul.f32 %v6562, %v8007
  %v8119 = vmul.f32 %v6563, %v8008
  %v8120 = vmul.f32 %v6564, %v8009
  %v8121 = vmul.f32 %v6565, %v8010
  %v8122 = vsub.f32 %v7567, %v8011
  %v8123 = vsub.f32 %v7568, %v8012
  %v8124 = vsub.f32 %v7569, %v8013
  %v8125 = vsub.f32 %v7570, %v8014
  %v8126 = vsub.f32 %v7571, %v8015
  %v8127 = vsub.f32 %v7572, %v8016
  %v8128 = vsub.f32 %v7573, %v8017
  %v8129 = vsub.f32 %v7574, %v8018
  %v8130 = vsub.f32 %v7575, %v8019
  %v8131 = vsub.f32 %v7576, %v8020
  %v8132 = vsub.f32 %v7577, %v8021
  %v8133 = vsub.f32 %v7578, %v8022
  %v8134 = vsub.f32 %v7579, %v8023
  %v8135 = vsub.f32 %v7580, %v8024
  %v8136 = vsub.f32 %v7581, %v8025
  %v8137 = vsub.f32 %v7582, %v8026
  %v8138 = vsub.f32 %v7583, %v8027
  %v8139 = vsub.f32 %v7584, %v8028
  %v8140 = vsub.f32 %v7585, %v8029
  %v8141 = vsub.f32 %v7586, %v8030
  %v8142 = vsub.f32 %v7587, %v8031
  %v8143 = vsub.f32 %v7588, %v8032
  %v8144 = vsub.f32 %v7589, %v8033
  %v8145 = vsub.f32 %v7590, %v8034
  %v8146 = vsub.f32 %v7591, %v8035
  %v8147 = vsub.f32 %v7592, %v8036
  %v8148 = vsub.f32 %v7593, %v8037
  %v8149 = vsub.f32 %v7594, %v8038
  %v8150 = vsub.f32 %v7595, %v8039
  %v8151 = vsub.f32 %v7596, %v8040
  %v8152 = vsub.f32 %v7597, %v8041
  %v8153 = vsub.f32 %v7598, %v8042
  %v8154 = vsub.f32 %v7599, %v8043
  %v8155 = vsub.f32 %v7600, %v8044
  %v8156 = vsub.f32 %v7601, %v8045
  %v8157 = vsub.f32 %v7602, %v8046
  %v8158 = vsub.f32 %v7603, %v8047
  %v8159 = vsub.f32 %v7604, %v8048
  %v8160 = vsub.f32 %v7605, %v8049
  %v8161 = vsub.f32 %v7606, %v8050
  %v8162 = vsub.f32 %v7607, %v8051
  %v8163 = vsub.f32 %v7608, %v8052
  %v8164 = vsub.f32 %v7609, %v8053
  %v8165 = vsub.f32 %v7610, %v8054
  %v8166 = vsub.f32 %v7611, %v8055
  %v8167 = vsub.f32 %v7612, %v8056
  %v8168 = vsub.f32 %v7613, %v8057
  %v8169 = vsub.f32 %v7614, %v8058
  %v8170 = vsub.f32 %v7615, %v8059
  %v8171 = vsub.f32 %v7616, %v8060
  %v8172 = vsub.f32 %v7617, %v8061
  %v8173 = vsub.f32 %v7618, %v8062
  %v8174 = vsub.f32 %v7619, %v8063
  %v8175 = vsub.f32 %v7620, %v8064
  %v8176 = vsub.f32 %v7621, %v8065
  %v8177 = vsub.f32 %v7622, %v8066
  %v8178 = vsub.f32 %v7623, %v8067
  %v8179 = vsub.f32 %v7624, %v8068
  %v8180 = vsub.f32 %v7625, %v8069
  %v8181 = vsub.f32 %v7626, %v8070
  %v8182 = vsub.f32 %v7627, %v8071
  %v8183 = vsub.f32 %v7628, %v8072
  %v8184 = vsub.f32 %v7629, %v8073
  %v8185 = vsub.f32 %v7630, %v8074
  %v8186 = vsub.f32 %v7631, %v8075
  %v8187 = vsub.f32 %v7632, %v8076
  %v8188 = vsub.f32 %v7633, %v8077
  %v8189 = vsub.f32 %v7634, %v8078
  %v8190 = vsub.f32 %v7635, %v8079
  %v8191 = vsub.f32 %v7636, %v8080
  %v8192 = vsub.f32 %v7637, %v8081
  %v8193 = vsub.f32 %v7638, %v8082
  %v8194 = vsub.f32 %v7639, %v8083
  %v8195 = vsub.f32 %v7640, %v8084
  %v8196 = vsub.f32 %v7641, %v8085
  %v8197 = vsub.f32 %v7642, %v8086
  %v8198 = vsub.f32 %v7643, %v8087
  %v8199 = vsub.f32 %v7644, %v8088
  %v8200 = vsub.f32 %v7645, %v8089
  %v8201 = vsub.f32 %v7646, %v8090
  %v8202 = vsub.f32 %v7647, %v8091
  %v8203 = vsub.f32 %v7648, %v8092
  %v8204 = vsub.f32 %v7649, %v8093
  %v8205 = vsub.f32 %v7650, %v8094
  %v8206 = vsub.f32 %v7651, %v8095
  %v8207 = vsub.f32 %v7652, %v8096
  %v8208 = vsub.f32 %v7653, %v8097
  %v8209 = vsub.f32 %v7654, %v8098
  %v8210 = vsub.f32 %v7655, %v8099
  %v8211 = vsub.f32 %v7656, %v8100
  %v8212 = vsub.f32 %v7657, %v8101
  %v8213 = vsub.f32 %v7658, %v8102
  %v8214 = vsub.f32 %v7659, %v8103
  %v8215 = vsub.f32 %v7660, %v8104
  %v8216 = vsub.f32 %v7661, %v8105
  %v8217 = vsub.f32 %v7662, %v8106
  %v8218 = vsub.f32 %v7663, %v8107
  %v8219 = vsub.f32 %v7664, %v8108
  %v8220 = vsub.f32 %v7665, %v8109
  %v8221 = vsub.f32 %v7666, %v8110
  %v8222 = vsub.f32 %v7667, %v8111
  %v8223 = vsub.f32 %v7668, %v8112
  %v8224 = vsub.f32 %v7669, %v8113
  %v8225 = vsub.f32 %v7670, %v8114
  %v8226 = vsub.f32 %v7671, %v8115
  %v8227 = vsub.f32 %v7672, %v8116
  %v8228 = vsub.f32 %v7673, %v8117
  %v8229 = vsub.f32 %v7674, %v8118
  %v8230 = vsub.f32 %v7675, %v8119
  %v8231 = vsub.f32 %v7676, %v8120
  %v8232 = vsub.f32 %v7677, %v8121
  %v8233 = vld [vmem:[%s5] sm:$0xff]
  %v8234 = vld [vmem:[%s5 + $0x8] sm:$0xff]
  %v8235 = vld [vmem:[%s5 + $0x10] sm:$0xff]
  %v8236 = vld [vmem:[%s5 + $0x18] sm:$0xff]
  %v8237 = vld [vmem:[%s5 + $0x20] sm:$0xff]
  %v8238 = vld [vmem:[%s5 + $0x28] sm:$0xff]
  %v8239 = vld [vmem:[%s5 + $0x30] sm:$0xff]
  %v8240 = vld [vmem:[%s5 + $0x38] sm:$0xff]
  %v8241 = vld [vmem:[%s5 + $0x40] sm:$0xff]
  %v8242 = vld [vmem:[%s5 + $0x48] sm:$0xff]
  %v8243 = vld [vmem:[%s5 + $0x50] sm:$0xff]
  %v8244 = vld [vmem:[%s5 + $0x58] sm:$0xff]
  %v8245 = vld [vmem:[%s5 + $0x60] sm:$0xff]
  %v8246 = vld [vmem:[%s5 + $0x68] sm:$0xff]
  %v8247 = vld [vmem:[%s5 + $0x70] sm:$0xff]
  %v8248 = vld [vmem:[%s5 + $0x78] sm:$0xff]
  %v8249 = vld [vmem:[%s5 + $0x80] sm:$0xff]
  %v8250 = vld [vmem:[%s5 + $0x88] sm:$0xff]
  %v8251 = vld [vmem:[%s5 + $0x90] sm:$0xff]
  %v8252 = vld [vmem:[%s5 + $0x98] sm:$0xff]
  %v8253 = vld [vmem:[%s5 + $0xa0] sm:$0xff]
  %v8254 = vld [vmem:[%s5 + $0xa8] sm:$0xff]
  %v8255 = vld [vmem:[%s5 + $0xb0] sm:$0xff]
  %v8256 = vld [vmem:[%s5 + $0xb8] sm:$0xff]
  %v8257 = vld [vmem:[%s5 + $0xc0] sm:$0xff]
  %v8258 = vld [vmem:[%s5 + $0xc8] sm:$0xff]
  %v8259 = vld [vmem:[%s5 + $0xd0] sm:$0xff]
  %v8260 = vld [vmem:[%s5 + $0xd8] sm:$0xff]
  %v8261 = vld [vmem:[%s5 + $0xe0] sm:$0xff]
  %v8262 = vld [vmem:[%s5 + $0xe8] sm:$0xff]
  %v8263 = vld [vmem:[%s5 + $0xf0] sm:$0xff]
  %v8264 = vld [vmem:[%s5 + $0xf8] sm:$0xff]
  %v8265 = vld [vmem:[%s5 + $0x100] sm:$0xff]
  %v8266 = vld [vmem:[%s5 + $0x108] sm:$0xff]
  %v8267 = vld [vmem:[%s5 + $0x110] sm:$0xff]
  %v8268 = vld [vmem:[%s5 + $0x118] sm:$0xff]
  %v8269 = vld [vmem:[%s5 + $0x120] sm:$0xff]
  %v8270 = vld [vmem:[%s5 + $0x128] sm:$0xff]
  %v8271 = vld [vmem:[%s5 + $0x130] sm:$0xff]
  %v8272 = vld [vmem:[%s5 + $0x138] sm:$0xff]
  %v8273 = vld [vmem:[%s5 + $0x140] sm:$0xff]
  %v8274 = vld [vmem:[%s5 + $0x148] sm:$0xff]
  %v8275 = vld [vmem:[%s5 + $0x150] sm:$0xff]
  %v8276 = vld [vmem:[%s5 + $0x158] sm:$0xff]
  %v8277 = vld [vmem:[%s5 + $0x160] sm:$0xff]
  %v8278 = vld [vmem:[%s5 + $0x168] sm:$0xff]
  %v8279 = vld [vmem:[%s5 + $0x170] sm:$0xff]
  %v8280 = vld [vmem:[%s5 + $0x178] sm:$0xff]
  %v8281 = vld [vmem:[%s5 + $0x180] sm:$0xff]
  %v8282 = vld [vmem:[%s5 + $0x188] sm:$0xff]
  %v8283 = vld [vmem:[%s5 + $0x190] sm:$0xff]
  %v8284 = vld [vmem:[%s5 + $0x198] sm:$0xff]
  %v8285 = vld [vmem:[%s5 + $0x1a0] sm:$0xff]
  %v8286 = vld [vmem:[%s5 + $0x1a8] sm:$0xff]
  %v8287 = vld [vmem:[%s5 + $0x1b0] sm:$0xff]
  %v8288 = vld [vmem:[%s5 + $0x1b8] sm:$0xff]
  %v8289 = vld [vmem:[%s5 + $0x1c0] sm:$0xff]
  %v8290 = vld [vmem:[%s5 + $0x1c8] sm:$0xff]
  %v8291 = vld [vmem:[%s5 + $0x1d0] sm:$0xff]
  %v8292 = vld [vmem:[%s5 + $0x1d8] sm:$0xff]
  %v8293 = vld [vmem:[%s5 + $0x1e0] sm:$0xff]
  %v8294 = vld [vmem:[%s5 + $0x1e8] sm:$0xff]
  %v8295 = vld [vmem:[%s5 + $0x1f0] sm:$0xff]
  %v8296 = vld [vmem:[%s5 + $0x1f8] sm:$0xff]
  %v8297 = vld [vmem:[%s5 + $0x200] sm:$0xff]
  %v8298 = vld [vmem:[%s5 + $0x208] sm:$0xff]
  %v8299 = vld [vmem:[%s5 + $0x210] sm:$0xff]
  %v8300 = vld [vmem:[%s5 + $0x218] sm:$0xff]
  %v8301 = vld [vmem:[%s5 + $0x220] sm:$0xff]
  %v8302 = vld [vmem:[%s5 + $0x228] sm:$0xff]
  %v8303 = vld [vmem:[%s5 + $0x230] sm:$0xff]
  %v8304 = vld [vmem:[%s5 + $0x238] sm:$0xff]
  %v8305 = vld [vmem:[%s5 + $0x240] sm:$0xff]
  %v8306 = vld [vmem:[%s5 + $0x248] sm:$0xff]
  %v8307 = vld [vmem:[%s5 + $0x250] sm:$0xff]
  %v8308 = vld [vmem:[%s5 + $0x258] sm:$0xff]
  %v8309 = vld [vmem:[%s5 + $0x260] sm:$0xff]
  %v8310 = vld [vmem:[%s5 + $0x268] sm:$0xff]
  %v8311 = vld [vmem:[%s5 + $0x270] sm:$0xff]
  %v8312 = vld [vmem:[%s5 + $0x278] sm:$0xff]
  %v8313 = vld [vmem:[%s5 + $0x280] sm:$0xff]
  %v8314 = vld [vmem:[%s5 + $0x288] sm:$0xff]
  %v8315 = vld [vmem:[%s5 + $0x290] sm:$0xff]
  %v8316 = vld [vmem:[%s5 + $0x298] sm:$0xff]
  %v8317 = vld [vmem:[%s5 + $0x2a0] sm:$0xff]
  %v8318 = vld [vmem:[%s5 + $0x2a8] sm:$0xff]
  %v8319 = vld [vmem:[%s5 + $0x2b0] sm:$0xff]
  %v8320 = vld [vmem:[%s5 + $0x2b8] sm:$0xff]
  %v8321 = vld [vmem:[%s5 + $0x2c0] sm:$0xff]
  %v8322 = vld [vmem:[%s5 + $0x2c8] sm:$0xff]
  %v8323 = vld [vmem:[%s5 + $0x2d0] sm:$0xff]
  %v8324 = vld [vmem:[%s5 + $0x2d8] sm:$0xff]
  %v8325 = vld [vmem:[%s5 + $0x2e0] sm:$0xff]
  %v8326 = vld [vmem:[%s5 + $0x2e8] sm:$0xff]
  %v8327 = vld [vmem:[%s5 + $0x2f0] sm:$0xff]
  %v8328 = vld [vmem:[%s5 + $0x2f8] sm:$0xff]
  %v8329 = vld [vmem:[%s5 + $0x300] sm:$0xff]
  %v8330 = vld [vmem:[%s5 + $0x308] sm:$0xff]
  %v8331 = vld [vmem:[%s5 + $0x310] sm:$0xff]
  %v8332 = vld [vmem:[%s5 + $0x318] sm:$0xff]
  %v8333 = vld [vmem:[%s5 + $0x320] sm:$0xff]
  %v8334 = vld [vmem:[%s5 + $0x328] sm:$0xff]
  %v8335 = vld [vmem:[%s5 + $0x330] sm:$0xff]
  %v8336 = vld [vmem:[%s5 + $0x338] sm:$0xff]
  %v8337 = vld [vmem:[%s5 + $0x340] sm:$0xff]
  %v8338 = vld [vmem:[%s5 + $0x348] sm:$0xff]
  %v8339 = vld [vmem:[%s5 + $0x350] sm:$0xff]
  %v8340 = vld [vmem:[%s5 + $0x358] sm:$0xff]
  %v8341 = vld [vmem:[%s5 + $0x360] sm:$0xff]
  %v8342 = vld [vmem:[%s5 + $0x368] sm:$0xff]
  %v8343 = vld [vmem:[%s5 + $0x370] sm:$0xff]
  %8345 = vset.pattern.permute.xlu0 0
  %8346 = vperm.xlu0 %8345, %v7900
  %v8347 = vpop.permute.xlu0 %8346
  %8350 = vset.pattern.permute.xlu0 0
  %8351 = vperm.xlu0 %8350, %v7901
  %v8352 = vpop.permute.xlu0 %8351
  %8355 = vset.pattern.permute.xlu0 0
  %8356 = vperm.xlu0 %8355, %v7902
  %v8357 = vpop.permute.xlu0 %8356
  %8360 = vset.pattern.permute.xlu0 0
  %8361 = vperm.xlu0 %8360, %v7903
  %v8362 = vpop.permute.xlu0 %8361
  %8365 = vset.pattern.permute.xlu0 0
  %8366 = vperm.xlu0 %8365, %v7904
  %v8367 = vpop.permute.xlu0 %8366
  %8370 = vset.pattern.permute.xlu0 0
  %8371 = vperm.xlu0 %8370, %v7905
  %v8372 = vpop.permute.xlu0 %8371
  %8375 = vset.pattern.permute.xlu0 0
  %8376 = vperm.xlu0 %8375, %v7906
  %v8377 = vpop.permute.xlu0 %8376
  %8380 = vset.pattern.permute.xlu0 0
  %8381 = vperm.xlu0 %8380, %v7907
  %v8382 = vpop.permute.xlu0 %8381
  %8385 = vset.pattern.permute.xlu0 0
  %8386 = vperm.xlu0 %8385, %v7908
  %v8387 = vpop.permute.xlu0 %8386
  %8390 = vset.pattern.permute.xlu0 0
  %8391 = vperm.xlu0 %8390, %v7909
  %v8392 = vpop.permute.xlu0 %8391
  %8395 = vset.pattern.permute.xlu0 0
  %8396 = vperm.xlu0 %8395, %v7910
  %v8397 = vpop.permute.xlu0 %8396
  %8400 = vset.pattern.permute.xlu0 0
  %8401 = vperm.xlu0 %8400, %v7911
  %v8402 = vpop.permute.xlu0 %8401
  %8405 = vset.pattern.permute.xlu0 0
  %8406 = vperm.xlu0 %8405, %v7912
  %v8407 = vpop.permute.xlu0 %8406
  %8410 = vset.pattern.permute.xlu0 0
  %8411 = vperm.xlu0 %8410, %v7913
  %v8412 = vpop.permute.xlu0 %8411
  %8415 = vset.pattern.permute.xlu0 0
  %8416 = vperm.xlu0 %8415, %v7914
  %v8417 = vpop.permute.xlu0 %8416
  %8420 = vset.pattern.permute.xlu0 0
  %8421 = vperm.xlu0 %8420, %v7915
  %v8422 = vpop.permute.xlu0 %8421
  %8425 = vset.pattern.permute.xlu0 0
  %8426 = vperm.xlu0 %8425, %v7916
  %v8427 = vpop.permute.xlu0 %8426
  %8430 = vset.pattern.permute.xlu0 0
  %8431 = vperm.xlu0 %8430, %v7917
  %v8432 = vpop.permute.xlu0 %8431
  %8435 = vset.pattern.permute.xlu0 0
  %8436 = vperm.xlu0 %8435, %v7918
  %v8437 = vpop.permute.xlu0 %8436
  %8440 = vset.pattern.permute.xlu0 0
  %8441 = vperm.xlu0 %8440, %v7919
  %v8442 = vpop.permute.xlu0 %8441
  %8445 = vset.pattern.permute.xlu0 0
  %8446 = vperm.xlu0 %8445, %v7920
  %v8447 = vpop.permute.xlu0 %8446
  %8450 = vset.pattern.permute.xlu0 0
  %8451 = vperm.xlu0 %8450, %v7921
  %v8452 = vpop.permute.xlu0 %8451
  %8455 = vset.pattern.permute.xlu0 0
  %8456 = vperm.xlu0 %8455, %v7922
  %v8457 = vpop.permute.xlu0 %8456
  %8460 = vset.pattern.permute.xlu0 0
  %8461 = vperm.xlu0 %8460, %v7923
  %v8462 = vpop.permute.xlu0 %8461
  %8465 = vset.pattern.permute.xlu0 0
  %8466 = vperm.xlu0 %8465, %v7924
  %v8467 = vpop.permute.xlu0 %8466
  %8470 = vset.pattern.permute.xlu0 0
  %8471 = vperm.xlu0 %8470, %v7925
  %v8472 = vpop.permute.xlu0 %8471
  %8475 = vset.pattern.permute.xlu0 0
  %8476 = vperm.xlu0 %8475, %v7926
  %v8477 = vpop.permute.xlu0 %8476
  %8480 = vset.pattern.permute.xlu0 0
  %8481 = vperm.xlu0 %8480, %v7927
  %v8482 = vpop.permute.xlu0 %8481
  %8485 = vset.pattern.permute.xlu0 0
  %8486 = vperm.xlu0 %8485, %v7928
  %v8487 = vpop.permute.xlu0 %8486
  %8490 = vset.pattern.permute.xlu0 0
  %8491 = vperm.xlu0 %8490, %v7929
  %v8492 = vpop.permute.xlu0 %8491
  %8495 = vset.pattern.permute.xlu0 0
  %8496 = vperm.xlu0 %8495, %v7930
  %v8497 = vpop.permute.xlu0 %8496
  %8500 = vset.pattern.permute.xlu0 0
  %8501 = vperm.xlu0 %8500, %v7931
  %v8502 = vpop.permute.xlu0 %8501
  %8505 = vset.pattern.permute.xlu0 0
  %8506 = vperm.xlu0 %8505, %v7932
  %v8507 = vpop.permute.xlu0 %8506
  %8510 = vset.pattern.permute.xlu0 0
  %8511 = vperm.xlu0 %8510, %v7933
  %v8512 = vpop.permute.xlu0 %8511
  %8515 = vset.pattern.permute.xlu0 0
  %8516 = vperm.xlu0 %8515, %v7934
  %v8517 = vpop.permute.xlu0 %8516
  %8520 = vset.pattern.permute.xlu0 0
  %8521 = vperm.xlu0 %8520, %v7935
  %v8522 = vpop.permute.xlu0 %8521
  %8525 = vset.pattern.permute.xlu0 0
  %8526 = vperm.xlu0 %8525, %v7936
  %v8527 = vpop.permute.xlu0 %8526
  %8530 = vset.pattern.permute.xlu0 0
  %8531 = vperm.xlu0 %8530, %v7937
  %v8532 = vpop.permute.xlu0 %8531
  %8535 = vset.pattern.permute.xlu0 0
  %8536 = vperm.xlu0 %8535, %v7938
  %v8537 = vpop.permute.xlu0 %8536
  %8540 = vset.pattern.permute.xlu0 0
  %8541 = vperm.xlu0 %8540, %v7939
  %v8542 = vpop.permute.xlu0 %8541
  %8545 = vset.pattern.permute.xlu0 0
  %8546 = vperm.xlu0 %8545, %v7940
  %v8547 = vpop.permute.xlu0 %8546
  %8550 = vset.pattern.permute.xlu0 0
  %8551 = vperm.xlu0 %8550, %v7941
  %v8552 = vpop.permute.xlu0 %8551
  %8555 = vset.pattern.permute.xlu0 0
  %8556 = vperm.xlu0 %8555, %v7942
  %v8557 = vpop.permute.xlu0 %8556
  %8560 = vset.pattern.permute.xlu0 0
  %8561 = vperm.xlu0 %8560, %v7943
  %v8562 = vpop.permute.xlu0 %8561
  %8565 = vset.pattern.permute.xlu0 0
  %8566 = vperm.xlu0 %8565, %v7944
  %v8567 = vpop.permute.xlu0 %8566
  %8570 = vset.pattern.permute.xlu0 0
  %8571 = vperm.xlu0 %8570, %v7945
  %v8572 = vpop.permute.xlu0 %8571
  %8575 = vset.pattern.permute.xlu0 0
  %8576 = vperm.xlu0 %8575, %v7946
  %v8577 = vpop.permute.xlu0 %8576
  %8580 = vset.pattern.permute.xlu0 0
  %8581 = vperm.xlu0 %8580, %v7947
  %v8582 = vpop.permute.xlu0 %8581
  %8585 = vset.pattern.permute.xlu0 0
  %8586 = vperm.xlu0 %8585, %v7948
  %v8587 = vpop.permute.xlu0 %8586
  %8590 = vset.pattern.permute.xlu0 0
  %8591 = vperm.xlu0 %8590, %v7949
  %v8592 = vpop.permute.xlu0 %8591
  %8595 = vset.pattern.permute.xlu0 0
  %8596 = vperm.xlu0 %8595, %v7950
  %v8597 = vpop.permute.xlu0 %8596
  %8600 = vset.pattern.permute.xlu0 0
  %8601 = vperm.xlu0 %8600, %v7951
  %v8602 = vpop.permute.xlu0 %8601
  %8605 = vset.pattern.permute.xlu0 0
  %8606 = vperm.xlu0 %8605, %v7952
  %v8607 = vpop.permute.xlu0 %8606
  %8610 = vset.pattern.permute.xlu0 0
  %8611 = vperm.xlu0 %8610, %v7953
  %v8612 = vpop.permute.xlu0 %8611
  %8615 = vset.pattern.permute.xlu0 0
  %8616 = vperm.xlu0 %8615, %v7954
  %v8617 = vpop.permute.xlu0 %8616
  %8620 = vset.pattern.permute.xlu0 0
  %8621 = vperm.xlu0 %8620, %v7955
  %v8622 = vpop.permute.xlu0 %8621
  %8625 = vset.pattern.permute.xlu0 0
  %8626 = vperm.xlu0 %8625, %v7956
  %v8627 = vpop.permute.xlu0 %8626
  %8630 = vset.pattern.permute.xlu0 0
  %8631 = vperm.xlu0 %8630, %v7957
  %v8632 = vpop.permute.xlu0 %8631
  %8635 = vset.pattern.permute.xlu0 0
  %8636 = vperm.xlu0 %8635, %v7958
  %v8637 = vpop.permute.xlu0 %8636
  %8640 = vset.pattern.permute.xlu0 0
  %8641 = vperm.xlu0 %8640, %v7959
  %v8642 = vpop.permute.xlu0 %8641
  %8645 = vset.pattern.permute.xlu0 0
  %8646 = vperm.xlu0 %8645, %v7960
  %v8647 = vpop.permute.xlu0 %8646
  %8650 = vset.pattern.permute.xlu0 0
  %8651 = vperm.xlu0 %8650, %v7961
  %v8652 = vpop.permute.xlu0 %8651
  %8655 = vset.pattern.permute.xlu0 0
  %8656 = vperm.xlu0 %8655, %v7962
  %v8657 = vpop.permute.xlu0 %8656
  %8660 = vset.pattern.permute.xlu0 0
  %8661 = vperm.xlu0 %8660, %v7963
  %v8662 = vpop.permute.xlu0 %8661
  %8665 = vset.pattern.permute.xlu0 0
  %8666 = vperm.xlu0 %8665, %v7964
  %v8667 = vpop.permute.xlu0 %8666
  %8670 = vset.pattern.permute.xlu0 0
  %8671 = vperm.xlu0 %8670, %v7965
  %v8672 = vpop.permute.xlu0 %8671
  %8675 = vset.pattern.permute.xlu0 0
  %8676 = vperm.xlu0 %8675, %v7966
  %v8677 = vpop.permute.xlu0 %8676
  %8680 = vset.pattern.permute.xlu0 0
  %8681 = vperm.xlu0 %8680, %v7967
  %v8682 = vpop.permute.xlu0 %8681
  %8685 = vset.pattern.permute.xlu0 0
  %8686 = vperm.xlu0 %8685, %v7968
  %v8687 = vpop.permute.xlu0 %8686
  %8690 = vset.pattern.permute.xlu0 0
  %8691 = vperm.xlu0 %8690, %v7969
  %v8692 = vpop.permute.xlu0 %8691
  %8695 = vset.pattern.permute.xlu0 0
  %8696 = vperm.xlu0 %8695, %v7970
  %v8697 = vpop.permute.xlu0 %8696
  %8700 = vset.pattern.permute.xlu0 0
  %8701 = vperm.xlu0 %8700, %v7971
  %v8702 = vpop.permute.xlu0 %8701
  %8705 = vset.pattern.permute.xlu0 0
  %8706 = vperm.xlu0 %8705, %v7972
  %v8707 = vpop.permute.xlu0 %8706
  %8710 = vset.pattern.permute.xlu0 0
  %8711 = vperm.xlu0 %8710, %v7973
  %v8712 = vpop.permute.xlu0 %8711
  %8715 = vset.pattern.permute.xlu0 0
  %8716 = vperm.xlu0 %8715, %v7974
  %v8717 = vpop.permute.xlu0 %8716
  %8720 = vset.pattern.permute.xlu0 0
  %8721 = vperm.xlu0 %8720, %v7975
  %v8722 = vpop.permute.xlu0 %8721
  %8725 = vset.pattern.permute.xlu0 0
  %8726 = vperm.xlu0 %8725, %v7976
  %v8727 = vpop.permute.xlu0 %8726
  %8730 = vset.pattern.permute.xlu0 0
  %8731 = vperm.xlu0 %8730, %v7977
  %v8732 = vpop.permute.xlu0 %8731
  %8735 = vset.pattern.permute.xlu0 0
  %8736 = vperm.xlu0 %8735, %v7978
  %v8737 = vpop.permute.xlu0 %8736
  %8740 = vset.pattern.permute.xlu0 0
  %8741 = vperm.xlu0 %8740, %v7979
  %v8742 = vpop.permute.xlu0 %8741
  %8745 = vset.pattern.permute.xlu0 0
  %8746 = vperm.xlu0 %8745, %v7980
  %v8747 = vpop.permute.xlu0 %8746
  %8750 = vset.pattern.permute.xlu0 0
  %8751 = vperm.xlu0 %8750, %v7981
  %v8752 = vpop.permute.xlu0 %8751
  %8755 = vset.pattern.permute.xlu0 0
  %8756 = vperm.xlu0 %8755, %v7982
  %v8757 = vpop.permute.xlu0 %8756
  %8760 = vset.pattern.permute.xlu0 0
  %8761 = vperm.xlu0 %8760, %v7983
  %v8762 = vpop.permute.xlu0 %8761
  %8765 = vset.pattern.permute.xlu0 0
  %8766 = vperm.xlu0 %8765, %v7984
  %v8767 = vpop.permute.xlu0 %8766
  %8770 = vset.pattern.permute.xlu0 0
  %8771 = vperm.xlu0 %8770, %v7985
  %v8772 = vpop.permute.xlu0 %8771
  %8775 = vset.pattern.permute.xlu0 0
  %8776 = vperm.xlu0 %8775, %v7986
  %v8777 = vpop.permute.xlu0 %8776
  %8780 = vset.pattern.permute.xlu0 0
  %8781 = vperm.xlu0 %8780, %v7987
  %v8782 = vpop.permute.xlu0 %8781
  %8785 = vset.pattern.permute.xlu0 0
  %8786 = vperm.xlu0 %8785, %v7988
  %v8787 = vpop.permute.xlu0 %8786
  %8790 = vset.pattern.permute.xlu0 0
  %8791 = vperm.xlu0 %8790, %v7989
  %v8792 = vpop.permute.xlu0 %8791
  %8795 = vset.pattern.permute.xlu0 0
  %8796 = vperm.xlu0 %8795, %v7990
  %v8797 = vpop.permute.xlu0 %8796
  %8800 = vset.pattern.permute.xlu0 0
  %8801 = vperm.xlu0 %8800, %v7991
  %v8802 = vpop.permute.xlu0 %8801
  %8805 = vset.pattern.permute.xlu0 0
  %8806 = vperm.xlu0 %8805, %v7992
  %v8807 = vpop.permute.xlu0 %8806
  %8810 = vset.pattern.permute.xlu0 0
  %8811 = vperm.xlu0 %8810, %v7993
  %v8812 = vpop.permute.xlu0 %8811
  %8815 = vset.pattern.permute.xlu0 0
  %8816 = vperm.xlu0 %8815, %v7994
  %v8817 = vpop.permute.xlu0 %8816
  %8820 = vset.pattern.permute.xlu0 0
  %8821 = vperm.xlu0 %8820, %v7995
  %v8822 = vpop.permute.xlu0 %8821
  %8825 = vset.pattern.permute.xlu0 0
  %8826 = vperm.xlu0 %8825, %v7996
  %v8827 = vpop.permute.xlu0 %8826
  %8830 = vset.pattern.permute.xlu0 0
  %8831 = vperm.xlu0 %8830, %v7997
  %v8832 = vpop.permute.xlu0 %8831
  %8835 = vset.pattern.permute.xlu0 0
  %8836 = vperm.xlu0 %8835, %v7998
  %v8837 = vpop.permute.xlu0 %8836
  %8840 = vset.pattern.permute.xlu0 0
  %8841 = vperm.xlu0 %8840, %v7999
  %v8842 = vpop.permute.xlu0 %8841
  %8845 = vset.pattern.permute.xlu0 0
  %8846 = vperm.xlu0 %8845, %v8000
  %v8847 = vpop.permute.xlu0 %8846
  %8850 = vset.pattern.permute.xlu0 0
  %8851 = vperm.xlu0 %8850, %v8001
  %v8852 = vpop.permute.xlu0 %8851
  %8855 = vset.pattern.permute.xlu0 0
  %8856 = vperm.xlu0 %8855, %v8002
  %v8857 = vpop.permute.xlu0 %8856
  %8860 = vset.pattern.permute.xlu0 0
  %8861 = vperm.xlu0 %8860, %v8003
  %v8862 = vpop.permute.xlu0 %8861
  %8865 = vset.pattern.permute.xlu0 0
  %8866 = vperm.xlu0 %8865, %v8004
  %v8867 = vpop.permute.xlu0 %8866
  %8870 = vset.pattern.permute.xlu0 0
  %8871 = vperm.xlu0 %8870, %v8005
  %v8872 = vpop.permute.xlu0 %8871
  %8875 = vset.pattern.permute.xlu0 0
  %8876 = vperm.xlu0 %8875, %v8006
  %v8877 = vpop.permute.xlu0 %8876
  %8880 = vset.pattern.permute.xlu0 0
  %8881 = vperm.xlu0 %8880, %v8007
  %v8882 = vpop.permute.xlu0 %8881
  %8885 = vset.pattern.permute.xlu0 0
  %8886 = vperm.xlu0 %8885, %v8008
  %v8887 = vpop.permute.xlu0 %8886
  %8890 = vset.pattern.permute.xlu0 0
  %8891 = vperm.xlu0 %8890, %v8009
  %v8892 = vpop.permute.xlu0 %8891
  %8895 = vset.pattern.permute.xlu0 0
  %8896 = vperm.xlu0 %8895, %v8010
  %v8897 = vpop.permute.xlu0 %8896
  %v8899 = vmul.f32 %v5676, %v8347
  %v8900 = vmul.f32 %v5679, %v8352
  %v8901 = vmul.f32 %v5684, %v8357
  %v8902 = vmul.f32 %v5687, %v8362
  %v8903 = vmul.f32 %v5692, %v8367
  %v8904 = vmul.f32 %v5695, %v8372
  %v8905 = vmul.f32 %v5700, %v8377
  %v8906 = vmul.f32 %v5703, %v8382
  %v8907 = vmul.f32 %v5708, %v8387
  %v8908 = vmul.f32 %v5711, %v8392
  %v8909 = vmul.f32 %v5716, %v8397
  %v8910 = vmul.f32 %v5719, %v8402
  %v8911 = vmul.f32 %v5724, %v8407
  %v8912 = vmul.f32 %v5727, %v8412
  %v8913 = vmul.f32 %v5732, %v8417
  %v8914 = vmul.f32 %v5735, %v8422
  %v8915 = vmul.f32 %v5740, %v8427
  %v8916 = vmul.f32 %v5743, %v8432
  %v8917 = vmul.f32 %v5748, %v8437
  %v8918 = vmul.f32 %v5751, %v8442
  %v8919 = vmul.f32 %v5756, %v8447
  %v8920 = vmul.f32 %v5759, %v8452
  %v8921 = vmul.f32 %v5764, %v8457
  %v8922 = vmul.f32 %v5767, %v8462
  %v8923 = vmul.f32 %v5772, %v8467
  %v8924 = vmul.f32 %v5775, %v8472
  %v8925 = vmul.f32 %v5780, %v8477
  %v8926 = vmul.f32 %v5783, %v8482
  %v8927 = vmul.f32 %v5788, %v8487
  %v8928 = vmul.f32 %v5791, %v8492
  %v8929 = vmul.f32 %v5796, %v8497
  %v8930 = vmul.f32 %v5799, %v8502
  %v8931 = vmul.f32 %v5804, %v8507
  %v8932 = vmul.f32 %v5807, %v8512
  %v8933 = vmul.f32 %v5812, %v8517
  %v8934 = vmul.f32 %v5815, %v8522
  %v8935 = vmul.f32 %v5820, %v8527
  %v8936 = vmul.f32 %v5823, %v8532
  %v8937 = vmul.f32 %v5828, %v8537
  %v8938 = vmul.f32 %v5831, %v8542
  %v8939 = vmul.f32 %v5836, %v8547
  %v8940 = vmul.f32 %v5839, %v8552
  %v8941 = vmul.f32 %v5844, %v8557
  %v8942 = vmul.f32 %v5847, %v8562
  %v8943 = vmul.f32 %v5852, %v8567
  %v8944 = vmul.f32 %v5855, %v8572
  %v8945 = vmul.f32 %v5860, %v8577
  %v8946 = vmul.f32 %v5863, %v8582
  %v8947 = vmul.f32 %v5868, %v8587
  %v8948 = vmul.f32 %v5871, %v8592
  %v8949 = vmul.f32 %v5876, %v8597
  %v8950 = vmul.f32 %v5879, %v8602
  %v8951 = vmul.f32 %v5884, %v8607
  %v8952 = vmul.f32 %v5887, %v8612
  %v8953 = vmul.f32 %v5892, %v8617
  %v8954 = vmul.f32 %v5895, %v8622
  %v8955 = vmul.f32 %v5900, %v8627
  %v8956 = vmul.f32 %v5903, %v8632
  %v8957 = vmul.f32 %v5908, %v8637
  %v8958 = vmul.f32 %v5911, %v8642
  %v8959 = vmul.f32 %v5916, %v8647
  %v8960 = vmul.f32 %v5919, %v8652
  %v8961 = vmul.f32 %v5924, %v8657
  %v8962 = vmul.f32 %v5927, %v8662
  %v8963 = vmul.f32 %v5932, %v8667
  %v8964 = vmul.f32 %v5935, %v8672
  %v8965 = vmul.f32 %v5940, %v8677
  %v8966 = vmul.f32 %v5943, %v8682
  %v8967 = vmul.f32 %v5948, %v8687
  %v8968 = vmul.f32 %v5951, %v8692
  %v8969 = vmul.f32 %v5956, %v8697
  %v8970 = vmul.f32 %v5959, %v8702
  %v8971 = vmul.f32 %v5964, %v8707
  %v8972 = vmul.f32 %v5967, %v8712
  %v8973 = vmul.f32 %v5972, %v8717
  %v8974 = vmul.f32 %v5975, %v8722
  %v8975 = vmul.f32 %v5980, %v8727
  %v8976 = vmul.f32 %v5983, %v8732
  %v8977 = vmul.f32 %v5988, %v8737
  %v8978 = vmul.f32 %v5991, %v8742
  %v8979 = vmul.f32 %v5996, %v8747
  %v8980 = vmul.f32 %v5999, %v8752
  %v8981 = vmul.f32 %v6004, %v8757
  %v8982 = vmul.f32 %v6007, %v8762
  %v8983 = vmul.f32 %v6012, %v8767
  %v8984 = vmul.f32 %v6015, %v8772
  %v8985 = vmul.f32 %v6020, %v8777
  %v8986 = vmul.f32 %v6023, %v8782
  %v8987 = vmul.f32 %v6028, %v8787
  %v8988 = vmul.f32 %v6031, %v8792
  %v8989 = vmul.f32 %v6036, %v8797
  %v8990 = vmul.f32 %v6039, %v8802
  %v8991 = vmul.f32 %v6044, %v8807
  %v8992 = vmul.f32 %v6047, %v8812
  %v8993 = vmul.f32 %v6052, %v8817
  %v8994 = vmul.f32 %v6055, %v8822
  %v8995 = vmul.f32 %v6060, %v8827
  %v8996 = vmul.f32 %v6063, %v8832
  %v8997 = vmul.f32 %v6068, %v8837
  %v8998 = vmul.f32 %v6071, %v8842
  %v8999 = vmul.f32 %v6076, %v8847
  %v9000 = vmul.f32 %v6079, %v8852
  %v9001 = vmul.f32 %v6084, %v8857
  %v9002 = vmul.f32 %v6087, %v8862
  %v9003 = vmul.f32 %v6092, %v8867
  %v9004 = vmul.f32 %v6095, %v8872
  %v9005 = vmul.f32 %v6100, %v8877
  %v9006 = vmul.f32 %v6103, %v8882
  %v9007 = vmul.f32 %v6108, %v8887
  %v9008 = vmul.f32 %v6111, %v8892
  %v9009 = vmul.f32 %v6116, %v8897
  %v9010 = vadd.f32 %v8233, %v8899
  %v9011 = vadd.f32 %v8234, %v8900
  %v9012 = vadd.f32 %v8235, %v8901
  %v9013 = vadd.f32 %v8236, %v8902
  %v9014 = vadd.f32 %v8237, %v8903
  %v9015 = vadd.f32 %v8238, %v8904
  %v9016 = vadd.f32 %v8239, %v8905
  %v9017 = vadd.f32 %v8240, %v8906
  %v9018 = vadd.f32 %v8241, %v8907
  %v9019 = vadd.f32 %v8242, %v8908
  %v9020 = vadd.f32 %v8243, %v8909
  %v9021 = vadd.f32 %v8244, %v8910
  %v9022 = vadd.f32 %v8245, %v8911
  %v9023 = vadd.f32 %v8246, %v8912
  %v9024 = vadd.f32 %v8247, %v8913
  %v9025 = vadd.f32 %v8248, %v8914
  %v9026 = vadd.f32 %v8249, %v8915
  %v9027 = vadd.f32 %v8250, %v8916
  %v9028 = vadd.f32 %v8251, %v8917
  %v9029 = vadd.f32 %v8252, %v8918
  %v9030 = vadd.f32 %v8253, %v8919
  %v9031 = vadd.f32 %v8254, %v8920
  %v9032 = vadd.f32 %v8255, %v8921
  %v9033 = vadd.f32 %v8256, %v8922
  %v9034 = vadd.f32 %v8257, %v8923
  %v9035 = vadd.f32 %v8258, %v8924
  %v9036 = vadd.f32 %v8259, %v8925
  %v9037 = vadd.f32 %v8260, %v8926
  %v9038 = vadd.f32 %v8261, %v8927
  %v9039 = vadd.f32 %v8262, %v8928
  %v9040 = vadd.f32 %v8263, %v8929
  %v9041 = vadd.f32 %v8264, %v8930
  %v9042 = vadd.f32 %v8265, %v8931
  %v9043 = vadd.f32 %v8266, %v8932
  %v9044 = vadd.f32 %v8267, %v8933
  %v9045 = vadd.f32 %v8268, %v8934
  %v9046 = vadd.f32 %v8269, %v8935
  %v9047 = vadd.f32 %v8270, %v8936
  %v9048 = vadd.f32 %v8271, %v8937
  %v9049 = vadd.f32 %v8272, %v8938
  %v9050 = vadd.f32 %v8273, %v8939
  %v9051 = vadd.f32 %v8274, %v8940
  %v9052 = vadd.f32 %v8275, %v8941
  %v9053 = vadd.f32 %v8276, %v8942
  %v9054 = vadd.f32 %v8277, %v8943
  %v9055 = vadd.f32 %v8278, %v8944
  %v9056 = vadd.f32 %v8279, %v8945
  %v9057 = vadd.f32 %v8280, %v8946
  %v9058 = vadd.f32 %v8281, %v8947
  %v9059 = vadd.f32 %v8282, %v8948
  %v9060 = vadd.f32 %v8283, %v8949
  %v9061 = vadd.f32 %v8284, %v8950
  %v9062 = vadd.f32 %v8285, %v8951
  %v9063 = vadd.f32 %v8286, %v8952
  %v9064 = vadd.f32 %v8287, %v8953
  %v9065 = vadd.f32 %v8288, %v8954
  %v9066 = vadd.f32 %v8289, %v8955
  %v9067 = vadd.f32 %v8290, %v8956
  %v9068 = vadd.f32 %v8291, %v8957
  %v9069 = vadd.f32 %v8292, %v8958
  %v9070 = vadd.f32 %v8293, %v8959
  %v9071 = vadd.f32 %v8294, %v8960
  %v9072 = vadd.f32 %v8295, %v8961
  %v9073 = vadd.f32 %v8296, %v8962
  %v9074 = vadd.f32 %v8297, %v8963
  %v9075 = vadd.f32 %v8298, %v8964
  %v9076 = vadd.f32 %v8299, %v8965
  %v9077 = vadd.f32 %v8300, %v8966
  %v9078 = vadd.f32 %v8301, %v8967
  %v9079 = vadd.f32 %v8302, %v8968
  %v9080 = vadd.f32 %v8303, %v8969
  %v9081 = vadd.f32 %v8304, %v8970
  %v9082 = vadd.f32 %v8305, %v8971
  %v9083 = vadd.f32 %v8306, %v8972
  %v9084 = vadd.f32 %v8307, %v8973
  %v9085 = vadd.f32 %v8308, %v8974
  %v9086 = vadd.f32 %v8309, %v8975
  %v9087 = vadd.f32 %v8310, %v8976
  %v9088 = vadd.f32 %v8311, %v8977
  %v9089 = vadd.f32 %v8312, %v8978
  %v9090 = vadd.f32 %v8313, %v8979
  %v9091 = vadd.f32 %v8314, %v8980
  %v9092 = vadd.f32 %v8315, %v8981
  %v9093 = vadd.f32 %v8316, %v8982
  %v9094 = vadd.f32 %v8317, %v8983
  %v9095 = vadd.f32 %v8318, %v8984
  %v9096 = vadd.f32 %v8319, %v8985
  %v9097 = vadd.f32 %v8320, %v8986
  %v9098 = vadd.f32 %v8321, %v8987
  %v9099 = vadd.f32 %v8322, %v8988
  %v9100 = vadd.f32 %v8323, %v8989
  %v9101 = vadd.f32 %v8324, %v8990
  %v9102 = vadd.f32 %v8325, %v8991
  %v9103 = vadd.f32 %v8326, %v8992
  %v9104 = vadd.f32 %v8327, %v8993
  %v9105 = vadd.f32 %v8328, %v8994
  %v9106 = vadd.f32 %v8329, %v8995
  %v9107 = vadd.f32 %v8330, %v8996
  %v9108 = vadd.f32 %v8331, %v8997
  %v9109 = vadd.f32 %v8332, %v8998
  %v9110 = vadd.f32 %v8333, %v8999
  %v9111 = vadd.f32 %v8334, %v9000
  %v9112 = vadd.f32 %v8335, %v9001
  %v9113 = vadd.f32 %v8336, %v9002
  %v9114 = vadd.f32 %v8337, %v9003
  %v9115 = vadd.f32 %v8338, %v9004
  %v9116 = vadd.f32 %v8339, %v9005
  %v9117 = vadd.f32 %v8340, %v9006
  %v9118 = vadd.f32 %v8341, %v9007
  %v9119 = vadd.f32 %v8342, %v9008
  %v9120 = vadd.f32 %v8343, %v9009
  %9122 = vset.pattern.permute.xlu0 0
  %9123 = vperm.xlu0 %9122, %v8122
  %v9124 = vpop.permute.xlu0 %9123
  %9127 = vset.pattern.permute.xlu0 0
  %9128 = vperm.xlu0 %9127, %v8123
  %v9129 = vpop.permute.xlu0 %9128
  %9132 = vset.pattern.permute.xlu0 0
  %9133 = vperm.xlu0 %9132, %v8124
  %v9134 = vpop.permute.xlu0 %9133
  %9137 = vset.pattern.permute.xlu0 0
  %9138 = vperm.xlu0 %9137, %v8125
  %v9139 = vpop.permute.xlu0 %9138
  %9142 = vset.pattern.permute.xlu0 0
  %9143 = vperm.xlu0 %9142, %v8126
  %v9144 = vpop.permute.xlu0 %9143
  %9147 = vset.pattern.permute.xlu0 0
  %9148 = vperm.xlu0 %9147, %v8127
  %v9149 = vpop.permute.xlu0 %9148
  %9152 = vset.pattern.permute.xlu0 0
  %9153 = vperm.xlu0 %9152, %v8128
  %v9154 = vpop.permute.xlu0 %9153
  %9157 = vset.pattern.permute.xlu0 0
  %9158 = vperm.xlu0 %9157, %v8129
  %v9159 = vpop.permute.xlu0 %9158
  %9162 = vset.pattern.permute.xlu0 0
  %9163 = vperm.xlu0 %9162, %v8130
  %v9164 = vpop.permute.xlu0 %9163
  %9167 = vset.pattern.permute.xlu0 0
  %9168 = vperm.xlu0 %9167, %v8131
  %v9169 = vpop.permute.xlu0 %9168
  %9172 = vset.pattern.permute.xlu0 0
  %9173 = vperm.xlu0 %9172, %v8132
  %v9174 = vpop.permute.xlu0 %9173
  %9177 = vset.pattern.permute.xlu0 0
  %9178 = vperm.xlu0 %9177, %v8133
  %v9179 = vpop.permute.xlu0 %9178
  %9182 = vset.pattern.permute.xlu0 0
  %9183 = vperm.xlu0 %9182, %v8134
  %v9184 = vpop.permute.xlu0 %9183
  %9187 = vset.pattern.permute.xlu0 0
  %9188 = vperm.xlu0 %9187, %v8135
  %v9189 = vpop.permute.xlu0 %9188
  %9192 = vset.pattern.permute.xlu0 0
  %9193 = vperm.xlu0 %9192, %v8136
  %v9194 = vpop.permute.xlu0 %9193
  %9197 = vset.pattern.permute.xlu0 0
  %9198 = vperm.xlu0 %9197, %v8137
  %v9199 = vpop.permute.xlu0 %9198
  %9202 = vset.pattern.permute.xlu0 0
  %9203 = vperm.xlu0 %9202, %v8138
  %v9204 = vpop.permute.xlu0 %9203
  %9207 = vset.pattern.permute.xlu0 0
  %9208 = vperm.xlu0 %9207, %v8139
  %v9209 = vpop.permute.xlu0 %9208
  %9212 = vset.pattern.permute.xlu0 0
  %9213 = vperm.xlu0 %9212, %v8140
  %v9214 = vpop.permute.xlu0 %9213
  %9217 = vset.pattern.permute.xlu0 0
  %9218 = vperm.xlu0 %9217, %v8141
  %v9219 = vpop.permute.xlu0 %9218
  %9222 = vset.pattern.permute.xlu0 0
  %9223 = vperm.xlu0 %9222, %v8142
  %v9224 = vpop.permute.xlu0 %9223
  %9227 = vset.pattern.permute.xlu0 0
  %9228 = vperm.xlu0 %9227, %v8143
  %v9229 = vpop.permute.xlu0 %9228
  %9232 = vset.pattern.permute.xlu0 0
  %9233 = vperm.xlu0 %9232, %v8144
  %v9234 = vpop.permute.xlu0 %9233
  %9237 = vset.pattern.permute.xlu0 0
  %9238 = vperm.xlu0 %9237, %v8145
  %v9239 = vpop.permute.xlu0 %9238
  %9242 = vset.pattern.permute.xlu0 0
  %9243 = vperm.xlu0 %9242, %v8146
  %v9244 = vpop.permute.xlu0 %9243
  %9247 = vset.pattern.permute.xlu0 0
  %9248 = vperm.xlu0 %9247, %v8147
  %v9249 = vpop.permute.xlu0 %9248
  %9252 = vset.pattern.permute.xlu0 0
  %9253 = vperm.xlu0 %9252, %v8148
  %v9254 = vpop.permute.xlu0 %9253
  %9257 = vset.pattern.permute.xlu0 0
  %9258 = vperm.xlu0 %9257, %v8149
  %v9259 = vpop.permute.xlu0 %9258
  %9262 = vset.pattern.permute.xlu0 0
  %9263 = vperm.xlu0 %9262, %v8150
  %v9264 = vpop.permute.xlu0 %9263
  %9267 = vset.pattern.permute.xlu0 0
  %9268 = vperm.xlu0 %9267, %v8151
  %v9269 = vpop.permute.xlu0 %9268
  %9272 = vset.pattern.permute.xlu0 0
  %9273 = vperm.xlu0 %9272, %v8152
  %v9274 = vpop.permute.xlu0 %9273
  %9277 = vset.pattern.permute.xlu0 0
  %9278 = vperm.xlu0 %9277, %v8153
  %v9279 = vpop.permute.xlu0 %9278
  %9282 = vset.pattern.permute.xlu0 0
  %9283 = vperm.xlu0 %9282, %v8154
  %v9284 = vpop.permute.xlu0 %9283
  %9287 = vset.pattern.permute.xlu0 0
  %9288 = vperm.xlu0 %9287, %v8155
  %v9289 = vpop.permute.xlu0 %9288
  %9292 = vset.pattern.permute.xlu0 0
  %9293 = vperm.xlu0 %9292, %v8156
  %v9294 = vpop.permute.xlu0 %9293
  %9297 = vset.pattern.permute.xlu0 0
  %9298 = vperm.xlu0 %9297, %v8157
  %v9299 = vpop.permute.xlu0 %9298
  %9302 = vset.pattern.permute.xlu0 0
  %9303 = vperm.xlu0 %9302, %v8158
  %v9304 = vpop.permute.xlu0 %9303
  %9307 = vset.pattern.permute.xlu0 0
  %9308 = vperm.xlu0 %9307, %v8159
  %v9309 = vpop.permute.xlu0 %9308
  %9312 = vset.pattern.permute.xlu0 0
  %9313 = vperm.xlu0 %9312, %v8160
  %v9314 = vpop.permute.xlu0 %9313
  %9317 = vset.pattern.permute.xlu0 0
  %9318 = vperm.xlu0 %9317, %v8161
  %v9319 = vpop.permute.xlu0 %9318
  %9322 = vset.pattern.permute.xlu0 0
  %9323 = vperm.xlu0 %9322, %v8162
  %v9324 = vpop.permute.xlu0 %9323
  %9327 = vset.pattern.permute.xlu0 0
  %9328 = vperm.xlu0 %9327, %v8163
  %v9329 = vpop.permute.xlu0 %9328
  %9332 = vset.pattern.permute.xlu0 0
  %9333 = vperm.xlu0 %9332, %v8164
  %v9334 = vpop.permute.xlu0 %9333
  %9337 = vset.pattern.permute.xlu0 0
  %9338 = vperm.xlu0 %9337, %v8165
  %v9339 = vpop.permute.xlu0 %9338
  %9342 = vset.pattern.permute.xlu0 0
  %9343 = vperm.xlu0 %9342, %v8166
  %v9344 = vpop.permute.xlu0 %9343
  %9347 = vset.pattern.permute.xlu0 0
  %9348 = vperm.xlu0 %9347, %v8167
  %v9349 = vpop.permute.xlu0 %9348
  %9352 = vset.pattern.permute.xlu0 0
  %9353 = vperm.xlu0 %9352, %v8168
  %v9354 = vpop.permute.xlu0 %9353
  %9357 = vset.pattern.permute.xlu0 0
  %9358 = vperm.xlu0 %9357, %v8169
  %v9359 = vpop.permute.xlu0 %9358
  %9362 = vset.pattern.permute.xlu0 0
  %9363 = vperm.xlu0 %9362, %v8170
  %v9364 = vpop.permute.xlu0 %9363
  %9367 = vset.pattern.permute.xlu0 0
  %9368 = vperm.xlu0 %9367, %v8171
  %v9369 = vpop.permute.xlu0 %9368
  %9372 = vset.pattern.permute.xlu0 0
  %9373 = vperm.xlu0 %9372, %v8172
  %v9374 = vpop.permute.xlu0 %9373
  %9377 = vset.pattern.permute.xlu0 0
  %9378 = vperm.xlu0 %9377, %v8173
  %v9379 = vpop.permute.xlu0 %9378
  %9382 = vset.pattern.permute.xlu0 0
  %9383 = vperm.xlu0 %9382, %v8174
  %v9384 = vpop.permute.xlu0 %9383
  %9387 = vset.pattern.permute.xlu0 0
  %9388 = vperm.xlu0 %9387, %v8175
  %v9389 = vpop.permute.xlu0 %9388
  %9392 = vset.pattern.permute.xlu0 0
  %9393 = vperm.xlu0 %9392, %v8176
  %v9394 = vpop.permute.xlu0 %9393
  %9397 = vset.pattern.permute.xlu0 0
  %9398 = vperm.xlu0 %9397, %v8177
  %v9399 = vpop.permute.xlu0 %9398
  %9402 = vset.pattern.permute.xlu0 0
  %9403 = vperm.xlu0 %9402, %v8178
  %v9404 = vpop.permute.xlu0 %9403
  %9407 = vset.pattern.permute.xlu0 0
  %9408 = vperm.xlu0 %9407, %v8179
  %v9409 = vpop.permute.xlu0 %9408
  %9412 = vset.pattern.permute.xlu0 0
  %9413 = vperm.xlu0 %9412, %v8180
  %v9414 = vpop.permute.xlu0 %9413
  %9417 = vset.pattern.permute.xlu0 0
  %9418 = vperm.xlu0 %9417, %v8181
  %v9419 = vpop.permute.xlu0 %9418
  %9422 = vset.pattern.permute.xlu0 0
  %9423 = vperm.xlu0 %9422, %v8182
  %v9424 = vpop.permute.xlu0 %9423
  %9427 = vset.pattern.permute.xlu0 0
  %9428 = vperm.xlu0 %9427, %v8183
  %v9429 = vpop.permute.xlu0 %9428
  %9432 = vset.pattern.permute.xlu0 0
  %9433 = vperm.xlu0 %9432, %v8184
  %v9434 = vpop.permute.xlu0 %9433
  %9437 = vset.pattern.permute.xlu0 0
  %9438 = vperm.xlu0 %9437, %v8185
  %v9439 = vpop.permute.xlu0 %9438
  %9442 = vset.pattern.permute.xlu0 0
  %9443 = vperm.xlu0 %9442, %v8186
  %v9444 = vpop.permute.xlu0 %9443
  %9447 = vset.pattern.permute.xlu0 0
  %9448 = vperm.xlu0 %9447, %v8187
  %v9449 = vpop.permute.xlu0 %9448
  %9452 = vset.pattern.permute.xlu0 0
  %9453 = vperm.xlu0 %9452, %v8188
  %v9454 = vpop.permute.xlu0 %9453
  %9457 = vset.pattern.permute.xlu0 0
  %9458 = vperm.xlu0 %9457, %v8189
  %v9459 = vpop.permute.xlu0 %9458
  %9462 = vset.pattern.permute.xlu0 0
  %9463 = vperm.xlu0 %9462, %v8190
  %v9464 = vpop.permute.xlu0 %9463
  %9467 = vset.pattern.permute.xlu0 0
  %9468 = vperm.xlu0 %9467, %v8191
  %v9469 = vpop.permute.xlu0 %9468
  %9472 = vset.pattern.permute.xlu0 0
  %9473 = vperm.xlu0 %9472, %v8192
  %v9474 = vpop.permute.xlu0 %9473
  %9477 = vset.pattern.permute.xlu0 0
  %9478 = vperm.xlu0 %9477, %v8193
  %v9479 = vpop.permute.xlu0 %9478
  %9482 = vset.pattern.permute.xlu0 0
  %9483 = vperm.xlu0 %9482, %v8194
  %v9484 = vpop.permute.xlu0 %9483
  %9487 = vset.pattern.permute.xlu0 0
  %9488 = vperm.xlu0 %9487, %v8195
  %v9489 = vpop.permute.xlu0 %9488
  %9492 = vset.pattern.permute.xlu0 0
  %9493 = vperm.xlu0 %9492, %v8196
  %v9494 = vpop.permute.xlu0 %9493
  %9497 = vset.pattern.permute.xlu0 0
  %9498 = vperm.xlu0 %9497, %v8197
  %v9499 = vpop.permute.xlu0 %9498
  %9502 = vset.pattern.permute.xlu0 0
  %9503 = vperm.xlu0 %9502, %v8198
  %v9504 = vpop.permute.xlu0 %9503
  %9507 = vset.pattern.permute.xlu0 0
  %9508 = vperm.xlu0 %9507, %v8199
  %v9509 = vpop.permute.xlu0 %9508
  %9512 = vset.pattern.permute.xlu0 0
  %9513 = vperm.xlu0 %9512, %v8200
  %v9514 = vpop.permute.xlu0 %9513
  %9517 = vset.pattern.permute.xlu0 0
  %9518 = vperm.xlu0 %9517, %v8201
  %v9519 = vpop.permute.xlu0 %9518
  %9522 = vset.pattern.permute.xlu0 0
  %9523 = vperm.xlu0 %9522, %v8202
  %v9524 = vpop.permute.xlu0 %9523
  %9527 = vset.pattern.permute.xlu0 0
  %9528 = vperm.xlu0 %9527, %v8203
  %v9529 = vpop.permute.xlu0 %9528
  %9532 = vset.pattern.permute.xlu0 0
  %9533 = vperm.xlu0 %9532, %v8204
  %v9534 = vpop.permute.xlu0 %9533
  %9537 = vset.pattern.permute.xlu0 0
  %9538 = vperm.xlu0 %9537, %v8205
  %v9539 = vpop.permute.xlu0 %9538
  %9542 = vset.pattern.permute.xlu0 0
  %9543 = vperm.xlu0 %9542, %v8206
  %v9544 = vpop.permute.xlu0 %9543
  %9547 = vset.pattern.permute.xlu0 0
  %9548 = vperm.xlu0 %9547, %v8207
  %v9549 = vpop.permute.xlu0 %9548
  %9552 = vset.pattern.permute.xlu0 0
  %9553 = vperm.xlu0 %9552, %v8208
  %v9554 = vpop.permute.xlu0 %9553
  %9557 = vset.pattern.permute.xlu0 0
  %9558 = vperm.xlu0 %9557, %v8209
  %v9559 = vpop.permute.xlu0 %9558
  %9562 = vset.pattern.permute.xlu0 0
  %9563 = vperm.xlu0 %9562, %v8210
  %v9564 = vpop.permute.xlu0 %9563
  %9567 = vset.pattern.permute.xlu0 0
  %9568 = vperm.xlu0 %9567, %v8211
  %v9569 = vpop.permute.xlu0 %9568
  %9572 = vset.pattern.permute.xlu0 0
  %9573 = vperm.xlu0 %9572, %v8212
  %v9574 = vpop.permute.xlu0 %9573
  %9577 = vset.pattern.permute.xlu0 0
  %9578 = vperm.xlu0 %9577, %v8213
  %v9579 = vpop.permute.xlu0 %9578
  %9582 = vset.pattern.permute.xlu0 0
  %9583 = vperm.xlu0 %9582, %v8214
  %v9584 = vpop.permute.xlu0 %9583
  %9587 = vset.pattern.permute.xlu0 0
  %9588 = vperm.xlu0 %9587, %v8215
  %v9589 = vpop.permute.xlu0 %9588
  %9592 = vset.pattern.permute.xlu0 0
  %9593 = vperm.xlu0 %9592, %v8216
  %v9594 = vpop.permute.xlu0 %9593
  %9597 = vset.pattern.permute.xlu0 0
  %9598 = vperm.xlu0 %9597, %v8217
  %v9599 = vpop.permute.xlu0 %9598
  %9602 = vset.pattern.permute.xlu0 0
  %9603 = vperm.xlu0 %9602, %v8218
  %v9604 = vpop.permute.xlu0 %9603
  %9607 = vset.pattern.permute.xlu0 0
  %9608 = vperm.xlu0 %9607, %v8219
  %v9609 = vpop.permute.xlu0 %9608
  %9612 = vset.pattern.permute.xlu0 0
  %9613 = vperm.xlu0 %9612, %v8220
  %v9614 = vpop.permute.xlu0 %9613
  %9617 = vset.pattern.permute.xlu0 0
  %9618 = vperm.xlu0 %9617, %v8221
  %v9619 = vpop.permute.xlu0 %9618
  %9622 = vset.pattern.permute.xlu0 0
  %9623 = vperm.xlu0 %9622, %v8222
  %v9624 = vpop.permute.xlu0 %9623
  %9627 = vset.pattern.permute.xlu0 0
  %9628 = vperm.xlu0 %9627, %v8223
  %v9629 = vpop.permute.xlu0 %9628
  %9632 = vset.pattern.permute.xlu0 0
  %9633 = vperm.xlu0 %9632, %v8224
  %v9634 = vpop.permute.xlu0 %9633
  %9637 = vset.pattern.permute.xlu0 0
  %9638 = vperm.xlu0 %9637, %v8225
  %v9639 = vpop.permute.xlu0 %9638
  %9642 = vset.pattern.permute.xlu0 0
  %9643 = vperm.xlu0 %9642, %v8226
  %v9644 = vpop.permute.xlu0 %9643
  %9647 = vset.pattern.permute.xlu0 0
  %9648 = vperm.xlu0 %9647, %v8227
  %v9649 = vpop.permute.xlu0 %9648
  %9652 = vset.pattern.permute.xlu0 0
  %9653 = vperm.xlu0 %9652, %v8228
  %v9654 = vpop.permute.xlu0 %9653
  %9657 = vset.pattern.permute.xlu0 0
  %9658 = vperm.xlu0 %9657, %v8229
  %v9659 = vpop.permute.xlu0 %9658
  %9662 = vset.pattern.permute.xlu0 0
  %9663 = vperm.xlu0 %9662, %v8230
  %v9664 = vpop.permute.xlu0 %9663
  %9667 = vset.pattern.permute.xlu0 0
  %9668 = vperm.xlu0 %9667, %v8231
  %v9669 = vpop.permute.xlu0 %9668
  %9672 = vset.pattern.permute.xlu0 0
  %9673 = vperm.xlu0 %9672, %v8232
  %v9674 = vpop.permute.xlu0 %9673
  %v9676 = vadd.f32 %v9010, %v9124
  %v9677 = vadd.f32 %v9011, %v9129
  %v9678 = vadd.f32 %v9012, %v9134
  %v9679 = vadd.f32 %v9013, %v9139
  %v9680 = vadd.f32 %v9014, %v9144
  %v9681 = vadd.f32 %v9015, %v9149
  %v9682 = vadd.f32 %v9016, %v9154
  %v9683 = vadd.f32 %v9017, %v9159
  %v9684 = vadd.f32 %v9018, %v9164
  %v9685 = vadd.f32 %v9019, %v9169
  %v9686 = vadd.f32 %v9020, %v9174
  %v9687 = vadd.f32 %v9021, %v9179
  %v9688 = vadd.f32 %v9022, %v9184
  %v9689 = vadd.f32 %v9023, %v9189
  %v9690 = vadd.f32 %v9024, %v9194
  %v9691 = vadd.f32 %v9025, %v9199
  %v9692 = vadd.f32 %v9026, %v9204
  %v9693 = vadd.f32 %v9027, %v9209
  %v9694 = vadd.f32 %v9028, %v9214
  %v9695 = vadd.f32 %v9029, %v9219
  %v9696 = vadd.f32 %v9030, %v9224
  %v9697 = vadd.f32 %v9031, %v9229
  %v9698 = vadd.f32 %v9032, %v9234
  %v9699 = vadd.f32 %v9033, %v9239
  %v9700 = vadd.f32 %v9034, %v9244
  %v9701 = vadd.f32 %v9035, %v9249
  %v9702 = vadd.f32 %v9036, %v9254
  %v9703 = vadd.f32 %v9037, %v9259
  %v9704 = vadd.f32 %v9038, %v9264
  %v9705 = vadd.f32 %v9039, %v9269
  %v9706 = vadd.f32 %v9040, %v9274
  %v9707 = vadd.f32 %v9041, %v9279
  %v9708 = vadd.f32 %v9042, %v9284
  %v9709 = vadd.f32 %v9043, %v9289
  %v9710 = vadd.f32 %v9044, %v9294
  %v9711 = vadd.f32 %v9045, %v9299
  %v9712 = vadd.f32 %v9046, %v9304
  %v9713 = vadd.f32 %v9047, %v9309
  %v9714 = vadd.f32 %v9048, %v9314
  %v9715 = vadd.f32 %v9049, %v9319
  %v9716 = vadd.f32 %v9050, %v9324
  %v9717 = vadd.f32 %v9051, %v9329
  %v9718 = vadd.f32 %v9052, %v9334
  %v9719 = vadd.f32 %v9053, %v9339
  %v9720 = vadd.f32 %v9054, %v9344
  %v9721 = vadd.f32 %v9055, %v9349
  %v9722 = vadd.f32 %v9056, %v9354
  %v9723 = vadd.f32 %v9057, %v9359
  %v9724 = vadd.f32 %v9058, %v9364
  %v9725 = vadd.f32 %v9059, %v9369
  %v9726 = vadd.f32 %v9060, %v9374
  %v9727 = vadd.f32 %v9061, %v9379
  %v9728 = vadd.f32 %v9062, %v9384
  %v9729 = vadd.f32 %v9063, %v9389
  %v9730 = vadd.f32 %v9064, %v9394
  %v9731 = vadd.f32 %v9065, %v9399
  %v9732 = vadd.f32 %v9066, %v9404
  %v9733 = vadd.f32 %v9067, %v9409
  %v9734 = vadd.f32 %v9068, %v9414
  %v9735 = vadd.f32 %v9069, %v9419
  %v9736 = vadd.f32 %v9070, %v9424
  %v9737 = vadd.f32 %v9071, %v9429
  %v9738 = vadd.f32 %v9072, %v9434
  %v9739 = vadd.f32 %v9073, %v9439
  %v9740 = vadd.f32 %v9074, %v9444
  %v9741 = vadd.f32 %v9075, %v9449
  %v9742 = vadd.f32 %v9076, %v9454
  %v9743 = vadd.f32 %v9077, %v9459
  %v9744 = vadd.f32 %v9078, %v9464
  %v9745 = vadd.f32 %v9079, %v9469
  %v9746 = vadd.f32 %v9080, %v9474
  %v9747 = vadd.f32 %v9081, %v9479
  %v9748 = vadd.f32 %v9082, %v9484
  %v9749 = vadd.f32 %v9083, %v9489
  %v9750 = vadd.f32 %v9084, %v9494
  %v9751 = vadd.f32 %v9085, %v9499
  %v9752 = vadd.f32 %v9086, %v9504
  %v9753 = vadd.f32 %v9087, %v9509
  %v9754 = vadd.f32 %v9088, %v9514
  %v9755 = vadd.f32 %v9089, %v9519
  %v9756 = vadd.f32 %v9090, %v9524
  %v9757 = vadd.f32 %v9091, %v9529
  %v9758 = vadd.f32 %v9092, %v9534
  %v9759 = vadd.f32 %v9093, %v9539
  %v9760 = vadd.f32 %v9094, %v9544
  %v9761 = vadd.f32 %v9095, %v9549
  %v9762 = vadd.f32 %v9096, %v9554
  %v9763 = vadd.f32 %v9097, %v9559
  %v9764 = vadd.f32 %v9098, %v9564
  %v9765 = vadd.f32 %v9099, %v9569
  %v9766 = vadd.f32 %v9100, %v9574
  %v9767 = vadd.f32 %v9101, %v9579
  %v9768 = vadd.f32 %v9102, %v9584
  %v9769 = vadd.f32 %v9103, %v9589
  %v9770 = vadd.f32 %v9104, %v9594
  %v9771 = vadd.f32 %v9105, %v9599
  %v9772 = vadd.f32 %v9106, %v9604
  %v9773 = vadd.f32 %v9107, %v9609
  %v9774 = vadd.f32 %v9108, %v9614
  %v9775 = vadd.f32 %v9109, %v9619
  %v9776 = vadd.f32 %v9110, %v9624
  %v9777 = vadd.f32 %v9111, %v9629
  %v9778 = vadd.f32 %v9112, %v9634
  %v9779 = vadd.f32 %v9113, %v9639
  %v9780 = vadd.f32 %v9114, %v9644
  %v9781 = vadd.f32 %v9115, %v9649
  %v9782 = vadd.f32 %v9116, %v9654
  %v9783 = vadd.f32 %v9117, %v9659
  %v9784 = vadd.f32 %v9118, %v9664
  %v9785 = vadd.f32 %v9119, %v9669
  %v9786 = vadd.f32 %v9120, %v9674
  %9787 = vst.msk [vmem:[%s6] sm:$0xff] %vm6121, %v9676
  %9788 = vst.msk [vmem:[%s6 + $0x8] sm:$0xff] %vm6121, %v9677
  %9789 = vst.msk [vmem:[%s6 + $0x10] sm:$0xff] %vm6121, %v9678
  %9790 = vst.msk [vmem:[%s6 + $0x18] sm:$0xff] %vm6121, %v9679
  %9791 = vst.msk [vmem:[%s6 + $0x20] sm:$0xff] %vm6121, %v9680
  %9792 = vst.msk [vmem:[%s6 + $0x28] sm:$0xff] %vm6121, %v9681
  %9793 = vst.msk [vmem:[%s6 + $0x30] sm:$0xff] %vm6121, %v9682
  %9794 = vst.msk [vmem:[%s6 + $0x38] sm:$0xff] %vm6121, %v9683
  %9795 = vst.msk [vmem:[%s6 + $0x40] sm:$0xff] %vm6121, %v9684
  %9796 = vst.msk [vmem:[%s6 + $0x48] sm:$0xff] %vm6121, %v9685
  %9797 = vst.msk [vmem:[%s6 + $0x50] sm:$0xff] %vm6121, %v9686
  %9798 = vst.msk [vmem:[%s6 + $0x58] sm:$0xff] %vm6121, %v9687
  %9799 = vst.msk [vmem:[%s6 + $0x60] sm:$0xff] %vm6121, %v9688
  %9800 = vst.msk [vmem:[%s6 + $0x68] sm:$0xff] %vm6121, %v9689
  %9801 = vst.msk [vmem:[%s6 + $0x70] sm:$0xff] %vm6121, %v9690
  %9802 = vst.msk [vmem:[%s6 + $0x78] sm:$0xff] %vm6121, %v9691
  %9803 = vst.msk [vmem:[%s6 + $0x80] sm:$0xff] %vm6121, %v9692
  %9804 = vst.msk [vmem:[%s6 + $0x88] sm:$0xff] %vm6121, %v9693
  %9805 = vst.msk [vmem:[%s6 + $0x90] sm:$0xff] %vm6121, %v9694
  %9806 = vst.msk [vmem:[%s6 + $0x98] sm:$0xff] %vm6121, %v9695
  %9807 = vst.msk [vmem:[%s6 + $0xa0] sm:$0xff] %vm6121, %v9696
  %9808 = vst.msk [vmem:[%s6 + $0xa8] sm:$0xff] %vm6121, %v9697
  %9809 = vst.msk [vmem:[%s6 + $0xb0] sm:$0xff] %vm6121, %v9698
  %9810 = vst.msk [vmem:[%s6 + $0xb8] sm:$0xff] %vm6121, %v9699
  %9811 = vst.msk [vmem:[%s6 + $0xc0] sm:$0xff] %vm6121, %v9700
  %9812 = vst.msk [vmem:[%s6 + $0xc8] sm:$0xff] %vm6121, %v9701
  %9813 = vst.msk [vmem:[%s6 + $0xd0] sm:$0xff] %vm6121, %v9702
  %9814 = vst.msk [vmem:[%s6 + $0xd8] sm:$0xff] %vm6121, %v9703
  %9815 = vst.msk [vmem:[%s6 + $0xe0] sm:$0xff] %vm6121, %v9704
  %9816 = vst.msk [vmem:[%s6 + $0xe8] sm:$0xff] %vm6121, %v9705
  %9817 = vst.msk [vmem:[%s6 + $0xf0] sm:$0xff] %vm6121, %v9706
  %9818 = vst.msk [vmem:[%s6 + $0xf8] sm:$0xff] %vm6121, %v9707
  %9819 = vst.msk [vmem:[%s6 + $0x100] sm:$0xff] %vm6121, %v9708
  %9820 = vst.msk [vmem:[%s6 + $0x108] sm:$0xff] %vm6121, %v9709
  %9821 = vst.msk [vmem:[%s6 + $0x110] sm:$0xff] %vm6121, %v9710
  %9822 = vst.msk [vmem:[%s6 + $0x118] sm:$0xff] %vm6121, %v9711
  %9823 = vst.msk [vmem:[%s6 + $0x120] sm:$0xff] %vm6121, %v9712
  %9824 = vst.msk [vmem:[%s6 + $0x128] sm:$0xff] %vm6121, %v9713
  %9825 = vst.msk [vmem:[%s6 + $0x130] sm:$0xff] %vm6121, %v9714
  %9826 = vst.msk [vmem:[%s6 + $0x138] sm:$0xff] %vm6121, %v9715
  %9827 = vst.msk [vmem:[%s6 + $0x140] sm:$0xff] %vm6121, %v9716
  %9828 = vst.msk [vmem:[%s6 + $0x148] sm:$0xff] %vm6121, %v9717
  %9829 = vst.msk [vmem:[%s6 + $0x150] sm:$0xff] %vm6121, %v9718
  %9830 = vst.msk [vmem:[%s6 + $0x158] sm:$0xff] %vm6121, %v9719
  %9831 = vst.msk [vmem:[%s6 + $0x160] sm:$0xff] %vm6121, %v9720
  %9832 = vst.msk [vmem:[%s6 + $0x168] sm:$0xff] %vm6121, %v9721
  %9833 = vst.msk [vmem:[%s6 + $0x170] sm:$0xff] %vm6121, %v9722
  %9834 = vst.msk [vmem:[%s6 + $0x178] sm:$0xff] %vm6121, %v9723
  %9835 = vst.msk [vmem:[%s6 + $0x180] sm:$0xff] %vm6121, %v9724
  %9836 = vst.msk [vmem:[%s6 + $0x188] sm:$0xff] %vm6121, %v9725
  %9837 = vst.msk [vmem:[%s6 + $0x190] sm:$0xff] %vm6121, %v9726
  %9838 = vst.msk [vmem:[%s6 + $0x198] sm:$0xff] %vm6121, %v9727
  %9839 = vst.msk [vmem:[%s6 + $0x1a0] sm:$0xff] %vm6121, %v9728
  %9840 = vst.msk [vmem:[%s6 + $0x1a8] sm:$0xff] %vm6121, %v9729
  %9841 = vst.msk [vmem:[%s6 + $0x1b0] sm:$0xff] %vm6121, %v9730
  %9842 = vst.msk [vmem:[%s6 + $0x1b8] sm:$0xff] %vm6121, %v9731
  %9843 = vst.msk [vmem:[%s6 + $0x1c0] sm:$0xff] %vm6121, %v9732
  %9844 = vst.msk [vmem:[%s6 + $0x1c8] sm:$0xff] %vm6121, %v9733
  %9845 = vst.msk [vmem:[%s6 + $0x1d0] sm:$0xff] %vm6121, %v9734
  %9846 = vst.msk [vmem:[%s6 + $0x1d8] sm:$0xff] %vm6121, %v9735
  %9847 = vst.msk [vmem:[%s6 + $0x1e0] sm:$0xff] %vm6121, %v9736
  %9848 = vst.msk [vmem:[%s6 + $0x1e8] sm:$0xff] %vm6121, %v9737
  %9849 = vst.msk [vmem:[%s6 + $0x1f0] sm:$0xff] %vm6121, %v9738
  %9850 = vst.msk [vmem:[%s6 + $0x1f8] sm:$0xff] %vm6121, %v9739
  %9851 = vst.msk [vmem:[%s6 + $0x200] sm:$0xff] %vm6121, %v9740
  %9852 = vst.msk [vmem:[%s6 + $0x208] sm:$0xff] %vm6121, %v9741
  %9853 = vst.msk [vmem:[%s6 + $0x210] sm:$0xff] %vm6121, %v9742
  %9854 = vst.msk [vmem:[%s6 + $0x218] sm:$0xff] %vm6121, %v9743
  %9855 = vst.msk [vmem:[%s6 + $0x220] sm:$0xff] %vm6121, %v9744
  %9856 = vst.msk [vmem:[%s6 + $0x228] sm:$0xff] %vm6121, %v9745
  %9857 = vst.msk [vmem:[%s6 + $0x230] sm:$0xff] %vm6121, %v9746
  %9858 = vst.msk [vmem:[%s6 + $0x238] sm:$0xff] %vm6121, %v9747
  %9859 = vst.msk [vmem:[%s6 + $0x240] sm:$0xff] %vm6121, %v9748
  %9860 = vst.msk [vmem:[%s6 + $0x248] sm:$0xff] %vm6121, %v9749
  %9861 = vst.msk [vmem:[%s6 + $0x250] sm:$0xff] %vm6121, %v9750
  %9862 = vst.msk [vmem:[%s6 + $0x258] sm:$0xff] %vm6121, %v9751
  %9863 = vst.msk [vmem:[%s6 + $0x260] sm:$0xff] %vm6121, %v9752
  %9864 = vst.msk [vmem:[%s6 + $0x268] sm:$0xff] %vm6121, %v9753
  %9865 = vst.msk [vmem:[%s6 + $0x270] sm:$0xff] %vm6121, %v9754
  %9866 = vst.msk [vmem:[%s6 + $0x278] sm:$0xff] %vm6121, %v9755
  %9867 = vst.msk [vmem:[%s6 + $0x280] sm:$0xff] %vm6121, %v9756
  %9868 = vst.msk [vmem:[%s6 + $0x288] sm:$0xff] %vm6121, %v9757
  %9869 = vst.msk [vmem:[%s6 + $0x290] sm:$0xff] %vm6121, %v9758
  %9870 = vst.msk [vmem:[%s6 + $0x298] sm:$0xff] %vm6121, %v9759
  %9871 = vst.msk [vmem:[%s6 + $0x2a0] sm:$0xff] %vm6121, %v9760
  %9872 = vst.msk [vmem:[%s6 + $0x2a8] sm:$0xff] %vm6121, %v9761
  %9873 = vst.msk [vmem:[%s6 + $0x2b0] sm:$0xff] %vm6121, %v9762
  %9874 = vst.msk [vmem:[%s6 + $0x2b8] sm:$0xff] %vm6121, %v9763
  %9875 = vst.msk [vmem:[%s6 + $0x2c0] sm:$0xff] %vm6121, %v9764
  %9876 = vst.msk [vmem:[%s6 + $0x2c8] sm:$0xff] %vm6121, %v9765
  %9877 = vst.msk [vmem:[%s6 + $0x2d0] sm:$0xff] %vm6121, %v9766
  %9878 = vst.msk [vmem:[%s6 + $0x2d8] sm:$0xff] %vm6121, %v9767
  %9879 = vst.msk [vmem:[%s6 + $0x2e0] sm:$0xff] %vm6121, %v9768
  %9880 = vst.msk [vmem:[%s6 + $0x2e8] sm:$0xff] %vm6121, %v9769
  %9881 = vst.msk [vmem:[%s6 + $0x2f0] sm:$0xff] %vm6121, %v9770
  %9882 = vst.msk [vmem:[%s6 + $0x2f8] sm:$0xff] %vm6121, %v9771
  %9883 = vst.msk [vmem:[%s6 + $0x300] sm:$0xff] %vm6121, %v9772
  %9884 = vst.msk [vmem:[%s6 + $0x308] sm:$0xff] %vm6121, %v9773
  %9885 = vst.msk [vmem:[%s6 + $0x310] sm:$0xff] %vm6121, %v9774
  %9886 = vst.msk [vmem:[%s6 + $0x318] sm:$0xff] %vm6121, %v9775
  %9887 = vst.msk [vmem:[%s6 + $0x320] sm:$0xff] %vm6121, %v9776
  %9888 = vst.msk [vmem:[%s6 + $0x328] sm:$0xff] %vm6121, %v9777
  %9889 = vst.msk [vmem:[%s6 + $0x330] sm:$0xff] %vm6121, %v9778
  %9890 = vst.msk [vmem:[%s6 + $0x338] sm:$0xff] %vm6121, %v9779
  %9891 = vst.msk [vmem:[%s6 + $0x340] sm:$0xff] %vm6121, %v9780
  %9892 = vst.msk [vmem:[%s6 + $0x348] sm:$0xff] %vm6121, %v9781
  %9893 = vst.msk [vmem:[%s6 + $0x350] sm:$0xff] %vm6121, %v9782
  %9894 = vst.msk [vmem:[%s6 + $0x358] sm:$0xff] %vm6121, %v9783
  %9895 = vst.msk [vmem:[%s6 + $0x360] sm:$0xff] %vm6121, %v9784
  %9896 = vst.msk [vmem:[%s6 + $0x368] sm:$0xff] %vm6121, %v9785
  %9897 = vst.msk [vmem:[%s6 + $0x370] sm:$0xff] %vm6121, %v9786
  // Predicated region
  $region26: #{fused_forward.1} parent=0 // pred_check
    _
  $region27: #{fused_forward.1} parent=0 // pred_check_branch
    %9899 = sbr.rel (0) target = $region29
  $region28: #{fused_forward.1} parent=0 // pred_region
    _
  $region29: #{fused_forward.1} parent=0 // pred_fallthru
    _
  // Predicated region
  $region30: #{fused_forward.1} parent=0 // pred_check
    _
  $region31: #{fused_forward.1} parent=0 // pred_check_branch
    %9901 = sbr.rel (0) target = $region33
  $region32: #{fused_forward.1} parent=0 // pred_region
    _
  $region33: #{fused_forward.1} parent=0 // pred_fallthru
    _

</llo_original>
